<compile_context>
chip_gen: v7x
topology: tpu7x:2x2x1
jax: 0.10.0
libtpu: 0.0.40
codegen_flags: <defaults>
</compile_context>

<pallas_src>
import numpy as np
import jax
import jax.numpy as jnp
from jax.experimental import pallas as pl
from jax.experimental.pallas import tpu as pltpu


# ----------------------------------------------------------------------------
# Pallas kernel: the whole decoder layer in one invocation (batch folded).
# ----------------------------------------------------------------------------
def make_decoder_kernel(B, S, D, H, DH, DFF, dot_dtype, approx_recip):
    f32 = jnp.float32

    def kernel(x_ref, mem_ref,
               cos_ref, sin_a_ref, sin_b_ref,
               wq_s, wk_s, wv_s, bq_s, bk_s, bv_s, wo_s, bo_s,
               wq_c, wk_c, wv_c, bq_c, bk_c, bv_c, wo_c, bo_c,
               w1_ref, b1_ref, w2_ref, b2_ref,
               g1_ref, be1_ref, g2_ref, be2_ref, g3_ref, be3_ref,
               out_ref):
        x = x_ref[...]          # [R, D], R = B*S (rows are (b, s) flattened)
        mem = mem_ref[...]      # [R, D]
        cos = cos_ref[...]      # [R, D]
        sin_a = sin_a_ref[...]  # [R, D]  (-sin on even lanes, 0 on odd)
        sin_b = sin_b_ref[...]  # [R, D]  (+sin on odd lanes, 0 on even)

        def rope(t):
            # interleaved-pair RoPE with XLU rolls instead of a [D,D] matmul:
            #   out[2i]   = t[2i]  *cos - t[2i+1]*sin
            #   out[2i+1] = t[2i+1]*cos + t[2i]  *sin
            # roll semantics match np.roll: roll(t, s)[j] = t[(j - s) mod D]
            nxt = pltpu.roll(t, D - 1, axis=1)   # nxt[j] = t[j+1]
            prv = pltpu.roll(t, 1, axis=1)       # prv[j] = t[j-1]
            return t * cos + nxt * sin_a + prv * sin_b

        def layernorm(t, g_ref, b_ref):
            mu = jnp.mean(t, axis=-1, keepdims=True)
            var = jnp.mean(jnp.square(t - mu), axis=-1, keepdims=True)
            return (t - mu) * jax.lax.rsqrt(var + 1e-5) * g_ref[...] + b_ref[...]

        # causal additive bias, built once and reused by both attentions
        rowi = jax.lax.broadcasted_iota(jnp.int32, (S, S), 0)
        coli = jax.lax.broadcasted_iota(jnp.int32, (S, S), 1)
        causal_bias = jnp.where(rowi >= coli, 0.0, -1e30).astype(f32)  # [S, S]
        scale = 1.0 / float(np.sqrt(DH))

        def mha(q_in, k_in, v_in, wq, wk, wv, bq, bk, bv, wo, bo):
            # q_in/k_in/v_in: [R, D] f32.  Weights are head-major refs:
            #   wq/wk/wv: [H, D, DH]   bq/bk/bv: [H, 1, DH]
            #   wo: [H, DH, D]         bo: [1, D]
            blocks = []
            for b in range(B):                       # static, tiny B
                rows = slice(b * S, (b + 1) * S)     # aligned sublane slice
                qb = q_in[rows].astype(dot_dtype)
                kb = k_in[rows].astype(dot_dtype)
                vb = v_in[rows].astype(dot_dtype)

                # head-major projections -> [H, S, DH] (f32 accumulation);
                # weights are indexed on the leading axis: no lane slicing.
                qh = jnp.stack([jnp.dot(qb, wq[h], preferred_element_type=f32)
                                + bq[h] for h in range(H)])
                kh = jnp.stack([jnp.dot(kb, wk[h], preferred_element_type=f32)
                                + bk[h] for h in range(H)])
                vh = jnp.stack([jnp.dot(vb, wv[h], preferred_element_type=f32)
                                + bv[h] for h in range(H)])

                # one batched dot over heads for scores and AV
                s = jnp.einsum("hqd,hkd->hqk",
                               qh.astype(dot_dtype), kh.astype(dot_dtype),
                               preferred_element_type=f32)           # [H,S,S]
                s = s * scale + causal_bias[None]
                s = s - jnp.max(s, axis=-1, keepdims=True)
                p = jnp.exp(s)                                        # f32
                denom = jnp.sum(p, axis=-1, keepdims=True)
                p = p * pl.reciprocal(denom, approx=approx_recip)
                o = jnp.einsum("hqk,hkd->hqd",
                               p.astype(dot_dtype), vh.astype(dot_dtype),
                               preferred_element_type=f32)            # [H,S,DH]

                # output projection: sum per-head contributions (no lane concat)
                ob = jnp.zeros((S, D), f32)
                for h in range(H):
                    ob = ob + jnp.dot(o[h].astype(dot_dtype), wo[h],
                                      preferred_element_type=f32)
                blocks.append(ob + bo[...])
            return jnp.concatenate(blocks, axis=0)    # rows (sublane) concat

        # --- self-attention block -------------------------------------------
        x_rope = rope(x)
        sa = mha(x_rope, x_rope, x,
                 wq_s, wk_s, wv_s, bq_s, bk_s, bv_s, wo_s, bo_s)
        x1 = layernorm(x + sa, g1_ref, be1_ref)

        # --- cross-attention block (causal mask, matching the PyTorch call) --
        x1_rope = rope(x1)
        mem_rope = rope(mem)
        ca = mha(x1_rope, mem_rope, mem,
                 wq_c, wk_c, wv_c, bq_c, bk_c, bv_c, wo_c, bo_c)
        x2 = layernorm(x1 + ca, g2_ref, be2_ref)

        # --- feed-forward -----------------------------------------------------
        hdn = jnp.maximum(
            jnp.dot(x2.astype(dot_dtype), w1_ref[...],
                    preferred_element_type=f32) + b1_ref[...], 0.0)
        ff = jnp.dot(hdn.astype(dot_dtype), w2_ref[...],
                     preferred_element_type=f32) + b2_ref[...]
        out_ref[...] = layernorm(x2 + ff, g3_ref, be3_ref)

    return kernel


# ----------------------------------------------------------------------------
# Wrapper: parameter plumbing (head-major reshapes, RoPE tables) + pallas_call
# ----------------------------------------------------------------------------
def transformer_decoder_layer(x, memory, params, *, num_heads,
                              matmul_dtype=jnp.bfloat16, approx_softmax=True):
    B, S, D = x.shape
    H = num_heads
    DH = D // H
    DFF = params["lin1_w"].shape[0]
    R = B * S
    f32 = jnp.float32

    # --- RoPE tables (torchtune convention, interleaved pairs), tiled over B --
    theta = 1.0 / (10000.0 ** (jnp.arange(0, DH, 2, dtype=f32) / DH))   # [DH/2]
    ang = jnp.arange(S, dtype=f32)[:, None] * theta[None, :]            # [S, DH/2]
    cos_d = jnp.tile(jnp.repeat(jnp.cos(ang), 2, axis=1), (1, H))       # [S, D]
    sin_d = jnp.tile(jnp.repeat(jnp.sin(ang), 2, axis=1), (1, H))       # [S, D]
    even = (jnp.arange(D) % 2 == 0)[None, :]
    sin_a = jnp.where(even, -sin_d, 0.0)   # pairs with t[j+1] on even lanes
    sin_b = jnp.where(even, 0.0, sin_d)    # pairs with t[j-1] on odd  lanes
    cos_r = jnp.tile(cos_d, (B, 1))        # [R, D]
    sin_a = jnp.tile(sin_a, (B, 1))
    sin_b = jnp.tile(sin_b, (B, 1))

    # --- head-major weight reshapes (done once, host/XLA side) ---------------
    def split_inproj(w, b):
        wq, wk, wv = jnp.split(w, 3, axis=0)       # each [D_out, D_in]
        bq, bk, bv = jnp.split(b, 3)

        def headmajor(wi):                         # -> [H, D_in, DH]
            return wi.reshape(H, DH, D).transpose(0, 2, 1).astype(matmul_dtype)

        def headbias(bi):                          # -> [H, 1, DH] (f32)
            return bi.reshape(H, 1, DH).astype(f32)

        return (headmajor(wq), headmajor(wk), headmajor(wv),
                headbias(bq), headbias(bk), headbias(bv))

    wq_s, wk_s, wv_s, bq_s, bk_s, bv_s = split_inproj(
        params["sa_in_w"], params["sa_in_b"])
    wq_c, wk_c, wv_c, bq_c, bk_c, bv_c = split_inproj(
        params["ca_in_w"], params["ca_in_b"])

    wo_s = params["sa_out_w"].T.reshape(H, DH, D).astype(matmul_dtype)
    bo_s = params["sa_out_b"].reshape(1, D).astype(f32)
    wo_c = params["ca_out_w"].T.reshape(H, DH, D).astype(matmul_dtype)
    bo_c = params["ca_out_b"].reshape(1, D).astype(f32)

    w1 = params["lin1_w"].T.astype(matmul_dtype)          # [D, DFF]
    b1 = params["lin1_b"].reshape(1, DFF).astype(f32)
    w2 = params["lin2_w"].T.astype(matmul_dtype)          # [DFF, D]
    b2 = params["lin2_b"].reshape(1, D).astype(f32)

    args = [
        x.reshape(R, D).astype(f32), memory.reshape(R, D).astype(f32),
        cos_r, sin_a, sin_b,
        wq_s, wk_s, wv_s, bq_s, bk_s, bv_s, wo_s, bo_s,
        wq_c, wk_c, wv_c, bq_c, bk_c, bv_c, wo_c, bo_c,
        w1, b1, w2, b2,
        params["ln1_g"].reshape(1, D).astype(f32), params["ln1_b"].reshape(1, D).astype(f32),
        params["ln2_g"].reshape(1, D).astype(f32), params["ln2_b"].reshape(1, D).astype(f32),
        params["ln3_g"].reshape(1, D).astype(f32), params["ln3_b"].reshape(1, D).astype(f32),
    ]

    def full_spec(a):
        zeros = (0,) * a.ndim
        return pl.BlockSpec(a.shape, lambda i, _z=zeros: _z)

    # VMEM budget & cost hint sized from the actual operand footprint
    out_bytes = R * D * 4
    in_bytes = sum(int(np.prod(a.shape)) * a.dtype.itemsize for a in args)
    bytes_accessed = in_bytes + out_bytes
    vmem_limit = int(min(100 * 2**20, max(32 * 2**20, 4 * bytes_accessed)))

    flops = int(16 * R * D * D            # QKV + out projections, both attns
                + 4 * R * D * DFF         # FFN
                + 8 * B * H * S * S * DH) # scores + AV, both attns
    transcendentals = int(2 * B * H * S * S + 3 * R + 2 * B * H * S)
    cost = pl.CostEstimate(flops=flops, transcendentals=transcendentals,
                           bytes_accessed=int(bytes_accessed))

    kernel = make_decoder_kernel(B, S, D, H, DH, DFF, matmul_dtype, approx_softmax)

    out2d = pl.pallas_call(
        kernel,
        out_shape=jax.ShapeDtypeStruct((R, D), f32),
        grid=(1,),
        in_specs=[full_spec(a) for a in args],
        out_specs=pl.BlockSpec((R, D), lambda i: (0, 0)),
        compiler_params=pltpu.CompilerParams(
            dimension_semantics=("arbitrary",),
            vmem_limit_bytes=vmem_limit),
        cost_estimate=cost,
    )(*args)
    return out2d.reshape(B, S, D)


# ----------------------------------------------------------------------------
# Pure-JAX reference (mirrors the PyTorch forward, eval-mode dropout)
# ----------------------------------------------------------------------------
def reference_forward(x, memory, params, *, num_heads):
    B, S, D = x.shape
    H, DH = num_heads, D // num_heads
    f32 = jnp.float32

    theta = 1.0 / (10000.0 ** (jnp.arange(0, DH, 2, dtype=f32) / DH))
    ang = jnp.arange(S, dtype=f32)[:, None] * theta[None, :]
    cos_pair, sin_pair = jnp.cos(ang), jnp.sin(ang)

    def rope(t):
        t4 = t.reshape(B, S, H, DH // 2, 2)
        x1, x2 = t4[..., 0], t4[..., 1]
        c = cos_pair[None, :, None, :]
        s = sin_pair[None, :, None, :]
        o = jnp.stack([x1 * c - x2 * s, x2 * c + x1 * s], axis=-1)
        return o.reshape(B, S, D)

    causal = jnp.tril(jnp.ones((S, S), bool))[None, None]

    def mha(q_in, k_in, v_in, in_w, in_b, out_w, out_b):
        wq, wk, wv = jnp.split(in_w, 3, axis=0)
        bq, bk, bv = jnp.split(in_b, 3)
        q = q_in @ wq.T + bq
        k = k_in @ wk.T + bk
        v = v_in @ wv.T + bv
        heads = lambda t: t.reshape(B, S, H, DH).transpose(0, 2, 1, 3)
        q, k, v = heads(q), heads(k), heads(v)
        s = jnp.einsum("bhqd,bhkd->bhqk", q, k) / jnp.sqrt(jnp.asarray(DH, f32))
        s = jnp.where(causal, s, -jnp.inf)
        a = jax.nn.softmax(s, axis=-1)
        o = jnp.einsum("bhqk,bhkd->bhqd", a, v).transpose(0, 2, 1, 3).reshape(B, S, D)
        return o @ out_w.T + out_b

    def layernorm(t, g, b):
        mu = jnp.mean(t, axis=-1, keepdims=True)
        var = jnp.mean(jnp.square(t - mu), axis=-1, keepdims=True)
        return (t - mu) / jnp.sqrt(var + 1e-5) * g + b

    x_rope = rope(x)
    sa = mha(x_rope, x_rope, x, params["sa_in_w"], params["sa_in_b"],
             params["sa_out_w"], params["sa_out_b"])
    x = layernorm(x + sa, params["ln1_g"], params["ln1_b"])

    x_rope = rope(x)
    mem_rope = rope(memory)
    ca = mha(x_rope, mem_rope, memory, params["ca_in_w"], params["ca_in_b"],
             params["ca_out_w"], params["ca_out_b"])
    x = layernorm(x + ca, params["ln2_g"], params["ln2_b"])

    h = jax.nn.relu(x @ params["lin1_w"].T + params["lin1_b"])
    ff = h @ params["lin2_w"].T + params["lin2_b"]
    return layernorm(x + ff, params["ln3_g"], params["ln3_b"])


# ----------------------------------------------------------------------------
if __name__ == "__main__":
    # D chosen as a multiple of 128 so the [B*S, D] slab is lane-dense.
    B, S, D, H, DFF = 2, 8, 128, 4, 256
    key = jax.random.PRNGKey(0)
    keys = iter(jax.random.split(key, 32))
    nrm = lambda shape, s=0.1: s * jax.random.normal(next(keys), shape, jnp.float32)

    params = {
        "sa_in_w": nrm((3 * D, D)), "sa_in_b": nrm((3 * D,), 0.05),
        "sa_out_w": nrm((D, D)),    "sa_out_b": nrm((D,), 0.05),
        "ca_in_w": nrm((3 * D, D)), "ca_in_b": nrm((3 * D,), 0.05),
        "ca_out_w": nrm((D, D)),    "ca_out_b": nrm((D,), 0.05),
        "lin1_w": nrm((DFF, D)),    "lin1_b": nrm((DFF,), 0.05),
        "lin2_w": nrm((D, DFF)),    "lin2_b": nrm((D,), 0.05),
        "ln1_g": 1.0 + nrm((D,)),   "ln1_b": nrm((D,), 0.05),
        "ln2_g": 1.0 + nrm((D,)),   "ln2_b": nrm((D,), 0.05),
        "ln3_g": 1.0 + nrm((D,)),   "ln3_b": nrm((D,), 0.05),
    }

    x = jax.random.normal(next(keys), (B, S, D), jnp.float32)
    memory = jax.random.normal(next(keys), (B, S, D), jnp.float32)

    ref = reference_forward(x, memory, params, num_heads=H)

    # 1) exact path (f32 matmuls, exact softmax divide) — tight structural check
    out_f32 = transformer_decoder_layer(x, memory, params, num_heads=H,
                                        matmul_dtype=jnp.float32,
                                        approx_softmax=False)
    out_f32 = jax.block_until_ready(out_f32)
    np.testing.assert_allclose(np.asarray(out_f32), np.asarray(ref),
                               rtol=5e-4, atol=5e-4)

    # 2) performance path (bf16 MXU matmuls with f32 accumulation,
    #    EUP approx-reciprocal softmax) — looser numeric tolerance
    out_bf16 = transformer_decoder_layer(x, memory, params, num_heads=H,
                                         matmul_dtype=jnp.bfloat16,
                                         approx_softmax=True)
    out_bf16 = jax.block_until_ready(out_bf16)
    np.testing.assert_allclose(np.asarray(out_bf16), np.asarray(ref),
                               rtol=3e-2, atol=3e-2)

    print("KERNEL_OK")
</pallas_src>

<mosaic_0001>
module attributes {stable_mosaic.version = 11 : i64} {
  func.func @kernel(%arg0: i32, %arg1: memref<16x128xf32, #tpu.memory_space<vmem>>, %arg2: memref<16x128xf32, #tpu.memory_space<vmem>>, %arg3: memref<16x128xf32, #tpu.memory_space<vmem>>, %arg4: memref<16x128xf32, #tpu.memory_space<vmem>>, %arg5: memref<16x128xf32, #tpu.memory_space<vmem>>, %arg6: memref<4x128x32xf32, #tpu.memory_space<vmem>>, %arg7: memref<4x128x32xf32, #tpu.memory_space<vmem>>, %arg8: memref<4x128x32xf32, #tpu.memory_space<vmem>>, %arg9: memref<4x1x32xf32, #tpu.memory_space<vmem>>, %arg10: memref<4x1x32xf32, #tpu.memory_space<vmem>>, %arg11: memref<4x1x32xf32, #tpu.memory_space<vmem>>, %arg12: memref<4x32x128xf32, #tpu.memory_space<vmem>>, %arg13: memref<1x128xf32, #tpu.memory_space<vmem>>, %arg14: memref<4x128x32xf32, #tpu.memory_space<vmem>>, %arg15: memref<4x128x32xf32, #tpu.memory_space<vmem>>, %arg16: memref<4x128x32xf32, #tpu.memory_space<vmem>>, %arg17: memref<4x1x32xf32, #tpu.memory_space<vmem>>, %arg18: memref<4x1x32xf32, #tpu.memory_space<vmem>>, %arg19: memref<4x1x32xf32, #tpu.memory_space<vmem>>, %arg20: memref<4x32x128xf32, #tpu.memory_space<vmem>>, %arg21: memref<1x128xf32, #tpu.memory_space<vmem>>, %arg22: memref<128x256xf32, #tpu.memory_space<vmem>>, %arg23: memref<1x256xf32, #tpu.memory_space<vmem>>, %arg24: memref<256x128xf32, #tpu.memory_space<vmem>>, %arg25: memref<1x128xf32, #tpu.memory_space<vmem>>, %arg26: memref<1x128xf32, #tpu.memory_space<vmem>>, %arg27: memref<1x128xf32, #tpu.memory_space<vmem>>, %arg28: memref<1x128xf32, #tpu.memory_space<vmem>>, %arg29: memref<1x128xf32, #tpu.memory_space<vmem>>, %arg30: memref<1x128xf32, #tpu.memory_space<vmem>>, %arg31: memref<1x128xf32, #tpu.memory_space<vmem>>, %arg32: memref<16x128xf32, #tpu.memory_space<vmem>>) attributes {dimension_semantics = [#tpu.dimension_semantics<arbitrary>], iteration_bounds = array<i64: 1>, scalar_prefetch = 0 : i64, scratch_operands = 0 : i64, tpu.core_type = #tpu.core_type<tc>, window_params = [{pipeline_mode = #tpu.pipeline_mode<synchronous>, transform_indices = @transform_0, window_bounds = array<i64: 16, 128>}, {pipeline_mode = #tpu.pipeline_mode<synchronous>, transform_indices = @transform_1, window_bounds = array<i64: 16, 128>}, {pipeline_mode = #tpu.pipeline_mode<synchronous>, transform_indices = @transform_2, window_bounds = array<i64: 16, 128>}, {pipeline_mode = #tpu.pipeline_mode<synchronous>, transform_indices = @transform_3, window_bounds = array<i64: 16, 128>}, {pipeline_mode = #tpu.pipeline_mode<synchronous>, transform_indices = @transform_4, window_bounds = array<i64: 16, 128>}, {pipeline_mode = #tpu.pipeline_mode<synchronous>, transform_indices = @transform_5, window_bounds = array<i64: 4, 128, 32>}, {pipeline_mode = #tpu.pipeline_mode<synchronous>, transform_indices = @transform_6, window_bounds = array<i64: 4, 128, 32>}, {pipeline_mode = #tpu.pipeline_mode<synchronous>, transform_indices = @transform_7, window_bounds = array<i64: 4, 128, 32>}, {pipeline_mode = #tpu.pipeline_mode<synchronous>, transform_indices = @transform_8, window_bounds = array<i64: 4, 1, 32>}, {pipeline_mode = #tpu.pipeline_mode<synchronous>, transform_indices = @transform_9, window_bounds = array<i64: 4, 1, 32>}, {pipeline_mode = #tpu.pipeline_mode<synchronous>, transform_indices = @transform_10, window_bounds = array<i64: 4, 1, 32>}, {pipeline_mode = #tpu.pipeline_mode<synchronous>, transform_indices = @transform_11, window_bounds = array<i64: 4, 32, 128>}, {pipeline_mode = #tpu.pipeline_mode<synchronous>, transform_indices = @transform_12, window_bounds = array<i64: 1, 128>}, {pipeline_mode = #tpu.pipeline_mode<synchronous>, transform_indices = @transform_13, window_bounds = array<i64: 4, 128, 32>}, {pipeline_mode = #tpu.pipeline_mode<synchronous>, transform_indices = @transform_14, window_bounds = array<i64: 4, 128, 32>}, {pipeline_mode = #tpu.pipeline_mode<synchronous>, transform_indices = @transform_15, window_bounds = array<i64: 4, 128, 32>}, {pipeline_mode = #tpu.pipeline_mode<synchronous>, transform_indices = @transform_16, window_bounds = array<i64: 4, 1, 32>}, {pipeline_mode = #tpu.pipeline_mode<synchronous>, transform_indices = @transform_17, window_bounds = array<i64: 4, 1, 32>}, {pipeline_mode = #tpu.pipeline_mode<synchronous>, transform_indices = @transform_18, window_bounds = array<i64: 4, 1, 32>}, {pipeline_mode = #tpu.pipeline_mode<synchronous>, transform_indices = @transform_19, window_bounds = array<i64: 4, 32, 128>}, {pipeline_mode = #tpu.pipeline_mode<synchronous>, transform_indices = @transform_20, window_bounds = array<i64: 1, 128>}, {pipeline_mode = #tpu.pipeline_mode<synchronous>, transform_indices = @transform_21, window_bounds = array<i64: 128, 256>}, {pipeline_mode = #tpu.pipeline_mode<synchronous>, transform_indices = @transform_22, window_bounds = array<i64: 1, 256>}, {pipeline_mode = #tpu.pipeline_mode<synchronous>, transform_indices = @transform_23, window_bounds = array<i64: 256, 128>}, {pipeline_mode = #tpu.pipeline_mode<synchronous>, transform_indices = @transform_24, window_bounds = array<i64: 1, 128>}, {pipeline_mode = #tpu.pipeline_mode<synchronous>, transform_indices = @transform_25, window_bounds = array<i64: 1, 128>}, {pipeline_mode = #tpu.pipeline_mode<synchronous>, transform_indices = @transform_26, window_bounds = array<i64: 1, 128>}, {pipeline_mode = #tpu.pipeline_mode<synchronous>, transform_indices = @transform_27, window_bounds = array<i64: 1, 128>}, {pipeline_mode = #tpu.pipeline_mode<synchronous>, transform_indices = @transform_28, window_bounds = array<i64: 1, 128>}, {pipeline_mode = #tpu.pipeline_mode<synchronous>, transform_indices = @transform_29, window_bounds = array<i64: 1, 128>}, {pipeline_mode = #tpu.pipeline_mode<synchronous>, transform_indices = @transform_30, window_bounds = array<i64: 1, 128>}, {pipeline_mode = #tpu.pipeline_mode<synchronous>, transform_indices = @transform_31, window_bounds = array<i64: 16, 128>}]} {
    %c0 = arith.constant 0 : index
    %c0_0 = arith.constant 0 : index
    %0 = vector.load %arg1[%c0, %c0_0] : memref<16x128xf32, #tpu.memory_space<vmem>>, vector<16x128xf32>
    %c0_1 = arith.constant 0 : index
    %c0_2 = arith.constant 0 : index
    %1 = vector.load %arg2[%c0_1, %c0_2] : memref<16x128xf32, #tpu.memory_space<vmem>>, vector<16x128xf32>
    %c0_3 = arith.constant 0 : index
    %c0_4 = arith.constant 0 : index
    %2 = vector.load %arg3[%c0_3, %c0_4] : memref<16x128xf32, #tpu.memory_space<vmem>>, vector<16x128xf32>
    %c0_5 = arith.constant 0 : index
    %c0_6 = arith.constant 0 : index
    %3 = vector.load %arg4[%c0_5, %c0_6] : memref<16x128xf32, #tpu.memory_space<vmem>>, vector<16x128xf32>
    %c0_7 = arith.constant 0 : index
    %c0_8 = arith.constant 0 : index
    %4 = vector.load %arg5[%c0_7, %c0_8] : memref<16x128xf32, #tpu.memory_space<vmem>>, vector<16x128xf32>
    %5 = tpu.iota {dimensions = array<i32: 0>} : vector<8x8xi32>
    %6 = tpu.iota {dimensions = array<i32: 1>} : vector<8x8xi32>
    %7 = arith.cmpi sge, %5, %6 : vector<8x8xi32>
    %cst = arith.constant 0.000000e+00 : f32
    %cst_9 = arith.constant -1.000000e+30 : f32
    %8 = vector.broadcast %cst : f32 to vector<8x8xf32>
    %9 = vector.broadcast %cst_9 : f32 to vector<8x8xf32>
    %10 = arith.select %7, %8, %9 : vector<8x8xi1>, vector<8x8xf32>
    %c127_i32 = arith.constant 127 : i32
    %11 = tpu.dynamic_rotate %0 by %c127_i32 dim 1 : vector<16x128xf32>, i32 -> vector<16x128xf32>
    %c1_i32 = arith.constant 1 : i32
    %12 = tpu.dynamic_rotate %0 by %c1_i32 dim 1 : vector<16x128xf32>, i32 -> vector<16x128xf32>
    %13 = arith.mulf %0, %2 : vector<16x128xf32>
    %14 = arith.mulf %11, %3 : vector<16x128xf32>
    %15 = arith.addf %13, %14 : vector<16x128xf32>
    %16 = arith.mulf %12, %4 : vector<16x128xf32>
    %17 = arith.addf %15, %16 : vector<16x128xf32>
    %18 = vector.extract_strided_slice %17 {offsets = [0, 0], sizes = [8, 128], strides = [1, 1]} : vector<16x128xf32> to vector<8x128xf32>
    %19 = vector.extract_strided_slice %17 {offsets = [0, 0], sizes = [8, 128], strides = [1, 1]} : vector<16x128xf32> to vector<8x128xf32>
    %20 = vector.extract_strided_slice %0 {offsets = [0, 0], sizes = [8, 128], strides = [1, 1]} : vector<16x128xf32> to vector<8x128xf32>
    %c0_10 = arith.constant 0 : index
    %c0_11 = arith.constant 0 : index
    %c0_12 = arith.constant 0 : index
    %21 = vector.load %arg6[%c0_10, %c0_11, %c0_12] : memref<4x128x32xf32, #tpu.memory_space<vmem>>, vector<1x128x32xf32>
    %22 = vector.shape_cast %21 : vector<1x128x32xf32> to vector<128x32xf32>
    %cst_13 = arith.constant dense<0.000000e+00> : vector<8x32xf32>
    %23 = tpu.matmul %18, %22, %cst_13 {dimension_numbers = #tpu.dot_dimension_numbers<[1], [0], [0], [1], [0, 0, 1, 1], [], []>} : vector<8x128xf32>, vector<128x32xf32>, vector<8x32xf32> -> vector<8x32xf32>
    %c0_14 = arith.constant 0 : index
    %c0_15 = arith.constant 0 : index
    %c0_16 = arith.constant 0 : index
    %24 = vector.load %arg9[%c0_14, %c0_15, %c0_16] : memref<4x1x32xf32, #tpu.memory_space<vmem>>, vector<1x1x32xf32>
    %25 = vector.shape_cast %24 : vector<1x1x32xf32> to vector<1x32xf32>
    %26 = vector.broadcast %25 : vector<1x32xf32> to vector<8x32xf32>
    %27 = arith.addf %23, %26 : vector<8x32xf32>
    %c1 = arith.constant 1 : index
    %c0_17 = arith.constant 0 : index
    %c0_18 = arith.constant 0 : index
    %28 = vector.load %arg6[%c1, %c0_17, %c0_18] : memref<4x128x32xf32, #tpu.memory_space<vmem>>, vector<1x128x32xf32>
    %29 = vector.shape_cast %28 : vector<1x128x32xf32> to vector<128x32xf32>
    %cst_19 = arith.constant dense<0.000000e+00> : vector<8x32xf32>
    %30 = tpu.matmul %18, %29, %cst_19 {dimension_numbers = #tpu.dot_dimension_numbers<[1], [0], [0], [1], [0, 0, 1, 1], [], []>} : vector<8x128xf32>, vector<128x32xf32>, vector<8x32xf32> -> vector<8x32xf32>
    %c1_20 = arith.constant 1 : index
    %c0_21 = arith.constant 0 : index
    %c0_22 = arith.constant 0 : index
    %31 = vector.load %arg9[%c1_20, %c0_21, %c0_22] : memref<4x1x32xf32, #tpu.memory_space<vmem>>, vector<1x1x32xf32>
    %32 = vector.shape_cast %31 : vector<1x1x32xf32> to vector<1x32xf32>
    %33 = vector.broadcast %32 : vector<1x32xf32> to vector<8x32xf32>
    %34 = arith.addf %30, %33 : vector<8x32xf32>
    %c2 = arith.constant 2 : index
    %c0_23 = arith.constant 0 : index
    %c0_24 = arith.constant 0 : index
    %35 = vector.load %arg6[%c2, %c0_23, %c0_24] : memref<4x128x32xf32, #tpu.memory_space<vmem>>, vector<1x128x32xf32>
    %36 = vector.shape_cast %35 : vector<1x128x32xf32> to vector<128x32xf32>
    %cst_25 = arith.constant dense<0.000000e+00> : vector<8x32xf32>
    %37 = tpu.matmul %18, %36, %cst_25 {dimension_numbers = #tpu.dot_dimension_numbers<[1], [0], [0], [1], [0, 0, 1, 1], [], []>} : vector<8x128xf32>, vector<128x32xf32>, vector<8x32xf32> -> vector<8x32xf32>
    %c2_26 = arith.constant 2 : index
    %c0_27 = arith.constant 0 : index
    %c0_28 = arith.constant 0 : index
    %38 = vector.load %arg9[%c2_26, %c0_27, %c0_28] : memref<4x1x32xf32, #tpu.memory_space<vmem>>, vector<1x1x32xf32>
    %39 = vector.shape_cast %38 : vector<1x1x32xf32> to vector<1x32xf32>
    %40 = vector.broadcast %39 : vector<1x32xf32> to vector<8x32xf32>
    %41 = arith.addf %37, %40 : vector<8x32xf32>
    %c3 = arith.constant 3 : index
    %c0_29 = arith.constant 0 : index
    %c0_30 = arith.constant 0 : index
    %42 = vector.load %arg6[%c3, %c0_29, %c0_30] : memref<4x128x32xf32, #tpu.memory_space<vmem>>, vector<1x128x32xf32>
    %43 = vector.shape_cast %42 : vector<1x128x32xf32> to vector<128x32xf32>
    %cst_31 = arith.constant dense<0.000000e+00> : vector<8x32xf32>
    %44 = tpu.matmul %18, %43, %cst_31 {dimension_numbers = #tpu.dot_dimension_numbers<[1], [0], [0], [1], [0, 0, 1, 1], [], []>} : vector<8x128xf32>, vector<128x32xf32>, vector<8x32xf32> -> vector<8x32xf32>
    %c3_32 = arith.constant 3 : index
    %c0_33 = arith.constant 0 : index
    %c0_34 = arith.constant 0 : index
    %45 = vector.load %arg9[%c3_32, %c0_33, %c0_34] : memref<4x1x32xf32, #tpu.memory_space<vmem>>, vector<1x1x32xf32>
    %46 = vector.shape_cast %45 : vector<1x1x32xf32> to vector<1x32xf32>
    %47 = vector.broadcast %46 : vector<1x32xf32> to vector<8x32xf32>
    %48 = arith.addf %44, %47 : vector<8x32xf32>
    %49 = vector.shape_cast %27 : vector<8x32xf32> to vector<1x8x32xf32>
    %50 = vector.shape_cast %34 : vector<8x32xf32> to vector<1x8x32xf32>
    %51 = vector.shape_cast %41 : vector<8x32xf32> to vector<1x8x32xf32>
    %52 = vector.shape_cast %48 : vector<8x32xf32> to vector<1x8x32xf32>
    %53 = tpu.concatenate %49, %50, %51, %52 in 0 : vector<1x8x32xf32>, vector<1x8x32xf32>, vector<1x8x32xf32>, vector<1x8x32xf32> -> vector<4x8x32xf32>
    %c0_35 = arith.constant 0 : index
    %c0_36 = arith.constant 0 : index
    %c0_37 = arith.constant 0 : index
    %54 = vector.load %arg7[%c0_35, %c0_36, %c0_37] : memref<4x128x32xf32, #tpu.memory_space<vmem>>, vector<1x128x32xf32>
    %55 = vector.shape_cast %54 : vector<1x128x32xf32> to vector<128x32xf32>
    %cst_38 = arith.constant dense<0.000000e+00> : vector<8x32xf32>
    %56 = tpu.matmul %19, %55, %cst_38 {dimension_numbers = #tpu.dot_dimension_numbers<[1], [0], [0], [1], [0, 0, 1, 1], [], []>} : vector<8x128xf32>, vector<128x32xf32>, vector<8x32xf32> -> vector<8x32xf32>
    %c0_39 = arith.constant 0 : index
    %c0_40 = arith.constant 0 : index
    %c0_41 = arith.constant 0 : index
    %57 = vector.load %arg10[%c0_39, %c0_40, %c0_41] : memref<4x1x32xf32, #tpu.memory_space<vmem>>, vector<1x1x32xf32>
    %58 = vector.shape_cast %57 : vector<1x1x32xf32> to vector<1x32xf32>
    %59 = vector.broadcast %58 : vector<1x32xf32> to vector<8x32xf32>
    %60 = arith.addf %56, %59 : vector<8x32xf32>
    %c1_42 = arith.constant 1 : index
    %c0_43 = arith.constant 0 : index
    %c0_44 = arith.constant 0 : index
    %61 = vector.load %arg7[%c1_42, %c0_43, %c0_44] : memref<4x128x32xf32, #tpu.memory_space<vmem>>, vector<1x128x32xf32>
    %62 = vector.shape_cast %61 : vector<1x128x32xf32> to vector<128x32xf32>
    %cst_45 = arith.constant dense<0.000000e+00> : vector<8x32xf32>
    %63 = tpu.matmul %19, %62, %cst_45 {dimension_numbers = #tpu.dot_dimension_numbers<[1], [0], [0], [1], [0, 0, 1, 1], [], []>} : vector<8x128xf32>, vector<128x32xf32>, vector<8x32xf32> -> vector<8x32xf32>
    %c1_46 = arith.constant 1 : index
    %c0_47 = arith.constant 0 : index
    %c0_48 = arith.constant 0 : index
    %64 = vector.load %arg10[%c1_46, %c0_47, %c0_48] : memref<4x1x32xf32, #tpu.memory_space<vmem>>, vector<1x1x32xf32>
    %65 = vector.shape_cast %64 : vector<1x1x32xf32> to vector<1x32xf32>
    %66 = vector.broadcast %65 : vector<1x32xf32> to vector<8x32xf32>
    %67 = arith.addf %63, %66 : vector<8x32xf32>
    %c2_49 = arith.constant 2 : index
    %c0_50 = arith.constant 0 : index
    %c0_51 = arith.constant 0 : index
    %68 = vector.load %arg7[%c2_49, %c0_50, %c0_51] : memref<4x128x32xf32, #tpu.memory_space<vmem>>, vector<1x128x32xf32>
    %69 = vector.shape_cast %68 : vector<1x128x32xf32> to vector<128x32xf32>
    %cst_52 = arith.constant dense<0.000000e+00> : vector<8x32xf32>
    %70 = tpu.matmul %19, %69, %cst_52 {dimension_numbers = #tpu.dot_dimension_numbers<[1], [0], [0], [1], [0, 0, 1, 1], [], []>} : vector<8x128xf32>, vector<128x32xf32>, vector<8x32xf32> -> vector<8x32xf32>
    %c2_53 = arith.constant 2 : index
    %c0_54 = arith.constant 0 : index
    %c0_55 = arith.constant 0 : index
    %71 = vector.load %arg10[%c2_53, %c0_54, %c0_55] : memref<4x1x32xf32, #tpu.memory_space<vmem>>, vector<1x1x32xf32>
    %72 = vector.shape_cast %71 : vector<1x1x32xf32> to vector<1x32xf32>
    %73 = vector.broadcast %72 : vector<1x32xf32> to vector<8x32xf32>
    %74 = arith.addf %70, %73 : vector<8x32xf32>
    %c3_56 = arith.constant 3 : index
    %c0_57 = arith.constant 0 : index
    %c0_58 = arith.constant 0 : index
    %75 = vector.load %arg7[%c3_56, %c0_57, %c0_58] : memref<4x128x32xf32, #tpu.memory_space<vmem>>, vector<1x128x32xf32>
    %76 = vector.shape_cast %75 : vector<1x128x32xf32> to vector<128x32xf32>
    %cst_59 = arith.constant dense<0.000000e+00> : vector<8x32xf32>
    %77 = tpu.matmul %19, %76, %cst_59 {dimension_numbers = #tpu.dot_dimension_numbers<[1], [0], [0], [1], [0, 0, 1, 1], [], []>} : vector<8x128xf32>, vector<128x32xf32>, vector<8x32xf32> -> vector<8x32xf32>
    %c3_60 = arith.constant 3 : index
    %c0_61 = arith.constant 0 : index
    %c0_62 = arith.constant 0 : index
    %78 = vector.load %arg10[%c3_60, %c0_61, %c0_62] : memref<4x1x32xf32, #tpu.memory_space<vmem>>, vector<1x1x32xf32>
    %79 = vector.shape_cast %78 : vector<1x1x32xf32> to vector<1x32xf32>
    %80 = vector.broadcast %79 : vector<1x32xf32> to vector<8x32xf32>
    %81 = arith.addf %77, %80 : vector<8x32xf32>
    %82 = vector.shape_cast %60 : vector<8x32xf32> to vector<1x8x32xf32>
    %83 = vector.shape_cast %67 : vector<8x32xf32> to vector<1x8x32xf32>
    %84 = vector.shape_cast %74 : vector<8x32xf32> to vector<1x8x32xf32>
    %85 = vector.shape_cast %81 : vector<8x32xf32> to vector<1x8x32xf32>
    %86 = tpu.concatenate %82, %83, %84, %85 in 0 : vector<1x8x32xf32>, vector<1x8x32xf32>, vector<1x8x32xf32>, vector<1x8x32xf32> -> vector<4x8x32xf32>
    %c0_63 = arith.constant 0 : index
    %c0_64 = arith.constant 0 : index
    %c0_65 = arith.constant 0 : index
    %87 = vector.load %arg8[%c0_63, %c0_64, %c0_65] : memref<4x128x32xf32, #tpu.memory_space<vmem>>, vector<1x128x32xf32>
    %88 = vector.shape_cast %87 : vector<1x128x32xf32> to vector<128x32xf32>
    %cst_66 = arith.constant dense<0.000000e+00> : vector<8x32xf32>
    %89 = tpu.matmul %20, %88, %cst_66 {dimension_numbers = #tpu.dot_dimension_numbers<[1], [0], [0], [1], [0, 0, 1, 1], [], []>} : vector<8x128xf32>, vector<128x32xf32>, vector<8x32xf32> -> vector<8x32xf32>
    %c0_67 = arith.constant 0 : index
    %c0_68 = arith.constant 0 : index
    %c0_69 = arith.constant 0 : index
    %90 = vector.load %arg11[%c0_67, %c0_68, %c0_69] : memref<4x1x32xf32, #tpu.memory_space<vmem>>, vector<1x1x32xf32>
    %91 = vector.shape_cast %90 : vector<1x1x32xf32> to vector<1x32xf32>
    %92 = vector.broadcast %91 : vector<1x32xf32> to vector<8x32xf32>
    %93 = arith.addf %89, %92 : vector<8x32xf32>
    %c1_70 = arith.constant 1 : index
    %c0_71 = arith.constant 0 : index
    %c0_72 = arith.constant 0 : index
    %94 = vector.load %arg8[%c1_70, %c0_71, %c0_72] : memref<4x128x32xf32, #tpu.memory_space<vmem>>, vector<1x128x32xf32>
    %95 = vector.shape_cast %94 : vector<1x128x32xf32> to vector<128x32xf32>
    %cst_73 = arith.constant dense<0.000000e+00> : vector<8x32xf32>
    %96 = tpu.matmul %20, %95, %cst_73 {dimension_numbers = #tpu.dot_dimension_numbers<[1], [0], [0], [1], [0, 0, 1, 1], [], []>} : vector<8x128xf32>, vector<128x32xf32>, vector<8x32xf32> -> vector<8x32xf32>
    %c1_74 = arith.constant 1 : index
    %c0_75 = arith.constant 0 : index
    %c0_76 = arith.constant 0 : index
    %97 = vector.load %arg11[%c1_74, %c0_75, %c0_76] : memref<4x1x32xf32, #tpu.memory_space<vmem>>, vector<1x1x32xf32>
    %98 = vector.shape_cast %97 : vector<1x1x32xf32> to vector<1x32xf32>
    %99 = vector.broadcast %98 : vector<1x32xf32> to vector<8x32xf32>
    %100 = arith.addf %96, %99 : vector<8x32xf32>
    %c2_77 = arith.constant 2 : index
    %c0_78 = arith.constant 0 : index
    %c0_79 = arith.constant 0 : index
    %101 = vector.load %arg8[%c2_77, %c0_78, %c0_79] : memref<4x128x32xf32, #tpu.memory_space<vmem>>, vector<1x128x32xf32>
    %102 = vector.shape_cast %101 : vector<1x128x32xf32> to vector<128x32xf32>
    %cst_80 = arith.constant dense<0.000000e+00> : vector<8x32xf32>
    %103 = tpu.matmul %20, %102, %cst_80 {dimension_numbers = #tpu.dot_dimension_numbers<[1], [0], [0], [1], [0, 0, 1, 1], [], []>} : vector<8x128xf32>, vector<128x32xf32>, vector<8x32xf32> -> vector<8x32xf32>
    %c2_81 = arith.constant 2 : index
    %c0_82 = arith.constant 0 : index
    %c0_83 = arith.constant 0 : index
    %104 = vector.load %arg11[%c2_81, %c0_82, %c0_83] : memref<4x1x32xf32, #tpu.memory_space<vmem>>, vector<1x1x32xf32>
    %105 = vector.shape_cast %104 : vector<1x1x32xf32> to vector<1x32xf32>
    %106 = vector.broadcast %105 : vector<1x32xf32> to vector<8x32xf32>
    %107 = arith.addf %103, %106 : vector<8x32xf32>
    %c3_84 = arith.constant 3 : index
    %c0_85 = arith.constant 0 : index
    %c0_86 = arith.constant 0 : index
    %108 = vector.load %arg8[%c3_84, %c0_85, %c0_86] : memref<4x128x32xf32, #tpu.memory_space<vmem>>, vector<1x128x32xf32>
    %109 = vector.shape_cast %108 : vector<1x128x32xf32> to vector<128x32xf32>
    %cst_87 = arith.constant dense<0.000000e+00> : vector<8x32xf32>
    %110 = tpu.matmul %20, %109, %cst_87 {dimension_numbers = #tpu.dot_dimension_numbers<[1], [0], [0], [1], [0, 0, 1, 1], [], []>} : vector<8x128xf32>, vector<128x32xf32>, vector<8x32xf32> -> vector<8x32xf32>
    %c3_88 = arith.constant 3 : index
    %c0_89 = arith.constant 0 : index
    %c0_90 = arith.constant 0 : index
    %111 = vector.load %arg11[%c3_88, %c0_89, %c0_90] : memref<4x1x32xf32, #tpu.memory_space<vmem>>, vector<1x1x32xf32>
    %112 = vector.shape_cast %111 : vector<1x1x32xf32> to vector<1x32xf32>
    %113 = vector.broadcast %112 : vector<1x32xf32> to vector<8x32xf32>
    %114 = arith.addf %110, %113 : vector<8x32xf32>
    %115 = vector.shape_cast %93 : vector<8x32xf32> to vector<1x8x32xf32>
    %116 = vector.shape_cast %100 : vector<8x32xf32> to vector<1x8x32xf32>
    %117 = vector.shape_cast %107 : vector<8x32xf32> to vector<1x8x32xf32>
    %118 = vector.shape_cast %114 : vector<8x32xf32> to vector<1x8x32xf32>
    %119 = tpu.concatenate %115, %116, %117, %118 in 0 : vector<1x8x32xf32>, vector<1x8x32xf32>, vector<1x8x32xf32>, vector<1x8x32xf32> -> vector<4x8x32xf32>
    "tpu.trace_start"() <{level = 10 : i32, message = "hqd,hkd->hqk"}> : () -> ()
    %cst_91 = arith.constant dense<0.000000e+00> : vector<4x8x8xf32>
    %120 = tpu.matmul %53, %86, %cst_91 {dimension_numbers = #tpu.dot_dimension_numbers<[2], [2], [1], [1], [0, 0, 0, 1, 1, 1], [0], [0]>} : vector<4x8x32xf32>, vector<4x8x32xf32>, vector<4x8x8xf32> -> vector<4x8x8xf32>
    "tpu.trace_stop"() : () -> ()
    %cst_92 = arith.constant 0.176776692 : f32
    %121 = vector.broadcast %cst_92 : f32 to vector<4x8x8xf32>
    %122 = arith.mulf %120, %121 : vector<4x8x8xf32>
    %123 = vector.shape_cast %10 : vector<8x8xf32> to vector<1x8x8xf32>
    %124 = vector.broadcast %123 : vector<1x8x8xf32> to vector<4x8x8xf32>
    %125 = arith.addf %122, %124 : vector<4x8x8xf32>
    %cst_93 = arith.constant dense<0xFF800000> : vector<4x8xf32>
    %126 = vector.multi_reduction <maximumf>, %125, %cst_93 [2] : vector<4x8x8xf32> to vector<4x8xf32>
    %127 = vector.shape_cast %126 : vector<4x8xf32> to vector<4x8x1xf32>
    %128 = vector.broadcast %127 : vector<4x8x1xf32> to vector<4x8x8xf32>
    %129 = arith.subf %125, %128 : vector<4x8x8xf32>
    %130 = math.exp %129 : vector<4x8x8xf32>
    %cst_94 = arith.constant dense<0.000000e+00> : vector<4x8xf32>
    %131 = vector.multi_reduction <add>, %130, %cst_94 [2] : vector<4x8x8xf32> to vector<4x8xf32>
    %132 = vector.shape_cast %131 : vector<4x8xf32> to vector<4x8x1xf32>
    %133 = tpu.reciprocal %132 : vector<4x8x1xf32> -> vector<4x8x1xf32>
    %134 = vector.broadcast %133 : vector<4x8x1xf32> to vector<4x8x8xf32>
    %135 = arith.mulf %130, %134 : vector<4x8x8xf32>
    "tpu.trace_start"() <{level = 10 : i32, message = "hqk,hkd->hqd"}> : () -> ()
    %cst_95 = arith.constant dense<0.000000e+00> : vector<4x8x32xf32>
    %136 = tpu.matmul %135, %119, %cst_95 {dimension_numbers = #tpu.dot_dimension_numbers<[2], [1], [1], [2], [0, 0, 0, 1, 1, 2], [0], [0]>} : vector<4x8x8xf32>, vector<4x8x32xf32>, vector<4x8x32xf32> -> vector<4x8x32xf32>
    %cst_96 = arith.constant 0.000000e+00 : f32
    "tpu.trace_stop"() : () -> ()
    %137 = vector.broadcast %cst_96 : f32 to vector<8x128xf32>
    %138 = vector.extract_strided_slice %136 {offsets = [0, 0, 0], sizes = [1, 8, 32], strides = [1, 1, 1]} : vector<4x8x32xf32> to vector<1x8x32xf32>
    %139 = vector.shape_cast %138 : vector<1x8x32xf32> to vector<8x32xf32>
    %c0_97 = arith.constant 0 : index
    %c0_98 = arith.constant 0 : index
    %c0_99 = arith.constant 0 : index
    %140 = vector.load %arg12[%c0_97, %c0_98, %c0_99] : memref<4x32x128xf32, #tpu.memory_space<vmem>>, vector<1x32x128xf32>
    %141 = vector.shape_cast %140 : vector<1x32x128xf32> to vector<32x128xf32>
    %cst_100 = arith.constant dense<0.000000e+00> : vector<8x128xf32>
    %142 = tpu.matmul %139, %141, %cst_100 {dimension_numbers = #tpu.dot_dimension_numbers<[1], [0], [0], [1], [0, 0, 1, 1], [], []>} : vector<8x32xf32>, vector<32x128xf32>, vector<8x128xf32> -> vector<8x128xf32>
    %143 = arith.addf %137, %142 : vector<8x128xf32>
    %144 = vector.extract_strided_slice %136 {offsets = [1, 0, 0], sizes = [1, 8, 32], strides = [1, 1, 1]} : vector<4x8x32xf32> to vector<1x8x32xf32>
    %145 = vector.shape_cast %144 : vector<1x8x32xf32> to vector<8x32xf32>
    %c1_101 = arith.constant 1 : index
    %c0_102 = arith.constant 0 : index
    %c0_103 = arith.constant 0 : index
    %146 = vector.load %arg12[%c1_101, %c0_102, %c0_103] : memref<4x32x128xf32, #tpu.memory_space<vmem>>, vector<1x32x128xf32>
    %147 = vector.shape_cast %146 : vector<1x32x128xf32> to vector<32x128xf32>
    %cst_104 = arith.constant dense<0.000000e+00> : vector<8x128xf32>
    %148 = tpu.matmul %145, %147, %cst_104 {dimension_numbers = #tpu.dot_dimension_numbers<[1], [0], [0], [1], [0, 0, 1, 1], [], []>} : vector<8x32xf32>, vector<32x128xf32>, vector<8x128xf32> -> vector<8x128xf32>
    %149 = arith.addf %143, %148 : vector<8x128xf32>
    %150 = vector.extract_strided_slice %136 {offsets = [2, 0, 0], sizes = [1, 8, 32], strides = [1, 1, 1]} : vector<4x8x32xf32> to vector<1x8x32xf32>
    %151 = vector.shape_cast %150 : vector<1x8x32xf32> to vector<8x32xf32>
    %c2_105 = arith.constant 2 : index
    %c0_106 = arith.constant 0 : index
    %c0_107 = arith.constant 0 : index
    %152 = vector.load %arg12[%c2_105, %c0_106, %c0_107] : memref<4x32x128xf32, #tpu.memory_space<vmem>>, vector<1x32x128xf32>
    %153 = vector.shape_cast %152 : vector<1x32x128xf32> to vector<32x128xf32>
    %cst_108 = arith.constant dense<0.000000e+00> : vector<8x128xf32>
    %154 = tpu.matmul %151, %153, %cst_108 {dimension_numbers = #tpu.dot_dimension_numbers<[1], [0], [0], [1], [0, 0, 1, 1], [], []>} : vector<8x32xf32>, vector<32x128xf32>, vector<8x128xf32> -> vector<8x128xf32>
    %155 = arith.addf %149, %154 : vector<8x128xf32>
    %156 = vector.extract_strided_slice %136 {offsets = [3, 0, 0], sizes = [1, 8, 32], strides = [1, 1, 1]} : vector<4x8x32xf32> to vector<1x8x32xf32>
    %157 = vector.shape_cast %156 : vector<1x8x32xf32> to vector<8x32xf32>
    %c3_109 = arith.constant 3 : index
    %c0_110 = arith.constant 0 : index
    %c0_111 = arith.constant 0 : index
    %158 = vector.load %arg12[%c3_109, %c0_110, %c0_111] : memref<4x32x128xf32, #tpu.memory_space<vmem>>, vector<1x32x128xf32>
    %159 = vector.shape_cast %158 : vector<1x32x128xf32> to vector<32x128xf32>
    %cst_112 = arith.constant dense<0.000000e+00> : vector<8x128xf32>
    %160 = tpu.matmul %157, %159, %cst_112 {dimension_numbers = #tpu.dot_dimension_numbers<[1], [0], [0], [1], [0, 0, 1, 1], [], []>} : vector<8x32xf32>, vector<32x128xf32>, vector<8x128xf32> -> vector<8x128xf32>
    %161 = arith.addf %155, %160 : vector<8x128xf32>
    %c0_113 = arith.constant 0 : index
    %c0_114 = arith.constant 0 : index
    %162 = vector.load %arg13[%c0_113, %c0_114] : memref<1x128xf32, #tpu.memory_space<vmem>>, vector<1x128xf32>
    %163 = vector.broadcast %162 : vector<1x128xf32> to vector<8x128xf32>
    %164 = arith.addf %161, %163 : vector<8x128xf32>
    %165 = vector.extract_strided_slice %17 {offsets = [8, 0], sizes = [8, 128], strides = [1, 1]} : vector<16x128xf32> to vector<8x128xf32>
    %166 = vector.extract_strided_slice %17 {offsets = [8, 0], sizes = [8, 128], strides = [1, 1]} : vector<16x128xf32> to vector<8x128xf32>
    %167 = vector.extract_strided_slice %0 {offsets = [8, 0], sizes = [8, 128], strides = [1, 1]} : vector<16x128xf32> to vector<8x128xf32>
    %c0_115 = arith.constant 0 : index
    %c0_116 = arith.constant 0 : index
    %c0_117 = arith.constant 0 : index
    %168 = vector.load %arg6[%c0_115, %c0_116, %c0_117] : memref<4x128x32xf32, #tpu.memory_space<vmem>>, vector<1x128x32xf32>
    %169 = vector.shape_cast %168 : vector<1x128x32xf32> to vector<128x32xf32>
    %cst_118 = arith.constant dense<0.000000e+00> : vector<8x32xf32>
    %170 = tpu.matmul %165, %169, %cst_118 {dimension_numbers = #tpu.dot_dimension_numbers<[1], [0], [0], [1], [0, 0, 1, 1], [], []>} : vector<8x128xf32>, vector<128x32xf32>, vector<8x32xf32> -> vector<8x32xf32>
    %c0_119 = arith.constant 0 : index
    %c0_120 = arith.constant 0 : index
    %c0_121 = arith.constant 0 : index
    %171 = vector.load %arg9[%c0_119, %c0_120, %c0_121] : memref<4x1x32xf32, #tpu.memory_space<vmem>>, vector<1x1x32xf32>
    %172 = vector.shape_cast %171 : vector<1x1x32xf32> to vector<1x32xf32>
    %173 = vector.broadcast %172 : vector<1x32xf32> to vector<8x32xf32>
    %174 = arith.addf %170, %173 : vector<8x32xf32>
    %c1_122 = arith.constant 1 : index
    %c0_123 = arith.constant 0 : index
    %c0_124 = arith.constant 0 : index
    %175 = vector.load %arg6[%c1_122, %c0_123, %c0_124] : memref<4x128x32xf32, #tpu.memory_space<vmem>>, vector<1x128x32xf32>
    %176 = vector.shape_cast %175 : vector<1x128x32xf32> to vector<128x32xf32>
    %cst_125 = arith.constant dense<0.000000e+00> : vector<8x32xf32>
    %177 = tpu.matmul %165, %176, %cst_125 {dimension_numbers = #tpu.dot_dimension_numbers<[1], [0], [0], [1], [0, 0, 1, 1], [], []>} : vector<8x128xf32>, vector<128x32xf32>, vector<8x32xf32> -> vector<8x32xf32>
    %c1_126 = arith.constant 1 : index
    %c0_127 = arith.constant 0 : index
    %c0_128 = arith.constant 0 : index
    %178 = vector.load %arg9[%c1_126, %c0_127, %c0_128] : memref<4x1x32xf32, #tpu.memory_space<vmem>>, vector<1x1x32xf32>
    %179 = vector.shape_cast %178 : vector<1x1x32xf32> to vector<1x32xf32>
    %180 = vector.broadcast %179 : vector<1x32xf32> to vector<8x32xf32>
    %181 = arith.addf %177, %180 : vector<8x32xf32>
    %c2_129 = arith.constant 2 : index
    %c0_130 = arith.constant 0 : index
    %c0_131 = arith.constant 0 : index
    %182 = vector.load %arg6[%c2_129, %c0_130, %c0_131] : memref<4x128x32xf32, #tpu.memory_space<vmem>>, vector<1x128x32xf32>
    %183 = vector.shape_cast %182 : vector<1x128x32xf32> to vector<128x32xf32>
    %cst_132 = arith.constant dense<0.000000e+00> : vector<8x32xf32>
    %184 = tpu.matmul %165, %183, %cst_132 {dimension_numbers = #tpu.dot_dimension_numbers<[1], [0], [0], [1], [0, 0, 1, 1], [], []>} : vector<8x128xf32>, vector<128x32xf32>, vector<8x32xf32> -> vector<8x32xf32>
    %c2_133 = arith.constant 2 : index
    %c0_134 = arith.constant 0 : index
    %c0_135 = arith.constant 0 : index
    %185 = vector.load %arg9[%c2_133, %c0_134, %c0_135] : memref<4x1x32xf32, #tpu.memory_space<vmem>>, vector<1x1x32xf32>
    %186 = vector.shape_cast %185 : vector<1x1x32xf32> to vector<1x32xf32>
    %187 = vector.broadcast %186 : vector<1x32xf32> to vector<8x32xf32>
    %188 = arith.addf %184, %187 : vector<8x32xf32>
    %c3_136 = arith.constant 3 : index
    %c0_137 = arith.constant 0 : index
    %c0_138 = arith.constant 0 : index
    %189 = vector.load %arg6[%c3_136, %c0_137, %c0_138] : memref<4x128x32xf32, #tpu.memory_space<vmem>>, vector<1x128x32xf32>
    %190 = vector.shape_cast %189 : vector<1x128x32xf32> to vector<128x32xf32>
    %cst_139 = arith.constant dense<0.000000e+00> : vector<8x32xf32>
    %191 = tpu.matmul %165, %190, %cst_139 {dimension_numbers = #tpu.dot_dimension_numbers<[1], [0], [0], [1], [0, 0, 1, 1], [], []>} : vector<8x128xf32>, vector<128x32xf32>, vector<8x32xf32> -> vector<8x32xf32>
    %c3_140 = arith.constant 3 : index
    %c0_141 = arith.constant 0 : index
    %c0_142 = arith.constant 0 : index
    %192 = vector.load %arg9[%c3_140, %c0_141, %c0_142] : memref<4x1x32xf32, #tpu.memory_space<vmem>>, vector<1x1x32xf32>
    %193 = vector.shape_cast %192 : vector<1x1x32xf32> to vector<1x32xf32>
    %194 = vector.broadcast %193 : vector<1x32xf32> to vector<8x32xf32>
    %195 = arith.addf %191, %194 : vector<8x32xf32>
    %196 = vector.shape_cast %174 : vector<8x32xf32> to vector<1x8x32xf32>
    %197 = vector.shape_cast %181 : vector<8x32xf32> to vector<1x8x32xf32>
    %198 = vector.shape_cast %188 : vector<8x32xf32> to vector<1x8x32xf32>
    %199 = vector.shape_cast %195 : vector<8x32xf32> to vector<1x8x32xf32>
    %200 = tpu.concatenate %196, %197, %198, %199 in 0 : vector<1x8x32xf32>, vector<1x8x32xf32>, vector<1x8x32xf32>, vector<1x8x32xf32> -> vector<4x8x32xf32>
    %c0_143 = arith.constant 0 : index
    %c0_144 = arith.constant 0 : index
    %c0_145 = arith.constant 0 : index
    %201 = vector.load %arg7[%c0_143, %c0_144, %c0_145] : memref<4x128x32xf32, #tpu.memory_space<vmem>>, vector<1x128x32xf32>
    %202 = vector.shape_cast %201 : vector<1x128x32xf32> to vector<128x32xf32>
    %cst_146 = arith.constant dense<0.000000e+00> : vector<8x32xf32>
    %203 = tpu.matmul %166, %202, %cst_146 {dimension_numbers = #tpu.dot_dimension_numbers<[1], [0], [0], [1], [0, 0, 1, 1], [], []>} : vector<8x128xf32>, vector<128x32xf32>, vector<8x32xf32> -> vector<8x32xf32>
    %c0_147 = arith.constant 0 : index
    %c0_148 = arith.constant 0 : index
    %c0_149 = arith.constant 0 : index
    %204 = vector.load %arg10[%c0_147, %c0_148, %c0_149] : memref<4x1x32xf32, #tpu.memory_space<vmem>>, vector<1x1x32xf32>
    %205 = vector.shape_cast %204 : vector<1x1x32xf32> to vector<1x32xf32>
    %206 = vector.broadcast %205 : vector<1x32xf32> to vector<8x32xf32>
    %207 = arith.addf %203, %206 : vector<8x32xf32>
    %c1_150 = arith.constant 1 : index
    %c0_151 = arith.constant 0 : index
    %c0_152 = arith.constant 0 : index
    %208 = vector.load %arg7[%c1_150, %c0_151, %c0_152] : memref<4x128x32xf32, #tpu.memory_space<vmem>>, vector<1x128x32xf32>
    %209 = vector.shape_cast %208 : vector<1x128x32xf32> to vector<128x32xf32>
    %cst_153 = arith.constant dense<0.000000e+00> : vector<8x32xf32>
    %210 = tpu.matmul %166, %209, %cst_153 {dimension_numbers = #tpu.dot_dimension_numbers<[1], [0], [0], [1], [0, 0, 1, 1], [], []>} : vector<8x128xf32>, vector<128x32xf32>, vector<8x32xf32> -> vector<8x32xf32>
    %c1_154 = arith.constant 1 : index
    %c0_155 = arith.constant 0 : index
    %c0_156 = arith.constant 0 : index
    %211 = vector.load %arg10[%c1_154, %c0_155, %c0_156] : memref<4x1x32xf32, #tpu.memory_space<vmem>>, vector<1x1x32xf32>
    %212 = vector.shape_cast %211 : vector<1x1x32xf32> to vector<1x32xf32>
    %213 = vector.broadcast %212 : vector<1x32xf32> to vector<8x32xf32>
    %214 = arith.addf %210, %213 : vector<8x32xf32>
    %c2_157 = arith.constant 2 : index
    %c0_158 = arith.constant 0 : index
    %c0_159 = arith.constant 0 : index
    %215 = vector.load %arg7[%c2_157, %c0_158, %c0_159] : memref<4x128x32xf32, #tpu.memory_space<vmem>>, vector<1x128x32xf32>
    %216 = vector.shape_cast %215 : vector<1x128x32xf32> to vector<128x32xf32>
    %cst_160 = arith.constant dense<0.000000e+00> : vector<8x32xf32>
    %217 = tpu.matmul %166, %216, %cst_160 {dimension_numbers = #tpu.dot_dimension_numbers<[1], [0], [0], [1], [0, 0, 1, 1], [], []>} : vector<8x128xf32>, vector<128x32xf32>, vector<8x32xf32> -> vector<8x32xf32>
    %c2_161 = arith.constant 2 : index
    %c0_162 = arith.constant 0 : index
    %c0_163 = arith.constant 0 : index
    %218 = vector.load %arg10[%c2_161, %c0_162, %c0_163] : memref<4x1x32xf32, #tpu.memory_space<vmem>>, vector<1x1x32xf32>
    %219 = vector.shape_cast %218 : vector<1x1x32xf32> to vector<1x32xf32>
    %220 = vector.broadcast %219 : vector<1x32xf32> to vector<8x32xf32>
    %221 = arith.addf %217, %220 : vector<8x32xf32>
    %c3_164 = arith.constant 3 : index
    %c0_165 = arith.constant 0 : index
    %c0_166 = arith.constant 0 : index
    %222 = vector.load %arg7[%c3_164, %c0_165, %c0_166] : memref<4x128x32xf32, #tpu.memory_space<vmem>>, vector<1x128x32xf32>
    %223 = vector.shape_cast %222 : vector<1x128x32xf32> to vector<128x32xf32>
    %cst_167 = arith.constant dense<0.000000e+00> : vector<8x32xf32>
    %224 = tpu.matmul %166, %223, %cst_167 {dimension_numbers = #tpu.dot_dimension_numbers<[1], [0], [0], [1], [0, 0, 1, 1], [], []>} : vector<8x128xf32>, vector<128x32xf32>, vector<8x32xf32> -> vector<8x32xf32>
    %c3_168 = arith.constant 3 : index
    %c0_169 = arith.constant 0 : index
    %c0_170 = arith.constant 0 : index
    %225 = vector.load %arg10[%c3_168, %c0_169, %c0_170] : memref<4x1x32xf32, #tpu.memory_space<vmem>>, vector<1x1x32xf32>
    %226 = vector.shape_cast %225 : vector<1x1x32xf32> to vector<1x32xf32>
    %227 = vector.broadcast %226 : vector<1x32xf32> to vector<8x32xf32>
    %228 = arith.addf %224, %227 : vector<8x32xf32>
    %229 = vector.shape_cast %207 : vector<8x32xf32> to vector<1x8x32xf32>
    %230 = vector.shape_cast %214 : vector<8x32xf32> to vector<1x8x32xf32>
    %231 = vector.shape_cast %221 : vector<8x32xf32> to vector<1x8x32xf32>
    %232 = vector.shape_cast %228 : vector<8x32xf32> to vector<1x8x32xf32>
    %233 = tpu.concatenate %229, %230, %231, %232 in 0 : vector<1x8x32xf32>, vector<1x8x32xf32>, vector<1x8x32xf32>, vector<1x8x32xf32> -> vector<4x8x32xf32>
    %c0_171 = arith.constant 0 : index
    %c0_172 = arith.constant 0 : index
    %c0_173 = arith.constant 0 : index
    %234 = vector.load %arg8[%c0_171, %c0_172, %c0_173] : memref<4x128x32xf32, #tpu.memory_space<vmem>>, vector<1x128x32xf32>
    %235 = vector.shape_cast %234 : vector<1x128x32xf32> to vector<128x32xf32>
    %cst_174 = arith.constant dense<0.000000e+00> : vector<8x32xf32>
    %236 = tpu.matmul %167, %235, %cst_174 {dimension_numbers = #tpu.dot_dimension_numbers<[1], [0], [0], [1], [0, 0, 1, 1], [], []>} : vector<8x128xf32>, vector<128x32xf32>, vector<8x32xf32> -> vector<8x32xf32>
    %c0_175 = arith.constant 0 : index
    %c0_176 = arith.constant 0 : index
    %c0_177 = arith.constant 0 : index
    %237 = vector.load %arg11[%c0_175, %c0_176, %c0_177] : memref<4x1x32xf32, #tpu.memory_space<vmem>>, vector<1x1x32xf32>
    %238 = vector.shape_cast %237 : vector<1x1x32xf32> to vector<1x32xf32>
    %239 = vector.broadcast %238 : vector<1x32xf32> to vector<8x32xf32>
    %240 = arith.addf %236, %239 : vector<8x32xf32>
    %c1_178 = arith.constant 1 : index
    %c0_179 = arith.constant 0 : index
    %c0_180 = arith.constant 0 : index
    %241 = vector.load %arg8[%c1_178, %c0_179, %c0_180] : memref<4x128x32xf32, #tpu.memory_space<vmem>>, vector<1x128x32xf32>
    %242 = vector.shape_cast %241 : vector<1x128x32xf32> to vector<128x32xf32>
    %cst_181 = arith.constant dense<0.000000e+00> : vector<8x32xf32>
    %243 = tpu.matmul %167, %242, %cst_181 {dimension_numbers = #tpu.dot_dimension_numbers<[1], [0], [0], [1], [0, 0, 1, 1], [], []>} : vector<8x128xf32>, vector<128x32xf32>, vector<8x32xf32> -> vector<8x32xf32>
    %c1_182 = arith.constant 1 : index
    %c0_183 = arith.constant 0 : index
    %c0_184 = arith.constant 0 : index
    %244 = vector.load %arg11[%c1_182, %c0_183, %c0_184] : memref<4x1x32xf32, #tpu.memory_space<vmem>>, vector<1x1x32xf32>
    %245 = vector.shape_cast %244 : vector<1x1x32xf32> to vector<1x32xf32>
    %246 = vector.broadcast %245 : vector<1x32xf32> to vector<8x32xf32>
    %247 = arith.addf %243, %246 : vector<8x32xf32>
    %c2_185 = arith.constant 2 : index
    %c0_186 = arith.constant 0 : index
    %c0_187 = arith.constant 0 : index
    %248 = vector.load %arg8[%c2_185, %c0_186, %c0_187] : memref<4x128x32xf32, #tpu.memory_space<vmem>>, vector<1x128x32xf32>
    %249 = vector.shape_cast %248 : vector<1x128x32xf32> to vector<128x32xf32>
    %cst_188 = arith.constant dense<0.000000e+00> : vector<8x32xf32>
    %250 = tpu.matmul %167, %249, %cst_188 {dimension_numbers = #tpu.dot_dimension_numbers<[1], [0], [0], [1], [0, 0, 1, 1], [], []>} : vector<8x128xf32>, vector<128x32xf32>, vector<8x32xf32> -> vector<8x32xf32>
    %c2_189 = arith.constant 2 : index
    %c0_190 = arith.constant 0 : index
    %c0_191 = arith.constant 0 : index
    %251 = vector.load %arg11[%c2_189, %c0_190, %c0_191] : memref<4x1x32xf32, #tpu.memory_space<vmem>>, vector<1x1x32xf32>
    %252 = vector.shape_cast %251 : vector<1x1x32xf32> to vector<1x32xf32>
    %253 = vector.broadcast %252 : vector<1x32xf32> to vector<8x32xf32>
    %254 = arith.addf %250, %253 : vector<8x32xf32>
    %c3_192 = arith.constant 3 : index
    %c0_193 = arith.constant 0 : index
    %c0_194 = arith.constant 0 : index
    %255 = vector.load %arg8[%c3_192, %c0_193, %c0_194] : memref<4x128x32xf32, #tpu.memory_space<vmem>>, vector<1x128x32xf32>
    %256 = vector.shape_cast %255 : vector<1x128x32xf32> to vector<128x32xf32>
    %cst_195 = arith.constant dense<0.000000e+00> : vector<8x32xf32>
    %257 = tpu.matmul %167, %256, %cst_195 {dimension_numbers = #tpu.dot_dimension_numbers<[1], [0], [0], [1], [0, 0, 1, 1], [], []>} : vector<8x128xf32>, vector<128x32xf32>, vector<8x32xf32> -> vector<8x32xf32>
    %c3_196 = arith.constant 3 : index
    %c0_197 = arith.constant 0 : index
    %c0_198 = arith.constant 0 : index
    %258 = vector.load %arg11[%c3_196, %c0_197, %c0_198] : memref<4x1x32xf32, #tpu.memory_space<vmem>>, vector<1x1x32xf32>
    %259 = vector.shape_cast %258 : vector<1x1x32xf32> to vector<1x32xf32>
    %260 = vector.broadcast %259 : vector<1x32xf32> to vector<8x32xf32>
    %261 = arith.addf %257, %260 : vector<8x32xf32>
    %262 = vector.shape_cast %240 : vector<8x32xf32> to vector<1x8x32xf32>
    %263 = vector.shape_cast %247 : vector<8x32xf32> to vector<1x8x32xf32>
    %264 = vector.shape_cast %254 : vector<8x32xf32> to vector<1x8x32xf32>
    %265 = vector.shape_cast %261 : vector<8x32xf32> to vector<1x8x32xf32>
    %266 = tpu.concatenate %262, %263, %264, %265 in 0 : vector<1x8x32xf32>, vector<1x8x32xf32>, vector<1x8x32xf32>, vector<1x8x32xf32> -> vector<4x8x32xf32>
    "tpu.trace_start"() <{level = 10 : i32, message = "hqd,hkd->hqk"}> : () -> ()
    %cst_199 = arith.constant dense<0.000000e+00> : vector<4x8x8xf32>
    %267 = tpu.matmul %200, %233, %cst_199 {dimension_numbers = #tpu.dot_dimension_numbers<[2], [2], [1], [1], [0, 0, 0, 1, 1, 1], [0], [0]>} : vector<4x8x32xf32>, vector<4x8x32xf32>, vector<4x8x8xf32> -> vector<4x8x8xf32>
    "tpu.trace_stop"() : () -> ()
    %cst_200 = arith.constant 0.176776692 : f32
    %268 = vector.broadcast %cst_200 : f32 to vector<4x8x8xf32>
    %269 = arith.mulf %267, %268 : vector<4x8x8xf32>
    %270 = vector.shape_cast %10 : vector<8x8xf32> to vector<1x8x8xf32>
    %271 = vector.broadcast %270 : vector<1x8x8xf32> to vector<4x8x8xf32>
    %272 = arith.addf %269, %271 : vector<4x8x8xf32>
    %cst_201 = arith.constant dense<0xFF800000> : vector<4x8xf32>
    %273 = vector.multi_reduction <maximumf>, %272, %cst_201 [2] : vector<4x8x8xf32> to vector<4x8xf32>
    %274 = vector.shape_cast %273 : vector<4x8xf32> to vector<4x8x1xf32>
    %275 = vector.broadcast %274 : vector<4x8x1xf32> to vector<4x8x8xf32>
    %276 = arith.subf %272, %275 : vector<4x8x8xf32>
    %277 = math.exp %276 : vector<4x8x8xf32>
    %cst_202 = arith.constant dense<0.000000e+00> : vector<4x8xf32>
    %278 = vector.multi_reduction <add>, %277, %cst_202 [2] : vector<4x8x8xf32> to vector<4x8xf32>
    %279 = vector.shape_cast %278 : vector<4x8xf32> to vector<4x8x1xf32>
    %280 = tpu.reciprocal %279 : vector<4x8x1xf32> -> vector<4x8x1xf32>
    %281 = vector.broadcast %280 : vector<4x8x1xf32> to vector<4x8x8xf32>
    %282 = arith.mulf %277, %281 : vector<4x8x8xf32>
    "tpu.trace_start"() <{level = 10 : i32, message = "hqk,hkd->hqd"}> : () -> ()
    %cst_203 = arith.constant dense<0.000000e+00> : vector<4x8x32xf32>
    %283 = tpu.matmul %282, %266, %cst_203 {dimension_numbers = #tpu.dot_dimension_numbers<[2], [1], [1], [2], [0, 0, 0, 1, 1, 2], [0], [0]>} : vector<4x8x8xf32>, vector<4x8x32xf32>, vector<4x8x32xf32> -> vector<4x8x32xf32>
    %cst_204 = arith.constant 0.000000e+00 : f32
    "tpu.trace_stop"() : () -> ()
    %284 = vector.broadcast %cst_204 : f32 to vector<8x128xf32>
    %285 = vector.extract_strided_slice %283 {offsets = [0, 0, 0], sizes = [1, 8, 32], strides = [1, 1, 1]} : vector<4x8x32xf32> to vector<1x8x32xf32>
    %286 = vector.shape_cast %285 : vector<1x8x32xf32> to vector<8x32xf32>
    %c0_205 = arith.constant 0 : index
    %c0_206 = arith.constant 0 : index
    %c0_207 = arith.constant 0 : index
    %287 = vector.load %arg12[%c0_205, %c0_206, %c0_207] : memref<4x32x128xf32, #tpu.memory_space<vmem>>, vector<1x32x128xf32>
    %288 = vector.shape_cast %287 : vector<1x32x128xf32> to vector<32x128xf32>
    %cst_208 = arith.constant dense<0.000000e+00> : vector<8x128xf32>
    %289 = tpu.matmul %286, %288, %cst_208 {dimension_numbers = #tpu.dot_dimension_numbers<[1], [0], [0], [1], [0, 0, 1, 1], [], []>} : vector<8x32xf32>, vector<32x128xf32>, vector<8x128xf32> -> vector<8x128xf32>
    %290 = arith.addf %284, %289 : vector<8x128xf32>
    %291 = vector.extract_strided_slice %283 {offsets = [1, 0, 0], sizes = [1, 8, 32], strides = [1, 1, 1]} : vector<4x8x32xf32> to vector<1x8x32xf32>
    %292 = vector.shape_cast %291 : vector<1x8x32xf32> to vector<8x32xf32>
    %c1_209 = arith.constant 1 : index
    %c0_210 = arith.constant 0 : index
    %c0_211 = arith.constant 0 : index
    %293 = vector.load %arg12[%c1_209, %c0_210, %c0_211] : memref<4x32x128xf32, #tpu.memory_space<vmem>>, vector<1x32x128xf32>
    %294 = vector.shape_cast %293 : vector<1x32x128xf32> to vector<32x128xf32>
    %cst_212 = arith.constant dense<0.000000e+00> : vector<8x128xf32>
    %295 = tpu.matmul %292, %294, %cst_212 {dimension_numbers = #tpu.dot_dimension_numbers<[1], [0], [0], [1], [0, 0, 1, 1], [], []>} : vector<8x32xf32>, vector<32x128xf32>, vector<8x128xf32> -> vector<8x128xf32>
    %296 = arith.addf %290, %295 : vector<8x128xf32>
    %297 = vector.extract_strided_slice %283 {offsets = [2, 0, 0], sizes = [1, 8, 32], strides = [1, 1, 1]} : vector<4x8x32xf32> to vector<1x8x32xf32>
    %298 = vector.shape_cast %297 : vector<1x8x32xf32> to vector<8x32xf32>
    %c2_213 = arith.constant 2 : index
    %c0_214 = arith.constant 0 : index
    %c0_215 = arith.constant 0 : index
    %299 = vector.load %arg12[%c2_213, %c0_214, %c0_215] : memref<4x32x128xf32, #tpu.memory_space<vmem>>, vector<1x32x128xf32>
    %300 = vector.shape_cast %299 : vector<1x32x128xf32> to vector<32x128xf32>
    %cst_216 = arith.constant dense<0.000000e+00> : vector<8x128xf32>
    %301 = tpu.matmul %298, %300, %cst_216 {dimension_numbers = #tpu.dot_dimension_numbers<[1], [0], [0], [1], [0, 0, 1, 1], [], []>} : vector<8x32xf32>, vector<32x128xf32>, vector<8x128xf32> -> vector<8x128xf32>
    %302 = arith.addf %296, %301 : vector<8x128xf32>
    %303 = vector.extract_strided_slice %283 {offsets = [3, 0, 0], sizes = [1, 8, 32], strides = [1, 1, 1]} : vector<4x8x32xf32> to vector<1x8x32xf32>
    %304 = vector.shape_cast %303 : vector<1x8x32xf32> to vector<8x32xf32>
    %c3_217 = arith.constant 3 : index
    %c0_218 = arith.constant 0 : index
    %c0_219 = arith.constant 0 : index
    %305 = vector.load %arg12[%c3_217, %c0_218, %c0_219] : memref<4x32x128xf32, #tpu.memory_space<vmem>>, vector<1x32x128xf32>
    %306 = vector.shape_cast %305 : vector<1x32x128xf32> to vector<32x128xf32>
    %cst_220 = arith.constant dense<0.000000e+00> : vector<8x128xf32>
    %307 = tpu.matmul %304, %306, %cst_220 {dimension_numbers = #tpu.dot_dimension_numbers<[1], [0], [0], [1], [0, 0, 1, 1], [], []>} : vector<8x32xf32>, vector<32x128xf32>, vector<8x128xf32> -> vector<8x128xf32>
    %308 = arith.addf %302, %307 : vector<8x128xf32>
    %c0_221 = arith.constant 0 : index
    %c0_222 = arith.constant 0 : index
    %309 = vector.load %arg13[%c0_221, %c0_222] : memref<1x128xf32, #tpu.memory_space<vmem>>, vector<1x128xf32>
    %310 = vector.broadcast %309 : vector<1x128xf32> to vector<8x128xf32>
    %311 = arith.addf %308, %310 : vector<8x128xf32>
    %312 = tpu.concatenate %164, %311 in 0 : vector<8x128xf32>, vector<8x128xf32> -> vector<16x128xf32>
    %313 = arith.addf %0, %312 : vector<16x128xf32>
    %cst_223 = arith.constant dense<0.000000e+00> : vector<16xf32>
    %314 = vector.multi_reduction <add>, %313, %cst_223 [1] : vector<16x128xf32> to vector<16xf32>
    %315 = vector.shape_cast %314 : vector<16xf32> to vector<16x1xf32>
    %cst_224 = arith.constant 1.280000e+02 : f32
    %316 = vector.broadcast %cst_224 : f32 to vector<16x1xf32>
    %317 = arith.divf %315, %316 : vector<16x1xf32>
    %318 = vector.broadcast %317 : vector<16x1xf32> to vector<16x128xf32>
    %319 = arith.subf %313, %318 : vector<16x128xf32>
    %320 = arith.mulf %319, %319 : vector<16x128xf32>
    %cst_225 = arith.constant dense<0.000000e+00> : vector<16xf32>
    %321 = vector.multi_reduction <add>, %320, %cst_225 [1] : vector<16x128xf32> to vector<16xf32>
    %322 = vector.shape_cast %321 : vector<16xf32> to vector<16x1xf32>
    %cst_226 = arith.constant 1.280000e+02 : f32
    %323 = vector.broadcast %cst_226 : f32 to vector<16x1xf32>
    %324 = arith.divf %322, %323 : vector<16x1xf32>
    %325 = vector.broadcast %317 : vector<16x1xf32> to vector<16x128xf32>
    %326 = arith.subf %313, %325 : vector<16x128xf32>
    %cst_227 = arith.constant 9.99999974E-6 : f32
    %327 = vector.broadcast %cst_227 : f32 to vector<16x1xf32>
    %328 = arith.addf %324, %327 : vector<16x1xf32>
    %329 = math.rsqrt %328 : vector<16x1xf32>
    %330 = vector.broadcast %329 : vector<16x1xf32> to vector<16x128xf32>
    %331 = arith.mulf %326, %330 : vector<16x128xf32>
    %c0_228 = arith.constant 0 : index
    %c0_229 = arith.constant 0 : index
    %332 = vector.load %arg26[%c0_228, %c0_229] : memref<1x128xf32, #tpu.memory_space<vmem>>, vector<1x128xf32>
    %333 = vector.broadcast %332 : vector<1x128xf32> to vector<16x128xf32>
    %334 = arith.mulf %331, %333 : vector<16x128xf32>
    %c0_230 = arith.constant 0 : index
    %c0_231 = arith.constant 0 : index
    %335 = vector.load %arg27[%c0_230, %c0_231] : memref<1x128xf32, #tpu.memory_space<vmem>>, vector<1x128xf32>
    %336 = vector.broadcast %335 : vector<1x128xf32> to vector<16x128xf32>
    %337 = arith.addf %334, %336 : vector<16x128xf32>
    %c127_i32_232 = arith.constant 127 : i32
    %338 = tpu.dynamic_rotate %337 by %c127_i32_232 dim 1 : vector<16x128xf32>, i32 -> vector<16x128xf32>
    %c1_i32_233 = arith.constant 1 : i32
    %339 = tpu.dynamic_rotate %337 by %c1_i32_233 dim 1 : vector<16x128xf32>, i32 -> vector<16x128xf32>
    %340 = arith.mulf %337, %2 : vector<16x128xf32>
    %341 = arith.mulf %338, %3 : vector<16x128xf32>
    %342 = arith.addf %340, %341 : vector<16x128xf32>
    %343 = arith.mulf %339, %4 : vector<16x128xf32>
    %344 = arith.addf %342, %343 : vector<16x128xf32>
    %c127_i32_234 = arith.constant 127 : i32
    %345 = tpu.dynamic_rotate %1 by %c127_i32_234 dim 1 : vector<16x128xf32>, i32 -> vector<16x128xf32>
    %c1_i32_235 = arith.constant 1 : i32
    %346 = tpu.dynamic_rotate %1 by %c1_i32_235 dim 1 : vector<16x128xf32>, i32 -> vector<16x128xf32>
    %347 = arith.mulf %1, %2 : vector<16x128xf32>
    %348 = arith.mulf %345, %3 : vector<16x128xf32>
    %349 = arith.addf %347, %348 : vector<16x128xf32>
    %350 = arith.mulf %346, %4 : vector<16x128xf32>
    %351 = arith.addf %349, %350 : vector<16x128xf32>
    %352 = vector.extract_strided_slice %344 {offsets = [0, 0], sizes = [8, 128], strides = [1, 1]} : vector<16x128xf32> to vector<8x128xf32>
    %353 = vector.extract_strided_slice %351 {offsets = [0, 0], sizes = [8, 128], strides = [1, 1]} : vector<16x128xf32> to vector<8x128xf32>
    %354 = vector.extract_strided_slice %1 {offsets = [0, 0], sizes = [8, 128], strides = [1, 1]} : vector<16x128xf32> to vector<8x128xf32>
    %c0_236 = arith.constant 0 : index
    %c0_237 = arith.constant 0 : index
    %c0_238 = arith.constant 0 : index
    %355 = vector.load %arg14[%c0_236, %c0_237, %c0_238] : memref<4x128x32xf32, #tpu.memory_space<vmem>>, vector<1x128x32xf32>
    %356 = vector.shape_cast %355 : vector<1x128x32xf32> to vector<128x32xf32>
    %cst_239 = arith.constant dense<0.000000e+00> : vector<8x32xf32>
    %357 = tpu.matmul %352, %356, %cst_239 {dimension_numbers = #tpu.dot_dimension_numbers<[1], [0], [0], [1], [0, 0, 1, 1], [], []>} : vector<8x128xf32>, vector<128x32xf32>, vector<8x32xf32> -> vector<8x32xf32>
    %c0_240 = arith.constant 0 : index
    %c0_241 = arith.constant 0 : index
    %c0_242 = arith.constant 0 : index
    %358 = vector.load %arg17[%c0_240, %c0_241, %c0_242] : memref<4x1x32xf32, #tpu.memory_space<vmem>>, vector<1x1x32xf32>
    %359 = vector.shape_cast %358 : vector<1x1x32xf32> to vector<1x32xf32>
    %360 = vector.broadcast %359 : vector<1x32xf32> to vector<8x32xf32>
    %361 = arith.addf %357, %360 : vector<8x32xf32>
    %c1_243 = arith.constant 1 : index
    %c0_244 = arith.constant 0 : index
    %c0_245 = arith.constant 0 : index
    %362 = vector.load %arg14[%c1_243, %c0_244, %c0_245] : memref<4x128x32xf32, #tpu.memory_space<vmem>>, vector<1x128x32xf32>
    %363 = vector.shape_cast %362 : vector<1x128x32xf32> to vector<128x32xf32>
    %cst_246 = arith.constant dense<0.000000e+00> : vector<8x32xf32>
    %364 = tpu.matmul %352, %363, %cst_246 {dimension_numbers = #tpu.dot_dimension_numbers<[1], [0], [0], [1], [0, 0, 1, 1], [], []>} : vector<8x128xf32>, vector<128x32xf32>, vector<8x32xf32> -> vector<8x32xf32>
    %c1_247 = arith.constant 1 : index
    %c0_248 = arith.constant 0 : index
    %c0_249 = arith.constant 0 : index
    %365 = vector.load %arg17[%c1_247, %c0_248, %c0_249] : memref<4x1x32xf32, #tpu.memory_space<vmem>>, vector<1x1x32xf32>
    %366 = vector.shape_cast %365 : vector<1x1x32xf32> to vector<1x32xf32>
    %367 = vector.broadcast %366 : vector<1x32xf32> to vector<8x32xf32>
    %368 = arith.addf %364, %367 : vector<8x32xf32>
    %c2_250 = arith.constant 2 : index
    %c0_251 = arith.constant 0 : index
    %c0_252 = arith.constant 0 : index
    %369 = vector.load %arg14[%c2_250, %c0_251, %c0_252] : memref<4x128x32xf32, #tpu.memory_space<vmem>>, vector<1x128x32xf32>
    %370 = vector.shape_cast %369 : vector<1x128x32xf32> to vector<128x32xf32>
    %cst_253 = arith.constant dense<0.000000e+00> : vector<8x32xf32>
    %371 = tpu.matmul %352, %370, %cst_253 {dimension_numbers = #tpu.dot_dimension_numbers<[1], [0], [0], [1], [0, 0, 1, 1], [], []>} : vector<8x128xf32>, vector<128x32xf32>, vector<8x32xf32> -> vector<8x32xf32>
    %c2_254 = arith.constant 2 : index
    %c0_255 = arith.constant 0 : index
    %c0_256 = arith.constant 0 : index
    %372 = vector.load %arg17[%c2_254, %c0_255, %c0_256] : memref<4x1x32xf32, #tpu.memory_space<vmem>>, vector<1x1x32xf32>
    %373 = vector.shape_cast %372 : vector<1x1x32xf32> to vector<1x32xf32>
    %374 = vector.broadcast %373 : vector<1x32xf32> to vector<8x32xf32>
    %375 = arith.addf %371, %374 : vector<8x32xf32>
    %c3_257 = arith.constant 3 : index
    %c0_258 = arith.constant 0 : index
    %c0_259 = arith.constant 0 : index
    %376 = vector.load %arg14[%c3_257, %c0_258, %c0_259] : memref<4x128x32xf32, #tpu.memory_space<vmem>>, vector<1x128x32xf32>
    %377 = vector.shape_cast %376 : vector<1x128x32xf32> to vector<128x32xf32>
    %cst_260 = arith.constant dense<0.000000e+00> : vector<8x32xf32>
    %378 = tpu.matmul %352, %377, %cst_260 {dimension_numbers = #tpu.dot_dimension_numbers<[1], [0], [0], [1], [0, 0, 1, 1], [], []>} : vector<8x128xf32>, vector<128x32xf32>, vector<8x32xf32> -> vector<8x32xf32>
    %c3_261 = arith.constant 3 : index
    %c0_262 = arith.constant 0 : index
    %c0_263 = arith.constant 0 : index
    %379 = vector.load %arg17[%c3_261, %c0_262, %c0_263] : memref<4x1x32xf32, #tpu.memory_space<vmem>>, vector<1x1x32xf32>
    %380 = vector.shape_cast %379 : vector<1x1x32xf32> to vector<1x32xf32>
    %381 = vector.broadcast %380 : vector<1x32xf32> to vector<8x32xf32>
    %382 = arith.addf %378, %381 : vector<8x32xf32>
    %383 = vector.shape_cast %361 : vector<8x32xf32> to vector<1x8x32xf32>
    %384 = vector.shape_cast %368 : vector<8x32xf32> to vector<1x8x32xf32>
    %385 = vector.shape_cast %375 : vector<8x32xf32> to vector<1x8x32xf32>
    %386 = vector.shape_cast %382 : vector<8x32xf32> to vector<1x8x32xf32>
    %387 = tpu.concatenate %383, %384, %385, %386 in 0 : vector<1x8x32xf32>, vector<1x8x32xf32>, vector<1x8x32xf32>, vector<1x8x32xf32> -> vector<4x8x32xf32>
    %c0_264 = arith.constant 0 : index
    %c0_265 = arith.constant 0 : index
    %c0_266 = arith.constant 0 : index
    %388 = vector.load %arg15[%c0_264, %c0_265, %c0_266] : memref<4x128x32xf32, #tpu.memory_space<vmem>>, vector<1x128x32xf32>
    %389 = vector.shape_cast %388 : vector<1x128x32xf32> to vector<128x32xf32>
    %cst_267 = arith.constant dense<0.000000e+00> : vector<8x32xf32>
    %390 = tpu.matmul %353, %389, %cst_267 {dimension_numbers = #tpu.dot_dimension_numbers<[1], [0], [0], [1], [0, 0, 1, 1], [], []>} : vector<8x128xf32>, vector<128x32xf32>, vector<8x32xf32> -> vector<8x32xf32>
    %c0_268 = arith.constant 0 : index
    %c0_269 = arith.constant 0 : index
    %c0_270 = arith.constant 0 : index
    %391 = vector.load %arg18[%c0_268, %c0_269, %c0_270] : memref<4x1x32xf32, #tpu.memory_space<vmem>>, vector<1x1x32xf32>
    %392 = vector.shape_cast %391 : vector<1x1x32xf32> to vector<1x32xf32>
    %393 = vector.broadcast %392 : vector<1x32xf32> to vector<8x32xf32>
    %394 = arith.addf %390, %393 : vector<8x32xf32>
    %c1_271 = arith.constant 1 : index
    %c0_272 = arith.constant 0 : index
    %c0_273 = arith.constant 0 : index
    %395 = vector.load %arg15[%c1_271, %c0_272, %c0_273] : memref<4x128x32xf32, #tpu.memory_space<vmem>>, vector<1x128x32xf32>
    %396 = vector.shape_cast %395 : vector<1x128x32xf32> to vector<128x32xf32>
    %cst_274 = arith.constant dense<0.000000e+00> : vector<8x32xf32>
    %397 = tpu.matmul %353, %396, %cst_274 {dimension_numbers = #tpu.dot_dimension_numbers<[1], [0], [0], [1], [0, 0, 1, 1], [], []>} : vector<8x128xf32>, vector<128x32xf32>, vector<8x32xf32> -> vector<8x32xf32>
    %c1_275 = arith.constant 1 : index
    %c0_276 = arith.constant 0 : index
    %c0_277 = arith.constant 0 : index
    %398 = vector.load %arg18[%c1_275, %c0_276, %c0_277] : memref<4x1x32xf32, #tpu.memory_space<vmem>>, vector<1x1x32xf32>
    %399 = vector.shape_cast %398 : vector<1x1x32xf32> to vector<1x32xf32>
    %400 = vector.broadcast %399 : vector<1x32xf32> to vector<8x32xf32>
    %401 = arith.addf %397, %400 : vector<8x32xf32>
    %c2_278 = arith.constant 2 : index
    %c0_279 = arith.constant 0 : index
    %c0_280 = arith.constant 0 : index
    %402 = vector.load %arg15[%c2_278, %c0_279, %c0_280] : memref<4x128x32xf32, #tpu.memory_space<vmem>>, vector<1x128x32xf32>
    %403 = vector.shape_cast %402 : vector<1x128x32xf32> to vector<128x32xf32>
    %cst_281 = arith.constant dense<0.000000e+00> : vector<8x32xf32>
    %404 = tpu.matmul %353, %403, %cst_281 {dimension_numbers = #tpu.dot_dimension_numbers<[1], [0], [0], [1], [0, 0, 1, 1], [], []>} : vector<8x128xf32>, vector<128x32xf32>, vector<8x32xf32> -> vector<8x32xf32>
    %c2_282 = arith.constant 2 : index
    %c0_283 = arith.constant 0 : index
    %c0_284 = arith.constant 0 : index
    %405 = vector.load %arg18[%c2_282, %c0_283, %c0_284] : memref<4x1x32xf32, #tpu.memory_space<vmem>>, vector<1x1x32xf32>
    %406 = vector.shape_cast %405 : vector<1x1x32xf32> to vector<1x32xf32>
    %407 = vector.broadcast %406 : vector<1x32xf32> to vector<8x32xf32>
    %408 = arith.addf %404, %407 : vector<8x32xf32>
    %c3_285 = arith.constant 3 : index
    %c0_286 = arith.constant 0 : index
    %c0_287 = arith.constant 0 : index
    %409 = vector.load %arg15[%c3_285, %c0_286, %c0_287] : memref<4x128x32xf32, #tpu.memory_space<vmem>>, vector<1x128x32xf32>
    %410 = vector.shape_cast %409 : vector<1x128x32xf32> to vector<128x32xf32>
    %cst_288 = arith.constant dense<0.000000e+00> : vector<8x32xf32>
    %411 = tpu.matmul %353, %410, %cst_288 {dimension_numbers = #tpu.dot_dimension_numbers<[1], [0], [0], [1], [0, 0, 1, 1], [], []>} : vector<8x128xf32>, vector<128x32xf32>, vector<8x32xf32> -> vector<8x32xf32>
    %c3_289 = arith.constant 3 : index
    %c0_290 = arith.constant 0 : index
    %c0_291 = arith.constant 0 : index
    %412 = vector.load %arg18[%c3_289, %c0_290, %c0_291] : memref<4x1x32xf32, #tpu.memory_space<vmem>>, vector<1x1x32xf32>
    %413 = vector.shape_cast %412 : vector<1x1x32xf32> to vector<1x32xf32>
    %414 = vector.broadcast %413 : vector<1x32xf32> to vector<8x32xf32>
    %415 = arith.addf %411, %414 : vector<8x32xf32>
    %416 = vector.shape_cast %394 : vector<8x32xf32> to vector<1x8x32xf32>
    %417 = vector.shape_cast %401 : vector<8x32xf32> to vector<1x8x32xf32>
    %418 = vector.shape_cast %408 : vector<8x32xf32> to vector<1x8x32xf32>
    %419 = vector.shape_cast %415 : vector<8x32xf32> to vector<1x8x32xf32>
    %420 = tpu.concatenate %416, %417, %418, %419 in 0 : vector<1x8x32xf32>, vector<1x8x32xf32>, vector<1x8x32xf32>, vector<1x8x32xf32> -> vector<4x8x32xf32>
    %c0_292 = arith.constant 0 : index
    %c0_293 = arith.constant 0 : index
    %c0_294 = arith.constant 0 : index
    %421 = vector.load %arg16[%c0_292, %c0_293, %c0_294] : memref<4x128x32xf32, #tpu.memory_space<vmem>>, vector<1x128x32xf32>
    %422 = vector.shape_cast %421 : vector<1x128x32xf32> to vector<128x32xf32>
    %cst_295 = arith.constant dense<0.000000e+00> : vector<8x32xf32>
    %423 = tpu.matmul %354, %422, %cst_295 {dimension_numbers = #tpu.dot_dimension_numbers<[1], [0], [0], [1], [0, 0, 1, 1], [], []>} : vector<8x128xf32>, vector<128x32xf32>, vector<8x32xf32> -> vector<8x32xf32>
    %c0_296 = arith.constant 0 : index
    %c0_297 = arith.constant 0 : index
    %c0_298 = arith.constant 0 : index
    %424 = vector.load %arg19[%c0_296, %c0_297, %c0_298] : memref<4x1x32xf32, #tpu.memory_space<vmem>>, vector<1x1x32xf32>
    %425 = vector.shape_cast %424 : vector<1x1x32xf32> to vector<1x32xf32>
    %426 = vector.broadcast %425 : vector<1x32xf32> to vector<8x32xf32>
    %427 = arith.addf %423, %426 : vector<8x32xf32>
    %c1_299 = arith.constant 1 : index
    %c0_300 = arith.constant 0 : index
    %c0_301 = arith.constant 0 : index
    %428 = vector.load %arg16[%c1_299, %c0_300, %c0_301] : memref<4x128x32xf32, #tpu.memory_space<vmem>>, vector<1x128x32xf32>
    %429 = vector.shape_cast %428 : vector<1x128x32xf32> to vector<128x32xf32>
    %cst_302 = arith.constant dense<0.000000e+00> : vector<8x32xf32>
    %430 = tpu.matmul %354, %429, %cst_302 {dimension_numbers = #tpu.dot_dimension_numbers<[1], [0], [0], [1], [0, 0, 1, 1], [], []>} : vector<8x128xf32>, vector<128x32xf32>, vector<8x32xf32> -> vector<8x32xf32>
    %c1_303 = arith.constant 1 : index
    %c0_304 = arith.constant 0 : index
    %c0_305 = arith.constant 0 : index
    %431 = vector.load %arg19[%c1_303, %c0_304, %c0_305] : memref<4x1x32xf32, #tpu.memory_space<vmem>>, vector<1x1x32xf32>
    %432 = vector.shape_cast %431 : vector<1x1x32xf32> to vector<1x32xf32>
    %433 = vector.broadcast %432 : vector<1x32xf32> to vector<8x32xf32>
    %434 = arith.addf %430, %433 : vector<8x32xf32>
    %c2_306 = arith.constant 2 : index
    %c0_307 = arith.constant 0 : index
    %c0_308 = arith.constant 0 : index
    %435 = vector.load %arg16[%c2_306, %c0_307, %c0_308] : memref<4x128x32xf32, #tpu.memory_space<vmem>>, vector<1x128x32xf32>
    %436 = vector.shape_cast %435 : vector<1x128x32xf32> to vector<128x32xf32>
    %cst_309 = arith.constant dense<0.000000e+00> : vector<8x32xf32>
    %437 = tpu.matmul %354, %436, %cst_309 {dimension_numbers = #tpu.dot_dimension_numbers<[1], [0], [0], [1], [0, 0, 1, 1], [], []>} : vector<8x128xf32>, vector<128x32xf32>, vector<8x32xf32> -> vector<8x32xf32>
    %c2_310 = arith.constant 2 : index
    %c0_311 = arith.constant 0 : index
    %c0_312 = arith.constant 0 : index
    %438 = vector.load %arg19[%c2_310, %c0_311, %c0_312] : memref<4x1x32xf32, #tpu.memory_space<vmem>>, vector<1x1x32xf32>
    %439 = vector.shape_cast %438 : vector<1x1x32xf32> to vector<1x32xf32>
    %440 = vector.broadcast %439 : vector<1x32xf32> to vector<8x32xf32>
    %441 = arith.addf %437, %440 : vector<8x32xf32>
    %c3_313 = arith.constant 3 : index
    %c0_314 = arith.constant 0 : index
    %c0_315 = arith.constant 0 : index
    %442 = vector.load %arg16[%c3_313, %c0_314, %c0_315] : memref<4x128x32xf32, #tpu.memory_space<vmem>>, vector<1x128x32xf32>
    %443 = vector.shape_cast %442 : vector<1x128x32xf32> to vector<128x32xf32>
    %cst_316 = arith.constant dense<0.000000e+00> : vector<8x32xf32>
    %444 = tpu.matmul %354, %443, %cst_316 {dimension_numbers = #tpu.dot_dimension_numbers<[1], [0], [0], [1], [0, 0, 1, 1], [], []>} : vector<8x128xf32>, vector<128x32xf32>, vector<8x32xf32> -> vector<8x32xf32>
    %c3_317 = arith.constant 3 : index
    %c0_318 = arith.constant 0 : index
    %c0_319 = arith.constant 0 : index
    %445 = vector.load %arg19[%c3_317, %c0_318, %c0_319] : memref<4x1x32xf32, #tpu.memory_space<vmem>>, vector<1x1x32xf32>
    %446 = vector.shape_cast %445 : vector<1x1x32xf32> to vector<1x32xf32>
    %447 = vector.broadcast %446 : vector<1x32xf32> to vector<8x32xf32>
    %448 = arith.addf %444, %447 : vector<8x32xf32>
    %449 = vector.shape_cast %427 : vector<8x32xf32> to vector<1x8x32xf32>
    %450 = vector.shape_cast %434 : vector<8x32xf32> to vector<1x8x32xf32>
    %451 = vector.shape_cast %441 : vector<8x32xf32> to vector<1x8x32xf32>
    %452 = vector.shape_cast %448 : vector<8x32xf32> to vector<1x8x32xf32>
    %453 = tpu.concatenate %449, %450, %451, %452 in 0 : vector<1x8x32xf32>, vector<1x8x32xf32>, vector<1x8x32xf32>, vector<1x8x32xf32> -> vector<4x8x32xf32>
    "tpu.trace_start"() <{level = 10 : i32, message = "hqd,hkd->hqk"}> : () -> ()
    %cst_320 = arith.constant dense<0.000000e+00> : vector<4x8x8xf32>
    %454 = tpu.matmul %387, %420, %cst_320 {dimension_numbers = #tpu.dot_dimension_numbers<[2], [2], [1], [1], [0, 0, 0, 1, 1, 1], [0], [0]>} : vector<4x8x32xf32>, vector<4x8x32xf32>, vector<4x8x8xf32> -> vector<4x8x8xf32>
    "tpu.trace_stop"() : () -> ()
    %cst_321 = arith.constant 0.176776692 : f32
    %455 = vector.broadcast %cst_321 : f32 to vector<4x8x8xf32>
    %456 = arith.mulf %454, %455 : vector<4x8x8xf32>
    %457 = vector.shape_cast %10 : vector<8x8xf32> to vector<1x8x8xf32>
    %458 = vector.broadcast %457 : vector<1x8x8xf32> to vector<4x8x8xf32>
    %459 = arith.addf %456, %458 : vector<4x8x8xf32>
    %cst_322 = arith.constant dense<0xFF800000> : vector<4x8xf32>
    %460 = vector.multi_reduction <maximumf>, %459, %cst_322 [2] : vector<4x8x8xf32> to vector<4x8xf32>
    %461 = vector.shape_cast %460 : vector<4x8xf32> to vector<4x8x1xf32>
    %462 = vector.broadcast %461 : vector<4x8x1xf32> to vector<4x8x8xf32>
    %463 = arith.subf %459, %462 : vector<4x8x8xf32>
    %464 = math.exp %463 : vector<4x8x8xf32>
    %cst_323 = arith.constant dense<0.000000e+00> : vector<4x8xf32>
    %465 = vector.multi_reduction <add>, %464, %cst_323 [2] : vector<4x8x8xf32> to vector<4x8xf32>
    %466 = vector.shape_cast %465 : vector<4x8xf32> to vector<4x8x1xf32>
    %467 = tpu.reciprocal %466 : vector<4x8x1xf32> -> vector<4x8x1xf32>
    %468 = vector.broadcast %467 : vector<4x8x1xf32> to vector<4x8x8xf32>
    %469 = arith.mulf %464, %468 : vector<4x8x8xf32>
    "tpu.trace_start"() <{level = 10 : i32, message = "hqk,hkd->hqd"}> : () -> ()
    %cst_324 = arith.constant dense<0.000000e+00> : vector<4x8x32xf32>
    %470 = tpu.matmul %469, %453, %cst_324 {dimension_numbers = #tpu.dot_dimension_numbers<[2], [1], [1], [2], [0, 0, 0, 1, 1, 2], [0], [0]>} : vector<4x8x8xf32>, vector<4x8x32xf32>, vector<4x8x32xf32> -> vector<4x8x32xf32>
    %cst_325 = arith.constant 0.000000e+00 : f32
    "tpu.trace_stop"() : () -> ()
    %471 = vector.broadcast %cst_325 : f32 to vector<8x128xf32>
    %472 = vector.extract_strided_slice %470 {offsets = [0, 0, 0], sizes = [1, 8, 32], strides = [1, 1, 1]} : vector<4x8x32xf32> to vector<1x8x32xf32>
    %473 = vector.shape_cast %472 : vector<1x8x32xf32> to vector<8x32xf32>
    %c0_326 = arith.constant 0 : index
    %c0_327 = arith.constant 0 : index
    %c0_328 = arith.constant 0 : index
    %474 = vector.load %arg20[%c0_326, %c0_327, %c0_328] : memref<4x32x128xf32, #tpu.memory_space<vmem>>, vector<1x32x128xf32>
    %475 = vector.shape_cast %474 : vector<1x32x128xf32> to vector<32x128xf32>
    %cst_329 = arith.constant dense<0.000000e+00> : vector<8x128xf32>
    %476 = tpu.matmul %473, %475, %cst_329 {dimension_numbers = #tpu.dot_dimension_numbers<[1], [0], [0], [1], [0, 0, 1, 1], [], []>} : vector<8x32xf32>, vector<32x128xf32>, vector<8x128xf32> -> vector<8x128xf32>
    %477 = arith.addf %471, %476 : vector<8x128xf32>
    %478 = vector.extract_strided_slice %470 {offsets = [1, 0, 0], sizes = [1, 8, 32], strides = [1, 1, 1]} : vector<4x8x32xf32> to vector<1x8x32xf32>
    %479 = vector.shape_cast %478 : vector<1x8x32xf32> to vector<8x32xf32>
    %c1_330 = arith.constant 1 : index
    %c0_331 = arith.constant 0 : index
    %c0_332 = arith.constant 0 : index
    %480 = vector.load %arg20[%c1_330, %c0_331, %c0_332] : memref<4x32x128xf32, #tpu.memory_space<vmem>>, vector<1x32x128xf32>
    %481 = vector.shape_cast %480 : vector<1x32x128xf32> to vector<32x128xf32>
    %cst_333 = arith.constant dense<0.000000e+00> : vector<8x128xf32>
    %482 = tpu.matmul %479, %481, %cst_333 {dimension_numbers = #tpu.dot_dimension_numbers<[1], [0], [0], [1], [0, 0, 1, 1], [], []>} : vector<8x32xf32>, vector<32x128xf32>, vector<8x128xf32> -> vector<8x128xf32>
    %483 = arith.addf %477, %482 : vector<8x128xf32>
    %484 = vector.extract_strided_slice %470 {offsets = [2, 0, 0], sizes = [1, 8, 32], strides = [1, 1, 1]} : vector<4x8x32xf32> to vector<1x8x32xf32>
    %485 = vector.shape_cast %484 : vector<1x8x32xf32> to vector<8x32xf32>
    %c2_334 = arith.constant 2 : index
    %c0_335 = arith.constant 0 : index
    %c0_336 = arith.constant 0 : index
    %486 = vector.load %arg20[%c2_334, %c0_335, %c0_336] : memref<4x32x128xf32, #tpu.memory_space<vmem>>, vector<1x32x128xf32>
    %487 = vector.shape_cast %486 : vector<1x32x128xf32> to vector<32x128xf32>
    %cst_337 = arith.constant dense<0.000000e+00> : vector<8x128xf32>
    %488 = tpu.matmul %485, %487, %cst_337 {dimension_numbers = #tpu.dot_dimension_numbers<[1], [0], [0], [1], [0, 0, 1, 1], [], []>} : vector<8x32xf32>, vector<32x128xf32>, vector<8x128xf32> -> vector<8x128xf32>
    %489 = arith.addf %483, %488 : vector<8x128xf32>
    %490 = vector.extract_strided_slice %470 {offsets = [3, 0, 0], sizes = [1, 8, 32], strides = [1, 1, 1]} : vector<4x8x32xf32> to vector<1x8x32xf32>
    %491 = vector.shape_cast %490 : vector<1x8x32xf32> to vector<8x32xf32>
    %c3_338 = arith.constant 3 : index
    %c0_339 = arith.constant 0 : index
    %c0_340 = arith.constant 0 : index
    %492 = vector.load %arg20[%c3_338, %c0_339, %c0_340] : memref<4x32x128xf32, #tpu.memory_space<vmem>>, vector<1x32x128xf32>
    %493 = vector.shape_cast %492 : vector<1x32x128xf32> to vector<32x128xf32>
    %cst_341 = arith.constant dense<0.000000e+00> : vector<8x128xf32>
    %494 = tpu.matmul %491, %493, %cst_341 {dimension_numbers = #tpu.dot_dimension_numbers<[1], [0], [0], [1], [0, 0, 1, 1], [], []>} : vector<8x32xf32>, vector<32x128xf32>, vector<8x128xf32> -> vector<8x128xf32>
    %495 = arith.addf %489, %494 : vector<8x128xf32>
    %c0_342 = arith.constant 0 : index
    %c0_343 = arith.constant 0 : index
    %496 = vector.load %arg21[%c0_342, %c0_343] : memref<1x128xf32, #tpu.memory_space<vmem>>, vector<1x128xf32>
    %497 = vector.broadcast %496 : vector<1x128xf32> to vector<8x128xf32>
    %498 = arith.addf %495, %497 : vector<8x128xf32>
    %499 = vector.extract_strided_slice %344 {offsets = [8, 0], sizes = [8, 128], strides = [1, 1]} : vector<16x128xf32> to vector<8x128xf32>
    %500 = vector.extract_strided_slice %351 {offsets = [8, 0], sizes = [8, 128], strides = [1, 1]} : vector<16x128xf32> to vector<8x128xf32>
    %501 = vector.extract_strided_slice %1 {offsets = [8, 0], sizes = [8, 128], strides = [1, 1]} : vector<16x128xf32> to vector<8x128xf32>
    %c0_344 = arith.constant 0 : index
    %c0_345 = arith.constant 0 : index
    %c0_346 = arith.constant 0 : index
    %502 = vector.load %arg14[%c0_344, %c0_345, %c0_346] : memref<4x128x32xf32, #tpu.memory_space<vmem>>, vector<1x128x32xf32>
    %503 = vector.shape_cast %502 : vector<1x128x32xf32> to vector<128x32xf32>
    %cst_347 = arith.constant dense<0.000000e+00> : vector<8x32xf32>
    %504 = tpu.matmul %499, %503, %cst_347 {dimension_numbers = #tpu.dot_dimension_numbers<[1], [0], [0], [1], [0, 0, 1, 1], [], []>} : vector<8x128xf32>, vector<128x32xf32>, vector<8x32xf32> -> vector<8x32xf32>
    %c0_348 = arith.constant 0 : index
    %c0_349 = arith.constant 0 : index
    %c0_350 = arith.constant 0 : index
    %505 = vector.load %arg17[%c0_348, %c0_349, %c0_350] : memref<4x1x32xf32, #tpu.memory_space<vmem>>, vector<1x1x32xf32>
    %506 = vector.shape_cast %505 : vector<1x1x32xf32> to vector<1x32xf32>
    %507 = vector.broadcast %506 : vector<1x32xf32> to vector<8x32xf32>
    %508 = arith.addf %504, %507 : vector<8x32xf32>
    %c1_351 = arith.constant 1 : index
    %c0_352 = arith.constant 0 : index
    %c0_353 = arith.constant 0 : index
    %509 = vector.load %arg14[%c1_351, %c0_352, %c0_353] : memref<4x128x32xf32, #tpu.memory_space<vmem>>, vector<1x128x32xf32>
    %510 = vector.shape_cast %509 : vector<1x128x32xf32> to vector<128x32xf32>
    %cst_354 = arith.constant dense<0.000000e+00> : vector<8x32xf32>
    %511 = tpu.matmul %499, %510, %cst_354 {dimension_numbers = #tpu.dot_dimension_numbers<[1], [0], [0], [1], [0, 0, 1, 1], [], []>} : vector<8x128xf32>, vector<128x32xf32>, vector<8x32xf32> -> vector<8x32xf32>
    %c1_355 = arith.constant 1 : index
    %c0_356 = arith.constant 0 : index
    %c0_357 = arith.constant 0 : index
    %512 = vector.load %arg17[%c1_355, %c0_356, %c0_357] : memref<4x1x32xf32, #tpu.memory_space<vmem>>, vector<1x1x32xf32>
    %513 = vector.shape_cast %512 : vector<1x1x32xf32> to vector<1x32xf32>
    %514 = vector.broadcast %513 : vector<1x32xf32> to vector<8x32xf32>
    %515 = arith.addf %511, %514 : vector<8x32xf32>
    %c2_358 = arith.constant 2 : index
    %c0_359 = arith.constant 0 : index
    %c0_360 = arith.constant 0 : index
    %516 = vector.load %arg14[%c2_358, %c0_359, %c0_360] : memref<4x128x32xf32, #tpu.memory_space<vmem>>, vector<1x128x32xf32>
    %517 = vector.shape_cast %516 : vector<1x128x32xf32> to vector<128x32xf32>
    %cst_361 = arith.constant dense<0.000000e+00> : vector<8x32xf32>
    %518 = tpu.matmul %499, %517, %cst_361 {dimension_numbers = #tpu.dot_dimension_numbers<[1], [0], [0], [1], [0, 0, 1, 1], [], []>} : vector<8x128xf32>, vector<128x32xf32>, vector<8x32xf32> -> vector<8x32xf32>
    %c2_362 = arith.constant 2 : index
    %c0_363 = arith.constant 0 : index
    %c0_364 = arith.constant 0 : index
    %519 = vector.load %arg17[%c2_362, %c0_363, %c0_364] : memref<4x1x32xf32, #tpu.memory_space<vmem>>, vector<1x1x32xf32>
    %520 = vector.shape_cast %519 : vector<1x1x32xf32> to vector<1x32xf32>
    %521 = vector.broadcast %520 : vector<1x32xf32> to vector<8x32xf32>
    %522 = arith.addf %518, %521 : vector<8x32xf32>
    %c3_365 = arith.constant 3 : index
    %c0_366 = arith.constant 0 : index
    %c0_367 = arith.constant 0 : index
    %523 = vector.load %arg14[%c3_365, %c0_366, %c0_367] : memref<4x128x32xf32, #tpu.memory_space<vmem>>, vector<1x128x32xf32>
    %524 = vector.shape_cast %523 : vector<1x128x32xf32> to vector<128x32xf32>
    %cst_368 = arith.constant dense<0.000000e+00> : vector<8x32xf32>
    %525 = tpu.matmul %499, %524, %cst_368 {dimension_numbers = #tpu.dot_dimension_numbers<[1], [0], [0], [1], [0, 0, 1, 1], [], []>} : vector<8x128xf32>, vector<128x32xf32>, vector<8x32xf32> -> vector<8x32xf32>
    %c3_369 = arith.constant 3 : index
    %c0_370 = arith.constant 0 : index
    %c0_371 = arith.constant 0 : index
    %526 = vector.load %arg17[%c3_369, %c0_370, %c0_371] : memref<4x1x32xf32, #tpu.memory_space<vmem>>, vector<1x1x32xf32>
    %527 = vector.shape_cast %526 : vector<1x1x32xf32> to vector<1x32xf32>
    %528 = vector.broadcast %527 : vector<1x32xf32> to vector<8x32xf32>
    %529 = arith.addf %525, %528 : vector<8x32xf32>
    %530 = vector.shape_cast %508 : vector<8x32xf32> to vector<1x8x32xf32>
    %531 = vector.shape_cast %515 : vector<8x32xf32> to vector<1x8x32xf32>
    %532 = vector.shape_cast %522 : vector<8x32xf32> to vector<1x8x32xf32>
    %533 = vector.shape_cast %529 : vector<8x32xf32> to vector<1x8x32xf32>
    %534 = tpu.concatenate %530, %531, %532, %533 in 0 : vector<1x8x32xf32>, vector<1x8x32xf32>, vector<1x8x32xf32>, vector<1x8x32xf32> -> vector<4x8x32xf32>
    %c0_372 = arith.constant 0 : index
    %c0_373 = arith.constant 0 : index
    %c0_374 = arith.constant 0 : index
    %535 = vector.load %arg15[%c0_372, %c0_373, %c0_374] : memref<4x128x32xf32, #tpu.memory_space<vmem>>, vector<1x128x32xf32>
    %536 = vector.shape_cast %535 : vector<1x128x32xf32> to vector<128x32xf32>
    %cst_375 = arith.constant dense<0.000000e+00> : vector<8x32xf32>
    %537 = tpu.matmul %500, %536, %cst_375 {dimension_numbers = #tpu.dot_dimension_numbers<[1], [0], [0], [1], [0, 0, 1, 1], [], []>} : vector<8x128xf32>, vector<128x32xf32>, vector<8x32xf32> -> vector<8x32xf32>
    %c0_376 = arith.constant 0 : index
    %c0_377 = arith.constant 0 : index
    %c0_378 = arith.constant 0 : index
    %538 = vector.load %arg18[%c0_376, %c0_377, %c0_378] : memref<4x1x32xf32, #tpu.memory_space<vmem>>, vector<1x1x32xf32>
    %539 = vector.shape_cast %538 : vector<1x1x32xf32> to vector<1x32xf32>
    %540 = vector.broadcast %539 : vector<1x32xf32> to vector<8x32xf32>
    %541 = arith.addf %537, %540 : vector<8x32xf32>
    %c1_379 = arith.constant 1 : index
    %c0_380 = arith.constant 0 : index
    %c0_381 = arith.constant 0 : index
    %542 = vector.load %arg15[%c1_379, %c0_380, %c0_381] : memref<4x128x32xf32, #tpu.memory_space<vmem>>, vector<1x128x32xf32>
    %543 = vector.shape_cast %542 : vector<1x128x32xf32> to vector<128x32xf32>
    %cst_382 = arith.constant dense<0.000000e+00> : vector<8x32xf32>
    %544 = tpu.matmul %500, %543, %cst_382 {dimension_numbers = #tpu.dot_dimension_numbers<[1], [0], [0], [1], [0, 0, 1, 1], [], []>} : vector<8x128xf32>, vector<128x32xf32>, vector<8x32xf32> -> vector<8x32xf32>
    %c1_383 = arith.constant 1 : index
    %c0_384 = arith.constant 0 : index
    %c0_385 = arith.constant 0 : index
    %545 = vector.load %arg18[%c1_383, %c0_384, %c0_385] : memref<4x1x32xf32, #tpu.memory_space<vmem>>, vector<1x1x32xf32>
    %546 = vector.shape_cast %545 : vector<1x1x32xf32> to vector<1x32xf32>
    %547 = vector.broadcast %546 : vector<1x32xf32> to vector<8x32xf32>
    %548 = arith.addf %544, %547 : vector<8x32xf32>
    %c2_386 = arith.constant 2 : index
    %c0_387 = arith.constant 0 : index
    %c0_388 = arith.constant 0 : index
    %549 = vector.load %arg15[%c2_386, %c0_387, %c0_388] : memref<4x128x32xf32, #tpu.memory_space<vmem>>, vector<1x128x32xf32>
    %550 = vector.shape_cast %549 : vector<1x128x32xf32> to vector<128x32xf32>
    %cst_389 = arith.constant dense<0.000000e+00> : vector<8x32xf32>
    %551 = tpu.matmul %500, %550, %cst_389 {dimension_numbers = #tpu.dot_dimension_numbers<[1], [0], [0], [1], [0, 0, 1, 1], [], []>} : vector<8x128xf32>, vector<128x32xf32>, vector<8x32xf32> -> vector<8x32xf32>
    %c2_390 = arith.constant 2 : index
    %c0_391 = arith.constant 0 : index
    %c0_392 = arith.constant 0 : index
    %552 = vector.load %arg18[%c2_390, %c0_391, %c0_392] : memref<4x1x32xf32, #tpu.memory_space<vmem>>, vector<1x1x32xf32>
    %553 = vector.shape_cast %552 : vector<1x1x32xf32> to vector<1x32xf32>
    %554 = vector.broadcast %553 : vector<1x32xf32> to vector<8x32xf32>
    %555 = arith.addf %551, %554 : vector<8x32xf32>
    %c3_393 = arith.constant 3 : index
    %c0_394 = arith.constant 0 : index
    %c0_395 = arith.constant 0 : index
    %556 = vector.load %arg15[%c3_393, %c0_394, %c0_395] : memref<4x128x32xf32, #tpu.memory_space<vmem>>, vector<1x128x32xf32>
    %557 = vector.shape_cast %556 : vector<1x128x32xf32> to vector<128x32xf32>
    %cst_396 = arith.constant dense<0.000000e+00> : vector<8x32xf32>
    %558 = tpu.matmul %500, %557, %cst_396 {dimension_numbers = #tpu.dot_dimension_numbers<[1], [0], [0], [1], [0, 0, 1, 1], [], []>} : vector<8x128xf32>, vector<128x32xf32>, vector<8x32xf32> -> vector<8x32xf32>
    %c3_397 = arith.constant 3 : index
    %c0_398 = arith.constant 0 : index
    %c0_399 = arith.constant 0 : index
    %559 = vector.load %arg18[%c3_397, %c0_398, %c0_399] : memref<4x1x32xf32, #tpu.memory_space<vmem>>, vector<1x1x32xf32>
    %560 = vector.shape_cast %559 : vector<1x1x32xf32> to vector<1x32xf32>
    %561 = vector.broadcast %560 : vector<1x32xf32> to vector<8x32xf32>
    %562 = arith.addf %558, %561 : vector<8x32xf32>
    %563 = vector.shape_cast %541 : vector<8x32xf32> to vector<1x8x32xf32>
    %564 = vector.shape_cast %548 : vector<8x32xf32> to vector<1x8x32xf32>
    %565 = vector.shape_cast %555 : vector<8x32xf32> to vector<1x8x32xf32>
    %566 = vector.shape_cast %562 : vector<8x32xf32> to vector<1x8x32xf32>
    %567 = tpu.concatenate %563, %564, %565, %566 in 0 : vector<1x8x32xf32>, vector<1x8x32xf32>, vector<1x8x32xf32>, vector<1x8x32xf32> -> vector<4x8x32xf32>
    %c0_400 = arith.constant 0 : index
    %c0_401 = arith.constant 0 : index
    %c0_402 = arith.constant 0 : index
    %568 = vector.load %arg16[%c0_400, %c0_401, %c0_402] : memref<4x128x32xf32, #tpu.memory_space<vmem>>, vector<1x128x32xf32>
    %569 = vector.shape_cast %568 : vector<1x128x32xf32> to vector<128x32xf32>
    %cst_403 = arith.constant dense<0.000000e+00> : vector<8x32xf32>
    %570 = tpu.matmul %501, %569, %cst_403 {dimension_numbers = #tpu.dot_dimension_numbers<[1], [0], [0], [1], [0, 0, 1, 1], [], []>} : vector<8x128xf32>, vector<128x32xf32>, vector<8x32xf32> -> vector<8x32xf32>
    %c0_404 = arith.constant 0 : index
    %c0_405 = arith.constant 0 : index
    %c0_406 = arith.constant 0 : index
    %571 = vector.load %arg19[%c0_404, %c0_405, %c0_406] : memref<4x1x32xf32, #tpu.memory_space<vmem>>, vector<1x1x32xf32>
    %572 = vector.shape_cast %571 : vector<1x1x32xf32> to vector<1x32xf32>
    %573 = vector.broadcast %572 : vector<1x32xf32> to vector<8x32xf32>
    %574 = arith.addf %570, %573 : vector<8x32xf32>
    %c1_407 = arith.constant 1 : index
    %c0_408 = arith.constant 0 : index
    %c0_409 = arith.constant 0 : index
    %575 = vector.load %arg16[%c1_407, %c0_408, %c0_409] : memref<4x128x32xf32, #tpu.memory_space<vmem>>, vector<1x128x32xf32>
    %576 = vector.shape_cast %575 : vector<1x128x32xf32> to vector<128x32xf32>
    %cst_410 = arith.constant dense<0.000000e+00> : vector<8x32xf32>
    %577 = tpu.matmul %501, %576, %cst_410 {dimension_numbers = #tpu.dot_dimension_numbers<[1], [0], [0], [1], [0, 0, 1, 1], [], []>} : vector<8x128xf32>, vector<128x32xf32>, vector<8x32xf32> -> vector<8x32xf32>
    %c1_411 = arith.constant 1 : index
    %c0_412 = arith.constant 0 : index
    %c0_413 = arith.constant 0 : index
    %578 = vector.load %arg19[%c1_411, %c0_412, %c0_413] : memref<4x1x32xf32, #tpu.memory_space<vmem>>, vector<1x1x32xf32>
    %579 = vector.shape_cast %578 : vector<1x1x32xf32> to vector<1x32xf32>
    %580 = vector.broadcast %579 : vector<1x32xf32> to vector<8x32xf32>
    %581 = arith.addf %577, %580 : vector<8x32xf32>
    %c2_414 = arith.constant 2 : index
    %c0_415 = arith.constant 0 : index
    %c0_416 = arith.constant 0 : index
    %582 = vector.load %arg16[%c2_414, %c0_415, %c0_416] : memref<4x128x32xf32, #tpu.memory_space<vmem>>, vector<1x128x32xf32>
    %583 = vector.shape_cast %582 : vector<1x128x32xf32> to vector<128x32xf32>
    %cst_417 = arith.constant dense<0.000000e+00> : vector<8x32xf32>
    %584 = tpu.matmul %501, %583, %cst_417 {dimension_numbers = #tpu.dot_dimension_numbers<[1], [0], [0], [1], [0, 0, 1, 1], [], []>} : vector<8x128xf32>, vector<128x32xf32>, vector<8x32xf32> -> vector<8x32xf32>
    %c2_418 = arith.constant 2 : index
    %c0_419 = arith.constant 0 : index
    %c0_420 = arith.constant 0 : index
    %585 = vector.load %arg19[%c2_418, %c0_419, %c0_420] : memref<4x1x32xf32, #tpu.memory_space<vmem>>, vector<1x1x32xf32>
    %586 = vector.shape_cast %585 : vector<1x1x32xf32> to vector<1x32xf32>
    %587 = vector.broadcast %586 : vector<1x32xf32> to vector<8x32xf32>
    %588 = arith.addf %584, %587 : vector<8x32xf32>
    %c3_421 = arith.constant 3 : index
    %c0_422 = arith.constant 0 : index
    %c0_423 = arith.constant 0 : index
    %589 = vector.load %arg16[%c3_421, %c0_422, %c0_423] : memref<4x128x32xf32, #tpu.memory_space<vmem>>, vector<1x128x32xf32>
    %590 = vector.shape_cast %589 : vector<1x128x32xf32> to vector<128x32xf32>
    %cst_424 = arith.constant dense<0.000000e+00> : vector<8x32xf32>
    %591 = tpu.matmul %501, %590, %cst_424 {dimension_numbers = #tpu.dot_dimension_numbers<[1], [0], [0], [1], [0, 0, 1, 1], [], []>} : vector<8x128xf32>, vector<128x32xf32>, vector<8x32xf32> -> vector<8x32xf32>
    %c3_425 = arith.constant 3 : index
    %c0_426 = arith.constant 0 : index
    %c0_427 = arith.constant 0 : index
    %592 = vector.load %arg19[%c3_425, %c0_426, %c0_427] : memref<4x1x32xf32, #tpu.memory_space<vmem>>, vector<1x1x32xf32>
    %593 = vector.shape_cast %592 : vector<1x1x32xf32> to vector<1x32xf32>
    %594 = vector.broadcast %593 : vector<1x32xf32> to vector<8x32xf32>
    %595 = arith.addf %591, %594 : vector<8x32xf32>
    %596 = vector.shape_cast %574 : vector<8x32xf32> to vector<1x8x32xf32>
    %597 = vector.shape_cast %581 : vector<8x32xf32> to vector<1x8x32xf32>
    %598 = vector.shape_cast %588 : vector<8x32xf32> to vector<1x8x32xf32>
    %599 = vector.shape_cast %595 : vector<8x32xf32> to vector<1x8x32xf32>
    %600 = tpu.concatenate %596, %597, %598, %599 in 0 : vector<1x8x32xf32>, vector<1x8x32xf32>, vector<1x8x32xf32>, vector<1x8x32xf32> -> vector<4x8x32xf32>
    "tpu.trace_start"() <{level = 10 : i32, message = "hqd,hkd->hqk"}> : () -> ()
    %cst_428 = arith.constant dense<0.000000e+00> : vector<4x8x8xf32>
    %601 = tpu.matmul %534, %567, %cst_428 {dimension_numbers = #tpu.dot_dimension_numbers<[2], [2], [1], [1], [0, 0, 0, 1, 1, 1], [0], [0]>} : vector<4x8x32xf32>, vector<4x8x32xf32>, vector<4x8x8xf32> -> vector<4x8x8xf32>
    "tpu.trace_stop"() : () -> ()
    %cst_429 = arith.constant 0.176776692 : f32
    %602 = vector.broadcast %cst_429 : f32 to vector<4x8x8xf32>
    %603 = arith.mulf %601, %602 : vector<4x8x8xf32>
    %604 = vector.shape_cast %10 : vector<8x8xf32> to vector<1x8x8xf32>
    %605 = vector.broadcast %604 : vector<1x8x8xf32> to vector<4x8x8xf32>
    %606 = arith.addf %603, %605 : vector<4x8x8xf32>
    %cst_430 = arith.constant dense<0xFF800000> : vector<4x8xf32>
    %607 = vector.multi_reduction <maximumf>, %606, %cst_430 [2] : vector<4x8x8xf32> to vector<4x8xf32>
    %608 = vector.shape_cast %607 : vector<4x8xf32> to vector<4x8x1xf32>
    %609 = vector.broadcast %608 : vector<4x8x1xf32> to vector<4x8x8xf32>
    %610 = arith.subf %606, %609 : vector<4x8x8xf32>
    %611 = math.exp %610 : vector<4x8x8xf32>
    %cst_431 = arith.constant dense<0.000000e+00> : vector<4x8xf32>
    %612 = vector.multi_reduction <add>, %611, %cst_431 [2] : vector<4x8x8xf32> to vector<4x8xf32>
    %613 = vector.shape_cast %612 : vector<4x8xf32> to vector<4x8x1xf32>
    %614 = tpu.reciprocal %613 : vector<4x8x1xf32> -> vector<4x8x1xf32>
    %615 = vector.broadcast %614 : vector<4x8x1xf32> to vector<4x8x8xf32>
    %616 = arith.mulf %611, %615 : vector<4x8x8xf32>
    "tpu.trace_start"() <{level = 10 : i32, message = "hqk,hkd->hqd"}> : () -> ()
    %cst_432 = arith.constant dense<0.000000e+00> : vector<4x8x32xf32>
    %617 = tpu.matmul %616, %600, %cst_432 {dimension_numbers = #tpu.dot_dimension_numbers<[2], [1], [1], [2], [0, 0, 0, 1, 1, 2], [0], [0]>} : vector<4x8x8xf32>, vector<4x8x32xf32>, vector<4x8x32xf32> -> vector<4x8x32xf32>
    %cst_433 = arith.constant 0.000000e+00 : f32
    "tpu.trace_stop"() : () -> ()
    %618 = vector.broadcast %cst_433 : f32 to vector<8x128xf32>
    %619 = vector.extract_strided_slice %617 {offsets = [0, 0, 0], sizes = [1, 8, 32], strides = [1, 1, 1]} : vector<4x8x32xf32> to vector<1x8x32xf32>
    %620 = vector.shape_cast %619 : vector<1x8x32xf32> to vector<8x32xf32>
    %c0_434 = arith.constant 0 : index
    %c0_435 = arith.constant 0 : index
    %c0_436 = arith.constant 0 : index
    %621 = vector.load %arg20[%c0_434, %c0_435, %c0_436] : memref<4x32x128xf32, #tpu.memory_space<vmem>>, vector<1x32x128xf32>
    %622 = vector.shape_cast %621 : vector<1x32x128xf32> to vector<32x128xf32>
    %cst_437 = arith.constant dense<0.000000e+00> : vector<8x128xf32>
    %623 = tpu.matmul %620, %622, %cst_437 {dimension_numbers = #tpu.dot_dimension_numbers<[1], [0], [0], [1], [0, 0, 1, 1], [], []>} : vector<8x32xf32>, vector<32x128xf32>, vector<8x128xf32> -> vector<8x128xf32>
    %624 = arith.addf %618, %623 : vector<8x128xf32>
    %625 = vector.extract_strided_slice %617 {offsets = [1, 0, 0], sizes = [1, 8, 32], strides = [1, 1, 1]} : vector<4x8x32xf32> to vector<1x8x32xf32>
    %626 = vector.shape_cast %625 : vector<1x8x32xf32> to vector<8x32xf32>
    %c1_438 = arith.constant 1 : index
    %c0_439 = arith.constant 0 : index
    %c0_440 = arith.constant 0 : index
    %627 = vector.load %arg20[%c1_438, %c0_439, %c0_440] : memref<4x32x128xf32, #tpu.memory_space<vmem>>, vector<1x32x128xf32>
    %628 = vector.shape_cast %627 : vector<1x32x128xf32> to vector<32x128xf32>
    %cst_441 = arith.constant dense<0.000000e+00> : vector<8x128xf32>
    %629 = tpu.matmul %626, %628, %cst_441 {dimension_numbers = #tpu.dot_dimension_numbers<[1], [0], [0], [1], [0, 0, 1, 1], [], []>} : vector<8x32xf32>, vector<32x128xf32>, vector<8x128xf32> -> vector<8x128xf32>
    %630 = arith.addf %624, %629 : vector<8x128xf32>
    %631 = vector.extract_strided_slice %617 {offsets = [2, 0, 0], sizes = [1, 8, 32], strides = [1, 1, 1]} : vector<4x8x32xf32> to vector<1x8x32xf32>
    %632 = vector.shape_cast %631 : vector<1x8x32xf32> to vector<8x32xf32>
    %c2_442 = arith.constant 2 : index
    %c0_443 = arith.constant 0 : index
    %c0_444 = arith.constant 0 : index
    %633 = vector.load %arg20[%c2_442, %c0_443, %c0_444] : memref<4x32x128xf32, #tpu.memory_space<vmem>>, vector<1x32x128xf32>
    %634 = vector.shape_cast %633 : vector<1x32x128xf32> to vector<32x128xf32>
    %cst_445 = arith.constant dense<0.000000e+00> : vector<8x128xf32>
    %635 = tpu.matmul %632, %634, %cst_445 {dimension_numbers = #tpu.dot_dimension_numbers<[1], [0], [0], [1], [0, 0, 1, 1], [], []>} : vector<8x32xf32>, vector<32x128xf32>, vector<8x128xf32> -> vector<8x128xf32>
    %636 = arith.addf %630, %635 : vector<8x128xf32>
    %637 = vector.extract_strided_slice %617 {offsets = [3, 0, 0], sizes = [1, 8, 32], strides = [1, 1, 1]} : vector<4x8x32xf32> to vector<1x8x32xf32>
    %638 = vector.shape_cast %637 : vector<1x8x32xf32> to vector<8x32xf32>
    %c3_446 = arith.constant 3 : index
    %c0_447 = arith.constant 0 : index
    %c0_448 = arith.constant 0 : index
    %639 = vector.load %arg20[%c3_446, %c0_447, %c0_448] : memref<4x32x128xf32, #tpu.memory_space<vmem>>, vector<1x32x128xf32>
    %640 = vector.shape_cast %639 : vector<1x32x128xf32> to vector<32x128xf32>
    %cst_449 = arith.constant dense<0.000000e+00> : vector<8x128xf32>
    %641 = tpu.matmul %638, %640, %cst_449 {dimension_numbers = #tpu.dot_dimension_numbers<[1], [0], [0], [1], [0, 0, 1, 1], [], []>} : vector<8x32xf32>, vector<32x128xf32>, vector<8x128xf32> -> vector<8x128xf32>
    %642 = arith.addf %636, %641 : vector<8x128xf32>
    %c0_450 = arith.constant 0 : index
    %c0_451 = arith.constant 0 : index
    %643 = vector.load %arg21[%c0_450, %c0_451] : memref<1x128xf32, #tpu.memory_space<vmem>>, vector<1x128xf32>
    %644 = vector.broadcast %643 : vector<1x128xf32> to vector<8x128xf32>
    %645 = arith.addf %642, %644 : vector<8x128xf32>
    %646 = tpu.concatenate %498, %645 in 0 : vector<8x128xf32>, vector<8x128xf32> -> vector<16x128xf32>
    %647 = arith.addf %337, %646 : vector<16x128xf32>
    %cst_452 = arith.constant dense<0.000000e+00> : vector<16xf32>
    %648 = vector.multi_reduction <add>, %647, %cst_452 [1] : vector<16x128xf32> to vector<16xf32>
    %649 = vector.shape_cast %648 : vector<16xf32> to vector<16x1xf32>
    %cst_453 = arith.constant 1.280000e+02 : f32
    %650 = vector.broadcast %cst_453 : f32 to vector<16x1xf32>
    %651 = arith.divf %649, %650 : vector<16x1xf32>
    %652 = vector.broadcast %651 : vector<16x1xf32> to vector<16x128xf32>
    %653 = arith.subf %647, %652 : vector<16x128xf32>
    %654 = arith.mulf %653, %653 : vector<16x128xf32>
    %cst_454 = arith.constant dense<0.000000e+00> : vector<16xf32>
    %655 = vector.multi_reduction <add>, %654, %cst_454 [1] : vector<16x128xf32> to vector<16xf32>
    %656 = vector.shape_cast %655 : vector<16xf32> to vector<16x1xf32>
    %cst_455 = arith.constant 1.280000e+02 : f32
    %657 = vector.broadcast %cst_455 : f32 to vector<16x1xf32>
    %658 = arith.divf %656, %657 : vector<16x1xf32>
    %659 = vector.broadcast %651 : vector<16x1xf32> to vector<16x128xf32>
    %660 = arith.subf %647, %659 : vector<16x128xf32>
    %cst_456 = arith.constant 9.99999974E-6 : f32
    %661 = vector.broadcast %cst_456 : f32 to vector<16x1xf32>
    %662 = arith.addf %658, %661 : vector<16x1xf32>
    %663 = math.rsqrt %662 : vector<16x1xf32>
    %664 = vector.broadcast %663 : vector<16x1xf32> to vector<16x128xf32>
    %665 = arith.mulf %660, %664 : vector<16x128xf32>
    %c0_457 = arith.constant 0 : index
    %c0_458 = arith.constant 0 : index
    %666 = vector.load %arg28[%c0_457, %c0_458] : memref<1x128xf32, #tpu.memory_space<vmem>>, vector<1x128xf32>
    %667 = vector.broadcast %666 : vector<1x128xf32> to vector<16x128xf32>
    %668 = arith.mulf %665, %667 : vector<16x128xf32>
    %c0_459 = arith.constant 0 : index
    %c0_460 = arith.constant 0 : index
    %669 = vector.load %arg29[%c0_459, %c0_460] : memref<1x128xf32, #tpu.memory_space<vmem>>, vector<1x128xf32>
    %670 = vector.broadcast %669 : vector<1x128xf32> to vector<16x128xf32>
    %671 = arith.addf %668, %670 : vector<16x128xf32>
    %c0_461 = arith.constant 0 : index
    %c0_462 = arith.constant 0 : index
    %672 = vector.load %arg22[%c0_461, %c0_462] : memref<128x256xf32, #tpu.memory_space<vmem>>, vector<128x256xf32>
    %cst_463 = arith.constant dense<0.000000e+00> : vector<16x256xf32>
    %673 = tpu.matmul %671, %672, %cst_463 {dimension_numbers = #tpu.dot_dimension_numbers<[1], [0], [0], [1], [0, 0, 1, 1], [], []>} : vector<16x128xf32>, vector<128x256xf32>, vector<16x256xf32> -> vector<16x256xf32>
    %c0_464 = arith.constant 0 : index
    %c0_465 = arith.constant 0 : index
    %674 = vector.load %arg23[%c0_464, %c0_465] : memref<1x256xf32, #tpu.memory_space<vmem>>, vector<1x256xf32>
    %675 = vector.broadcast %674 : vector<1x256xf32> to vector<16x256xf32>
    %676 = arith.addf %673, %675 : vector<16x256xf32>
    %cst_466 = arith.constant 0.000000e+00 : f32
    %677 = vector.broadcast %cst_466 : f32 to vector<16x256xf32>
    %678 = arith.maximumf %676, %677 : vector<16x256xf32>
    %c0_467 = arith.constant 0 : index
    %c0_468 = arith.constant 0 : index
    %679 = vector.load %arg24[%c0_467, %c0_468] : memref<256x128xf32, #tpu.memory_space<vmem>>, vector<256x128xf32>
    %cst_469 = arith.constant dense<0.000000e+00> : vector<16x128xf32>
    %680 = tpu.matmul %678, %679, %cst_469 {dimension_numbers = #tpu.dot_dimension_numbers<[1], [0], [0], [1], [0, 0, 1, 1], [], []>} : vector<16x256xf32>, vector<256x128xf32>, vector<16x128xf32> -> vector<16x128xf32>
    %c0_470 = arith.constant 0 : index
    %c0_471 = arith.constant 0 : index
    %681 = vector.load %arg25[%c0_470, %c0_471] : memref<1x128xf32, #tpu.memory_space<vmem>>, vector<1x128xf32>
    %682 = vector.broadcast %681 : vector<1x128xf32> to vector<16x128xf32>
    %683 = arith.addf %680, %682 : vector<16x128xf32>
    %684 = arith.addf %671, %683 : vector<16x128xf32>
    %cst_472 = arith.constant dense<0.000000e+00> : vector<16xf32>
    %685 = vector.multi_reduction <add>, %684, %cst_472 [1] : vector<16x128xf32> to vector<16xf32>
    %686 = vector.shape_cast %685 : vector<16xf32> to vector<16x1xf32>
    %cst_473 = arith.constant 1.280000e+02 : f32
    %687 = vector.broadcast %cst_473 : f32 to vector<16x1xf32>
    %688 = arith.divf %686, %687 : vector<16x1xf32>
    %689 = vector.broadcast %688 : vector<16x1xf32> to vector<16x128xf32>
    %690 = arith.subf %684, %689 : vector<16x128xf32>
    %691 = arith.mulf %690, %690 : vector<16x128xf32>
    %cst_474 = arith.constant dense<0.000000e+00> : vector<16xf32>
    %692 = vector.multi_reduction <add>, %691, %cst_474 [1] : vector<16x128xf32> to vector<16xf32>
    %693 = vector.shape_cast %692 : vector<16xf32> to vector<16x1xf32>
    %cst_475 = arith.constant 1.280000e+02 : f32
    %694 = vector.broadcast %cst_475 : f32 to vector<16x1xf32>
    %695 = arith.divf %693, %694 : vector<16x1xf32>
    %696 = vector.broadcast %688 : vector<16x1xf32> to vector<16x128xf32>
    %697 = arith.subf %684, %696 : vector<16x128xf32>
    %cst_476 = arith.constant 9.99999974E-6 : f32
    %698 = vector.broadcast %cst_476 : f32 to vector<16x1xf32>
    %699 = arith.addf %695, %698 : vector<16x1xf32>
    %700 = math.rsqrt %699 : vector<16x1xf32>
    %701 = vector.broadcast %700 : vector<16x1xf32> to vector<16x128xf32>
    %702 = arith.mulf %697, %701 : vector<16x128xf32>
    %c0_477 = arith.constant 0 : index
    %c0_478 = arith.constant 0 : index
    %703 = vector.load %arg30[%c0_477, %c0_478] : memref<1x128xf32, #tpu.memory_space<vmem>>, vector<1x128xf32>
    %704 = vector.broadcast %703 : vector<1x128xf32> to vector<16x128xf32>
    %705 = arith.mulf %702, %704 : vector<16x128xf32>
    %c0_479 = arith.constant 0 : index
    %c0_480 = arith.constant 0 : index
    %706 = vector.load %arg31[%c0_479, %c0_480] : memref<1x128xf32, #tpu.memory_space<vmem>>, vector<1x128xf32>
    %707 = vector.broadcast %706 : vector<1x128xf32> to vector<16x128xf32>
    %708 = arith.addf %705, %707 : vector<16x128xf32>
    %c0_481 = arith.constant 0 : index
    %c0_482 = arith.constant 0 : index
    %709 = vector.load %arg32[%c0_481, %c0_482] : memref<16x128xf32, #tpu.memory_space<vmem>>, vector<16x128xf32>
    tpu.vector_store %arg32[%c0_481, %c0_482], %708 {strides = array<i32>} : memref<16x128xf32, #tpu.memory_space<vmem>>, vector<16x128xf32>,
    return
  }
  func.func @transform_0(%arg0: i32) -> (i32, i32) {
    %c0_i32 = arith.constant 0 : i32
    %c0_i32_0 = arith.constant 0 : i32
    %c0_i32_1 = arith.constant 0 : i32
    return %c0_i32, %c0_i32_0 : i32, i32
  }
  func.func @transform_1(%arg0: i32) -> (i32, i32) {
    %c0_i32 = arith.constant 0 : i32
    %c0_i32_0 = arith.constant 0 : i32
    %c0_i32_1 = arith.constant 0 : i32
    return %c0_i32, %c0_i32_0 : i32, i32
  }
  func.func @transform_2(%arg0: i32) -> (i32, i32) {
    %c0_i32 = arith.constant 0 : i32
    %c0_i32_0 = arith.constant 0 : i32
    %c0_i32_1 = arith.constant 0 : i32
    return %c0_i32, %c0_i32_0 : i32, i32
  }
  func.func @transform_3(%arg0: i32) -> (i32, i32) {
    %c0_i32 = arith.constant 0 : i32
    %c0_i32_0 = arith.constant 0 : i32
    %c0_i32_1 = arith.constant 0 : i32
    return %c0_i32, %c0_i32_0 : i32, i32
  }
  func.func @transform_4(%arg0: i32) -> (i32, i32) {
    %c0_i32 = arith.constant 0 : i32
    %c0_i32_0 = arith.constant 0 : i32
    %c0_i32_1 = arith.constant 0 : i32
    return %c0_i32, %c0_i32_0 : i32, i32
  }
  func.func @transform_5(%arg0: i32) -> (i32, i32, i32) {
    %c0_i32 = arith.constant 0 : i32
    %c0_i32_0 = arith.constant 0 : i32
    %c0_i32_1 = arith.constant 0 : i32
    %c0_i32_2 = arith.constant 0 : i32
    return %c0_i32, %c0_i32_0, %c0_i32_1 : i32, i32, i32
  }
  func.func @transform_6(%arg0: i32) -> (i32, i32, i32) {
    %c0_i32 = arith.constant 0 : i32
    %c0_i32_0 = arith.constant 0 : i32
    %c0_i32_1 = arith.constant 0 : i32
    %c0_i32_2 = arith.constant 0 : i32
    return %c0_i32, %c0_i32_0, %c0_i32_1 : i32, i32, i32
  }
  func.func @transform_7(%arg0: i32) -> (i32, i32, i32) {
    %c0_i32 = arith.constant 0 : i32
    %c0_i32_0 = arith.constant 0 : i32
    %c0_i32_1 = arith.constant 0 : i32
    %c0_i32_2 = arith.constant 0 : i32
    return %c0_i32, %c0_i32_0, %c0_i32_1 : i32, i32, i32
  }
  func.func @transform_8(%arg0: i32) -> (i32, i32, i32) {
    %c0_i32 = arith.constant 0 : i32
    %c0_i32_0 = arith.constant 0 : i32
    %c0_i32_1 = arith.constant 0 : i32
    %c0_i32_2 = arith.constant 0 : i32
    return %c0_i32, %c0_i32_0, %c0_i32_1 : i32, i32, i32
  }
  func.func @transform_9(%arg0: i32) -> (i32, i32, i32) {
    %c0_i32 = arith.constant 0 : i32
    %c0_i32_0 = arith.constant 0 : i32
    %c0_i32_1 = arith.constant 0 : i32
    %c0_i32_2 = arith.constant 0 : i32
    return %c0_i32, %c0_i32_0, %c0_i32_1 : i32, i32, i32
  }
  func.func @transform_10(%arg0: i32) -> (i32, i32, i32) {
    %c0_i32 = arith.constant 0 : i32
    %c0_i32_0 = arith.constant 0 : i32
    %c0_i32_1 = arith.constant 0 : i32
    %c0_i32_2 = arith.constant 0 : i32
    return %c0_i32, %c0_i32_0, %c0_i32_1 : i32, i32, i32
  }
  func.func @transform_11(%arg0: i32) -> (i32, i32, i32) {
    %c0_i32 = arith.constant 0 : i32
    %c0_i32_0 = arith.constant 0 : i32
    %c0_i32_1 = arith.constant 0 : i32
    %c0_i32_2 = arith.constant 0 : i32
    return %c0_i32, %c0_i32_0, %c0_i32_1 : i32, i32, i32
  }
  func.func @transform_12(%arg0: i32) -> (i32, i32) {
    %c0_i32 = arith.constant 0 : i32
    %c0_i32_0 = arith.constant 0 : i32
    %c0_i32_1 = arith.constant 0 : i32
    return %c0_i32, %c0_i32_0 : i32, i32
  }
  func.func @transform_13(%arg0: i32) -> (i32, i32, i32) {
    %c0_i32 = arith.constant 0 : i32
    %c0_i32_0 = arith.constant 0 : i32
    %c0_i32_1 = arith.constant 0 : i32
    %c0_i32_2 = arith.constant 0 : i32
    return %c0_i32, %c0_i32_0, %c0_i32_1 : i32, i32, i32
  }
  func.func @transform_14(%arg0: i32) -> (i32, i32, i32) {
    %c0_i32 = arith.constant 0 : i32
    %c0_i32_0 = arith.constant 0 : i32
    %c0_i32_1 = arith.constant 0 : i32
    %c0_i32_2 = arith.constant 0 : i32
    return %c0_i32, %c0_i32_0, %c0_i32_1 : i32, i32, i32
  }
  func.func @transform_15(%arg0: i32) -> (i32, i32, i32) {
    %c0_i32 = arith.constant 0 : i32
    %c0_i32_0 = arith.constant 0 : i32
    %c0_i32_1 = arith.constant 0 : i32
    %c0_i32_2 = arith.constant 0 : i32
    return %c0_i32, %c0_i32_0, %c0_i32_1 : i32, i32, i32
  }
  func.func @transform_16(%arg0: i32) -> (i32, i32, i32) {
    %c0_i32 = arith.constant 0 : i32
    %c0_i32_0 = arith.constant 0 : i32
    %c0_i32_1 = arith.constant 0 : i32
    %c0_i32_2 = arith.constant 0 : i32
    return %c0_i32, %c0_i32_0, %c0_i32_1 : i32, i32, i32
  }
  func.func @transform_17(%arg0: i32) -> (i32, i32, i32) {
    %c0_i32 = arith.constant 0 : i32
    %c0_i32_0 = arith.constant 0 : i32
    %c0_i32_1 = arith.constant 0 : i32
    %c0_i32_2 = arith.constant 0 : i32
    return %c0_i32, %c0_i32_0, %c0_i32_1 : i32, i32, i32
  }
  func.func @transform_18(%arg0: i32) -> (i32, i32, i32) {
    %c0_i32 = arith.constant 0 : i32
    %c0_i32_0 = arith.constant 0 : i32
    %c0_i32_1 = arith.constant 0 : i32
    %c0_i32_2 = arith.constant 0 : i32
    return %c0_i32, %c0_i32_0, %c0_i32_1 : i32, i32, i32
  }
  func.func @transform_19(%arg0: i32) -> (i32, i32, i32) {
    %c0_i32 = arith.constant 0 : i32
    %c0_i32_0 = arith.constant 0 : i32
    %c0_i32_1 = arith.constant 0 : i32
    %c0_i32_2 = arith.constant 0 : i32
    return %c0_i32, %c0_i32_0, %c0_i32_1 : i32, i32, i32
  }
  func.func @transform_20(%arg0: i32) -> (i32, i32) {
    %c0_i32 = arith.constant 0 : i32
    %c0_i32_0 = arith.constant 0 : i32
    %c0_i32_1 = arith.constant 0 : i32
    return %c0_i32, %c0_i32_0 : i32, i32
  }
  func.func @transform_21(%arg0: i32) -> (i32, i32) {
    %c0_i32 = arith.constant 0 : i32
    %c0_i32_0 = arith.constant 0 : i32
    %c0_i32_1 = arith.constant 0 : i32
    return %c0_i32, %c0_i32_0 : i32, i32
  }
  func.func @transform_22(%arg0: i32) -> (i32, i32) {
    %c0_i32 = arith.constant 0 : i32
    %c0_i32_0 = arith.constant 0 : i32
    %c0_i32_1 = arith.constant 0 : i32
    return %c0_i32, %c0_i32_0 : i32, i32
  }
  func.func @transform_23(%arg0: i32) -> (i32, i32) {
    %c0_i32 = arith.constant 0 : i32
    %c0_i32_0 = arith.constant 0 : i32
    %c0_i32_1 = arith.constant 0 : i32
    return %c0_i32, %c0_i32_0 : i32, i32
  }
  func.func @transform_24(%arg0: i32) -> (i32, i32) {
    %c0_i32 = arith.constant 0 : i32
    %c0_i32_0 = arith.constant 0 : i32
    %c0_i32_1 = arith.constant 0 : i32
    return %c0_i32, %c0_i32_0 : i32, i32
  }
  func.func @transform_25(%arg0: i32) -> (i32, i32) {
    %c0_i32 = arith.constant 0 : i32
    %c0_i32_0 = arith.constant 0 : i32
    %c0_i32_1 = arith.constant 0 : i32
    return %c0_i32, %c0_i32_0 : i32, i32
  }
  func.func @transform_26(%arg0: i32) -> (i32, i32) {
    %c0_i32 = arith.constant 0 : i32
    %c0_i32_0 = arith.constant 0 : i32
    %c0_i32_1 = arith.constant 0 : i32
    return %c0_i32, %c0_i32_0 : i32, i32
  }
  func.func @transform_27(%arg0: i32) -> (i32, i32) {
    %c0_i32 = arith.constant 0 : i32
    %c0_i32_0 = arith.constant 0 : i32
    %c0_i32_1 = arith.constant 0 : i32
    return %c0_i32, %c0_i32_0 : i32, i32
  }
  func.func @transform_28(%arg0: i32) -> (i32, i32) {
    %c0_i32 = arith.constant 0 : i32
    %c0_i32_0 = arith.constant 0 : i32
    %c0_i32_1 = arith.constant 0 : i32
    return %c0_i32, %c0_i32_0 : i32, i32
  }
  func.func @transform_29(%arg0: i32) -> (i32, i32) {
    %c0_i32 = arith.constant 0 : i32
    %c0_i32_0 = arith.constant 0 : i32
    %c0_i32_1 = arith.constant 0 : i32
    return %c0_i32, %c0_i32_0 : i32, i32
  }
  func.func @transform_30(%arg0: i32) -> (i32, i32) {
    %c0_i32 = arith.constant 0 : i32
    %c0_i32_0 = arith.constant 0 : i32
    %c0_i32_1 = arith.constant 0 : i32
    return %c0_i32, %c0_i32_0 : i32, i32
  }
  func.func @transform_31(%arg0: i32) -> (i32, i32) {
    %c0_i32 = arith.constant 0 : i32
    %c0_i32_0 = arith.constant 0 : i32
    %c0_i32_1 = arith.constant 0 : i32
    return %c0_i32, %c0_i32_0 : i32, i32
  }
}

</mosaic_0001>

<llo_original>
// kernel: tpu_custom_call.1
$region0: #{tpu_custom_call.1}
  #allocation0 [shape = 'u32[]', space=smem, size = 0x4, offset = 0x4, fixed_abs, tag = 'smem constant byte address 0x4 - core index']
  #allocation1 [shape = 'u32[144,128]{1,0:T(1,128)}', space=vmem, size = 0x12000, scoped, tag = 'internal scratch']
  %s0 = inlined_call_operand.smem [shape: u32[32], index: -1, kind: input, shape index: {}]
  %s1 = sld [smem:[%s0]]
  %s2 = scalar_lea.smem %s0, 1
  %s3 = sld [smem:[%s2]]
  %s4 = scalar_lea.smem %s0, 2
  %s5 = sld [smem:[%s4]]
  %s6 = scalar_lea.smem %s0, 3
  %s7 = sld [smem:[%s6]]
  %s8 = scalar_lea.smem %s0, 4
  %s9 = sld [smem:[%s8]]
  %s10 = scalar_lea.smem %s0, 5
  %s11 = sld [smem:[%s10]]
  %s12 = scalar_lea.smem %s0, 6
  %s13 = sld [smem:[%s12]]
  %s14 = scalar_lea.smem %s0, 7
  %s15 = sld [smem:[%s14]]
  %s16 = scalar_lea.smem %s0, 8
  %s17 = sld [smem:[%s16]]
  %s18 = scalar_lea.smem %s0, 9
  %s19 = sld [smem:[%s18]]
  %s20 = scalar_lea.smem %s0, 10
  %s21 = sld [smem:[%s20]]
  %s22 = scalar_lea.smem %s0, 11
  %s23 = sld [smem:[%s22]]
  %s24 = scalar_lea.smem %s0, 12
  %s25 = sld [smem:[%s24]]
  %s26 = scalar_lea.smem %s0, 13
  %s27 = sld [smem:[%s26]]
  %s28 = scalar_lea.smem %s0, 14
  %s29 = sld [smem:[%s28]]
  %s30 = scalar_lea.smem %s0, 15
  %s31 = sld [smem:[%s30]]
  %s32 = scalar_lea.smem %s0, 16
  %s33 = sld [smem:[%s32]]
  %s34 = scalar_lea.smem %s0, 17
  %s35 = sld [smem:[%s34]]
  %s36 = scalar_lea.smem %s0, 18
  %s37 = sld [smem:[%s36]]
  %s38 = scalar_lea.smem %s0, 19
  %s39 = sld [smem:[%s38]]
  %s40 = scalar_lea.smem %s0, 20
  %s41 = sld [smem:[%s40]]
  %s42 = scalar_lea.smem %s0, 21
  %s43 = sld [smem:[%s42]]
  %s44 = scalar_lea.smem %s0, 22
  %s45 = sld [smem:[%s44]]
  %s46 = scalar_lea.smem %s0, 23
  %s47 = sld [smem:[%s46]]
  %s48 = scalar_lea.smem %s0, 24
  %s49 = sld [smem:[%s48]]
  %s50 = scalar_lea.smem %s0, 25
  %s51 = sld [smem:[%s50]]
  %s52 = scalar_lea.smem %s0, 26
  %s53 = sld [smem:[%s52]]
  %s54 = scalar_lea.smem %s0, 27
  %s55 = sld [smem:[%s54]]
  %s56 = scalar_lea.smem %s0, 28
  %s57 = sld [smem:[%s56]]
  %s58 = scalar_lea.smem %s0, 29
  %s59 = sld [smem:[%s58]]
  %s60 = scalar_lea.smem %s0, 30
  %s61 = sld [smem:[%s60]]
  %s62 = scalar_lea.smem %s0, 31
  %s63 = sld [smem:[%s62]]
  %s64 = sld [smem:[#allocation0]]
  $region134: #{tpu_custom_call.1} parent=0
    _
  %s66 = ssub.s32 1, %s64
  %s67 = scalar_select 0, %s66, %s64
  $region1: #{tpu_custom_call.1} parent=0
    #allocation2 [shape = 'u8[8192]{0}', space=vmem, size = 0x2000, scoped, tag = 'output window, operand 0, single buffered']
    #allocation3 [shape = 's32[1]{0}', space=sflag, size = 0x4, scoped, tag = 'scoped memory for tpu_custom_call.1']
    %68 = vsyncpa [#allocation3], 0
    // Predicated region
    $region2: #{tpu_custom_call.1} parent=1 // pred_check
      _
    $region3: #{tpu_custom_call.1} parent=1 // pred_check_branch
      %70 = sbr.rel (0) target = $region5
    $region4: #{tpu_custom_call.1} parent=1 // pred_region
      _
    $region5: #{tpu_custom_call.1} parent=1 // pred_fallthru
      _
    // Predicated region
    $region6: #{tpu_custom_call.1} parent=1 // pred_check
      _
    $region7: #{tpu_custom_call.1} parent=1 // pred_check_branch
      %72 = sbr.rel (0) target = $region9
    $region8: #{tpu_custom_call.1} parent=1 // pred_region
      _
    $region9: #{tpu_custom_call.1} parent=1 // pred_fallthru
      _
    // Predicated region
    $region10: #{tpu_custom_call.1} parent=1 // pred_check
      _
    $region11: #{tpu_custom_call.1} parent=1 // pred_check_branch
      %74 = sbr.rel (0) target = $region13
    $region12: #{tpu_custom_call.1} parent=1 // pred_region
      _
    $region13: #{tpu_custom_call.1} parent=1 // pred_fallthru
      _
    // Predicated region
    $region14: #{tpu_custom_call.1} parent=1 // pred_check
      _
    $region15: #{tpu_custom_call.1} parent=1 // pred_check_branch
      %76 = sbr.rel (0) target = $region17
    $region16: #{tpu_custom_call.1} parent=1 // pred_region
      _
    $region17: #{tpu_custom_call.1} parent=1 // pred_fallthru
      _
    // Predicated region
    $region18: #{tpu_custom_call.1} parent=1 // pred_check
      _
    $region19: #{tpu_custom_call.1} parent=1 // pred_check_branch
      %78 = sbr.rel (0) target = $region21
    $region20: #{tpu_custom_call.1} parent=1 // pred_region
      _
    $region21: #{tpu_custom_call.1} parent=1 // pred_fallthru
      _
    // Predicated region
    $region22: #{tpu_custom_call.1} parent=1 // pred_check
      _
    $region23: #{tpu_custom_call.1} parent=1 // pred_check_branch
      %80 = sbr.rel (0) target = $region25
    $region24: #{tpu_custom_call.1} parent=1 // pred_region
      _
    $region25: #{tpu_custom_call.1} parent=1 // pred_fallthru
      _
    // Predicated region
    $region26: #{tpu_custom_call.1} parent=1 // pred_check
      _
    $region27: #{tpu_custom_call.1} parent=1 // pred_check_branch
      %82 = sbr.rel (0) target = $region29
    $region28: #{tpu_custom_call.1} parent=1 // pred_region
      _
    $region29: #{tpu_custom_call.1} parent=1 // pred_fallthru
      _
    // Predicated region
    $region30: #{tpu_custom_call.1} parent=1 // pred_check
      _
    $region31: #{tpu_custom_call.1} parent=1 // pred_check_branch
      %84 = sbr.rel (0) target = $region33
    $region32: #{tpu_custom_call.1} parent=1 // pred_region
      _
    $region33: #{tpu_custom_call.1} parent=1 // pred_fallthru
      _
    // Predicated region
    $region34: #{tpu_custom_call.1} parent=1 // pred_check
      _
    $region35: #{tpu_custom_call.1} parent=1 // pred_check_branch
      %86 = sbr.rel (0) target = $region37
    $region36: #{tpu_custom_call.1} parent=1 // pred_region
      _
    $region37: #{tpu_custom_call.1} parent=1 // pred_fallthru
      _
    // Predicated region
    $region38: #{tpu_custom_call.1} parent=1 // pred_check
      _
    $region39: #{tpu_custom_call.1} parent=1 // pred_check_branch
      %88 = sbr.rel (0) target = $region41
    $region40: #{tpu_custom_call.1} parent=1 // pred_region
      _
    $region41: #{tpu_custom_call.1} parent=1 // pred_fallthru
      _
    // Predicated region
    $region42: #{tpu_custom_call.1} parent=1 // pred_check
      _
    $region43: #{tpu_custom_call.1} parent=1 // pred_check_branch
      %90 = sbr.rel (0) target = $region45
    $region44: #{tpu_custom_call.1} parent=1 // pred_region
      _
    $region45: #{tpu_custom_call.1} parent=1 // pred_fallthru
      _
    // Predicated region
    $region46: #{tpu_custom_call.1} parent=1 // pred_check
      _
    $region47: #{tpu_custom_call.1} parent=1 // pred_check_branch
      %92 = sbr.rel (0) target = $region49
    $region48: #{tpu_custom_call.1} parent=1 // pred_region
      _
    $region49: #{tpu_custom_call.1} parent=1 // pred_fallthru
      _
    // Predicated region
    $region50: #{tpu_custom_call.1} parent=1 // pred_check
      _
    $region51: #{tpu_custom_call.1} parent=1 // pred_check_branch
      %94 = sbr.rel (0) target = $region53
    $region52: #{tpu_custom_call.1} parent=1 // pred_region
      _
    $region53: #{tpu_custom_call.1} parent=1 // pred_fallthru
      _
    // Predicated region
    $region54: #{tpu_custom_call.1} parent=1 // pred_check
      _
    $region55: #{tpu_custom_call.1} parent=1 // pred_check_branch
      %96 = sbr.rel (0) target = $region57
    $region56: #{tpu_custom_call.1} parent=1 // pred_region
      _
    $region57: #{tpu_custom_call.1} parent=1 // pred_fallthru
      _
    // Predicated region
    $region58: #{tpu_custom_call.1} parent=1 // pred_check
      _
    $region59: #{tpu_custom_call.1} parent=1 // pred_check_branch
      %98 = sbr.rel (0) target = $region61
    $region60: #{tpu_custom_call.1} parent=1 // pred_region
      _
    $region61: #{tpu_custom_call.1} parent=1 // pred_fallthru
      _
    // Predicated region
    $region62: #{tpu_custom_call.1} parent=1 // pred_check
      _
    $region63: #{tpu_custom_call.1} parent=1 // pred_check_branch
      %100 = sbr.rel (0) target = $region65
    $region64: #{tpu_custom_call.1} parent=1 // pred_region
      _
    $region65: #{tpu_custom_call.1} parent=1 // pred_fallthru
      _
    // Predicated region
    $region66: #{tpu_custom_call.1} parent=1 // pred_check
      _
    $region67: #{tpu_custom_call.1} parent=1 // pred_check_branch
      %102 = sbr.rel (0) target = $region69
    $region68: #{tpu_custom_call.1} parent=1 // pred_region
      _
    $region69: #{tpu_custom_call.1} parent=1 // pred_fallthru
      _
    // Predicated region
    $region70: #{tpu_custom_call.1} parent=1 // pred_check
      _
    $region71: #{tpu_custom_call.1} parent=1 // pred_check_branch
      %104 = sbr.rel (0) target = $region73
    $region72: #{tpu_custom_call.1} parent=1 // pred_region
      _
    $region73: #{tpu_custom_call.1} parent=1 // pred_fallthru
      _
    // Predicated region
    $region74: #{tpu_custom_call.1} parent=1 // pred_check
      _
    $region75: #{tpu_custom_call.1} parent=1 // pred_check_branch
      %106 = sbr.rel (0) target = $region77
    $region76: #{tpu_custom_call.1} parent=1 // pred_region
      _
    $region77: #{tpu_custom_call.1} parent=1 // pred_fallthru
      _
    // Predicated region
    $region78: #{tpu_custom_call.1} parent=1 // pred_check
      _
    $region79: #{tpu_custom_call.1} parent=1 // pred_check_branch
      %108 = sbr.rel (0) target = $region81
    $region80: #{tpu_custom_call.1} parent=1 // pred_region
      _
    $region81: #{tpu_custom_call.1} parent=1 // pred_fallthru
      _
    // Predicated region
    $region82: #{tpu_custom_call.1} parent=1 // pred_check
      _
    $region83: #{tpu_custom_call.1} parent=1 // pred_check_branch
      %110 = sbr.rel (0) target = $region85
    $region84: #{tpu_custom_call.1} parent=1 // pred_region
      _
    $region85: #{tpu_custom_call.1} parent=1 // pred_fallthru
      _
    // Predicated region
    $region86: #{tpu_custom_call.1} parent=1 // pred_check
      _
    $region87: #{tpu_custom_call.1} parent=1 // pred_check_branch
      %112 = sbr.rel (0) target = $region89
    $region88: #{tpu_custom_call.1} parent=1 // pred_region
      _
    $region89: #{tpu_custom_call.1} parent=1 // pred_fallthru
      _
    // Predicated region
    $region90: #{tpu_custom_call.1} parent=1 // pred_check
      _
    $region91: #{tpu_custom_call.1} parent=1 // pred_check_branch
      %114 = sbr.rel (0) target = $region93
    $region92: #{tpu_custom_call.1} parent=1 // pred_region
      _
    $region93: #{tpu_custom_call.1} parent=1 // pred_fallthru
      _
    // Predicated region
    $region94: #{tpu_custom_call.1} parent=1 // pred_check
      _
    $region95: #{tpu_custom_call.1} parent=1 // pred_check_branch
      %116 = sbr.rel (0) target = $region97
    $region96: #{tpu_custom_call.1} parent=1 // pred_region
      _
    $region97: #{tpu_custom_call.1} parent=1 // pred_fallthru
      _
    // Predicated region
    $region98: #{tpu_custom_call.1} parent=1 // pred_check
      _
    $region99: #{tpu_custom_call.1} parent=1 // pred_check_branch
      %118 = sbr.rel (0) target = $region101
    $region100: #{tpu_custom_call.1} parent=1 // pred_region
      _
    $region101: #{tpu_custom_call.1} parent=1 // pred_fallthru
      _
    // Predicated region
    $region102: #{tpu_custom_call.1} parent=1 // pred_check
      _
    $region103: #{tpu_custom_call.1} parent=1 // pred_check_branch
      %120 = sbr.rel (0) target = $region105
    $region104: #{tpu_custom_call.1} parent=1 // pred_region
      _
    $region105: #{tpu_custom_call.1} parent=1 // pred_fallthru
      _
    // Predicated region
    $region106: #{tpu_custom_call.1} parent=1 // pred_check
      _
    $region107: #{tpu_custom_call.1} parent=1 // pred_check_branch
      %122 = sbr.rel (0) target = $region109
    $region108: #{tpu_custom_call.1} parent=1 // pred_region
      _
    $region109: #{tpu_custom_call.1} parent=1 // pred_fallthru
      _
    // Predicated region
    $region110: #{tpu_custom_call.1} parent=1 // pred_check
      _
    $region111: #{tpu_custom_call.1} parent=1 // pred_check_branch
      %124 = sbr.rel (0) target = $region113
    $region112: #{tpu_custom_call.1} parent=1 // pred_region
      _
    $region113: #{tpu_custom_call.1} parent=1 // pred_fallthru
      _
    // Predicated region
    $region114: #{tpu_custom_call.1} parent=1 // pred_check
      _
    $region115: #{tpu_custom_call.1} parent=1 // pred_check_branch
      %126 = sbr.rel (0) target = $region117
    $region116: #{tpu_custom_call.1} parent=1 // pred_region
      _
    $region117: #{tpu_custom_call.1} parent=1 // pred_fallthru
      _
    // Predicated region
    $region118: #{tpu_custom_call.1} parent=1 // pred_check
      _
    $region119: #{tpu_custom_call.1} parent=1 // pred_check_branch
      %128 = sbr.rel (0) target = $region121
    $region120: #{tpu_custom_call.1} parent=1 // pred_region
      _
    $region121: #{tpu_custom_call.1} parent=1 // pred_fallthru
      _
    // Predicated region
    $region122: #{tpu_custom_call.1} parent=1 // pred_check
      _
    $region123: #{tpu_custom_call.1} parent=1 // pred_check_branch
      %130 = sbr.rel (0) target = $region125
    $region124: #{tpu_custom_call.1} parent=1 // pred_region
      _
    $region125: #{tpu_custom_call.1} parent=1 // pred_fallthru
      _
    %v131 = vld [vmem:[%s1] sm:$0xff]
    %v132 = vld [vmem:[%s1 + $0x8] sm:$0xff]
    %v133 = vld [vmem:[%s3] sm:$0xff]
    %v134 = vld [vmem:[%s3 + $0x8] sm:$0xff]
    %v135 = vld [vmem:[%s5] sm:$0xff]
    %v136 = vld [vmem:[%s5 + $0x8] sm:$0xff]
    %v137 = vld [vmem:[%s7] sm:$0xff]
    %v138 = vld [vmem:[%s7 + $0x8] sm:$0xff]
    %v139 = vld [vmem:[%s9] sm:$0xff]
    %v140 = vld [vmem:[%s9 + $0x8] sm:$0xff]
    %v141 = vlaneseq
    %v142 = vshrl.u32 %v141, 7
    %v143 = vlaneseq
    %v144 = vand.u32 %v143, 127
    %vm145 = vcmp.ge.s32.totalorder %v142, %v144
    %v146 = vsel %vm145, 0.0, -1e+30
    %147 = vrot.lane.b32.xlu0 %v131, 127
    %v148 = vpop.permute.xlu0 %147
    %149 = vrot.lane.b32.xlu0 %v132, 127
    %v150 = vpop.permute.xlu0 %149
    %151 = vrot.lane.b32.xlu0 %v131, 1
    %v152 = vpop.permute.xlu0 %151
    %153 = vrot.lane.b32.xlu0 %v132, 1
    %v154 = vpop.permute.xlu0 %153
    %v155 = vmul.f32 %v131, %v135
    %v156 = vmul.f32 %v132, %v136
    %v157 = vmul.f32 %v148, %v137
    %v158 = vmul.f32 %v150, %v138
    %v159 = vadd.f32 %v155, %v157
    %v160 = vadd.f32 %v156, %v158
    %v161 = vmul.f32 %v152, %v139
    %v162 = vmul.f32 %v154, %v140
    %v163 = vadd.f32 %v159, %v161
    %v164 = vadd.f32 %v160, %v162
    %v165 = vld [vmem:[%s11] sm:$0xff]
    %v166 = vld [vmem:[%s11 + $0x8] sm:$0xff]
    %v167 = vld [vmem:[%s11 + $0x10] sm:$0xff]
    %v168 = vld [vmem:[%s11 + $0x18] sm:$0xff]
    %v169 = vld [vmem:[%s11 + $0x20] sm:$0xff]
    %v170 = vld [vmem:[%s11 + $0x28] sm:$0xff]
    %v171 = vld [vmem:[%s11 + $0x30] sm:$0xff]
    %v172 = vld [vmem:[%s11 + $0x38] sm:$0xff]
    %v173 = vld [vmem:[%s11 + $0x40] sm:$0xff]
    %v174 = vld [vmem:[%s11 + $0x48] sm:$0xff]
    %v175 = vld [vmem:[%s11 + $0x50] sm:$0xff]
    %v176 = vld [vmem:[%s11 + $0x58] sm:$0xff]
    %v177 = vld [vmem:[%s11 + $0x60] sm:$0xff]
    %v178 = vld [vmem:[%s11 + $0x68] sm:$0xff]
    %v179 = vld [vmem:[%s11 + $0x70] sm:$0xff]
    %v180 = vld [vmem:[%s11 + $0x78] sm:$0xff]
    %v181 = vld [vmem:[%s17] sm:$0x1]
    %v183 = vlaneseq
    %v184 = vshrl.u32 %v183, 7
    %v185 = vsub.s32 0, %v184
    %v186 = vrot.slane %v181, %v185
    %188 = vmatprep.subr.mxu0 0.0
    %189 = vmatpush1.msra.mxu0 %v165
    %190 = vmatprep.subr.mxu0 0.0
    %191 = vmatpush1.msra.mxu0 %v166
    %192 = vmatprep.subr.mxu0 0.0
    %193 = vmatpush1.msra.mxu0 %v167
    %194 = vmatprep.subr.mxu0 0.0
    %195 = vmatpush1.msra.mxu0 %v168
    %196 = vmatprep.subr.mxu0 0.0
    %197 = vmatpush1.msra.mxu0 %v169
    %198 = vmatprep.subr.mxu0 0.0
    %199 = vmatpush1.msra.mxu0 %v170
    %200 = vmatprep.subr.mxu0 0.0
    %201 = vmatpush1.msra.mxu0 %v171
    %202 = vmatprep.subr.mxu0 0.0
    %203 = vmatpush1.msra.mxu0 %v172
    %204 = vmatprep.subr.mxu0 0.0
    %205 = vmatpush1.msra.mxu0 %v173
    %206 = vmatprep.subr.mxu0 0.0
    %207 = vmatpush1.msra.mxu0 %v174
    %208 = vmatprep.subr.mxu0 0.0
    %209 = vmatpush1.msra.mxu0 %v175
    %210 = vmatprep.subr.mxu0 0.0
    %211 = vmatpush1.msra.mxu0 %v176
    %212 = vmatprep.subr.mxu0 0.0
    %213 = vmatpush1.msra.mxu0 %v177
    %214 = vmatprep.subr.mxu0 0.0
    %215 = vmatpush1.msra.mxu0 %v178
    %216 = vmatprep.subr.mxu0 0.0
    %217 = vmatpush1.msra.mxu0 %v179
    %218 = vmatprep.subr.mxu0 0.0
    %219 = vmatpush1.msra.mxu0 %v180
    %220 = vmatprep.subr.mxu0 0.0
    %221 = vmatpush1.msra.mxu0 0.0
    %222 = vmatprep.subr.mxu0 0.0
    %223 = vmatpush1.msra.mxu0 0.0
    %224 = vmatprep.subr.mxu0 0.0
    %225 = vmatpush1.msra.mxu0 0.0
    %226 = vmatprep.subr.mxu0 0.0
    %227 = vmatpush1.msra.mxu0 0.0
    %228 = vmatprep.subr.mxu0 0.0
    %229 = vmatpush1.msra.mxu0 0.0
    %230 = vmatprep.subr.mxu0 0.0
    %231 = vmatpush1.msra.mxu0 0.0
    %232 = vmatprep.subr.mxu0 0.0
    %233 = vmatpush1.msra.mxu0 0.0
    %234 = vmatprep.subr.mxu0 0.0
    %235 = vmatpush1.msra.mxu0 0.0
    %236 = vmatprep.subr.mxu0 0.0
    %237 = vmatpush1.msra.mxu0 0.0
    %238 = vmatprep.subr.mxu0 0.0
    %239 = vmatpush1.msra.mxu0 0.0
    %240 = vmatprep.subr.mxu0 0.0
    %241 = vmatpush1.msra.mxu0 0.0
    %242 = vmatprep.subr.mxu0 0.0
    %243 = vmatpush1.msra.mxu0 0.0
    %244 = vmatprep.subr.mxu0 0.0
    %245 = vmatpush1.msra.mxu0 0.0
    %246 = vmatprep.subr.mxu0 0.0
    %247 = vmatpush1.msra.mxu0 0.0
    %248 = vmatprep.subr.mxu0 0.0
    %249 = vmatpush1.msra.mxu0 0.0
    %250 = vmatprep.subr.mxu0 0.0
    %251 = vmatpush1.msra.mxu0 0.0
    %252 = vmatprep.mubr.f32.mxu0 0.0
    %253 = vmatmul.mubr.f32.gmra.mrb[0].mxu0 %v163
    %v254 = vpop.f32.mrb[0].mxu0
    %v255 = vadd.f32 %v186, %v254
    %v256 = vpop.f32.mrb[0].mxu0
    %257 = vdwg.mxu0
    %s258 = scalar_lea.vmem %s11, 128
    %v259 = vld [vmem:[%s258] sm:$0xff]
    %v260 = vld [vmem:[%s258 + $0x8] sm:$0xff]
    %v261 = vld [vmem:[%s258 + $0x10] sm:$0xff]
    %v262 = vld [vmem:[%s258 + $0x18] sm:$0xff]
    %v263 = vld [vmem:[%s258 + $0x20] sm:$0xff]
    %v264 = vld [vmem:[%s258 + $0x28] sm:$0xff]
    %v265 = vld [vmem:[%s258 + $0x30] sm:$0xff]
    %v266 = vld [vmem:[%s258 + $0x38] sm:$0xff]
    %v267 = vld [vmem:[%s258 + $0x40] sm:$0xff]
    %v268 = vld [vmem:[%s258 + $0x48] sm:$0xff]
    %v269 = vld [vmem:[%s258 + $0x50] sm:$0xff]
    %v270 = vld [vmem:[%s258 + $0x58] sm:$0xff]
    %v271 = vld [vmem:[%s258 + $0x60] sm:$0xff]
    %v272 = vld [vmem:[%s258 + $0x68] sm:$0xff]
    %v273 = vld [vmem:[%s258 + $0x70] sm:$0xff]
    %v274 = vld [vmem:[%s258 + $0x78] sm:$0xff]
    %s275 = scalar_lea.vmem %s17, 1
    %v276 = vld [vmem:[%s275] sm:$0x1]
    %v278 = vlaneseq
    %v279 = vshrl.u32 %v278, 7
    %v280 = vsub.s32 0, %v279
    %v281 = vrot.slane %v276, %v280
    %283 = vmatprep.subr.mxu0 0.0
    %284 = vmatpush1.msra.mxu0 %v259
    %285 = vmatprep.subr.mxu0 0.0
    %286 = vmatpush1.msra.mxu0 %v260
    %287 = vmatprep.subr.mxu0 0.0
    %288 = vmatpush1.msra.mxu0 %v261
    %289 = vmatprep.subr.mxu0 0.0
    %290 = vmatpush1.msra.mxu0 %v262
    %291 = vmatprep.subr.mxu0 0.0
    %292 = vmatpush1.msra.mxu0 %v263
    %293 = vmatprep.subr.mxu0 0.0
    %294 = vmatpush1.msra.mxu0 %v264
    %295 = vmatprep.subr.mxu0 0.0
    %296 = vmatpush1.msra.mxu0 %v265
    %297 = vmatprep.subr.mxu0 0.0
    %298 = vmatpush1.msra.mxu0 %v266
    %299 = vmatprep.subr.mxu0 0.0
    %300 = vmatpush1.msra.mxu0 %v267
    %301 = vmatprep.subr.mxu0 0.0
    %302 = vmatpush1.msra.mxu0 %v268
    %303 = vmatprep.subr.mxu0 0.0
    %304 = vmatpush1.msra.mxu0 %v269
    %305 = vmatprep.subr.mxu0 0.0
    %306 = vmatpush1.msra.mxu0 %v270
    %307 = vmatprep.subr.mxu0 0.0
    %308 = vmatpush1.msra.mxu0 %v271
    %309 = vmatprep.subr.mxu0 0.0
    %310 = vmatpush1.msra.mxu0 %v272
    %311 = vmatprep.subr.mxu0 0.0
    %312 = vmatpush1.msra.mxu0 %v273
    %313 = vmatprep.subr.mxu0 0.0
    %314 = vmatpush1.msra.mxu0 %v274
    %315 = vmatprep.subr.mxu0 0.0
    %316 = vmatpush1.msra.mxu0 0.0
    %317 = vmatprep.subr.mxu0 0.0
    %318 = vmatpush1.msra.mxu0 0.0
    %319 = vmatprep.subr.mxu0 0.0
    %320 = vmatpush1.msra.mxu0 0.0
    %321 = vmatprep.subr.mxu0 0.0
    %322 = vmatpush1.msra.mxu0 0.0
    %323 = vmatprep.subr.mxu0 0.0
    %324 = vmatpush1.msra.mxu0 0.0
    %325 = vmatprep.subr.mxu0 0.0
    %326 = vmatpush1.msra.mxu0 0.0
    %327 = vmatprep.subr.mxu0 0.0
    %328 = vmatpush1.msra.mxu0 0.0
    %329 = vmatprep.subr.mxu0 0.0
    %330 = vmatpush1.msra.mxu0 0.0
    %331 = vmatprep.subr.mxu0 0.0
    %332 = vmatpush1.msra.mxu0 0.0
    %333 = vmatprep.subr.mxu0 0.0
    %334 = vmatpush1.msra.mxu0 0.0
    %335 = vmatprep.subr.mxu0 0.0
    %336 = vmatpush1.msra.mxu0 0.0
    %337 = vmatprep.subr.mxu0 0.0
    %338 = vmatpush1.msra.mxu0 0.0
    %339 = vmatprep.subr.mxu0 0.0
    %340 = vmatpush1.msra.mxu0 0.0
    %341 = vmatprep.subr.mxu0 0.0
    %342 = vmatpush1.msra.mxu0 0.0
    %343 = vmatprep.subr.mxu0 0.0
    %344 = vmatpush1.msra.mxu0 0.0
    %345 = vmatprep.subr.mxu0 0.0
    %346 = vmatpush1.msra.mxu0 0.0
    %347 = vmatprep.mubr.f32.mxu0 0.0
    %348 = vmatmul.mubr.f32.gmra.mrb[0].mxu0 %v163
    %v349 = vpop.f32.mrb[0].mxu0
    %v350 = vadd.f32 %v281, %v349
    %v351 = vpop.f32.mrb[0].mxu0
    %352 = vdwg.mxu0
    %s353 = scalar_lea.vmem %s11, 256
    %v354 = vld [vmem:[%s353] sm:$0xff]
    %v355 = vld [vmem:[%s353 + $0x8] sm:$0xff]
    %v356 = vld [vmem:[%s353 + $0x10] sm:$0xff]
    %v357 = vld [vmem:[%s353 + $0x18] sm:$0xff]
    %v358 = vld [vmem:[%s353 + $0x20] sm:$0xff]
    %v359 = vld [vmem:[%s353 + $0x28] sm:$0xff]
    %v360 = vld [vmem:[%s353 + $0x30] sm:$0xff]
    %v361 = vld [vmem:[%s353 + $0x38] sm:$0xff]
    %v362 = vld [vmem:[%s353 + $0x40] sm:$0xff]
    %v363 = vld [vmem:[%s353 + $0x48] sm:$0xff]
    %v364 = vld [vmem:[%s353 + $0x50] sm:$0xff]
    %v365 = vld [vmem:[%s353 + $0x58] sm:$0xff]
    %v366 = vld [vmem:[%s353 + $0x60] sm:$0xff]
    %v367 = vld [vmem:[%s353 + $0x68] sm:$0xff]
    %v368 = vld [vmem:[%s353 + $0x70] sm:$0xff]
    %v369 = vld [vmem:[%s353 + $0x78] sm:$0xff]
    %s370 = scalar_lea.vmem %s17, 2
    %v371 = vld [vmem:[%s370] sm:$0x1]
    %v373 = vlaneseq
    %v374 = vshrl.u32 %v373, 7
    %v375 = vsub.s32 0, %v374
    %v376 = vrot.slane %v371, %v375
    %378 = vmatprep.subr.mxu0 0.0
    %379 = vmatpush1.msra.mxu0 %v354
    %380 = vmatprep.subr.mxu0 0.0
    %381 = vmatpush1.msra.mxu0 %v355
    %382 = vmatprep.subr.mxu0 0.0
    %383 = vmatpush1.msra.mxu0 %v356
    %384 = vmatprep.subr.mxu0 0.0
    %385 = vmatpush1.msra.mxu0 %v357
    %386 = vmatprep.subr.mxu0 0.0
    %387 = vmatpush1.msra.mxu0 %v358
    %388 = vmatprep.subr.mxu0 0.0
    %389 = vmatpush1.msra.mxu0 %v359
    %390 = vmatprep.subr.mxu0 0.0
    %391 = vmatpush1.msra.mxu0 %v360
    %392 = vmatprep.subr.mxu0 0.0
    %393 = vmatpush1.msra.mxu0 %v361
    %394 = vmatprep.subr.mxu0 0.0
    %395 = vmatpush1.msra.mxu0 %v362
    %396 = vmatprep.subr.mxu0 0.0
    %397 = vmatpush1.msra.mxu0 %v363
    %398 = vmatprep.subr.mxu0 0.0
    %399 = vmatpush1.msra.mxu0 %v364
    %400 = vmatprep.subr.mxu0 0.0
    %401 = vmatpush1.msra.mxu0 %v365
    %402 = vmatprep.subr.mxu0 0.0
    %403 = vmatpush1.msra.mxu0 %v366
    %404 = vmatprep.subr.mxu0 0.0
    %405 = vmatpush1.msra.mxu0 %v367
    %406 = vmatprep.subr.mxu0 0.0
    %407 = vmatpush1.msra.mxu0 %v368
    %408 = vmatprep.subr.mxu0 0.0
    %409 = vmatpush1.msra.mxu0 %v369
    %410 = vmatprep.subr.mxu0 0.0
    %411 = vmatpush1.msra.mxu0 0.0
    %412 = vmatprep.subr.mxu0 0.0
    %413 = vmatpush1.msra.mxu0 0.0
    %414 = vmatprep.subr.mxu0 0.0
    %415 = vmatpush1.msra.mxu0 0.0
    %416 = vmatprep.subr.mxu0 0.0
    %417 = vmatpush1.msra.mxu0 0.0
    %418 = vmatprep.subr.mxu0 0.0
    %419 = vmatpush1.msra.mxu0 0.0
    %420 = vmatprep.subr.mxu0 0.0
    %421 = vmatpush1.msra.mxu0 0.0
    %422 = vmatprep.subr.mxu0 0.0
    %423 = vmatpush1.msra.mxu0 0.0
    %424 = vmatprep.subr.mxu0 0.0
    %425 = vmatpush1.msra.mxu0 0.0
    %426 = vmatprep.subr.mxu0 0.0
    %427 = vmatpush1.msra.mxu0 0.0
    %428 = vmatprep.subr.mxu0 0.0
    %429 = vmatpush1.msra.mxu0 0.0
    %430 = vmatprep.subr.mxu0 0.0
    %431 = vmatpush1.msra.mxu0 0.0
    %432 = vmatprep.subr.mxu0 0.0
    %433 = vmatpush1.msra.mxu0 0.0
    %434 = vmatprep.subr.mxu0 0.0
    %435 = vmatpush1.msra.mxu0 0.0
    %436 = vmatprep.subr.mxu0 0.0
    %437 = vmatpush1.msra.mxu0 0.0
    %438 = vmatprep.subr.mxu0 0.0
    %439 = vmatpush1.msra.mxu0 0.0
    %440 = vmatprep.subr.mxu0 0.0
    %441 = vmatpush1.msra.mxu0 0.0
    %442 = vmatprep.mubr.f32.mxu0 0.0
    %443 = vmatmul.mubr.f32.gmra.mrb[0].mxu0 %v163
    %v444 = vpop.f32.mrb[0].mxu0
    %v445 = vadd.f32 %v376, %v444
    %v446 = vpop.f32.mrb[0].mxu0
    %447 = vdwg.mxu0
    %s448 = scalar_lea.vmem %s11, 384
    %v449 = vld [vmem:[%s448] sm:$0xff]
    %v450 = vld [vmem:[%s448 + $0x8] sm:$0xff]
    %v451 = vld [vmem:[%s448 + $0x10] sm:$0xff]
    %v452 = vld [vmem:[%s448 + $0x18] sm:$0xff]
    %v453 = vld [vmem:[%s448 + $0x20] sm:$0xff]
    %v454 = vld [vmem:[%s448 + $0x28] sm:$0xff]
    %v455 = vld [vmem:[%s448 + $0x30] sm:$0xff]
    %v456 = vld [vmem:[%s448 + $0x38] sm:$0xff]
    %v457 = vld [vmem:[%s448 + $0x40] sm:$0xff]
    %v458 = vld [vmem:[%s448 + $0x48] sm:$0xff]
    %v459 = vld [vmem:[%s448 + $0x50] sm:$0xff]
    %v460 = vld [vmem:[%s448 + $0x58] sm:$0xff]
    %v461 = vld [vmem:[%s448 + $0x60] sm:$0xff]
    %v462 = vld [vmem:[%s448 + $0x68] sm:$0xff]
    %v463 = vld [vmem:[%s448 + $0x70] sm:$0xff]
    %v464 = vld [vmem:[%s448 + $0x78] sm:$0xff]
    %s465 = scalar_lea.vmem %s17, 3
    %v466 = vld [vmem:[%s465] sm:$0x1]
    %v468 = vlaneseq
    %v469 = vshrl.u32 %v468, 7
    %v470 = vsub.s32 0, %v469
    %v471 = vrot.slane %v466, %v470
    %473 = vmatprep.subr.mxu0 0.0
    %474 = vmatpush1.msra.mxu0 %v449
    %475 = vmatprep.subr.mxu0 0.0
    %476 = vmatpush1.msra.mxu0 %v450
    %477 = vmatprep.subr.mxu0 0.0
    %478 = vmatpush1.msra.mxu0 %v451
    %479 = vmatprep.subr.mxu0 0.0
    %480 = vmatpush1.msra.mxu0 %v452
    %481 = vmatprep.subr.mxu0 0.0
    %482 = vmatpush1.msra.mxu0 %v453
    %483 = vmatprep.subr.mxu0 0.0
    %484 = vmatpush1.msra.mxu0 %v454
    %485 = vmatprep.subr.mxu0 0.0
    %486 = vmatpush1.msra.mxu0 %v455
    %487 = vmatprep.subr.mxu0 0.0
    %488 = vmatpush1.msra.mxu0 %v456
    %489 = vmatprep.subr.mxu0 0.0
    %490 = vmatpush1.msra.mxu0 %v457
    %491 = vmatprep.subr.mxu0 0.0
    %492 = vmatpush1.msra.mxu0 %v458
    %493 = vmatprep.subr.mxu0 0.0
    %494 = vmatpush1.msra.mxu0 %v459
    %495 = vmatprep.subr.mxu0 0.0
    %496 = vmatpush1.msra.mxu0 %v460
    %497 = vmatprep.subr.mxu0 0.0
    %498 = vmatpush1.msra.mxu0 %v461
    %499 = vmatprep.subr.mxu0 0.0
    %500 = vmatpush1.msra.mxu0 %v462
    %501 = vmatprep.subr.mxu0 0.0
    %502 = vmatpush1.msra.mxu0 %v463
    %503 = vmatprep.subr.mxu0 0.0
    %504 = vmatpush1.msra.mxu0 %v464
    %505 = vmatprep.subr.mxu0 0.0
    %506 = vmatpush1.msra.mxu0 0.0
    %507 = vmatprep.subr.mxu0 0.0
    %508 = vmatpush1.msra.mxu0 0.0
    %509 = vmatprep.subr.mxu0 0.0
    %510 = vmatpush1.msra.mxu0 0.0
    %511 = vmatprep.subr.mxu0 0.0
    %512 = vmatpush1.msra.mxu0 0.0
    %513 = vmatprep.subr.mxu0 0.0
    %514 = vmatpush1.msra.mxu0 0.0
    %515 = vmatprep.subr.mxu0 0.0
    %516 = vmatpush1.msra.mxu0 0.0
    %517 = vmatprep.subr.mxu0 0.0
    %518 = vmatpush1.msra.mxu0 0.0
    %519 = vmatprep.subr.mxu0 0.0
    %520 = vmatpush1.msra.mxu0 0.0
    %521 = vmatprep.subr.mxu0 0.0
    %522 = vmatpush1.msra.mxu0 0.0
    %523 = vmatprep.subr.mxu0 0.0
    %524 = vmatpush1.msra.mxu0 0.0
    %525 = vmatprep.subr.mxu0 0.0
    %526 = vmatpush1.msra.mxu0 0.0
    %527 = vmatprep.subr.mxu0 0.0
    %528 = vmatpush1.msra.mxu0 0.0
    %529 = vmatprep.subr.mxu0 0.0
    %530 = vmatpush1.msra.mxu0 0.0
    %531 = vmatprep.subr.mxu0 0.0
    %532 = vmatpush1.msra.mxu0 0.0
    %533 = vmatprep.subr.mxu0 0.0
    %534 = vmatpush1.msra.mxu0 0.0
    %535 = vmatprep.subr.mxu0 0.0
    %536 = vmatpush1.msra.mxu0 0.0
    %537 = vmatprep.mubr.f32.mxu0 0.0
    %538 = vmatmul.mubr.f32.gmra.mrb[0].mxu0 %v163
    %v539 = vpop.f32.mrb[0].mxu0
    %v540 = vadd.f32 %v471, %v539
    %v541 = vpop.f32.mrb[0].mxu0
    %542 = vdwg.mxu0
    %v543 = vld [vmem:[%s13] sm:$0xff]
    %v544 = vld [vmem:[%s13 + $0x8] sm:$0xff]
    %v545 = vld [vmem:[%s13 + $0x10] sm:$0xff]
    %v546 = vld [vmem:[%s13 + $0x18] sm:$0xff]
    %v547 = vld [vmem:[%s13 + $0x20] sm:$0xff]
    %v548 = vld [vmem:[%s13 + $0x28] sm:$0xff]
    %v549 = vld [vmem:[%s13 + $0x30] sm:$0xff]
    %v550 = vld [vmem:[%s13 + $0x38] sm:$0xff]
    %v551 = vld [vmem:[%s13 + $0x40] sm:$0xff]
    %v552 = vld [vmem:[%s13 + $0x48] sm:$0xff]
    %v553 = vld [vmem:[%s13 + $0x50] sm:$0xff]
    %v554 = vld [vmem:[%s13 + $0x58] sm:$0xff]
    %v555 = vld [vmem:[%s13 + $0x60] sm:$0xff]
    %v556 = vld [vmem:[%s13 + $0x68] sm:$0xff]
    %v557 = vld [vmem:[%s13 + $0x70] sm:$0xff]
    %v558 = vld [vmem:[%s13 + $0x78] sm:$0xff]
    %v559 = vld [vmem:[%s19] sm:$0x1]
    %v561 = vlaneseq
    %v562 = vshrl.u32 %v561, 7
    %v563 = vsub.s32 0, %v562
    %v564 = vrot.slane %v559, %v563
    %566 = vmatprep.subr.mxu0 0.0
    %567 = vmatpush1.msra.mxu0 %v543
    %568 = vmatprep.subr.mxu0 0.0
    %569 = vmatpush1.msra.mxu0 %v544
    %570 = vmatprep.subr.mxu0 0.0
    %571 = vmatpush1.msra.mxu0 %v545
    %572 = vmatprep.subr.mxu0 0.0
    %573 = vmatpush1.msra.mxu0 %v546
    %574 = vmatprep.subr.mxu0 0.0
    %575 = vmatpush1.msra.mxu0 %v547
    %576 = vmatprep.subr.mxu0 0.0
    %577 = vmatpush1.msra.mxu0 %v548
    %578 = vmatprep.subr.mxu0 0.0
    %579 = vmatpush1.msra.mxu0 %v549
    %580 = vmatprep.subr.mxu0 0.0
    %581 = vmatpush1.msra.mxu0 %v550
    %582 = vmatprep.subr.mxu0 0.0
    %583 = vmatpush1.msra.mxu0 %v551
    %584 = vmatprep.subr.mxu0 0.0
    %585 = vmatpush1.msra.mxu0 %v552
    %586 = vmatprep.subr.mxu0 0.0
    %587 = vmatpush1.msra.mxu0 %v553
    %588 = vmatprep.subr.mxu0 0.0
    %589 = vmatpush1.msra.mxu0 %v554
    %590 = vmatprep.subr.mxu0 0.0
    %591 = vmatpush1.msra.mxu0 %v555
    %592 = vmatprep.subr.mxu0 0.0
    %593 = vmatpush1.msra.mxu0 %v556
    %594 = vmatprep.subr.mxu0 0.0
    %595 = vmatpush1.msra.mxu0 %v557
    %596 = vmatprep.subr.mxu0 0.0
    %597 = vmatpush1.msra.mxu0 %v558
    %598 = vmatprep.subr.mxu0 0.0
    %599 = vmatpush1.msra.mxu0 0.0
    %600 = vmatprep.subr.mxu0 0.0
    %601 = vmatpush1.msra.mxu0 0.0
    %602 = vmatprep.subr.mxu0 0.0
    %603 = vmatpush1.msra.mxu0 0.0
    %604 = vmatprep.subr.mxu0 0.0
    %605 = vmatpush1.msra.mxu0 0.0
    %606 = vmatprep.subr.mxu0 0.0
    %607 = vmatpush1.msra.mxu0 0.0
    %608 = vmatprep.subr.mxu0 0.0
    %609 = vmatpush1.msra.mxu0 0.0
    %610 = vmatprep.subr.mxu0 0.0
    %611 = vmatpush1.msra.mxu0 0.0
    %612 = vmatprep.subr.mxu0 0.0
    %613 = vmatpush1.msra.mxu0 0.0
    %614 = vmatprep.subr.mxu0 0.0
    %615 = vmatpush1.msra.mxu0 0.0
    %616 = vmatprep.subr.mxu0 0.0
    %617 = vmatpush1.msra.mxu0 0.0
    %618 = vmatprep.subr.mxu0 0.0
    %619 = vmatpush1.msra.mxu0 0.0
    %620 = vmatprep.subr.mxu0 0.0
    %621 = vmatpush1.msra.mxu0 0.0
    %622 = vmatprep.subr.mxu0 0.0
    %623 = vmatpush1.msra.mxu0 0.0
    %624 = vmatprep.subr.mxu0 0.0
    %625 = vmatpush1.msra.mxu0 0.0
    %626 = vmatprep.subr.mxu0 0.0
    %627 = vmatpush1.msra.mxu0 0.0
    %628 = vmatprep.subr.mxu0 0.0
    %629 = vmatpush1.msra.mxu0 0.0
    %630 = vmatprep.mubr.f32.mxu0 0.0
    %631 = vmatmul.mubr.f32.gmra.mrb[0].mxu0 %v163
    %v632 = vpop.f32.mrb[0].mxu0
    %v633 = vadd.f32 %v564, %v632
    %v634 = vpop.f32.mrb[0].mxu0
    %635 = vdwg.mxu0
    %s636 = scalar_lea.vmem %s13, 128
    %v637 = vld [vmem:[%s636] sm:$0xff]
    %v638 = vld [vmem:[%s636 + $0x8] sm:$0xff]
    %v639 = vld [vmem:[%s636 + $0x10] sm:$0xff]
    %v640 = vld [vmem:[%s636 + $0x18] sm:$0xff]
    %v641 = vld [vmem:[%s636 + $0x20] sm:$0xff]
    %v642 = vld [vmem:[%s636 + $0x28] sm:$0xff]
    %v643 = vld [vmem:[%s636 + $0x30] sm:$0xff]
    %v644 = vld [vmem:[%s636 + $0x38] sm:$0xff]
    %v645 = vld [vmem:[%s636 + $0x40] sm:$0xff]
    %v646 = vld [vmem:[%s636 + $0x48] sm:$0xff]
    %v647 = vld [vmem:[%s636 + $0x50] sm:$0xff]
    %v648 = vld [vmem:[%s636 + $0x58] sm:$0xff]
    %v649 = vld [vmem:[%s636 + $0x60] sm:$0xff]
    %v650 = vld [vmem:[%s636 + $0x68] sm:$0xff]
    %v651 = vld [vmem:[%s636 + $0x70] sm:$0xff]
    %v652 = vld [vmem:[%s636 + $0x78] sm:$0xff]
    %s653 = scalar_lea.vmem %s19, 1
    %v654 = vld [vmem:[%s653] sm:$0x1]
    %v656 = vlaneseq
    %v657 = vshrl.u32 %v656, 7
    %v658 = vsub.s32 0, %v657
    %v659 = vrot.slane %v654, %v658
    %661 = vmatprep.subr.mxu0 0.0
    %662 = vmatpush1.msra.mxu0 %v637
    %663 = vmatprep.subr.mxu0 0.0
    %664 = vmatpush1.msra.mxu0 %v638
    %665 = vmatprep.subr.mxu0 0.0
    %666 = vmatpush1.msra.mxu0 %v639
    %667 = vmatprep.subr.mxu0 0.0
    %668 = vmatpush1.msra.mxu0 %v640
    %669 = vmatprep.subr.mxu0 0.0
    %670 = vmatpush1.msra.mxu0 %v641
    %671 = vmatprep.subr.mxu0 0.0
    %672 = vmatpush1.msra.mxu0 %v642
    %673 = vmatprep.subr.mxu0 0.0
    %674 = vmatpush1.msra.mxu0 %v643
    %675 = vmatprep.subr.mxu0 0.0
    %676 = vmatpush1.msra.mxu0 %v644
    %677 = vmatprep.subr.mxu0 0.0
    %678 = vmatpush1.msra.mxu0 %v645
    %679 = vmatprep.subr.mxu0 0.0
    %680 = vmatpush1.msra.mxu0 %v646
    %681 = vmatprep.subr.mxu0 0.0
    %682 = vmatpush1.msra.mxu0 %v647
    %683 = vmatprep.subr.mxu0 0.0
    %684 = vmatpush1.msra.mxu0 %v648
    %685 = vmatprep.subr.mxu0 0.0
    %686 = vmatpush1.msra.mxu0 %v649
    %687 = vmatprep.subr.mxu0 0.0
    %688 = vmatpush1.msra.mxu0 %v650
    %689 = vmatprep.subr.mxu0 0.0
    %690 = vmatpush1.msra.mxu0 %v651
    %691 = vmatprep.subr.mxu0 0.0
    %692 = vmatpush1.msra.mxu0 %v652
    %693 = vmatprep.subr.mxu0 0.0
    %694 = vmatpush1.msra.mxu0 0.0
    %695 = vmatprep.subr.mxu0 0.0
    %696 = vmatpush1.msra.mxu0 0.0
    %697 = vmatprep.subr.mxu0 0.0
    %698 = vmatpush1.msra.mxu0 0.0
    %699 = vmatprep.subr.mxu0 0.0
    %700 = vmatpush1.msra.mxu0 0.0
    %701 = vmatprep.subr.mxu0 0.0
    %702 = vmatpush1.msra.mxu0 0.0
    %703 = vmatprep.subr.mxu0 0.0
    %704 = vmatpush1.msra.mxu0 0.0
    %705 = vmatprep.subr.mxu0 0.0
    %706 = vmatpush1.msra.mxu0 0.0
    %707 = vmatprep.subr.mxu0 0.0
    %708 = vmatpush1.msra.mxu0 0.0
    %709 = vmatprep.subr.mxu0 0.0
    %710 = vmatpush1.msra.mxu0 0.0
    %711 = vmatprep.subr.mxu0 0.0
    %712 = vmatpush1.msra.mxu0 0.0
    %713 = vmatprep.subr.mxu0 0.0
    %714 = vmatpush1.msra.mxu0 0.0
    %715 = vmatprep.subr.mxu0 0.0
    %716 = vmatpush1.msra.mxu0 0.0
    %717 = vmatprep.subr.mxu0 0.0
    %718 = vmatpush1.msra.mxu0 0.0
    %719 = vmatprep.subr.mxu0 0.0
    %720 = vmatpush1.msra.mxu0 0.0
    %721 = vmatprep.subr.mxu0 0.0
    %722 = vmatpush1.msra.mxu0 0.0
    %723 = vmatprep.subr.mxu0 0.0
    %724 = vmatpush1.msra.mxu0 0.0
    %725 = vmatprep.mubr.f32.mxu0 0.0
    %726 = vmatmul.mubr.f32.gmra.mrb[0].mxu0 %v163
    %v727 = vpop.f32.mrb[0].mxu0
    %v728 = vadd.f32 %v659, %v727
    %v729 = vpop.f32.mrb[0].mxu0
    %730 = vdwg.mxu0
    %s731 = scalar_lea.vmem %s13, 256
    %v732 = vld [vmem:[%s731] sm:$0xff]
    %v733 = vld [vmem:[%s731 + $0x8] sm:$0xff]
    %v734 = vld [vmem:[%s731 + $0x10] sm:$0xff]
    %v735 = vld [vmem:[%s731 + $0x18] sm:$0xff]
    %v736 = vld [vmem:[%s731 + $0x20] sm:$0xff]
    %v737 = vld [vmem:[%s731 + $0x28] sm:$0xff]
    %v738 = vld [vmem:[%s731 + $0x30] sm:$0xff]
    %v739 = vld [vmem:[%s731 + $0x38] sm:$0xff]
    %v740 = vld [vmem:[%s731 + $0x40] sm:$0xff]
    %v741 = vld [vmem:[%s731 + $0x48] sm:$0xff]
    %v742 = vld [vmem:[%s731 + $0x50] sm:$0xff]
    %v743 = vld [vmem:[%s731 + $0x58] sm:$0xff]
    %v744 = vld [vmem:[%s731 + $0x60] sm:$0xff]
    %v745 = vld [vmem:[%s731 + $0x68] sm:$0xff]
    %v746 = vld [vmem:[%s731 + $0x70] sm:$0xff]
    %v747 = vld [vmem:[%s731 + $0x78] sm:$0xff]
    %s748 = scalar_lea.vmem %s19, 2
    %v749 = vld [vmem:[%s748] sm:$0x1]
    %v751 = vlaneseq
    %v752 = vshrl.u32 %v751, 7
    %v753 = vsub.s32 0, %v752
    %v754 = vrot.slane %v749, %v753
    %756 = vmatprep.subr.mxu0 0.0
    %757 = vmatpush1.msra.mxu0 %v732
    %758 = vmatprep.subr.mxu0 0.0
    %759 = vmatpush1.msra.mxu0 %v733
    %760 = vmatprep.subr.mxu0 0.0
    %761 = vmatpush1.msra.mxu0 %v734
    %762 = vmatprep.subr.mxu0 0.0
    %763 = vmatpush1.msra.mxu0 %v735
    %764 = vmatprep.subr.mxu0 0.0
    %765 = vmatpush1.msra.mxu0 %v736
    %766 = vmatprep.subr.mxu0 0.0
    %767 = vmatpush1.msra.mxu0 %v737
    %768 = vmatprep.subr.mxu0 0.0
    %769 = vmatpush1.msra.mxu0 %v738
    %770 = vmatprep.subr.mxu0 0.0
    %771 = vmatpush1.msra.mxu0 %v739
    %772 = vmatprep.subr.mxu0 0.0
    %773 = vmatpush1.msra.mxu0 %v740
    %774 = vmatprep.subr.mxu0 0.0
    %775 = vmatpush1.msra.mxu0 %v741
    %776 = vmatprep.subr.mxu0 0.0
    %777 = vmatpush1.msra.mxu0 %v742
    %778 = vmatprep.subr.mxu0 0.0
    %779 = vmatpush1.msra.mxu0 %v743
    %780 = vmatprep.subr.mxu0 0.0
    %781 = vmatpush1.msra.mxu0 %v744
    %782 = vmatprep.subr.mxu0 0.0
    %783 = vmatpush1.msra.mxu0 %v745
    %784 = vmatprep.subr.mxu0 0.0
    %785 = vmatpush1.msra.mxu0 %v746
    %786 = vmatprep.subr.mxu0 0.0
    %787 = vmatpush1.msra.mxu0 %v747
    %788 = vmatprep.subr.mxu0 0.0
    %789 = vmatpush1.msra.mxu0 0.0
    %790 = vmatprep.subr.mxu0 0.0
    %791 = vmatpush1.msra.mxu0 0.0
    %792 = vmatprep.subr.mxu0 0.0
    %793 = vmatpush1.msra.mxu0 0.0
    %794 = vmatprep.subr.mxu0 0.0
    %795 = vmatpush1.msra.mxu0 0.0
    %796 = vmatprep.subr.mxu0 0.0
    %797 = vmatpush1.msra.mxu0 0.0
    %798 = vmatprep.subr.mxu0 0.0
    %799 = vmatpush1.msra.mxu0 0.0
    %800 = vmatprep.subr.mxu0 0.0
    %801 = vmatpush1.msra.mxu0 0.0
    %802 = vmatprep.subr.mxu0 0.0
    %803 = vmatpush1.msra.mxu0 0.0
    %804 = vmatprep.subr.mxu0 0.0
    %805 = vmatpush1.msra.mxu0 0.0
    %806 = vmatprep.subr.mxu0 0.0
    %807 = vmatpush1.msra.mxu0 0.0
    %808 = vmatprep.subr.mxu0 0.0
    %809 = vmatpush1.msra.mxu0 0.0
    %810 = vmatprep.subr.mxu0 0.0
    %811 = vmatpush1.msra.mxu0 0.0
    %812 = vmatprep.subr.mxu0 0.0
    %813 = vmatpush1.msra.mxu0 0.0
    %814 = vmatprep.subr.mxu0 0.0
    %815 = vmatpush1.msra.mxu0 0.0
    %816 = vmatprep.subr.mxu0 0.0
    %817 = vmatpush1.msra.mxu0 0.0
    %818 = vmatprep.subr.mxu0 0.0
    %819 = vmatpush1.msra.mxu0 0.0
    %820 = vmatprep.mubr.f32.mxu0 0.0
    %821 = vmatmul.mubr.f32.gmra.mrb[0].mxu0 %v163
    %v822 = vpop.f32.mrb[0].mxu0
    %v823 = vadd.f32 %v754, %v822
    %v824 = vpop.f32.mrb[0].mxu0
    %825 = vdwg.mxu0
    %s826 = scalar_lea.vmem %s13, 384
    %v827 = vld [vmem:[%s826] sm:$0xff]
    %v828 = vld [vmem:[%s826 + $0x8] sm:$0xff]
    %v829 = vld [vmem:[%s826 + $0x10] sm:$0xff]
    %v830 = vld [vmem:[%s826 + $0x18] sm:$0xff]
    %v831 = vld [vmem:[%s826 + $0x20] sm:$0xff]
    %v832 = vld [vmem:[%s826 + $0x28] sm:$0xff]
    %v833 = vld [vmem:[%s826 + $0x30] sm:$0xff]
    %v834 = vld [vmem:[%s826 + $0x38] sm:$0xff]
    %v835 = vld [vmem:[%s826 + $0x40] sm:$0xff]
    %v836 = vld [vmem:[%s826 + $0x48] sm:$0xff]
    %v837 = vld [vmem:[%s826 + $0x50] sm:$0xff]
    %v838 = vld [vmem:[%s826 + $0x58] sm:$0xff]
    %v839 = vld [vmem:[%s826 + $0x60] sm:$0xff]
    %v840 = vld [vmem:[%s826 + $0x68] sm:$0xff]
    %v841 = vld [vmem:[%s826 + $0x70] sm:$0xff]
    %v842 = vld [vmem:[%s826 + $0x78] sm:$0xff]
    %s843 = scalar_lea.vmem %s19, 3
    %v844 = vld [vmem:[%s843] sm:$0x1]
    %v846 = vlaneseq
    %v847 = vshrl.u32 %v846, 7
    %v848 = vsub.s32 0, %v847
    %v849 = vrot.slane %v844, %v848
    %851 = vmatprep.subr.mxu0 0.0
    %852 = vmatpush1.msra.mxu0 %v827
    %853 = vmatprep.subr.mxu0 0.0
    %854 = vmatpush1.msra.mxu0 %v828
    %855 = vmatprep.subr.mxu0 0.0
    %856 = vmatpush1.msra.mxu0 %v829
    %857 = vmatprep.subr.mxu0 0.0
    %858 = vmatpush1.msra.mxu0 %v830
    %859 = vmatprep.subr.mxu0 0.0
    %860 = vmatpush1.msra.mxu0 %v831
    %861 = vmatprep.subr.mxu0 0.0
    %862 = vmatpush1.msra.mxu0 %v832
    %863 = vmatprep.subr.mxu0 0.0
    %864 = vmatpush1.msra.mxu0 %v833
    %865 = vmatprep.subr.mxu0 0.0
    %866 = vmatpush1.msra.mxu0 %v834
    %867 = vmatprep.subr.mxu0 0.0
    %868 = vmatpush1.msra.mxu0 %v835
    %869 = vmatprep.subr.mxu0 0.0
    %870 = vmatpush1.msra.mxu0 %v836
    %871 = vmatprep.subr.mxu0 0.0
    %872 = vmatpush1.msra.mxu0 %v837
    %873 = vmatprep.subr.mxu0 0.0
    %874 = vmatpush1.msra.mxu0 %v838
    %875 = vmatprep.subr.mxu0 0.0
    %876 = vmatpush1.msra.mxu0 %v839
    %877 = vmatprep.subr.mxu0 0.0
    %878 = vmatpush1.msra.mxu0 %v840
    %879 = vmatprep.subr.mxu0 0.0
    %880 = vmatpush1.msra.mxu0 %v841
    %881 = vmatprep.subr.mxu0 0.0
    %882 = vmatpush1.msra.mxu0 %v842
    %883 = vmatprep.subr.mxu0 0.0
    %884 = vmatpush1.msra.mxu0 0.0
    %885 = vmatprep.subr.mxu0 0.0
    %886 = vmatpush1.msra.mxu0 0.0
    %887 = vmatprep.subr.mxu0 0.0
    %888 = vmatpush1.msra.mxu0 0.0
    %889 = vmatprep.subr.mxu0 0.0
    %890 = vmatpush1.msra.mxu0 0.0
    %891 = vmatprep.subr.mxu0 0.0
    %892 = vmatpush1.msra.mxu0 0.0
    %893 = vmatprep.subr.mxu0 0.0
    %894 = vmatpush1.msra.mxu0 0.0
    %895 = vmatprep.subr.mxu0 0.0
    %896 = vmatpush1.msra.mxu0 0.0
    %897 = vmatprep.subr.mxu0 0.0
    %898 = vmatpush1.msra.mxu0 0.0
    %899 = vmatprep.subr.mxu0 0.0
    %900 = vmatpush1.msra.mxu0 0.0
    %901 = vmatprep.subr.mxu0 0.0
    %902 = vmatpush1.msra.mxu0 0.0
    %903 = vmatprep.subr.mxu0 0.0
    %904 = vmatpush1.msra.mxu0 0.0
    %905 = vmatprep.subr.mxu0 0.0
    %906 = vmatpush1.msra.mxu0 0.0
    %907 = vmatprep.subr.mxu0 0.0
    %908 = vmatpush1.msra.mxu0 0.0
    %909 = vmatprep.subr.mxu0 0.0
    %910 = vmatpush1.msra.mxu0 0.0
    %911 = vmatprep.subr.mxu0 0.0
    %912 = vmatpush1.msra.mxu0 0.0
    %913 = vmatprep.subr.mxu0 0.0
    %914 = vmatpush1.msra.mxu0 0.0
    %915 = vmatprep.mubr.f32.mxu0 0.0
    %916 = vmatmul.mubr.f32.gmra.mrb[0].mxu0 %v163
    %v917 = vpop.f32.mrb[0].mxu0
    %v918 = vadd.f32 %v849, %v917
    %v919 = vpop.f32.mrb[0].mxu0
    %920 = vdwg.mxu0
    %v921 = vld [vmem:[%s15] sm:$0xff]
    %v922 = vld [vmem:[%s15 + $0x8] sm:$0xff]
    %v923 = vld [vmem:[%s15 + $0x10] sm:$0xff]
    %v924 = vld [vmem:[%s15 + $0x18] sm:$0xff]
    %v925 = vld [vmem:[%s15 + $0x20] sm:$0xff]
    %v926 = vld [vmem:[%s15 + $0x28] sm:$0xff]
    %v927 = vld [vmem:[%s15 + $0x30] sm:$0xff]
    %v928 = vld [vmem:[%s15 + $0x38] sm:$0xff]
    %v929 = vld [vmem:[%s15 + $0x40] sm:$0xff]
    %v930 = vld [vmem:[%s15 + $0x48] sm:$0xff]
    %v931 = vld [vmem:[%s15 + $0x50] sm:$0xff]
    %v932 = vld [vmem:[%s15 + $0x58] sm:$0xff]
    %v933 = vld [vmem:[%s15 + $0x60] sm:$0xff]
    %v934 = vld [vmem:[%s15 + $0x68] sm:$0xff]
    %v935 = vld [vmem:[%s15 + $0x70] sm:$0xff]
    %v936 = vld [vmem:[%s15 + $0x78] sm:$0xff]
    %v937 = vld [vmem:[%s21] sm:$0x1]
    %v939 = vlaneseq
    %v940 = vshrl.u32 %v939, 7
    %v941 = vsub.s32 0, %v940
    %v942 = vrot.slane %v937, %v941
    %944 = vmatprep.subr.mxu0 0.0
    %945 = vmatpush1.msra.mxu0 %v921
    %946 = vmatprep.subr.mxu0 0.0
    %947 = vmatpush1.msra.mxu0 %v922
    %948 = vmatprep.subr.mxu0 0.0
    %949 = vmatpush1.msra.mxu0 %v923
    %950 = vmatprep.subr.mxu0 0.0
    %951 = vmatpush1.msra.mxu0 %v924
    %952 = vmatprep.subr.mxu0 0.0
    %953 = vmatpush1.msra.mxu0 %v925
    %954 = vmatprep.subr.mxu0 0.0
    %955 = vmatpush1.msra.mxu0 %v926
    %956 = vmatprep.subr.mxu0 0.0
    %957 = vmatpush1.msra.mxu0 %v927
    %958 = vmatprep.subr.mxu0 0.0
    %959 = vmatpush1.msra.mxu0 %v928
    %960 = vmatprep.subr.mxu0 0.0
    %961 = vmatpush1.msra.mxu0 %v929
    %962 = vmatprep.subr.mxu0 0.0
    %963 = vmatpush1.msra.mxu0 %v930
    %964 = vmatprep.subr.mxu0 0.0
    %965 = vmatpush1.msra.mxu0 %v931
    %966 = vmatprep.subr.mxu0 0.0
    %967 = vmatpush1.msra.mxu0 %v932
    %968 = vmatprep.subr.mxu0 0.0
    %969 = vmatpush1.msra.mxu0 %v933
    %970 = vmatprep.subr.mxu0 0.0
    %971 = vmatpush1.msra.mxu0 %v934
    %972 = vmatprep.subr.mxu0 0.0
    %973 = vmatpush1.msra.mxu0 %v935
    %974 = vmatprep.subr.mxu0 0.0
    %975 = vmatpush1.msra.mxu0 %v936
    %976 = vmatprep.subr.mxu0 0.0
    %977 = vmatpush1.msra.mxu0 0.0
    %978 = vmatprep.subr.mxu0 0.0
    %979 = vmatpush1.msra.mxu0 0.0
    %980 = vmatprep.subr.mxu0 0.0
    %981 = vmatpush1.msra.mxu0 0.0
    %982 = vmatprep.subr.mxu0 0.0
    %983 = vmatpush1.msra.mxu0 0.0
    %984 = vmatprep.subr.mxu0 0.0
    %985 = vmatpush1.msra.mxu0 0.0
    %986 = vmatprep.subr.mxu0 0.0
    %987 = vmatpush1.msra.mxu0 0.0
    %988 = vmatprep.subr.mxu0 0.0
    %989 = vmatpush1.msra.mxu0 0.0
    %990 = vmatprep.subr.mxu0 0.0
    %991 = vmatpush1.msra.mxu0 0.0
    %992 = vmatprep.subr.mxu0 0.0
    %993 = vmatpush1.msra.mxu0 0.0
    %994 = vmatprep.subr.mxu0 0.0
    %995 = vmatpush1.msra.mxu0 0.0
    %996 = vmatprep.subr.mxu0 0.0
    %997 = vmatpush1.msra.mxu0 0.0
    %998 = vmatprep.subr.mxu0 0.0
    %999 = vmatpush1.msra.mxu0 0.0
    %1000 = vmatprep.subr.mxu0 0.0
    %1001 = vmatpush1.msra.mxu0 0.0
    %1002 = vmatprep.subr.mxu0 0.0
    %1003 = vmatpush1.msra.mxu0 0.0
    %1004 = vmatprep.subr.mxu0 0.0
    %1005 = vmatpush1.msra.mxu0 0.0
    %1006 = vmatprep.subr.mxu0 0.0
    %1007 = vmatpush1.msra.mxu0 0.0
    %1008 = vmatprep.mubr.f32.mxu0 0.0
    %1009 = vmatmul.mubr.f32.gmra.mrb[0].mxu0 %v131
    %v1010 = vpop.f32.mrb[0].mxu0
    %v1011 = vadd.f32 %v942, %v1010
    %v1012 = vpop.f32.mrb[0].mxu0
    %1013 = vdwg.mxu0
    %s1014 = scalar_lea.vmem %s15, 128
    %v1015 = vld [vmem:[%s1014] sm:$0xff]
    %v1016 = vld [vmem:[%s1014 + $0x8] sm:$0xff]
    %v1017 = vld [vmem:[%s1014 + $0x10] sm:$0xff]
    %v1018 = vld [vmem:[%s1014 + $0x18] sm:$0xff]
    %v1019 = vld [vmem:[%s1014 + $0x20] sm:$0xff]
    %v1020 = vld [vmem:[%s1014 + $0x28] sm:$0xff]
    %v1021 = vld [vmem:[%s1014 + $0x30] sm:$0xff]
    %v1022 = vld [vmem:[%s1014 + $0x38] sm:$0xff]
    %v1023 = vld [vmem:[%s1014 + $0x40] sm:$0xff]
    %v1024 = vld [vmem:[%s1014 + $0x48] sm:$0xff]
    %v1025 = vld [vmem:[%s1014 + $0x50] sm:$0xff]
    %v1026 = vld [vmem:[%s1014 + $0x58] sm:$0xff]
    %v1027 = vld [vmem:[%s1014 + $0x60] sm:$0xff]
    %v1028 = vld [vmem:[%s1014 + $0x68] sm:$0xff]
    %v1029 = vld [vmem:[%s1014 + $0x70] sm:$0xff]
    %v1030 = vld [vmem:[%s1014 + $0x78] sm:$0xff]
    %s1031 = scalar_lea.vmem %s21, 1
    %v1032 = vld [vmem:[%s1031] sm:$0x1]
    %v1034 = vlaneseq
    %v1035 = vshrl.u32 %v1034, 7
    %v1036 = vsub.s32 0, %v1035
    %v1037 = vrot.slane %v1032, %v1036
    %1039 = vmatprep.subr.mxu0 0.0
    %1040 = vmatpush1.msra.mxu0 %v1015
    %1041 = vmatprep.subr.mxu0 0.0
    %1042 = vmatpush1.msra.mxu0 %v1016
    %1043 = vmatprep.subr.mxu0 0.0
    %1044 = vmatpush1.msra.mxu0 %v1017
    %1045 = vmatprep.subr.mxu0 0.0
    %1046 = vmatpush1.msra.mxu0 %v1018
    %1047 = vmatprep.subr.mxu0 0.0
    %1048 = vmatpush1.msra.mxu0 %v1019
    %1049 = vmatprep.subr.mxu0 0.0
    %1050 = vmatpush1.msra.mxu0 %v1020
    %1051 = vmatprep.subr.mxu0 0.0
    %1052 = vmatpush1.msra.mxu0 %v1021
    %1053 = vmatprep.subr.mxu0 0.0
    %1054 = vmatpush1.msra.mxu0 %v1022
    %1055 = vmatprep.subr.mxu0 0.0
    %1056 = vmatpush1.msra.mxu0 %v1023
    %1057 = vmatprep.subr.mxu0 0.0
    %1058 = vmatpush1.msra.mxu0 %v1024
    %1059 = vmatprep.subr.mxu0 0.0
    %1060 = vmatpush1.msra.mxu0 %v1025
    %1061 = vmatprep.subr.mxu0 0.0
    %1062 = vmatpush1.msra.mxu0 %v1026
    %1063 = vmatprep.subr.mxu0 0.0
    %1064 = vmatpush1.msra.mxu0 %v1027
    %1065 = vmatprep.subr.mxu0 0.0
    %1066 = vmatpush1.msra.mxu0 %v1028
    %1067 = vmatprep.subr.mxu0 0.0
    %1068 = vmatpush1.msra.mxu0 %v1029
    %1069 = vmatprep.subr.mxu0 0.0
    %1070 = vmatpush1.msra.mxu0 %v1030
    %1071 = vmatprep.subr.mxu0 0.0
    %1072 = vmatpush1.msra.mxu0 0.0
    %1073 = vmatprep.subr.mxu0 0.0
    %1074 = vmatpush1.msra.mxu0 0.0
    %1075 = vmatprep.subr.mxu0 0.0
    %1076 = vmatpush1.msra.mxu0 0.0
    %1077 = vmatprep.subr.mxu0 0.0
    %1078 = vmatpush1.msra.mxu0 0.0
    %1079 = vmatprep.subr.mxu0 0.0
    %1080 = vmatpush1.msra.mxu0 0.0
    %1081 = vmatprep.subr.mxu0 0.0
    %1082 = vmatpush1.msra.mxu0 0.0
    %1083 = vmatprep.subr.mxu0 0.0
    %1084 = vmatpush1.msra.mxu0 0.0
    %1085 = vmatprep.subr.mxu0 0.0
    %1086 = vmatpush1.msra.mxu0 0.0
    %1087 = vmatprep.subr.mxu0 0.0
    %1088 = vmatpush1.msra.mxu0 0.0
    %1089 = vmatprep.subr.mxu0 0.0
    %1090 = vmatpush1.msra.mxu0 0.0
    %1091 = vmatprep.subr.mxu0 0.0
    %1092 = vmatpush1.msra.mxu0 0.0
    %1093 = vmatprep.subr.mxu0 0.0
    %1094 = vmatpush1.msra.mxu0 0.0
    %1095 = vmatprep.subr.mxu0 0.0
    %1096 = vmatpush1.msra.mxu0 0.0
    %1097 = vmatprep.subr.mxu0 0.0
    %1098 = vmatpush1.msra.mxu0 0.0
    %1099 = vmatprep.subr.mxu0 0.0
    %1100 = vmatpush1.msra.mxu0 0.0
    %1101 = vmatprep.subr.mxu0 0.0
    %1102 = vmatpush1.msra.mxu0 0.0
    %1103 = vmatprep.mubr.f32.mxu0 0.0
    %1104 = vmatmul.mubr.f32.gmra.mrb[0].mxu0 %v131
    %v1105 = vpop.f32.mrb[0].mxu0
    %v1106 = vadd.f32 %v1037, %v1105
    %v1107 = vpop.f32.mrb[0].mxu0
    %1108 = vdwg.mxu0
    %s1109 = scalar_lea.vmem %s15, 256
    %v1110 = vld [vmem:[%s1109] sm:$0xff]
    %v1111 = vld [vmem:[%s1109 + $0x8] sm:$0xff]
    %v1112 = vld [vmem:[%s1109 + $0x10] sm:$0xff]
    %v1113 = vld [vmem:[%s1109 + $0x18] sm:$0xff]
    %v1114 = vld [vmem:[%s1109 + $0x20] sm:$0xff]
    %v1115 = vld [vmem:[%s1109 + $0x28] sm:$0xff]
    %v1116 = vld [vmem:[%s1109 + $0x30] sm:$0xff]
    %v1117 = vld [vmem:[%s1109 + $0x38] sm:$0xff]
    %v1118 = vld [vmem:[%s1109 + $0x40] sm:$0xff]
    %v1119 = vld [vmem:[%s1109 + $0x48] sm:$0xff]
    %v1120 = vld [vmem:[%s1109 + $0x50] sm:$0xff]
    %v1121 = vld [vmem:[%s1109 + $0x58] sm:$0xff]
    %v1122 = vld [vmem:[%s1109 + $0x60] sm:$0xff]
    %v1123 = vld [vmem:[%s1109 + $0x68] sm:$0xff]
    %v1124 = vld [vmem:[%s1109 + $0x70] sm:$0xff]
    %v1125 = vld [vmem:[%s1109 + $0x78] sm:$0xff]
    %s1126 = scalar_lea.vmem %s21, 2
    %v1127 = vld [vmem:[%s1126] sm:$0x1]
    %v1129 = vlaneseq
    %v1130 = vshrl.u32 %v1129, 7
    %v1131 = vsub.s32 0, %v1130
    %v1132 = vrot.slane %v1127, %v1131
    %1134 = vmatprep.subr.mxu0 0.0
    %1135 = vmatpush1.msra.mxu0 %v1110
    %1136 = vmatprep.subr.mxu0 0.0
    %1137 = vmatpush1.msra.mxu0 %v1111
    %1138 = vmatprep.subr.mxu0 0.0
    %1139 = vmatpush1.msra.mxu0 %v1112
    %1140 = vmatprep.subr.mxu0 0.0
    %1141 = vmatpush1.msra.mxu0 %v1113
    %1142 = vmatprep.subr.mxu0 0.0
    %1143 = vmatpush1.msra.mxu0 %v1114
    %1144 = vmatprep.subr.mxu0 0.0
    %1145 = vmatpush1.msra.mxu0 %v1115
    %1146 = vmatprep.subr.mxu0 0.0
    %1147 = vmatpush1.msra.mxu0 %v1116
    %1148 = vmatprep.subr.mxu0 0.0
    %1149 = vmatpush1.msra.mxu0 %v1117
    %1150 = vmatprep.subr.mxu0 0.0
    %1151 = vmatpush1.msra.mxu0 %v1118
    %1152 = vmatprep.subr.mxu0 0.0
    %1153 = vmatpush1.msra.mxu0 %v1119
    %1154 = vmatprep.subr.mxu0 0.0
    %1155 = vmatpush1.msra.mxu0 %v1120
    %1156 = vmatprep.subr.mxu0 0.0
    %1157 = vmatpush1.msra.mxu0 %v1121
    %1158 = vmatprep.subr.mxu0 0.0
    %1159 = vmatpush1.msra.mxu0 %v1122
    %1160 = vmatprep.subr.mxu0 0.0
    %1161 = vmatpush1.msra.mxu0 %v1123
    %1162 = vmatprep.subr.mxu0 0.0
    %1163 = vmatpush1.msra.mxu0 %v1124
    %1164 = vmatprep.subr.mxu0 0.0
    %1165 = vmatpush1.msra.mxu0 %v1125
    %1166 = vmatprep.subr.mxu0 0.0
    %1167 = vmatpush1.msra.mxu0 0.0
    %1168 = vmatprep.subr.mxu0 0.0
    %1169 = vmatpush1.msra.mxu0 0.0
    %1170 = vmatprep.subr.mxu0 0.0
    %1171 = vmatpush1.msra.mxu0 0.0
    %1172 = vmatprep.subr.mxu0 0.0
    %1173 = vmatpush1.msra.mxu0 0.0
    %1174 = vmatprep.subr.mxu0 0.0
    %1175 = vmatpush1.msra.mxu0 0.0
    %1176 = vmatprep.subr.mxu0 0.0
    %1177 = vmatpush1.msra.mxu0 0.0
    %1178 = vmatprep.subr.mxu0 0.0
    %1179 = vmatpush1.msra.mxu0 0.0
    %1180 = vmatprep.subr.mxu0 0.0
    %1181 = vmatpush1.msra.mxu0 0.0
    %1182 = vmatprep.subr.mxu0 0.0
    %1183 = vmatpush1.msra.mxu0 0.0
    %1184 = vmatprep.subr.mxu0 0.0
    %1185 = vmatpush1.msra.mxu0 0.0
    %1186 = vmatprep.subr.mxu0 0.0
    %1187 = vmatpush1.msra.mxu0 0.0
    %1188 = vmatprep.subr.mxu0 0.0
    %1189 = vmatpush1.msra.mxu0 0.0
    %1190 = vmatprep.subr.mxu0 0.0
    %1191 = vmatpush1.msra.mxu0 0.0
    %1192 = vmatprep.subr.mxu0 0.0
    %1193 = vmatpush1.msra.mxu0 0.0
    %1194 = vmatprep.subr.mxu0 0.0
    %1195 = vmatpush1.msra.mxu0 0.0
    %1196 = vmatprep.subr.mxu0 0.0
    %1197 = vmatpush1.msra.mxu0 0.0
    %1198 = vmatprep.mubr.f32.mxu0 0.0
    %1199 = vmatmul.mubr.f32.gmra.mrb[0].mxu0 %v131
    %v1200 = vpop.f32.mrb[0].mxu0
    %v1201 = vadd.f32 %v1132, %v1200
    %v1202 = vpop.f32.mrb[0].mxu0
    %1203 = vdwg.mxu0
    %s1204 = scalar_lea.vmem %s15, 384
    %v1205 = vld [vmem:[%s1204] sm:$0xff]
    %v1206 = vld [vmem:[%s1204 + $0x8] sm:$0xff]
    %v1207 = vld [vmem:[%s1204 + $0x10] sm:$0xff]
    %v1208 = vld [vmem:[%s1204 + $0x18] sm:$0xff]
    %v1209 = vld [vmem:[%s1204 + $0x20] sm:$0xff]
    %v1210 = vld [vmem:[%s1204 + $0x28] sm:$0xff]
    %v1211 = vld [vmem:[%s1204 + $0x30] sm:$0xff]
    %v1212 = vld [vmem:[%s1204 + $0x38] sm:$0xff]
    %v1213 = vld [vmem:[%s1204 + $0x40] sm:$0xff]
    %v1214 = vld [vmem:[%s1204 + $0x48] sm:$0xff]
    %v1215 = vld [vmem:[%s1204 + $0x50] sm:$0xff]
    %v1216 = vld [vmem:[%s1204 + $0x58] sm:$0xff]
    %v1217 = vld [vmem:[%s1204 + $0x60] sm:$0xff]
    %v1218 = vld [vmem:[%s1204 + $0x68] sm:$0xff]
    %v1219 = vld [vmem:[%s1204 + $0x70] sm:$0xff]
    %v1220 = vld [vmem:[%s1204 + $0x78] sm:$0xff]
    %s1221 = scalar_lea.vmem %s21, 3
    %v1222 = vld [vmem:[%s1221] sm:$0x1]
    %v1224 = vlaneseq
    %v1225 = vshrl.u32 %v1224, 7
    %v1226 = vsub.s32 0, %v1225
    %v1227 = vrot.slane %v1222, %v1226
    %1229 = vmatprep.subr.mxu0 0.0
    %1230 = vmatpush1.msra.mxu0 %v1205
    %1231 = vmatprep.subr.mxu0 0.0
    %1232 = vmatpush1.msra.mxu0 %v1206
    %1233 = vmatprep.subr.mxu0 0.0
    %1234 = vmatpush1.msra.mxu0 %v1207
    %1235 = vmatprep.subr.mxu0 0.0
    %1236 = vmatpush1.msra.mxu0 %v1208
    %1237 = vmatprep.subr.mxu0 0.0
    %1238 = vmatpush1.msra.mxu0 %v1209
    %1239 = vmatprep.subr.mxu0 0.0
    %1240 = vmatpush1.msra.mxu0 %v1210
    %1241 = vmatprep.subr.mxu0 0.0
    %1242 = vmatpush1.msra.mxu0 %v1211
    %1243 = vmatprep.subr.mxu0 0.0
    %1244 = vmatpush1.msra.mxu0 %v1212
    %1245 = vmatprep.subr.mxu0 0.0
    %1246 = vmatpush1.msra.mxu0 %v1213
    %1247 = vmatprep.subr.mxu0 0.0
    %1248 = vmatpush1.msra.mxu0 %v1214
    %1249 = vmatprep.subr.mxu0 0.0
    %1250 = vmatpush1.msra.mxu0 %v1215
    %1251 = vmatprep.subr.mxu0 0.0
    %1252 = vmatpush1.msra.mxu0 %v1216
    %1253 = vmatprep.subr.mxu0 0.0
    %1254 = vmatpush1.msra.mxu0 %v1217
    %1255 = vmatprep.subr.mxu0 0.0
    %1256 = vmatpush1.msra.mxu0 %v1218
    %1257 = vmatprep.subr.mxu0 0.0
    %1258 = vmatpush1.msra.mxu0 %v1219
    %1259 = vmatprep.subr.mxu0 0.0
    %1260 = vmatpush1.msra.mxu0 %v1220
    %1261 = vmatprep.subr.mxu0 0.0
    %1262 = vmatpush1.msra.mxu0 0.0
    %1263 = vmatprep.subr.mxu0 0.0
    %1264 = vmatpush1.msra.mxu0 0.0
    %1265 = vmatprep.subr.mxu0 0.0
    %1266 = vmatpush1.msra.mxu0 0.0
    %1267 = vmatprep.subr.mxu0 0.0
    %1268 = vmatpush1.msra.mxu0 0.0
    %1269 = vmatprep.subr.mxu0 0.0
    %1270 = vmatpush1.msra.mxu0 0.0
    %1271 = vmatprep.subr.mxu0 0.0
    %1272 = vmatpush1.msra.mxu0 0.0
    %1273 = vmatprep.subr.mxu0 0.0
    %1274 = vmatpush1.msra.mxu0 0.0
    %1275 = vmatprep.subr.mxu0 0.0
    %1276 = vmatpush1.msra.mxu0 0.0
    %1277 = vmatprep.subr.mxu0 0.0
    %1278 = vmatpush1.msra.mxu0 0.0
    %1279 = vmatprep.subr.mxu0 0.0
    %1280 = vmatpush1.msra.mxu0 0.0
    %1281 = vmatprep.subr.mxu0 0.0
    %1282 = vmatpush1.msra.mxu0 0.0
    %1283 = vmatprep.subr.mxu0 0.0
    %1284 = vmatpush1.msra.mxu0 0.0
    %1285 = vmatprep.subr.mxu0 0.0
    %1286 = vmatpush1.msra.mxu0 0.0
    %1287 = vmatprep.subr.mxu0 0.0
    %1288 = vmatpush1.msra.mxu0 0.0
    %1289 = vmatprep.subr.mxu0 0.0
    %1290 = vmatpush1.msra.mxu0 0.0
    %1291 = vmatprep.subr.mxu0 0.0
    %1292 = vmatpush1.msra.mxu0 0.0
    %1293 = vmatprep.mubr.f32.mxu0 0.0
    %1294 = vmatmul.mubr.f32.gmra.mrb[0].mxu0 %v131
    %v1295 = vpop.f32.mrb[0].mxu0
    %v1296 = vadd.f32 %v1227, %v1295
    %v1297 = vpop.f32.mrb[0].mxu0
    %1298 = vdwg.mxu0
    %vm1299 = vcmask 261120
    %v1301 = vsel %vm1299, %v255, 0
    %v1304 = vsel %vm1299, %v633, 0
    %1306 = vmatprep.subr.mxu0 0.0
    %1307 = vmatpush1.xpose.msra.mxu0 %v1304
    %1308 = vmatprep.subr.mxu0 0.0
    %1309 = vmatpush1.xpose.msra.mxu0 0.0
    %1310 = vmatprep.subr.mxu0 0.0
    %1311 = vmatpush1.xpose.msra.mxu0 0.0
    %1312 = vmatprep.subr.mxu0 0.0
    %1313 = vmatpush1.xpose.msra.mxu0 0.0
    %1314 = vmatprep.subr.mxu0 0.0
    %1315 = vmatpush1.xpose.msra.mxu0 0.0
    %1316 = vmatprep.subr.mxu0 0.0
    %1317 = vmatpush1.xpose.msra.mxu0 0.0
    %1318 = vmatprep.subr.mxu0 0.0
    %1319 = vmatpush1.xpose.msra.mxu0 0.0
    %1320 = vmatprep.subr.mxu0 0.0
    %1321 = vmatpush1.xpose.msra.mxu0 0.0
    %1322 = vmatprep.subr.mxu0 0.0
    %1323 = vmatpush1.xpose.msra.mxu0 0.0
    %1324 = vmatprep.subr.mxu0 0.0
    %1325 = vmatpush1.xpose.msra.mxu0 0.0
    %1326 = vmatprep.subr.mxu0 0.0
    %1327 = vmatpush1.xpose.msra.mxu0 0.0
    %1328 = vmatprep.subr.mxu0 0.0
    %1329 = vmatpush1.xpose.msra.mxu0 0.0
    %1330 = vmatprep.subr.mxu0 0.0
    %1331 = vmatpush1.xpose.msra.mxu0 0.0
    %1332 = vmatprep.subr.mxu0 0.0
    %1333 = vmatpush1.xpose.msra.mxu0 0.0
    %1334 = vmatprep.subr.mxu0 0.0
    %1335 = vmatpush1.xpose.msra.mxu0 0.0
    %1336 = vmatprep.subr.mxu0 0.0
    %1337 = vmatpush1.xpose.msra.mxu0 0.0
    %1338 = vmatprep.subr.mxu0 0.0
    %1339 = vmatpush1.xpose.msra.mxu0 0.0
    %1340 = vmatprep.subr.mxu0 0.0
    %1341 = vmatpush1.xpose.msra.mxu0 0.0
    %1342 = vmatprep.subr.mxu0 0.0
    %1343 = vmatpush1.xpose.msra.mxu0 0.0
    %1344 = vmatprep.subr.mxu0 0.0
    %1345 = vmatpush1.xpose.msra.mxu0 0.0
    %1346 = vmatprep.subr.mxu0 0.0
    %1347 = vmatpush1.xpose.msra.mxu0 0.0
    %1348 = vmatprep.subr.mxu0 0.0
    %1349 = vmatpush1.xpose.msra.mxu0 0.0
    %1350 = vmatprep.subr.mxu0 0.0
    %1351 = vmatpush1.xpose.msra.mxu0 0.0
    %1352 = vmatprep.subr.mxu0 0.0
    %1353 = vmatpush1.xpose.msra.mxu0 0.0
    %1354 = vmatprep.subr.mxu0 0.0
    %1355 = vmatpush1.xpose.msra.mxu0 0.0
    %1356 = vmatprep.subr.mxu0 0.0
    %1357 = vmatpush1.xpose.msra.mxu0 0.0
    %1358 = vmatprep.subr.mxu0 0.0
    %1359 = vmatpush1.xpose.msra.mxu0 0.0
    %1360 = vmatprep.subr.mxu0 0.0
    %1361 = vmatpush1.xpose.msra.mxu0 0.0
    %1362 = vmatprep.subr.mxu0 0.0
    %1363 = vmatpush1.xpose.msra.mxu0 0.0
    %1364 = vmatprep.subr.mxu0 0.0
    %1365 = vmatpush1.xpose.msra.mxu0 0.0
    %1366 = vmatprep.subr.mxu0 0.0
    %1367 = vmatpush1.xpose.msra.mxu0 0.0
    %1368 = vmatprep.subr.mxu0 0.0
    %1369 = vmatpush1.xpose.msra.mxu0 0.0
    %1370 = vmatprep.mubr.f32.mxu0 0.0
    %1371 = vmatmul.mubr.f32.gmra.mrb[0].mxu0 %v1301
    %v1372 = vpop.f32.mrb[0].mxu0
    %v1373 = vadd.f32 0.0, %v1372
    %v1374 = vpop.f32.mrb[0].mxu0
    %1375 = vdwg.mxu0
    %v1377 = vsel %vm1299, %v350, 0
    %v1380 = vsel %vm1299, %v728, 0
    %1382 = vmatprep.subr.mxu0 0.0
    %1383 = vmatpush1.xpose.msra.mxu0 %v1380
    %1384 = vmatprep.subr.mxu0 0.0
    %1385 = vmatpush1.xpose.msra.mxu0 0.0
    %1386 = vmatprep.subr.mxu0 0.0
    %1387 = vmatpush1.xpose.msra.mxu0 0.0
    %1388 = vmatprep.subr.mxu0 0.0
    %1389 = vmatpush1.xpose.msra.mxu0 0.0
    %1390 = vmatprep.subr.mxu0 0.0
    %1391 = vmatpush1.xpose.msra.mxu0 0.0
    %1392 = vmatprep.subr.mxu0 0.0
    %1393 = vmatpush1.xpose.msra.mxu0 0.0
    %1394 = vmatprep.subr.mxu0 0.0
    %1395 = vmatpush1.xpose.msra.mxu0 0.0
    %1396 = vmatprep.subr.mxu0 0.0
    %1397 = vmatpush1.xpose.msra.mxu0 0.0
    %1398 = vmatprep.subr.mxu0 0.0
    %1399 = vmatpush1.xpose.msra.mxu0 0.0
    %1400 = vmatprep.subr.mxu0 0.0
    %1401 = vmatpush1.xpose.msra.mxu0 0.0
    %1402 = vmatprep.subr.mxu0 0.0
    %1403 = vmatpush1.xpose.msra.mxu0 0.0
    %1404 = vmatprep.subr.mxu0 0.0
    %1405 = vmatpush1.xpose.msra.mxu0 0.0
    %1406 = vmatprep.subr.mxu0 0.0
    %1407 = vmatpush1.xpose.msra.mxu0 0.0
    %1408 = vmatprep.subr.mxu0 0.0
    %1409 = vmatpush1.xpose.msra.mxu0 0.0
    %1410 = vmatprep.subr.mxu0 0.0
    %1411 = vmatpush1.xpose.msra.mxu0 0.0
    %1412 = vmatprep.subr.mxu0 0.0
    %1413 = vmatpush1.xpose.msra.mxu0 0.0
    %1414 = vmatprep.subr.mxu0 0.0
    %1415 = vmatpush1.xpose.msra.mxu0 0.0
    %1416 = vmatprep.subr.mxu0 0.0
    %1417 = vmatpush1.xpose.msra.mxu0 0.0
    %1418 = vmatprep.subr.mxu0 0.0
    %1419 = vmatpush1.xpose.msra.mxu0 0.0
    %1420 = vmatprep.subr.mxu0 0.0
    %1421 = vmatpush1.xpose.msra.mxu0 0.0
    %1422 = vmatprep.subr.mxu0 0.0
    %1423 = vmatpush1.xpose.msra.mxu0 0.0
    %1424 = vmatprep.subr.mxu0 0.0
    %1425 = vmatpush1.xpose.msra.mxu0 0.0
    %1426 = vmatprep.subr.mxu0 0.0
    %1427 = vmatpush1.xpose.msra.mxu0 0.0
    %1428 = vmatprep.subr.mxu0 0.0
    %1429 = vmatpush1.xpose.msra.mxu0 0.0
    %1430 = vmatprep.subr.mxu0 0.0
    %1431 = vmatpush1.xpose.msra.mxu0 0.0
    %1432 = vmatprep.subr.mxu0 0.0
    %1433 = vmatpush1.xpose.msra.mxu0 0.0
    %1434 = vmatprep.subr.mxu0 0.0
    %1435 = vmatpush1.xpose.msra.mxu0 0.0
    %1436 = vmatprep.subr.mxu0 0.0
    %1437 = vmatpush1.xpose.msra.mxu0 0.0
    %1438 = vmatprep.subr.mxu0 0.0
    %1439 = vmatpush1.xpose.msra.mxu0 0.0
    %1440 = vmatprep.subr.mxu0 0.0
    %1441 = vmatpush1.xpose.msra.mxu0 0.0
    %1442 = vmatprep.subr.mxu0 0.0
    %1443 = vmatpush1.xpose.msra.mxu0 0.0
    %1444 = vmatprep.subr.mxu0 0.0
    %1445 = vmatpush1.xpose.msra.mxu0 0.0
    %1446 = vmatprep.mubr.f32.mxu0 0.0
    %1447 = vmatmul.mubr.f32.gmra.mrb[0].mxu0 %v1377
    %v1448 = vpop.f32.mrb[0].mxu0
    %v1449 = vadd.f32 0.0, %v1448
    %v1450 = vpop.f32.mrb[0].mxu0
    %1451 = vdwg.mxu0
    %v1453 = vsel %vm1299, %v445, 0
    %v1456 = vsel %vm1299, %v823, 0
    %1458 = vmatprep.subr.mxu0 0.0
    %1459 = vmatpush1.xpose.msra.mxu0 %v1456
    %1460 = vmatprep.subr.mxu0 0.0
    %1461 = vmatpush1.xpose.msra.mxu0 0.0
    %1462 = vmatprep.subr.mxu0 0.0
    %1463 = vmatpush1.xpose.msra.mxu0 0.0
    %1464 = vmatprep.subr.mxu0 0.0
    %1465 = vmatpush1.xpose.msra.mxu0 0.0
    %1466 = vmatprep.subr.mxu0 0.0
    %1467 = vmatpush1.xpose.msra.mxu0 0.0
    %1468 = vmatprep.subr.mxu0 0.0
    %1469 = vmatpush1.xpose.msra.mxu0 0.0
    %1470 = vmatprep.subr.mxu0 0.0
    %1471 = vmatpush1.xpose.msra.mxu0 0.0
    %1472 = vmatprep.subr.mxu0 0.0
    %1473 = vmatpush1.xpose.msra.mxu0 0.0
    %1474 = vmatprep.subr.mxu0 0.0
    %1475 = vmatpush1.xpose.msra.mxu0 0.0
    %1476 = vmatprep.subr.mxu0 0.0
    %1477 = vmatpush1.xpose.msra.mxu0 0.0
    %1478 = vmatprep.subr.mxu0 0.0
    %1479 = vmatpush1.xpose.msra.mxu0 0.0
    %1480 = vmatprep.subr.mxu0 0.0
    %1481 = vmatpush1.xpose.msra.mxu0 0.0
    %1482 = vmatprep.subr.mxu0 0.0
    %1483 = vmatpush1.xpose.msra.mxu0 0.0
    %1484 = vmatprep.subr.mxu0 0.0
    %1485 = vmatpush1.xpose.msra.mxu0 0.0
    %1486 = vmatprep.subr.mxu0 0.0
    %1487 = vmatpush1.xpose.msra.mxu0 0.0
    %1488 = vmatprep.subr.mxu0 0.0
    %1489 = vmatpush1.xpose.msra.mxu0 0.0
    %1490 = vmatprep.subr.mxu0 0.0
    %1491 = vmatpush1.xpose.msra.mxu0 0.0
    %1492 = vmatprep.subr.mxu0 0.0
    %1493 = vmatpush1.xpose.msra.mxu0 0.0
    %1494 = vmatprep.subr.mxu0 0.0
    %1495 = vmatpush1.xpose.msra.mxu0 0.0
    %1496 = vmatprep.subr.mxu0 0.0
    %1497 = vmatpush1.xpose.msra.mxu0 0.0
    %1498 = vmatprep.subr.mxu0 0.0
    %1499 = vmatpush1.xpose.msra.mxu0 0.0
    %1500 = vmatprep.subr.mxu0 0.0
    %1501 = vmatpush1.xpose.msra.mxu0 0.0
    %1502 = vmatprep.subr.mxu0 0.0
    %1503 = vmatpush1.xpose.msra.mxu0 0.0
    %1504 = vmatprep.subr.mxu0 0.0
    %1505 = vmatpush1.xpose.msra.mxu0 0.0
    %1506 = vmatprep.subr.mxu0 0.0
    %1507 = vmatpush1.xpose.msra.mxu0 0.0
    %1508 = vmatprep.subr.mxu0 0.0
    %1509 = vmatpush1.xpose.msra.mxu0 0.0
    %1510 = vmatprep.subr.mxu0 0.0
    %1511 = vmatpush1.xpose.msra.mxu0 0.0
    %1512 = vmatprep.subr.mxu0 0.0
    %1513 = vmatpush1.xpose.msra.mxu0 0.0
    %1514 = vmatprep.subr.mxu0 0.0
    %1515 = vmatpush1.xpose.msra.mxu0 0.0
    %1516 = vmatprep.subr.mxu0 0.0
    %1517 = vmatpush1.xpose.msra.mxu0 0.0
    %1518 = vmatprep.subr.mxu0 0.0
    %1519 = vmatpush1.xpose.msra.mxu0 0.0
    %1520 = vmatprep.subr.mxu0 0.0
    %1521 = vmatpush1.xpose.msra.mxu0 0.0
    %1522 = vmatprep.mubr.f32.mxu0 0.0
    %1523 = vmatmul.mubr.f32.gmra.mrb[0].mxu0 %v1453
    %v1524 = vpop.f32.mrb[0].mxu0
    %v1525 = vadd.f32 0.0, %v1524
    %v1526 = vpop.f32.mrb[0].mxu0
    %1527 = vdwg.mxu0
    %v1529 = vsel %vm1299, %v540, 0
    %v1532 = vsel %vm1299, %v918, 0
    %1534 = vmatprep.subr.mxu0 0.0
    %1535 = vmatpush1.xpose.msra.mxu0 %v1532
    %1536 = vmatprep.subr.mxu0 0.0
    %1537 = vmatpush1.xpose.msra.mxu0 0.0
    %1538 = vmatprep.subr.mxu0 0.0
    %1539 = vmatpush1.xpose.msra.mxu0 0.0
    %1540 = vmatprep.subr.mxu0 0.0
    %1541 = vmatpush1.xpose.msra.mxu0 0.0
    %1542 = vmatprep.subr.mxu0 0.0
    %1543 = vmatpush1.xpose.msra.mxu0 0.0
    %1544 = vmatprep.subr.mxu0 0.0
    %1545 = vmatpush1.xpose.msra.mxu0 0.0
    %1546 = vmatprep.subr.mxu0 0.0
    %1547 = vmatpush1.xpose.msra.mxu0 0.0
    %1548 = vmatprep.subr.mxu0 0.0
    %1549 = vmatpush1.xpose.msra.mxu0 0.0
    %1550 = vmatprep.subr.mxu0 0.0
    %1551 = vmatpush1.xpose.msra.mxu0 0.0
    %1552 = vmatprep.subr.mxu0 0.0
    %1553 = vmatpush1.xpose.msra.mxu0 0.0
    %1554 = vmatprep.subr.mxu0 0.0
    %1555 = vmatpush1.xpose.msra.mxu0 0.0
    %1556 = vmatprep.subr.mxu0 0.0
    %1557 = vmatpush1.xpose.msra.mxu0 0.0
    %1558 = vmatprep.subr.mxu0 0.0
    %1559 = vmatpush1.xpose.msra.mxu0 0.0
    %1560 = vmatprep.subr.mxu0 0.0
    %1561 = vmatpush1.xpose.msra.mxu0 0.0
    %1562 = vmatprep.subr.mxu0 0.0
    %1563 = vmatpush1.xpose.msra.mxu0 0.0
    %1564 = vmatprep.subr.mxu0 0.0
    %1565 = vmatpush1.xpose.msra.mxu0 0.0
    %1566 = vmatprep.subr.mxu0 0.0
    %1567 = vmatpush1.xpose.msra.mxu0 0.0
    %1568 = vmatprep.subr.mxu0 0.0
    %1569 = vmatpush1.xpose.msra.mxu0 0.0
    %1570 = vmatprep.subr.mxu0 0.0
    %1571 = vmatpush1.xpose.msra.mxu0 0.0
    %1572 = vmatprep.subr.mxu0 0.0
    %1573 = vmatpush1.xpose.msra.mxu0 0.0
    %1574 = vmatprep.subr.mxu0 0.0
    %1575 = vmatpush1.xpose.msra.mxu0 0.0
    %1576 = vmatprep.subr.mxu0 0.0
    %1577 = vmatpush1.xpose.msra.mxu0 0.0
    %1578 = vmatprep.subr.mxu0 0.0
    %1579 = vmatpush1.xpose.msra.mxu0 0.0
    %1580 = vmatprep.subr.mxu0 0.0
    %1581 = vmatpush1.xpose.msra.mxu0 0.0
    %1582 = vmatprep.subr.mxu0 0.0
    %1583 = vmatpush1.xpose.msra.mxu0 0.0
    %1584 = vmatprep.subr.mxu0 0.0
    %1585 = vmatpush1.xpose.msra.mxu0 0.0
    %1586 = vmatprep.subr.mxu0 0.0
    %1587 = vmatpush1.xpose.msra.mxu0 0.0
    %1588 = vmatprep.subr.mxu0 0.0
    %1589 = vmatpush1.xpose.msra.mxu0 0.0
    %1590 = vmatprep.subr.mxu0 0.0
    %1591 = vmatpush1.xpose.msra.mxu0 0.0
    %1592 = vmatprep.subr.mxu0 0.0
    %1593 = vmatpush1.xpose.msra.mxu0 0.0
    %1594 = vmatprep.subr.mxu0 0.0
    %1595 = vmatpush1.xpose.msra.mxu0 0.0
    %1596 = vmatprep.subr.mxu0 0.0
    %1597 = vmatpush1.xpose.msra.mxu0 0.0
    %1598 = vmatprep.mubr.f32.mxu0 0.0
    %1599 = vmatmul.mubr.f32.gmra.mrb[0].mxu0 %v1529
    %v1600 = vpop.f32.mrb[0].mxu0
    %v1601 = vadd.f32 0.0, %v1600
    %v1602 = vpop.f32.mrb[0].mxu0
    %1603 = vdwg.mxu0
    %v1604 = vmul.f32 %v1373, 0.17677669
    %v1605 = vmul.f32 %v1449, 0.17677669
    %v1606 = vmul.f32 %v1525, 0.17677669
    %v1607 = vmul.f32 %v1601, 0.17677669
    %v1608 = vadd.f32 %v1604, %v146
    %v1609 = vadd.f32 %v1605, %v146
    %v1610 = vadd.f32 %v1606, %v146
    %v1611 = vadd.f32 %v1607, %v146
    %vm1612 = vcmask 64512
    %v1613 = vsel %vm1612, %v1608, -inf
    %1614 = vmax.xlane.f32.xlu0 %v1613
    %v1615 = vpop.xlane.xlu0 %1614
    %v1616 = vsel %vm1612, %v1609, -inf
    %1617 = vmax.xlane.f32.xlu0 %v1616
    %v1618 = vpop.xlane.xlu0 %1617
    %v1619 = vsel %vm1612, %v1610, -inf
    %1620 = vmax.xlane.f32.xlu0 %v1619
    %v1621 = vpop.xlane.xlu0 %1620
    %v1622 = vsel %vm1612, %v1611, -inf
    %1623 = vmax.xlane.f32.xlu0 %v1622
    %v1624 = vpop.xlane.xlu0 %1623
    %v1625 = vsub.f32 %v1608, %v1615
    %v1626 = vsub.f32 %v1609, %v1618
    %v1627 = vsub.f32 %v1610, %v1621
    %v1628 = vsub.f32 %v1611, %v1624
    %v1629 = vmul.f32 %v1625, 1.442695
    %v1630 = vpow.pop %v1629
    %v1631 = vmul.f32 %v1626, 1.442695
    %v1632 = vpow.pop %v1631
    %v1633 = vmul.f32 %v1627, 1.442695
    %v1634 = vpow.pop %v1633
    %v1635 = vmul.f32 %v1628, 1.442695
    %v1636 = vpow.pop %v1635
    %v1637 = vsel %vm1612, %v1630, 0.0
    %1638 = vadd.xlane.f32.xlu0 %v1637
    %v1639 = vpop.xlane.xlu0 %1638
    %v1640 = vsel %vm1612, %v1632, 0.0
    %1641 = vadd.xlane.f32.xlu0 %v1640
    %v1642 = vpop.xlane.xlu0 %1641
    %v1643 = vsel %vm1612, %v1634, 0.0
    %1644 = vadd.xlane.f32.xlu0 %v1643
    %v1645 = vpop.xlane.xlu0 %1644
    %v1646 = vsel %vm1612, %v1636, 0.0
    %1647 = vadd.xlane.f32.xlu0 %v1646
    %v1648 = vpop.xlane.xlu0 %1647
    %v1649 = vrcp.pop %v1639
    %v1650 = vrcp.pop %v1642
    %v1651 = vrcp.pop %v1645
    %v1652 = vrcp.pop %v1648
    %v1653 = vmul.f32 %v1630, %v1649
    %v1654 = vmul.f32 %v1632, %v1650
    %v1655 = vmul.f32 %v1634, %v1651
    %v1656 = vmul.f32 %v1636, %v1652
    %v1658 = vsel %vm1612, %v1653, 0
    %1660 = vmatprep.subr.mxu0 0.0
    %1661 = vmatpush1.msra.mxu0 %v1011
    %1662 = vmatprep.subr.mxu0 0.0
    %1663 = vmatpush1.msra.mxu0 0.0
    %1664 = vmatprep.subr.mxu0 0.0
    %1665 = vmatpush1.msra.mxu0 0.0
    %1666 = vmatprep.subr.mxu0 0.0
    %1667 = vmatpush1.msra.mxu0 0.0
    %1668 = vmatprep.subr.mxu0 0.0
    %1669 = vmatpush1.msra.mxu0 0.0
    %1670 = vmatprep.subr.mxu0 0.0
    %1671 = vmatpush1.msra.mxu0 0.0
    %1672 = vmatprep.subr.mxu0 0.0
    %1673 = vmatpush1.msra.mxu0 0.0
    %1674 = vmatprep.subr.mxu0 0.0
    %1675 = vmatpush1.msra.mxu0 0.0
    %1676 = vmatprep.subr.mxu0 0.0
    %1677 = vmatpush1.msra.mxu0 0.0
    %1678 = vmatprep.subr.mxu0 0.0
    %1679 = vmatpush1.msra.mxu0 0.0
    %1680 = vmatprep.subr.mxu0 0.0
    %1681 = vmatpush1.msra.mxu0 0.0
    %1682 = vmatprep.subr.mxu0 0.0
    %1683 = vmatpush1.msra.mxu0 0.0
    %1684 = vmatprep.subr.mxu0 0.0
    %1685 = vmatpush1.msra.mxu0 0.0
    %1686 = vmatprep.subr.mxu0 0.0
    %1687 = vmatpush1.msra.mxu0 0.0
    %1688 = vmatprep.subr.mxu0 0.0
    %1689 = vmatpush1.msra.mxu0 0.0
    %1690 = vmatprep.subr.mxu0 0.0
    %1691 = vmatpush1.msra.mxu0 0.0
    %1692 = vmatprep.subr.mxu0 0.0
    %1693 = vmatpush1.msra.mxu0 0.0
    %1694 = vmatprep.subr.mxu0 0.0
    %1695 = vmatpush1.msra.mxu0 0.0
    %1696 = vmatprep.subr.mxu0 0.0
    %1697 = vmatpush1.msra.mxu0 0.0
    %1698 = vmatprep.subr.mxu0 0.0
    %1699 = vmatpush1.msra.mxu0 0.0
    %1700 = vmatprep.subr.mxu0 0.0
    %1701 = vmatpush1.msra.mxu0 0.0
    %1702 = vmatprep.subr.mxu0 0.0
    %1703 = vmatpush1.msra.mxu0 0.0
    %1704 = vmatprep.subr.mxu0 0.0
    %1705 = vmatpush1.msra.mxu0 0.0
    %1706 = vmatprep.subr.mxu0 0.0
    %1707 = vmatpush1.msra.mxu0 0.0
    %1708 = vmatprep.subr.mxu0 0.0
    %1709 = vmatpush1.msra.mxu0 0.0
    %1710 = vmatprep.subr.mxu0 0.0
    %1711 = vmatpush1.msra.mxu0 0.0
    %1712 = vmatprep.subr.mxu0 0.0
    %1713 = vmatpush1.msra.mxu0 0.0
    %1714 = vmatprep.subr.mxu0 0.0
    %1715 = vmatpush1.msra.mxu0 0.0
    %1716 = vmatprep.subr.mxu0 0.0
    %1717 = vmatpush1.msra.mxu0 0.0
    %1718 = vmatprep.subr.mxu0 0.0
    %1719 = vmatpush1.msra.mxu0 0.0
    %1720 = vmatprep.subr.mxu0 0.0
    %1721 = vmatpush1.msra.mxu0 0.0
    %1722 = vmatprep.subr.mxu0 0.0
    %1723 = vmatpush1.msra.mxu0 0.0
    %1724 = vmatprep.mubr.f32.mxu0 0.0
    %1725 = vmatmul.mubr.f32.gmra.mrb[0].mxu0 %v1658
    %v1726 = vpop.f32.mrb[0].mxu0
    %v1727 = vadd.f32 0.0, %v1726
    %v1728 = vpop.f32.mrb[0].mxu0
    %1729 = vdwg.mxu0
    %v1731 = vsel %vm1612, %v1654, 0
    %1733 = vmatprep.subr.mxu0 0.0
    %1734 = vmatpush1.msra.mxu0 %v1106
    %1735 = vmatprep.subr.mxu0 0.0
    %1736 = vmatpush1.msra.mxu0 0.0
    %1737 = vmatprep.subr.mxu0 0.0
    %1738 = vmatpush1.msra.mxu0 0.0
    %1739 = vmatprep.subr.mxu0 0.0
    %1740 = vmatpush1.msra.mxu0 0.0
    %1741 = vmatprep.subr.mxu0 0.0
    %1742 = vmatpush1.msra.mxu0 0.0
    %1743 = vmatprep.subr.mxu0 0.0
    %1744 = vmatpush1.msra.mxu0 0.0
    %1745 = vmatprep.subr.mxu0 0.0
    %1746 = vmatpush1.msra.mxu0 0.0
    %1747 = vmatprep.subr.mxu0 0.0
    %1748 = vmatpush1.msra.mxu0 0.0
    %1749 = vmatprep.subr.mxu0 0.0
    %1750 = vmatpush1.msra.mxu0 0.0
    %1751 = vmatprep.subr.mxu0 0.0
    %1752 = vmatpush1.msra.mxu0 0.0
    %1753 = vmatprep.subr.mxu0 0.0
    %1754 = vmatpush1.msra.mxu0 0.0
    %1755 = vmatprep.subr.mxu0 0.0
    %1756 = vmatpush1.msra.mxu0 0.0
    %1757 = vmatprep.subr.mxu0 0.0
    %1758 = vmatpush1.msra.mxu0 0.0
    %1759 = vmatprep.subr.mxu0 0.0
    %1760 = vmatpush1.msra.mxu0 0.0
    %1761 = vmatprep.subr.mxu0 0.0
    %1762 = vmatpush1.msra.mxu0 0.0
    %1763 = vmatprep.subr.mxu0 0.0
    %1764 = vmatpush1.msra.mxu0 0.0
    %1765 = vmatprep.subr.mxu0 0.0
    %1766 = vmatpush1.msra.mxu0 0.0
    %1767 = vmatprep.subr.mxu0 0.0
    %1768 = vmatpush1.msra.mxu0 0.0
    %1769 = vmatprep.subr.mxu0 0.0
    %1770 = vmatpush1.msra.mxu0 0.0
    %1771 = vmatprep.subr.mxu0 0.0
    %1772 = vmatpush1.msra.mxu0 0.0
    %1773 = vmatprep.subr.mxu0 0.0
    %1774 = vmatpush1.msra.mxu0 0.0
    %1775 = vmatprep.subr.mxu0 0.0
    %1776 = vmatpush1.msra.mxu0 0.0
    %1777 = vmatprep.subr.mxu0 0.0
    %1778 = vmatpush1.msra.mxu0 0.0
    %1779 = vmatprep.subr.mxu0 0.0
    %1780 = vmatpush1.msra.mxu0 0.0
    %1781 = vmatprep.subr.mxu0 0.0
    %1782 = vmatpush1.msra.mxu0 0.0
    %1783 = vmatprep.subr.mxu0 0.0
    %1784 = vmatpush1.msra.mxu0 0.0
    %1785 = vmatprep.subr.mxu0 0.0
    %1786 = vmatpush1.msra.mxu0 0.0
    %1787 = vmatprep.subr.mxu0 0.0
    %1788 = vmatpush1.msra.mxu0 0.0
    %1789 = vmatprep.subr.mxu0 0.0
    %1790 = vmatpush1.msra.mxu0 0.0
    %1791 = vmatprep.subr.mxu0 0.0
    %1792 = vmatpush1.msra.mxu0 0.0
    %1793 = vmatprep.subr.mxu0 0.0
    %1794 = vmatpush1.msra.mxu0 0.0
    %1795 = vmatprep.subr.mxu0 0.0
    %1796 = vmatpush1.msra.mxu0 0.0
    %1797 = vmatprep.mubr.f32.mxu0 0.0
    %1798 = vmatmul.mubr.f32.gmra.mrb[0].mxu0 %v1731
    %v1799 = vpop.f32.mrb[0].mxu0
    %v1800 = vadd.f32 0.0, %v1799
    %v1801 = vpop.f32.mrb[0].mxu0
    %1802 = vdwg.mxu0
    %v1804 = vsel %vm1612, %v1655, 0
    %1806 = vmatprep.subr.mxu0 0.0
    %1807 = vmatpush1.msra.mxu0 %v1201
    %1808 = vmatprep.subr.mxu0 0.0
    %1809 = vmatpush1.msra.mxu0 0.0
    %1810 = vmatprep.subr.mxu0 0.0
    %1811 = vmatpush1.msra.mxu0 0.0
    %1812 = vmatprep.subr.mxu0 0.0
    %1813 = vmatpush1.msra.mxu0 0.0
    %1814 = vmatprep.subr.mxu0 0.0
    %1815 = vmatpush1.msra.mxu0 0.0
    %1816 = vmatprep.subr.mxu0 0.0
    %1817 = vmatpush1.msra.mxu0 0.0
    %1818 = vmatprep.subr.mxu0 0.0
    %1819 = vmatpush1.msra.mxu0 0.0
    %1820 = vmatprep.subr.mxu0 0.0
    %1821 = vmatpush1.msra.mxu0 0.0
    %1822 = vmatprep.subr.mxu0 0.0
    %1823 = vmatpush1.msra.mxu0 0.0
    %1824 = vmatprep.subr.mxu0 0.0
    %1825 = vmatpush1.msra.mxu0 0.0
    %1826 = vmatprep.subr.mxu0 0.0
    %1827 = vmatpush1.msra.mxu0 0.0
    %1828 = vmatprep.subr.mxu0 0.0
    %1829 = vmatpush1.msra.mxu0 0.0
    %1830 = vmatprep.subr.mxu0 0.0
    %1831 = vmatpush1.msra.mxu0 0.0
    %1832 = vmatprep.subr.mxu0 0.0
    %1833 = vmatpush1.msra.mxu0 0.0
    %1834 = vmatprep.subr.mxu0 0.0
    %1835 = vmatpush1.msra.mxu0 0.0
    %1836 = vmatprep.subr.mxu0 0.0
    %1837 = vmatpush1.msra.mxu0 0.0
    %1838 = vmatprep.subr.mxu0 0.0
    %1839 = vmatpush1.msra.mxu0 0.0
    %1840 = vmatprep.subr.mxu0 0.0
    %1841 = vmatpush1.msra.mxu0 0.0
    %1842 = vmatprep.subr.mxu0 0.0
    %1843 = vmatpush1.msra.mxu0 0.0
    %1844 = vmatprep.subr.mxu0 0.0
    %1845 = vmatpush1.msra.mxu0 0.0
    %1846 = vmatprep.subr.mxu0 0.0
    %1847 = vmatpush1.msra.mxu0 0.0
    %1848 = vmatprep.subr.mxu0 0.0
    %1849 = vmatpush1.msra.mxu0 0.0
    %1850 = vmatprep.subr.mxu0 0.0
    %1851 = vmatpush1.msra.mxu0 0.0
    %1852 = vmatprep.subr.mxu0 0.0
    %1853 = vmatpush1.msra.mxu0 0.0
    %1854 = vmatprep.subr.mxu0 0.0
    %1855 = vmatpush1.msra.mxu0 0.0
    %1856 = vmatprep.subr.mxu0 0.0
    %1857 = vmatpush1.msra.mxu0 0.0
    %1858 = vmatprep.subr.mxu0 0.0
    %1859 = vmatpush1.msra.mxu0 0.0
    %1860 = vmatprep.subr.mxu0 0.0
    %1861 = vmatpush1.msra.mxu0 0.0
    %1862 = vmatprep.subr.mxu0 0.0
    %1863 = vmatpush1.msra.mxu0 0.0
    %1864 = vmatprep.subr.mxu0 0.0
    %1865 = vmatpush1.msra.mxu0 0.0
    %1866 = vmatprep.subr.mxu0 0.0
    %1867 = vmatpush1.msra.mxu0 0.0
    %1868 = vmatprep.subr.mxu0 0.0
    %1869 = vmatpush1.msra.mxu0 0.0
    %1870 = vmatprep.mubr.f32.mxu0 0.0
    %1871 = vmatmul.mubr.f32.gmra.mrb[0].mxu0 %v1804
    %v1872 = vpop.f32.mrb[0].mxu0
    %v1873 = vadd.f32 0.0, %v1872
    %v1874 = vpop.f32.mrb[0].mxu0
    %1875 = vdwg.mxu0
    %v1877 = vsel %vm1612, %v1656, 0
    %1879 = vmatprep.subr.mxu0 0.0
    %1880 = vmatpush1.msra.mxu0 %v1296
    %1881 = vmatprep.subr.mxu0 0.0
    %1882 = vmatpush1.msra.mxu0 0.0
    %1883 = vmatprep.subr.mxu0 0.0
    %1884 = vmatpush1.msra.mxu0 0.0
    %1885 = vmatprep.subr.mxu0 0.0
    %1886 = vmatpush1.msra.mxu0 0.0
    %1887 = vmatprep.subr.mxu0 0.0
    %1888 = vmatpush1.msra.mxu0 0.0
    %1889 = vmatprep.subr.mxu0 0.0
    %1890 = vmatpush1.msra.mxu0 0.0
    %1891 = vmatprep.subr.mxu0 0.0
    %1892 = vmatpush1.msra.mxu0 0.0
    %1893 = vmatprep.subr.mxu0 0.0
    %1894 = vmatpush1.msra.mxu0 0.0
    %1895 = vmatprep.subr.mxu0 0.0
    %1896 = vmatpush1.msra.mxu0 0.0
    %1897 = vmatprep.subr.mxu0 0.0
    %1898 = vmatpush1.msra.mxu0 0.0
    %1899 = vmatprep.subr.mxu0 0.0
    %1900 = vmatpush1.msra.mxu0 0.0
    %1901 = vmatprep.subr.mxu0 0.0
    %1902 = vmatpush1.msra.mxu0 0.0
    %1903 = vmatprep.subr.mxu0 0.0
    %1904 = vmatpush1.msra.mxu0 0.0
    %1905 = vmatprep.subr.mxu0 0.0
    %1906 = vmatpush1.msra.mxu0 0.0
    %1907 = vmatprep.subr.mxu0 0.0
    %1908 = vmatpush1.msra.mxu0 0.0
    %1909 = vmatprep.subr.mxu0 0.0
    %1910 = vmatpush1.msra.mxu0 0.0
    %1911 = vmatprep.subr.mxu0 0.0
    %1912 = vmatpush1.msra.mxu0 0.0
    %1913 = vmatprep.subr.mxu0 0.0
    %1914 = vmatpush1.msra.mxu0 0.0
    %1915 = vmatprep.subr.mxu0 0.0
    %1916 = vmatpush1.msra.mxu0 0.0
    %1917 = vmatprep.subr.mxu0 0.0
    %1918 = vmatpush1.msra.mxu0 0.0
    %1919 = vmatprep.subr.mxu0 0.0
    %1920 = vmatpush1.msra.mxu0 0.0
    %1921 = vmatprep.subr.mxu0 0.0
    %1922 = vmatpush1.msra.mxu0 0.0
    %1923 = vmatprep.subr.mxu0 0.0
    %1924 = vmatpush1.msra.mxu0 0.0
    %1925 = vmatprep.subr.mxu0 0.0
    %1926 = vmatpush1.msra.mxu0 0.0
    %1927 = vmatprep.subr.mxu0 0.0
    %1928 = vmatpush1.msra.mxu0 0.0
    %1929 = vmatprep.subr.mxu0 0.0
    %1930 = vmatpush1.msra.mxu0 0.0
    %1931 = vmatprep.subr.mxu0 0.0
    %1932 = vmatpush1.msra.mxu0 0.0
    %1933 = vmatprep.subr.mxu0 0.0
    %1934 = vmatpush1.msra.mxu0 0.0
    %1935 = vmatprep.subr.mxu0 0.0
    %1936 = vmatpush1.msra.mxu0 0.0
    %1937 = vmatprep.subr.mxu0 0.0
    %1938 = vmatpush1.msra.mxu0 0.0
    %1939 = vmatprep.subr.mxu0 0.0
    %1940 = vmatpush1.msra.mxu0 0.0
    %1941 = vmatprep.subr.mxu0 0.0
    %1942 = vmatpush1.msra.mxu0 0.0
    %1943 = vmatprep.mubr.f32.mxu0 0.0
    %1944 = vmatmul.mubr.f32.gmra.mrb[0].mxu0 %v1877
    %v1945 = vpop.f32.mrb[0].mxu0
    %v1946 = vadd.f32 0.0, %v1945
    %v1947 = vpop.f32.mrb[0].mxu0
    %1948 = vdwg.mxu0
    %v1949 = vld [vmem:[%s23] sm:$0xff]
    %v1950 = vld [vmem:[%s23 + $0x8] sm:$0xff]
    %v1951 = vld [vmem:[%s23 + $0x10] sm:$0xff]
    %v1952 = vld [vmem:[%s23 + $0x18] sm:$0xff]
    %s1953 = scalar_lea.vmem %s23, 32
    %v1954 = vld [vmem:[%s1953] sm:$0xff]
    %v1955 = vld [vmem:[%s1953 + $0x8] sm:$0xff]
    %v1956 = vld [vmem:[%s1953 + $0x10] sm:$0xff]
    %v1957 = vld [vmem:[%s1953 + $0x18] sm:$0xff]
    %v1959 = vsel %vm1299, %v1800, 0
    %1961 = vmatprep.subr.mxu0 0.0
    %1962 = vmatpush1.msra.mxu0 %v1954
    %1963 = vmatprep.subr.mxu0 0.0
    %1964 = vmatpush1.msra.mxu0 %v1955
    %1965 = vmatprep.subr.mxu0 0.0
    %1966 = vmatpush1.msra.mxu0 %v1956
    %1967 = vmatprep.subr.mxu0 0.0
    %1968 = vmatpush1.msra.mxu0 %v1957
    %1969 = vmatprep.subr.mxu0 0.0
    %1970 = vmatpush1.msra.mxu0 0.0
    %1971 = vmatprep.subr.mxu0 0.0
    %1972 = vmatpush1.msra.mxu0 0.0
    %1973 = vmatprep.subr.mxu0 0.0
    %1974 = vmatpush1.msra.mxu0 0.0
    %1975 = vmatprep.subr.mxu0 0.0
    %1976 = vmatpush1.msra.mxu0 0.0
    %1977 = vmatprep.subr.mxu0 0.0
    %1978 = vmatpush1.msra.mxu0 0.0
    %1979 = vmatprep.subr.mxu0 0.0
    %1980 = vmatpush1.msra.mxu0 0.0
    %1981 = vmatprep.subr.mxu0 0.0
    %1982 = vmatpush1.msra.mxu0 0.0
    %1983 = vmatprep.subr.mxu0 0.0
    %1984 = vmatpush1.msra.mxu0 0.0
    %1985 = vmatprep.subr.mxu0 0.0
    %1986 = vmatpush1.msra.mxu0 0.0
    %1987 = vmatprep.subr.mxu0 0.0
    %1988 = vmatpush1.msra.mxu0 0.0
    %1989 = vmatprep.subr.mxu0 0.0
    %1990 = vmatpush1.msra.mxu0 0.0
    %1991 = vmatprep.subr.mxu0 0.0
    %1992 = vmatpush1.msra.mxu0 0.0
    %1993 = vmatprep.subr.mxu0 0.0
    %1994 = vmatpush1.msra.mxu0 0.0
    %1995 = vmatprep.subr.mxu0 0.0
    %1996 = vmatpush1.msra.mxu0 0.0
    %1997 = vmatprep.subr.mxu0 0.0
    %1998 = vmatpush1.msra.mxu0 0.0
    %1999 = vmatprep.subr.mxu0 0.0
    %2000 = vmatpush1.msra.mxu0 0.0
    %2001 = vmatprep.subr.mxu0 0.0
    %2002 = vmatpush1.msra.mxu0 0.0
    %2003 = vmatprep.subr.mxu0 0.0
    %2004 = vmatpush1.msra.mxu0 0.0
    %2005 = vmatprep.subr.mxu0 0.0
    %2006 = vmatpush1.msra.mxu0 0.0
    %2007 = vmatprep.subr.mxu0 0.0
    %2008 = vmatpush1.msra.mxu0 0.0
    %2009 = vmatprep.subr.mxu0 0.0
    %2010 = vmatpush1.msra.mxu0 0.0
    %2011 = vmatprep.subr.mxu0 0.0
    %2012 = vmatpush1.msra.mxu0 0.0
    %2013 = vmatprep.subr.mxu0 0.0
    %2014 = vmatpush1.msra.mxu0 0.0
    %2015 = vmatprep.subr.mxu0 0.0
    %2016 = vmatpush1.msra.mxu0 0.0
    %2017 = vmatprep.subr.mxu0 0.0
    %2018 = vmatpush1.msra.mxu0 0.0
    %2019 = vmatprep.subr.mxu0 0.0
    %2020 = vmatpush1.msra.mxu0 0.0
    %2021 = vmatprep.subr.mxu0 0.0
    %2022 = vmatpush1.msra.mxu0 0.0
    %2023 = vmatprep.subr.mxu0 0.0
    %2024 = vmatpush1.msra.mxu0 0.0
    %2025 = vmatprep.mubr.f32.mxu0 0.0
    %2026 = vmatmul.mubr.f32.gmra.mrb[0].mxu0 %v1959
    %v2027 = vpop.f32.mrb[0].mxu0
    %v2028 = vadd.f32 0.0, %v2027
    %v2029 = vpop.f32.mrb[0].mxu0
    %2030 = vdwg.mxu0
    %v2032 = vsel %vm1299, %v1727, 0
    %2034 = vmatprep.subr.mxu0 0.0
    %2035 = vmatpush1.msra.mxu0 %v1949
    %2036 = vmatprep.subr.mxu0 0.0
    %2037 = vmatpush1.msra.mxu0 %v1950
    %2038 = vmatprep.subr.mxu0 0.0
    %2039 = vmatpush1.msra.mxu0 %v1951
    %2040 = vmatprep.subr.mxu0 0.0
    %2041 = vmatpush1.msra.mxu0 %v1952
    %2042 = vmatprep.subr.mxu0 0.0
    %2043 = vmatpush1.msra.mxu0 0.0
    %2044 = vmatprep.subr.mxu0 0.0
    %2045 = vmatpush1.msra.mxu0 0.0
    %2046 = vmatprep.subr.mxu0 0.0
    %2047 = vmatpush1.msra.mxu0 0.0
    %2048 = vmatprep.subr.mxu0 0.0
    %2049 = vmatpush1.msra.mxu0 0.0
    %2050 = vmatprep.subr.mxu0 0.0
    %2051 = vmatpush1.msra.mxu0 0.0
    %2052 = vmatprep.subr.mxu0 0.0
    %2053 = vmatpush1.msra.mxu0 0.0
    %2054 = vmatprep.subr.mxu0 0.0
    %2055 = vmatpush1.msra.mxu0 0.0
    %2056 = vmatprep.subr.mxu0 0.0
    %2057 = vmatpush1.msra.mxu0 0.0
    %2058 = vmatprep.subr.mxu0 0.0
    %2059 = vmatpush1.msra.mxu0 0.0
    %2060 = vmatprep.subr.mxu0 0.0
    %2061 = vmatpush1.msra.mxu0 0.0
    %2062 = vmatprep.subr.mxu0 0.0
    %2063 = vmatpush1.msra.mxu0 0.0
    %2064 = vmatprep.subr.mxu0 0.0
    %2065 = vmatpush1.msra.mxu0 0.0
    %2066 = vmatprep.subr.mxu0 0.0
    %2067 = vmatpush1.msra.mxu0 0.0
    %2068 = vmatprep.subr.mxu0 0.0
    %2069 = vmatpush1.msra.mxu0 0.0
    %2070 = vmatprep.subr.mxu0 0.0
    %2071 = vmatpush1.msra.mxu0 0.0
    %2072 = vmatprep.subr.mxu0 0.0
    %2073 = vmatpush1.msra.mxu0 0.0
    %2074 = vmatprep.subr.mxu0 0.0
    %2075 = vmatpush1.msra.mxu0 0.0
    %2076 = vmatprep.subr.mxu0 0.0
    %2077 = vmatpush1.msra.mxu0 0.0
    %2078 = vmatprep.subr.mxu0 0.0
    %2079 = vmatpush1.msra.mxu0 0.0
    %2080 = vmatprep.subr.mxu0 0.0
    %2081 = vmatpush1.msra.mxu0 0.0
    %2082 = vmatprep.subr.mxu0 0.0
    %2083 = vmatpush1.msra.mxu0 0.0
    %2084 = vmatprep.subr.mxu0 0.0
    %2085 = vmatpush1.msra.mxu0 0.0
    %2086 = vmatprep.subr.mxu0 0.0
    %2087 = vmatpush1.msra.mxu0 0.0
    %2088 = vmatprep.subr.mxu0 0.0
    %2089 = vmatpush1.msra.mxu0 0.0
    %2090 = vmatprep.subr.mxu0 0.0
    %2091 = vmatpush1.msra.mxu0 0.0
    %2092 = vmatprep.subr.mxu0 0.0
    %2093 = vmatpush1.msra.mxu0 0.0
    %2094 = vmatprep.subr.mxu0 0.0
    %2095 = vmatpush1.msra.mxu0 0.0
    %2096 = vmatprep.subr.mxu0 0.0
    %2097 = vmatpush1.msra.mxu0 0.0
    %2098 = vmatprep.mubr.f32.mxu0 0.0
    %2099 = vmatmul.mubr.f32.gmra.mrb[0].mxu0 %v2032
    %v2100 = vpop.f32.mrb[0].mxu0
    %v2101 = vadd.f32 %v2028, %v2100
    %v2102 = vpop.f32.mrb[0].mxu0
    %2103 = vdwg.mxu0
    %s2104 = scalar_lea.vmem %s23, 64
    %v2105 = vld [vmem:[%s2104] sm:$0xff]
    %v2106 = vld [vmem:[%s2104 + $0x8] sm:$0xff]
    %v2107 = vld [vmem:[%s2104 + $0x10] sm:$0xff]
    %v2108 = vld [vmem:[%s2104 + $0x18] sm:$0xff]
    %v2110 = vsel %vm1299, %v1873, 0
    %2112 = vmatprep.subr.mxu0 0.0
    %2113 = vmatpush1.msra.mxu0 %v2105
    %2114 = vmatprep.subr.mxu0 0.0
    %2115 = vmatpush1.msra.mxu0 %v2106
    %2116 = vmatprep.subr.mxu0 0.0
    %2117 = vmatpush1.msra.mxu0 %v2107
    %2118 = vmatprep.subr.mxu0 0.0
    %2119 = vmatpush1.msra.mxu0 %v2108
    %2120 = vmatprep.subr.mxu0 0.0
    %2121 = vmatpush1.msra.mxu0 0.0
    %2122 = vmatprep.subr.mxu0 0.0
    %2123 = vmatpush1.msra.mxu0 0.0
    %2124 = vmatprep.subr.mxu0 0.0
    %2125 = vmatpush1.msra.mxu0 0.0
    %2126 = vmatprep.subr.mxu0 0.0
    %2127 = vmatpush1.msra.mxu0 0.0
    %2128 = vmatprep.subr.mxu0 0.0
    %2129 = vmatpush1.msra.mxu0 0.0
    %2130 = vmatprep.subr.mxu0 0.0
    %2131 = vmatpush1.msra.mxu0 0.0
    %2132 = vmatprep.subr.mxu0 0.0
    %2133 = vmatpush1.msra.mxu0 0.0
    %2134 = vmatprep.subr.mxu0 0.0
    %2135 = vmatpush1.msra.mxu0 0.0
    %2136 = vmatprep.subr.mxu0 0.0
    %2137 = vmatpush1.msra.mxu0 0.0
    %2138 = vmatprep.subr.mxu0 0.0
    %2139 = vmatpush1.msra.mxu0 0.0
    %2140 = vmatprep.subr.mxu0 0.0
    %2141 = vmatpush1.msra.mxu0 0.0
    %2142 = vmatprep.subr.mxu0 0.0
    %2143 = vmatpush1.msra.mxu0 0.0
    %2144 = vmatprep.subr.mxu0 0.0
    %2145 = vmatpush1.msra.mxu0 0.0
    %2146 = vmatprep.subr.mxu0 0.0
    %2147 = vmatpush1.msra.mxu0 0.0
    %2148 = vmatprep.subr.mxu0 0.0
    %2149 = vmatpush1.msra.mxu0 0.0
    %2150 = vmatprep.subr.mxu0 0.0
    %2151 = vmatpush1.msra.mxu0 0.0
    %2152 = vmatprep.subr.mxu0 0.0
    %2153 = vmatpush1.msra.mxu0 0.0
    %2154 = vmatprep.subr.mxu0 0.0
    %2155 = vmatpush1.msra.mxu0 0.0
    %2156 = vmatprep.subr.mxu0 0.0
    %2157 = vmatpush1.msra.mxu0 0.0
    %2158 = vmatprep.subr.mxu0 0.0
    %2159 = vmatpush1.msra.mxu0 0.0
    %2160 = vmatprep.subr.mxu0 0.0
    %2161 = vmatpush1.msra.mxu0 0.0
    %2162 = vmatprep.subr.mxu0 0.0
    %2163 = vmatpush1.msra.mxu0 0.0
    %2164 = vmatprep.subr.mxu0 0.0
    %2165 = vmatpush1.msra.mxu0 0.0
    %2166 = vmatprep.subr.mxu0 0.0
    %2167 = vmatpush1.msra.mxu0 0.0
    %2168 = vmatprep.subr.mxu0 0.0
    %2169 = vmatpush1.msra.mxu0 0.0
    %2170 = vmatprep.subr.mxu0 0.0
    %2171 = vmatpush1.msra.mxu0 0.0
    %2172 = vmatprep.subr.mxu0 0.0
    %2173 = vmatpush1.msra.mxu0 0.0
    %2174 = vmatprep.subr.mxu0 0.0
    %2175 = vmatpush1.msra.mxu0 0.0
    %2176 = vmatprep.mubr.f32.mxu0 0.0
    %2177 = vmatmul.mubr.f32.gmra.mrb[0].mxu0 %v2110
    %v2178 = vpop.f32.mrb[0].mxu0
    %v2179 = vadd.f32 0.0, %v2178
    %v2180 = vpop.f32.mrb[0].mxu0
    %2181 = vdwg.mxu0
    %v2182 = vadd.f32 %v2101, %v2179
    %s2183 = scalar_lea.vmem %s23, 96
    %v2184 = vld [vmem:[%s2183] sm:$0xff]
    %v2185 = vld [vmem:[%s2183 + $0x8] sm:$0xff]
    %v2186 = vld [vmem:[%s2183 + $0x10] sm:$0xff]
    %v2187 = vld [vmem:[%s2183 + $0x18] sm:$0xff]
    %v2189 = vsel %vm1299, %v1946, 0
    %2191 = vmatprep.subr.mxu0 0.0
    %2192 = vmatpush1.msra.mxu0 %v2184
    %2193 = vmatprep.subr.mxu0 0.0
    %2194 = vmatpush1.msra.mxu0 %v2185
    %2195 = vmatprep.subr.mxu0 0.0
    %2196 = vmatpush1.msra.mxu0 %v2186
    %2197 = vmatprep.subr.mxu0 0.0
    %2198 = vmatpush1.msra.mxu0 %v2187
    %2199 = vmatprep.subr.mxu0 0.0
    %2200 = vmatpush1.msra.mxu0 0.0
    %2201 = vmatprep.subr.mxu0 0.0
    %2202 = vmatpush1.msra.mxu0 0.0
    %2203 = vmatprep.subr.mxu0 0.0
    %2204 = vmatpush1.msra.mxu0 0.0
    %2205 = vmatprep.subr.mxu0 0.0
    %2206 = vmatpush1.msra.mxu0 0.0
    %2207 = vmatprep.subr.mxu0 0.0
    %2208 = vmatpush1.msra.mxu0 0.0
    %2209 = vmatprep.subr.mxu0 0.0
    %2210 = vmatpush1.msra.mxu0 0.0
    %2211 = vmatprep.subr.mxu0 0.0
    %2212 = vmatpush1.msra.mxu0 0.0
    %2213 = vmatprep.subr.mxu0 0.0
    %2214 = vmatpush1.msra.mxu0 0.0
    %2215 = vmatprep.subr.mxu0 0.0
    %2216 = vmatpush1.msra.mxu0 0.0
    %2217 = vmatprep.subr.mxu0 0.0
    %2218 = vmatpush1.msra.mxu0 0.0
    %2219 = vmatprep.subr.mxu0 0.0
    %2220 = vmatpush1.msra.mxu0 0.0
    %2221 = vmatprep.subr.mxu0 0.0
    %2222 = vmatpush1.msra.mxu0 0.0
    %2223 = vmatprep.subr.mxu0 0.0
    %2224 = vmatpush1.msra.mxu0 0.0
    %2225 = vmatprep.subr.mxu0 0.0
    %2226 = vmatpush1.msra.mxu0 0.0
    %2227 = vmatprep.subr.mxu0 0.0
    %2228 = vmatpush1.msra.mxu0 0.0
    %2229 = vmatprep.subr.mxu0 0.0
    %2230 = vmatpush1.msra.mxu0 0.0
    %2231 = vmatprep.subr.mxu0 0.0
    %2232 = vmatpush1.msra.mxu0 0.0
    %2233 = vmatprep.subr.mxu0 0.0
    %2234 = vmatpush1.msra.mxu0 0.0
    %2235 = vmatprep.subr.mxu0 0.0
    %2236 = vmatpush1.msra.mxu0 0.0
    %2237 = vmatprep.subr.mxu0 0.0
    %2238 = vmatpush1.msra.mxu0 0.0
    %2239 = vmatprep.subr.mxu0 0.0
    %2240 = vmatpush1.msra.mxu0 0.0
    %2241 = vmatprep.subr.mxu0 0.0
    %2242 = vmatpush1.msra.mxu0 0.0
    %2243 = vmatprep.subr.mxu0 0.0
    %2244 = vmatpush1.msra.mxu0 0.0
    %2245 = vmatprep.subr.mxu0 0.0
    %2246 = vmatpush1.msra.mxu0 0.0
    %2247 = vmatprep.subr.mxu0 0.0
    %2248 = vmatpush1.msra.mxu0 0.0
    %2249 = vmatprep.subr.mxu0 0.0
    %2250 = vmatpush1.msra.mxu0 0.0
    %2251 = vmatprep.subr.mxu0 0.0
    %2252 = vmatpush1.msra.mxu0 0.0
    %2253 = vmatprep.subr.mxu0 0.0
    %2254 = vmatpush1.msra.mxu0 0.0
    %2255 = vmatprep.mubr.f32.mxu0 0.0
    %2256 = vmatmul.mubr.f32.gmra.mrb[0].mxu0 %v2189
    %v2257 = vpop.f32.mrb[0].mxu0
    %v2258 = vadd.f32 0.0, %v2257
    %v2259 = vpop.f32.mrb[0].mxu0
    %2260 = vdwg.mxu0
    %v2261 = vadd.f32 %v2182, %v2258
    %v2262 = vld [vmem:[%s25] sm:$0x1]
    %v2264 = vlaneseq
    %v2265 = vshrl.u32 %v2264, 7
    %v2266 = vsub.s32 0, %v2265
    %v2267 = vrot.slane %v2262, %v2266
    %v2269 = vadd.f32 %v2261, %v2267
    %v2270 = vld [vmem:[%s11] sm:$0xff]
    %v2271 = vld [vmem:[%s11 + $0x8] sm:$0xff]
    %v2272 = vld [vmem:[%s11 + $0x10] sm:$0xff]
    %v2273 = vld [vmem:[%s11 + $0x18] sm:$0xff]
    %v2274 = vld [vmem:[%s11 + $0x20] sm:$0xff]
    %v2275 = vld [vmem:[%s11 + $0x28] sm:$0xff]
    %v2276 = vld [vmem:[%s11 + $0x30] sm:$0xff]
    %v2277 = vld [vmem:[%s11 + $0x38] sm:$0xff]
    %v2278 = vld [vmem:[%s11 + $0x40] sm:$0xff]
    %v2279 = vld [vmem:[%s11 + $0x48] sm:$0xff]
    %v2280 = vld [vmem:[%s11 + $0x50] sm:$0xff]
    %v2281 = vld [vmem:[%s11 + $0x58] sm:$0xff]
    %v2282 = vld [vmem:[%s11 + $0x60] sm:$0xff]
    %v2283 = vld [vmem:[%s11 + $0x68] sm:$0xff]
    %v2284 = vld [vmem:[%s11 + $0x70] sm:$0xff]
    %v2285 = vld [vmem:[%s11 + $0x78] sm:$0xff]
    %v2286 = vld [vmem:[%s17] sm:$0x1]
    %v2288 = vlaneseq
    %v2289 = vshrl.u32 %v2288, 7
    %v2290 = vsub.s32 0, %v2289
    %v2291 = vrot.slane %v2286, %v2290
    %2293 = vmatprep.subr.mxu0 0.0
    %2294 = vmatpush1.msra.mxu0 %v2270
    %2295 = vmatprep.subr.mxu0 0.0
    %2296 = vmatpush1.msra.mxu0 %v2271
    %2297 = vmatprep.subr.mxu0 0.0
    %2298 = vmatpush1.msra.mxu0 %v2272
    %2299 = vmatprep.subr.mxu0 0.0
    %2300 = vmatpush1.msra.mxu0 %v2273
    %2301 = vmatprep.subr.mxu0 0.0
    %2302 = vmatpush1.msra.mxu0 %v2274
    %2303 = vmatprep.subr.mxu0 0.0
    %2304 = vmatpush1.msra.mxu0 %v2275
    %2305 = vmatprep.subr.mxu0 0.0
    %2306 = vmatpush1.msra.mxu0 %v2276
    %2307 = vmatprep.subr.mxu0 0.0
    %2308 = vmatpush1.msra.mxu0 %v2277
    %2309 = vmatprep.subr.mxu0 0.0
    %2310 = vmatpush1.msra.mxu0 %v2278
    %2311 = vmatprep.subr.mxu0 0.0
    %2312 = vmatpush1.msra.mxu0 %v2279
    %2313 = vmatprep.subr.mxu0 0.0
    %2314 = vmatpush1.msra.mxu0 %v2280
    %2315 = vmatprep.subr.mxu0 0.0
    %2316 = vmatpush1.msra.mxu0 %v2281
    %2317 = vmatprep.subr.mxu0 0.0
    %2318 = vmatpush1.msra.mxu0 %v2282
    %2319 = vmatprep.subr.mxu0 0.0
    %2320 = vmatpush1.msra.mxu0 %v2283
    %2321 = vmatprep.subr.mxu0 0.0
    %2322 = vmatpush1.msra.mxu0 %v2284
    %2323 = vmatprep.subr.mxu0 0.0
    %2324 = vmatpush1.msra.mxu0 %v2285
    %2325 = vmatprep.subr.mxu0 0.0
    %2326 = vmatpush1.msra.mxu0 0.0
    %2327 = vmatprep.subr.mxu0 0.0
    %2328 = vmatpush1.msra.mxu0 0.0
    %2329 = vmatprep.subr.mxu0 0.0
    %2330 = vmatpush1.msra.mxu0 0.0
    %2331 = vmatprep.subr.mxu0 0.0
    %2332 = vmatpush1.msra.mxu0 0.0
    %2333 = vmatprep.subr.mxu0 0.0
    %2334 = vmatpush1.msra.mxu0 0.0
    %2335 = vmatprep.subr.mxu0 0.0
    %2336 = vmatpush1.msra.mxu0 0.0
    %2337 = vmatprep.subr.mxu0 0.0
    %2338 = vmatpush1.msra.mxu0 0.0
    %2339 = vmatprep.subr.mxu0 0.0
    %2340 = vmatpush1.msra.mxu0 0.0
    %2341 = vmatprep.subr.mxu0 0.0
    %2342 = vmatpush1.msra.mxu0 0.0
    %2343 = vmatprep.subr.mxu0 0.0
    %2344 = vmatpush1.msra.mxu0 0.0
    %2345 = vmatprep.subr.mxu0 0.0
    %2346 = vmatpush1.msra.mxu0 0.0
    %2347 = vmatprep.subr.mxu0 0.0
    %2348 = vmatpush1.msra.mxu0 0.0
    %2349 = vmatprep.subr.mxu0 0.0
    %2350 = vmatpush1.msra.mxu0 0.0
    %2351 = vmatprep.subr.mxu0 0.0
    %2352 = vmatpush1.msra.mxu0 0.0
    %2353 = vmatprep.subr.mxu0 0.0
    %2354 = vmatpush1.msra.mxu0 0.0
    %2355 = vmatprep.subr.mxu0 0.0
    %2356 = vmatpush1.msra.mxu0 0.0
    %2357 = vmatprep.mubr.f32.mxu0 0.0
    %2358 = vmatmul.mubr.f32.gmra.mrb[0].mxu0 %v164
    %v2359 = vpop.f32.mrb[0].mxu0
    %v2360 = vadd.f32 %v2291, %v2359
    %v2361 = vpop.f32.mrb[0].mxu0
    %2362 = vdwg.mxu0
    %v2363 = vld [vmem:[%s258] sm:$0xff]
    %v2364 = vld [vmem:[%s258 + $0x8] sm:$0xff]
    %v2365 = vld [vmem:[%s258 + $0x10] sm:$0xff]
    %v2366 = vld [vmem:[%s258 + $0x18] sm:$0xff]
    %v2367 = vld [vmem:[%s258 + $0x20] sm:$0xff]
    %v2368 = vld [vmem:[%s258 + $0x28] sm:$0xff]
    %v2369 = vld [vmem:[%s258 + $0x30] sm:$0xff]
    %v2370 = vld [vmem:[%s258 + $0x38] sm:$0xff]
    %v2371 = vld [vmem:[%s258 + $0x40] sm:$0xff]
    %v2372 = vld [vmem:[%s258 + $0x48] sm:$0xff]
    %v2373 = vld [vmem:[%s258 + $0x50] sm:$0xff]
    %v2374 = vld [vmem:[%s258 + $0x58] sm:$0xff]
    %v2375 = vld [vmem:[%s258 + $0x60] sm:$0xff]
    %v2376 = vld [vmem:[%s258 + $0x68] sm:$0xff]
    %v2377 = vld [vmem:[%s258 + $0x70] sm:$0xff]
    %v2378 = vld [vmem:[%s258 + $0x78] sm:$0xff]
    %v2379 = vld [vmem:[%s275] sm:$0x1]
    %v2381 = vlaneseq
    %v2382 = vshrl.u32 %v2381, 7
    %v2383 = vsub.s32 0, %v2382
    %v2384 = vrot.slane %v2379, %v2383
    %2386 = vmatprep.subr.mxu0 0.0
    %2387 = vmatpush1.msra.mxu0 %v2363
    %2388 = vmatprep.subr.mxu0 0.0
    %2389 = vmatpush1.msra.mxu0 %v2364
    %2390 = vmatprep.subr.mxu0 0.0
    %2391 = vmatpush1.msra.mxu0 %v2365
    %2392 = vmatprep.subr.mxu0 0.0
    %2393 = vmatpush1.msra.mxu0 %v2366
    %2394 = vmatprep.subr.mxu0 0.0
    %2395 = vmatpush1.msra.mxu0 %v2367
    %2396 = vmatprep.subr.mxu0 0.0
    %2397 = vmatpush1.msra.mxu0 %v2368
    %2398 = vmatprep.subr.mxu0 0.0
    %2399 = vmatpush1.msra.mxu0 %v2369
    %2400 = vmatprep.subr.mxu0 0.0
    %2401 = vmatpush1.msra.mxu0 %v2370
    %2402 = vmatprep.subr.mxu0 0.0
    %2403 = vmatpush1.msra.mxu0 %v2371
    %2404 = vmatprep.subr.mxu0 0.0
    %2405 = vmatpush1.msra.mxu0 %v2372
    %2406 = vmatprep.subr.mxu0 0.0
    %2407 = vmatpush1.msra.mxu0 %v2373
    %2408 = vmatprep.subr.mxu0 0.0
    %2409 = vmatpush1.msra.mxu0 %v2374
    %2410 = vmatprep.subr.mxu0 0.0
    %2411 = vmatpush1.msra.mxu0 %v2375
    %2412 = vmatprep.subr.mxu0 0.0
    %2413 = vmatpush1.msra.mxu0 %v2376
    %2414 = vmatprep.subr.mxu0 0.0
    %2415 = vmatpush1.msra.mxu0 %v2377
    %2416 = vmatprep.subr.mxu0 0.0
    %2417 = vmatpush1.msra.mxu0 %v2378
    %2418 = vmatprep.subr.mxu0 0.0
    %2419 = vmatpush1.msra.mxu0 0.0
    %2420 = vmatprep.subr.mxu0 0.0
    %2421 = vmatpush1.msra.mxu0 0.0
    %2422 = vmatprep.subr.mxu0 0.0
    %2423 = vmatpush1.msra.mxu0 0.0
    %2424 = vmatprep.subr.mxu0 0.0
    %2425 = vmatpush1.msra.mxu0 0.0
    %2426 = vmatprep.subr.mxu0 0.0
    %2427 = vmatpush1.msra.mxu0 0.0
    %2428 = vmatprep.subr.mxu0 0.0
    %2429 = vmatpush1.msra.mxu0 0.0
    %2430 = vmatprep.subr.mxu0 0.0
    %2431 = vmatpush1.msra.mxu0 0.0
    %2432 = vmatprep.subr.mxu0 0.0
    %2433 = vmatpush1.msra.mxu0 0.0
    %2434 = vmatprep.subr.mxu0 0.0
    %2435 = vmatpush1.msra.mxu0 0.0
    %2436 = vmatprep.subr.mxu0 0.0
    %2437 = vmatpush1.msra.mxu0 0.0
    %2438 = vmatprep.subr.mxu0 0.0
    %2439 = vmatpush1.msra.mxu0 0.0
    %2440 = vmatprep.subr.mxu0 0.0
    %2441 = vmatpush1.msra.mxu0 0.0
    %2442 = vmatprep.subr.mxu0 0.0
    %2443 = vmatpush1.msra.mxu0 0.0
    %2444 = vmatprep.subr.mxu0 0.0
    %2445 = vmatpush1.msra.mxu0 0.0
    %2446 = vmatprep.subr.mxu0 0.0
    %2447 = vmatpush1.msra.mxu0 0.0
    %2448 = vmatprep.subr.mxu0 0.0
    %2449 = vmatpush1.msra.mxu0 0.0
    %2450 = vmatprep.mubr.f32.mxu0 0.0
    %2451 = vmatmul.mubr.f32.gmra.mrb[0].mxu0 %v164
    %v2452 = vpop.f32.mrb[0].mxu0
    %v2453 = vadd.f32 %v2384, %v2452
    %v2454 = vpop.f32.mrb[0].mxu0
    %2455 = vdwg.mxu0
    %v2456 = vld [vmem:[%s353] sm:$0xff]
    %v2457 = vld [vmem:[%s353 + $0x8] sm:$0xff]
    %v2458 = vld [vmem:[%s353 + $0x10] sm:$0xff]
    %v2459 = vld [vmem:[%s353 + $0x18] sm:$0xff]
    %v2460 = vld [vmem:[%s353 + $0x20] sm:$0xff]
    %v2461 = vld [vmem:[%s353 + $0x28] sm:$0xff]
    %v2462 = vld [vmem:[%s353 + $0x30] sm:$0xff]
    %v2463 = vld [vmem:[%s353 + $0x38] sm:$0xff]
    %v2464 = vld [vmem:[%s353 + $0x40] sm:$0xff]
    %v2465 = vld [vmem:[%s353 + $0x48] sm:$0xff]
    %v2466 = vld [vmem:[%s353 + $0x50] sm:$0xff]
    %v2467 = vld [vmem:[%s353 + $0x58] sm:$0xff]
    %v2468 = vld [vmem:[%s353 + $0x60] sm:$0xff]
    %v2469 = vld [vmem:[%s353 + $0x68] sm:$0xff]
    %v2470 = vld [vmem:[%s353 + $0x70] sm:$0xff]
    %v2471 = vld [vmem:[%s353 + $0x78] sm:$0xff]
    %v2472 = vld [vmem:[%s370] sm:$0x1]
    %v2474 = vlaneseq
    %v2475 = vshrl.u32 %v2474, 7
    %v2476 = vsub.s32 0, %v2475
    %v2477 = vrot.slane %v2472, %v2476
    %2479 = vmatprep.subr.mxu0 0.0
    %2480 = vmatpush1.msra.mxu0 %v2456
    %2481 = vmatprep.subr.mxu0 0.0
    %2482 = vmatpush1.msra.mxu0 %v2457
    %2483 = vmatprep.subr.mxu0 0.0
    %2484 = vmatpush1.msra.mxu0 %v2458
    %2485 = vmatprep.subr.mxu0 0.0
    %2486 = vmatpush1.msra.mxu0 %v2459
    %2487 = vmatprep.subr.mxu0 0.0
    %2488 = vmatpush1.msra.mxu0 %v2460
    %2489 = vmatprep.subr.mxu0 0.0
    %2490 = vmatpush1.msra.mxu0 %v2461
    %2491 = vmatprep.subr.mxu0 0.0
    %2492 = vmatpush1.msra.mxu0 %v2462
    %2493 = vmatprep.subr.mxu0 0.0
    %2494 = vmatpush1.msra.mxu0 %v2463
    %2495 = vmatprep.subr.mxu0 0.0
    %2496 = vmatpush1.msra.mxu0 %v2464
    %2497 = vmatprep.subr.mxu0 0.0
    %2498 = vmatpush1.msra.mxu0 %v2465
    %2499 = vmatprep.subr.mxu0 0.0
    %2500 = vmatpush1.msra.mxu0 %v2466
    %2501 = vmatprep.subr.mxu0 0.0
    %2502 = vmatpush1.msra.mxu0 %v2467
    %2503 = vmatprep.subr.mxu0 0.0
    %2504 = vmatpush1.msra.mxu0 %v2468
    %2505 = vmatprep.subr.mxu0 0.0
    %2506 = vmatpush1.msra.mxu0 %v2469
    %2507 = vmatprep.subr.mxu0 0.0
    %2508 = vmatpush1.msra.mxu0 %v2470
    %2509 = vmatprep.subr.mxu0 0.0
    %2510 = vmatpush1.msra.mxu0 %v2471
    %2511 = vmatprep.subr.mxu0 0.0
    %2512 = vmatpush1.msra.mxu0 0.0
    %2513 = vmatprep.subr.mxu0 0.0
    %2514 = vmatpush1.msra.mxu0 0.0
    %2515 = vmatprep.subr.mxu0 0.0
    %2516 = vmatpush1.msra.mxu0 0.0
    %2517 = vmatprep.subr.mxu0 0.0
    %2518 = vmatpush1.msra.mxu0 0.0
    %2519 = vmatprep.subr.mxu0 0.0
    %2520 = vmatpush1.msra.mxu0 0.0
    %2521 = vmatprep.subr.mxu0 0.0
    %2522 = vmatpush1.msra.mxu0 0.0
    %2523 = vmatprep.subr.mxu0 0.0
    %2524 = vmatpush1.msra.mxu0 0.0
    %2525 = vmatprep.subr.mxu0 0.0
    %2526 = vmatpush1.msra.mxu0 0.0
    %2527 = vmatprep.subr.mxu0 0.0
    %2528 = vmatpush1.msra.mxu0 0.0
    %2529 = vmatprep.subr.mxu0 0.0
    %2530 = vmatpush1.msra.mxu0 0.0
    %2531 = vmatprep.subr.mxu0 0.0
    %2532 = vmatpush1.msra.mxu0 0.0
    %2533 = vmatprep.subr.mxu0 0.0
    %2534 = vmatpush1.msra.mxu0 0.0
    %2535 = vmatprep.subr.mxu0 0.0
    %2536 = vmatpush1.msra.mxu0 0.0
    %2537 = vmatprep.subr.mxu0 0.0
    %2538 = vmatpush1.msra.mxu0 0.0
    %2539 = vmatprep.subr.mxu0 0.0
    %2540 = vmatpush1.msra.mxu0 0.0
    %2541 = vmatprep.subr.mxu0 0.0
    %2542 = vmatpush1.msra.mxu0 0.0
    %2543 = vmatprep.mubr.f32.mxu0 0.0
    %2544 = vmatmul.mubr.f32.gmra.mrb[0].mxu0 %v164
    %v2545 = vpop.f32.mrb[0].mxu0
    %v2546 = vadd.f32 %v2477, %v2545
    %v2547 = vpop.f32.mrb[0].mxu0
    %2548 = vdwg.mxu0
    %v2549 = vld [vmem:[%s448] sm:$0xff]
    %v2550 = vld [vmem:[%s448 + $0x8] sm:$0xff]
    %v2551 = vld [vmem:[%s448 + $0x10] sm:$0xff]
    %v2552 = vld [vmem:[%s448 + $0x18] sm:$0xff]
    %v2553 = vld [vmem:[%s448 + $0x20] sm:$0xff]
    %v2554 = vld [vmem:[%s448 + $0x28] sm:$0xff]
    %v2555 = vld [vmem:[%s448 + $0x30] sm:$0xff]
    %v2556 = vld [vmem:[%s448 + $0x38] sm:$0xff]
    %v2557 = vld [vmem:[%s448 + $0x40] sm:$0xff]
    %v2558 = vld [vmem:[%s448 + $0x48] sm:$0xff]
    %v2559 = vld [vmem:[%s448 + $0x50] sm:$0xff]
    %v2560 = vld [vmem:[%s448 + $0x58] sm:$0xff]
    %v2561 = vld [vmem:[%s448 + $0x60] sm:$0xff]
    %v2562 = vld [vmem:[%s448 + $0x68] sm:$0xff]
    %v2563 = vld [vmem:[%s448 + $0x70] sm:$0xff]
    %v2564 = vld [vmem:[%s448 + $0x78] sm:$0xff]
    %v2565 = vld [vmem:[%s465] sm:$0x1]
    %v2567 = vlaneseq
    %v2568 = vshrl.u32 %v2567, 7
    %v2569 = vsub.s32 0, %v2568
    %v2570 = vrot.slane %v2565, %v2569
    %2572 = vmatprep.subr.mxu0 0.0
    %2573 = vmatpush1.msra.mxu0 %v2549
    %2574 = vmatprep.subr.mxu0 0.0
    %2575 = vmatpush1.msra.mxu0 %v2550
    %2576 = vmatprep.subr.mxu0 0.0
    %2577 = vmatpush1.msra.mxu0 %v2551
    %2578 = vmatprep.subr.mxu0 0.0
    %2579 = vmatpush1.msra.mxu0 %v2552
    %2580 = vmatprep.subr.mxu0 0.0
    %2581 = vmatpush1.msra.mxu0 %v2553
    %2582 = vmatprep.subr.mxu0 0.0
    %2583 = vmatpush1.msra.mxu0 %v2554
    %2584 = vmatprep.subr.mxu0 0.0
    %2585 = vmatpush1.msra.mxu0 %v2555
    %2586 = vmatprep.subr.mxu0 0.0
    %2587 = vmatpush1.msra.mxu0 %v2556
    %2588 = vmatprep.subr.mxu0 0.0
    %2589 = vmatpush1.msra.mxu0 %v2557
    %2590 = vmatprep.subr.mxu0 0.0
    %2591 = vmatpush1.msra.mxu0 %v2558
    %2592 = vmatprep.subr.mxu0 0.0
    %2593 = vmatpush1.msra.mxu0 %v2559
    %2594 = vmatprep.subr.mxu0 0.0
    %2595 = vmatpush1.msra.mxu0 %v2560
    %2596 = vmatprep.subr.mxu0 0.0
    %2597 = vmatpush1.msra.mxu0 %v2561
    %2598 = vmatprep.subr.mxu0 0.0
    %2599 = vmatpush1.msra.mxu0 %v2562
    %2600 = vmatprep.subr.mxu0 0.0
    %2601 = vmatpush1.msra.mxu0 %v2563
    %2602 = vmatprep.subr.mxu0 0.0
    %2603 = vmatpush1.msra.mxu0 %v2564
    %2604 = vmatprep.subr.mxu0 0.0
    %2605 = vmatpush1.msra.mxu0 0.0
    %2606 = vmatprep.subr.mxu0 0.0
    %2607 = vmatpush1.msra.mxu0 0.0
    %2608 = vmatprep.subr.mxu0 0.0
    %2609 = vmatpush1.msra.mxu0 0.0
    %2610 = vmatprep.subr.mxu0 0.0
    %2611 = vmatpush1.msra.mxu0 0.0
    %2612 = vmatprep.subr.mxu0 0.0
    %2613 = vmatpush1.msra.mxu0 0.0
    %2614 = vmatprep.subr.mxu0 0.0
    %2615 = vmatpush1.msra.mxu0 0.0
    %2616 = vmatprep.subr.mxu0 0.0
    %2617 = vmatpush1.msra.mxu0 0.0
    %2618 = vmatprep.subr.mxu0 0.0
    %2619 = vmatpush1.msra.mxu0 0.0
    %2620 = vmatprep.subr.mxu0 0.0
    %2621 = vmatpush1.msra.mxu0 0.0
    %2622 = vmatprep.subr.mxu0 0.0
    %2623 = vmatpush1.msra.mxu0 0.0
    %2624 = vmatprep.subr.mxu0 0.0
    %2625 = vmatpush1.msra.mxu0 0.0
    %2626 = vmatprep.subr.mxu0 0.0
    %2627 = vmatpush1.msra.mxu0 0.0
    %2628 = vmatprep.subr.mxu0 0.0
    %2629 = vmatpush1.msra.mxu0 0.0
    %2630 = vmatprep.subr.mxu0 0.0
    %2631 = vmatpush1.msra.mxu0 0.0
    %2632 = vmatprep.subr.mxu0 0.0
    %2633 = vmatpush1.msra.mxu0 0.0
    %2634 = vmatprep.subr.mxu0 0.0
    %2635 = vmatpush1.msra.mxu0 0.0
    %2636 = vmatprep.mubr.f32.mxu0 0.0
    %2637 = vmatmul.mubr.f32.gmra.mrb[0].mxu0 %v164
    %v2638 = vpop.f32.mrb[0].mxu0
    %v2639 = vadd.f32 %v2570, %v2638
    %v2640 = vpop.f32.mrb[0].mxu0
    %2641 = vdwg.mxu0
    %v2642 = vld [vmem:[%s13] sm:$0xff]
    %v2643 = vld [vmem:[%s13 + $0x8] sm:$0xff]
    %v2644 = vld [vmem:[%s13 + $0x10] sm:$0xff]
    %v2645 = vld [vmem:[%s13 + $0x18] sm:$0xff]
    %v2646 = vld [vmem:[%s13 + $0x20] sm:$0xff]
    %v2647 = vld [vmem:[%s13 + $0x28] sm:$0xff]
    %v2648 = vld [vmem:[%s13 + $0x30] sm:$0xff]
    %v2649 = vld [vmem:[%s13 + $0x38] sm:$0xff]
    %v2650 = vld [vmem:[%s13 + $0x40] sm:$0xff]
    %v2651 = vld [vmem:[%s13 + $0x48] sm:$0xff]
    %v2652 = vld [vmem:[%s13 + $0x50] sm:$0xff]
    %v2653 = vld [vmem:[%s13 + $0x58] sm:$0xff]
    %v2654 = vld [vmem:[%s13 + $0x60] sm:$0xff]
    %v2655 = vld [vmem:[%s13 + $0x68] sm:$0xff]
    %v2656 = vld [vmem:[%s13 + $0x70] sm:$0xff]
    %v2657 = vld [vmem:[%s13 + $0x78] sm:$0xff]
    %v2658 = vld [vmem:[%s19] sm:$0x1]
    %v2660 = vlaneseq
    %v2661 = vshrl.u32 %v2660, 7
    %v2662 = vsub.s32 0, %v2661
    %v2663 = vrot.slane %v2658, %v2662
    %2665 = vmatprep.subr.mxu0 0.0
    %2666 = vmatpush1.msra.mxu0 %v2642
    %2667 = vmatprep.subr.mxu0 0.0
    %2668 = vmatpush1.msra.mxu0 %v2643
    %2669 = vmatprep.subr.mxu0 0.0
    %2670 = vmatpush1.msra.mxu0 %v2644
    %2671 = vmatprep.subr.mxu0 0.0
    %2672 = vmatpush1.msra.mxu0 %v2645
    %2673 = vmatprep.subr.mxu0 0.0
    %2674 = vmatpush1.msra.mxu0 %v2646
    %2675 = vmatprep.subr.mxu0 0.0
    %2676 = vmatpush1.msra.mxu0 %v2647
    %2677 = vmatprep.subr.mxu0 0.0
    %2678 = vmatpush1.msra.mxu0 %v2648
    %2679 = vmatprep.subr.mxu0 0.0
    %2680 = vmatpush1.msra.mxu0 %v2649
    %2681 = vmatprep.subr.mxu0 0.0
    %2682 = vmatpush1.msra.mxu0 %v2650
    %2683 = vmatprep.subr.mxu0 0.0
    %2684 = vmatpush1.msra.mxu0 %v2651
    %2685 = vmatprep.subr.mxu0 0.0
    %2686 = vmatpush1.msra.mxu0 %v2652
    %2687 = vmatprep.subr.mxu0 0.0
    %2688 = vmatpush1.msra.mxu0 %v2653
    %2689 = vmatprep.subr.mxu0 0.0
    %2690 = vmatpush1.msra.mxu0 %v2654
    %2691 = vmatprep.subr.mxu0 0.0
    %2692 = vmatpush1.msra.mxu0 %v2655
    %2693 = vmatprep.subr.mxu0 0.0
    %2694 = vmatpush1.msra.mxu0 %v2656
    %2695 = vmatprep.subr.mxu0 0.0
    %2696 = vmatpush1.msra.mxu0 %v2657
    %2697 = vmatprep.subr.mxu0 0.0
    %2698 = vmatpush1.msra.mxu0 0.0
    %2699 = vmatprep.subr.mxu0 0.0
    %2700 = vmatpush1.msra.mxu0 0.0
    %2701 = vmatprep.subr.mxu0 0.0
    %2702 = vmatpush1.msra.mxu0 0.0
    %2703 = vmatprep.subr.mxu0 0.0
    %2704 = vmatpush1.msra.mxu0 0.0
    %2705 = vmatprep.subr.mxu0 0.0
    %2706 = vmatpush1.msra.mxu0 0.0
    %2707 = vmatprep.subr.mxu0 0.0
    %2708 = vmatpush1.msra.mxu0 0.0
    %2709 = vmatprep.subr.mxu0 0.0
    %2710 = vmatpush1.msra.mxu0 0.0
    %2711 = vmatprep.subr.mxu0 0.0
    %2712 = vmatpush1.msra.mxu0 0.0
    %2713 = vmatprep.subr.mxu0 0.0
    %2714 = vmatpush1.msra.mxu0 0.0
    %2715 = vmatprep.subr.mxu0 0.0
    %2716 = vmatpush1.msra.mxu0 0.0
    %2717 = vmatprep.subr.mxu0 0.0
    %2718 = vmatpush1.msra.mxu0 0.0
    %2719 = vmatprep.subr.mxu0 0.0
    %2720 = vmatpush1.msra.mxu0 0.0
    %2721 = vmatprep.subr.mxu0 0.0
    %2722 = vmatpush1.msra.mxu0 0.0
    %2723 = vmatprep.subr.mxu0 0.0
    %2724 = vmatpush1.msra.mxu0 0.0
    %2725 = vmatprep.subr.mxu0 0.0
    %2726 = vmatpush1.msra.mxu0 0.0
    %2727 = vmatprep.subr.mxu0 0.0
    %2728 = vmatpush1.msra.mxu0 0.0
    %2729 = vmatprep.mubr.f32.mxu0 0.0
    %2730 = vmatmul.mubr.f32.gmra.mrb[0].mxu0 %v164
    %v2731 = vpop.f32.mrb[0].mxu0
    %v2732 = vadd.f32 %v2663, %v2731
    %v2733 = vpop.f32.mrb[0].mxu0
    %2734 = vdwg.mxu0
    %v2735 = vld [vmem:[%s636] sm:$0xff]
    %v2736 = vld [vmem:[%s636 + $0x8] sm:$0xff]
    %v2737 = vld [vmem:[%s636 + $0x10] sm:$0xff]
    %v2738 = vld [vmem:[%s636 + $0x18] sm:$0xff]
    %v2739 = vld [vmem:[%s636 + $0x20] sm:$0xff]
    %v2740 = vld [vmem:[%s636 + $0x28] sm:$0xff]
    %v2741 = vld [vmem:[%s636 + $0x30] sm:$0xff]
    %v2742 = vld [vmem:[%s636 + $0x38] sm:$0xff]
    %v2743 = vld [vmem:[%s636 + $0x40] sm:$0xff]
    %v2744 = vld [vmem:[%s636 + $0x48] sm:$0xff]
    %v2745 = vld [vmem:[%s636 + $0x50] sm:$0xff]
    %v2746 = vld [vmem:[%s636 + $0x58] sm:$0xff]
    %v2747 = vld [vmem:[%s636 + $0x60] sm:$0xff]
    %v2748 = vld [vmem:[%s636 + $0x68] sm:$0xff]
    %v2749 = vld [vmem:[%s636 + $0x70] sm:$0xff]
    %v2750 = vld [vmem:[%s636 + $0x78] sm:$0xff]
    %v2751 = vld [vmem:[%s653] sm:$0x1]
    %v2753 = vlaneseq
    %v2754 = vshrl.u32 %v2753, 7
    %v2755 = vsub.s32 0, %v2754
    %v2756 = vrot.slane %v2751, %v2755
    %2758 = vmatprep.subr.mxu0 0.0
    %2759 = vmatpush1.msra.mxu0 %v2735
    %2760 = vmatprep.subr.mxu0 0.0
    %2761 = vmatpush1.msra.mxu0 %v2736
    %2762 = vmatprep.subr.mxu0 0.0
    %2763 = vmatpush1.msra.mxu0 %v2737
    %2764 = vmatprep.subr.mxu0 0.0
    %2765 = vmatpush1.msra.mxu0 %v2738
    %2766 = vmatprep.subr.mxu0 0.0
    %2767 = vmatpush1.msra.mxu0 %v2739
    %2768 = vmatprep.subr.mxu0 0.0
    %2769 = vmatpush1.msra.mxu0 %v2740
    %2770 = vmatprep.subr.mxu0 0.0
    %2771 = vmatpush1.msra.mxu0 %v2741
    %2772 = vmatprep.subr.mxu0 0.0
    %2773 = vmatpush1.msra.mxu0 %v2742
    %2774 = vmatprep.subr.mxu0 0.0
    %2775 = vmatpush1.msra.mxu0 %v2743
    %2776 = vmatprep.subr.mxu0 0.0
    %2777 = vmatpush1.msra.mxu0 %v2744
    %2778 = vmatprep.subr.mxu0 0.0
    %2779 = vmatpush1.msra.mxu0 %v2745
    %2780 = vmatprep.subr.mxu0 0.0
    %2781 = vmatpush1.msra.mxu0 %v2746
    %2782 = vmatprep.subr.mxu0 0.0
    %2783 = vmatpush1.msra.mxu0 %v2747
    %2784 = vmatprep.subr.mxu0 0.0
    %2785 = vmatpush1.msra.mxu0 %v2748
    %2786 = vmatprep.subr.mxu0 0.0
    %2787 = vmatpush1.msra.mxu0 %v2749
    %2788 = vmatprep.subr.mxu0 0.0
    %2789 = vmatpush1.msra.mxu0 %v2750
    %2790 = vmatprep.subr.mxu0 0.0
    %2791 = vmatpush1.msra.mxu0 0.0
    %2792 = vmatprep.subr.mxu0 0.0
    %2793 = vmatpush1.msra.mxu0 0.0
    %2794 = vmatprep.subr.mxu0 0.0
    %2795 = vmatpush1.msra.mxu0 0.0
    %2796 = vmatprep.subr.mxu0 0.0
    %2797 = vmatpush1.msra.mxu0 0.0
    %2798 = vmatprep.subr.mxu0 0.0
    %2799 = vmatpush1.msra.mxu0 0.0
    %2800 = vmatprep.subr.mxu0 0.0
    %2801 = vmatpush1.msra.mxu0 0.0
    %2802 = vmatprep.subr.mxu0 0.0
    %2803 = vmatpush1.msra.mxu0 0.0
    %2804 = vmatprep.subr.mxu0 0.0
    %2805 = vmatpush1.msra.mxu0 0.0
    %2806 = vmatprep.subr.mxu0 0.0
    %2807 = vmatpush1.msra.mxu0 0.0
    %2808 = vmatprep.subr.mxu0 0.0
    %2809 = vmatpush1.msra.mxu0 0.0
    %2810 = vmatprep.subr.mxu0 0.0
    %2811 = vmatpush1.msra.mxu0 0.0
    %2812 = vmatprep.subr.mxu0 0.0
    %2813 = vmatpush1.msra.mxu0 0.0
    %2814 = vmatprep.subr.mxu0 0.0
    %2815 = vmatpush1.msra.mxu0 0.0
    %2816 = vmatprep.subr.mxu0 0.0
    %2817 = vmatpush1.msra.mxu0 0.0
    %2818 = vmatprep.subr.mxu0 0.0
    %2819 = vmatpush1.msra.mxu0 0.0
    %2820 = vmatprep.subr.mxu0 0.0
    %2821 = vmatpush1.msra.mxu0 0.0
    %2822 = vmatprep.mubr.f32.mxu0 0.0
    %2823 = vmatmul.mubr.f32.gmra.mrb[0].mxu0 %v164
    %v2824 = vpop.f32.mrb[0].mxu0
    %v2825 = vadd.f32 %v2756, %v2824
    %v2826 = vpop.f32.mrb[0].mxu0
    %2827 = vdwg.mxu0
    %v2828 = vld [vmem:[%s731] sm:$0xff]
    %v2829 = vld [vmem:[%s731 + $0x8] sm:$0xff]
    %v2830 = vld [vmem:[%s731 + $0x10] sm:$0xff]
    %v2831 = vld [vmem:[%s731 + $0x18] sm:$0xff]
    %v2832 = vld [vmem:[%s731 + $0x20] sm:$0xff]
    %v2833 = vld [vmem:[%s731 + $0x28] sm:$0xff]
    %v2834 = vld [vmem:[%s731 + $0x30] sm:$0xff]
    %v2835 = vld [vmem:[%s731 + $0x38] sm:$0xff]
    %v2836 = vld [vmem:[%s731 + $0x40] sm:$0xff]
    %v2837 = vld [vmem:[%s731 + $0x48] sm:$0xff]
    %v2838 = vld [vmem:[%s731 + $0x50] sm:$0xff]
    %v2839 = vld [vmem:[%s731 + $0x58] sm:$0xff]
    %v2840 = vld [vmem:[%s731 + $0x60] sm:$0xff]
    %v2841 = vld [vmem:[%s731 + $0x68] sm:$0xff]
    %v2842 = vld [vmem:[%s731 + $0x70] sm:$0xff]
    %v2843 = vld [vmem:[%s731 + $0x78] sm:$0xff]
    %v2844 = vld [vmem:[%s748] sm:$0x1]
    %v2846 = vlaneseq
    %v2847 = vshrl.u32 %v2846, 7
    %v2848 = vsub.s32 0, %v2847
    %v2849 = vrot.slane %v2844, %v2848
    %2851 = vmatprep.subr.mxu0 0.0
    %2852 = vmatpush1.msra.mxu0 %v2828
    %2853 = vmatprep.subr.mxu0 0.0
    %2854 = vmatpush1.msra.mxu0 %v2829
    %2855 = vmatprep.subr.mxu0 0.0
    %2856 = vmatpush1.msra.mxu0 %v2830
    %2857 = vmatprep.subr.mxu0 0.0
    %2858 = vmatpush1.msra.mxu0 %v2831
    %2859 = vmatprep.subr.mxu0 0.0
    %2860 = vmatpush1.msra.mxu0 %v2832
    %2861 = vmatprep.subr.mxu0 0.0
    %2862 = vmatpush1.msra.mxu0 %v2833
    %2863 = vmatprep.subr.mxu0 0.0
    %2864 = vmatpush1.msra.mxu0 %v2834
    %2865 = vmatprep.subr.mxu0 0.0
    %2866 = vmatpush1.msra.mxu0 %v2835
    %2867 = vmatprep.subr.mxu0 0.0
    %2868 = vmatpush1.msra.mxu0 %v2836
    %2869 = vmatprep.subr.mxu0 0.0
    %2870 = vmatpush1.msra.mxu0 %v2837
    %2871 = vmatprep.subr.mxu0 0.0
    %2872 = vmatpush1.msra.mxu0 %v2838
    %2873 = vmatprep.subr.mxu0 0.0
    %2874 = vmatpush1.msra.mxu0 %v2839
    %2875 = vmatprep.subr.mxu0 0.0
    %2876 = vmatpush1.msra.mxu0 %v2840
    %2877 = vmatprep.subr.mxu0 0.0
    %2878 = vmatpush1.msra.mxu0 %v2841
    %2879 = vmatprep.subr.mxu0 0.0
    %2880 = vmatpush1.msra.mxu0 %v2842
    %2881 = vmatprep.subr.mxu0 0.0
    %2882 = vmatpush1.msra.mxu0 %v2843
    %2883 = vmatprep.subr.mxu0 0.0
    %2884 = vmatpush1.msra.mxu0 0.0
    %2885 = vmatprep.subr.mxu0 0.0
    %2886 = vmatpush1.msra.mxu0 0.0
    %2887 = vmatprep.subr.mxu0 0.0
    %2888 = vmatpush1.msra.mxu0 0.0
    %2889 = vmatprep.subr.mxu0 0.0
    %2890 = vmatpush1.msra.mxu0 0.0
    %2891 = vmatprep.subr.mxu0 0.0
    %2892 = vmatpush1.msra.mxu0 0.0
    %2893 = vmatprep.subr.mxu0 0.0
    %2894 = vmatpush1.msra.mxu0 0.0
    %2895 = vmatprep.subr.mxu0 0.0
    %2896 = vmatpush1.msra.mxu0 0.0
    %2897 = vmatprep.subr.mxu0 0.0
    %2898 = vmatpush1.msra.mxu0 0.0
    %2899 = vmatprep.subr.mxu0 0.0
    %2900 = vmatpush1.msra.mxu0 0.0
    %2901 = vmatprep.subr.mxu0 0.0
    %2902 = vmatpush1.msra.mxu0 0.0
    %2903 = vmatprep.subr.mxu0 0.0
    %2904 = vmatpush1.msra.mxu0 0.0
    %2905 = vmatprep.subr.mxu0 0.0
    %2906 = vmatpush1.msra.mxu0 0.0
    %2907 = vmatprep.subr.mxu0 0.0
    %2908 = vmatpush1.msra.mxu0 0.0
    %2909 = vmatprep.subr.mxu0 0.0
    %2910 = vmatpush1.msra.mxu0 0.0
    %2911 = vmatprep.subr.mxu0 0.0
    %2912 = vmatpush1.msra.mxu0 0.0
    %2913 = vmatprep.subr.mxu0 0.0
    %2914 = vmatpush1.msra.mxu0 0.0
    %2915 = vmatprep.mubr.f32.mxu0 0.0
    %2916 = vmatmul.mubr.f32.gmra.mrb[0].mxu0 %v164
    %v2917 = vpop.f32.mrb[0].mxu0
    %v2918 = vadd.f32 %v2849, %v2917
    %v2919 = vpop.f32.mrb[0].mxu0
    %2920 = vdwg.mxu0
    %v2921 = vld [vmem:[%s826] sm:$0xff]
    %v2922 = vld [vmem:[%s826 + $0x8] sm:$0xff]
    %v2923 = vld [vmem:[%s826 + $0x10] sm:$0xff]
    %v2924 = vld [vmem:[%s826 + $0x18] sm:$0xff]
    %v2925 = vld [vmem:[%s826 + $0x20] sm:$0xff]
    %v2926 = vld [vmem:[%s826 + $0x28] sm:$0xff]
    %v2927 = vld [vmem:[%s826 + $0x30] sm:$0xff]
    %v2928 = vld [vmem:[%s826 + $0x38] sm:$0xff]
    %v2929 = vld [vmem:[%s826 + $0x40] sm:$0xff]
    %v2930 = vld [vmem:[%s826 + $0x48] sm:$0xff]
    %v2931 = vld [vmem:[%s826 + $0x50] sm:$0xff]
    %v2932 = vld [vmem:[%s826 + $0x58] sm:$0xff]
    %v2933 = vld [vmem:[%s826 + $0x60] sm:$0xff]
    %v2934 = vld [vmem:[%s826 + $0x68] sm:$0xff]
    %v2935 = vld [vmem:[%s826 + $0x70] sm:$0xff]
    %v2936 = vld [vmem:[%s826 + $0x78] sm:$0xff]
    %v2937 = vld [vmem:[%s843] sm:$0x1]
    %v2939 = vlaneseq
    %v2940 = vshrl.u32 %v2939, 7
    %v2941 = vsub.s32 0, %v2940
    %v2942 = vrot.slane %v2937, %v2941
    %2944 = vmatprep.subr.mxu0 0.0
    %2945 = vmatpush1.msra.mxu0 %v2921
    %2946 = vmatprep.subr.mxu0 0.0
    %2947 = vmatpush1.msra.mxu0 %v2922
    %2948 = vmatprep.subr.mxu0 0.0
    %2949 = vmatpush1.msra.mxu0 %v2923
    %2950 = vmatprep.subr.mxu0 0.0
    %2951 = vmatpush1.msra.mxu0 %v2924
    %2952 = vmatprep.subr.mxu0 0.0
    %2953 = vmatpush1.msra.mxu0 %v2925
    %2954 = vmatprep.subr.mxu0 0.0
    %2955 = vmatpush1.msra.mxu0 %v2926
    %2956 = vmatprep.subr.mxu0 0.0
    %2957 = vmatpush1.msra.mxu0 %v2927
    %2958 = vmatprep.subr.mxu0 0.0
    %2959 = vmatpush1.msra.mxu0 %v2928
    %2960 = vmatprep.subr.mxu0 0.0
    %2961 = vmatpush1.msra.mxu0 %v2929
    %2962 = vmatprep.subr.mxu0 0.0
    %2963 = vmatpush1.msra.mxu0 %v2930
    %2964 = vmatprep.subr.mxu0 0.0
    %2965 = vmatpush1.msra.mxu0 %v2931
    %2966 = vmatprep.subr.mxu0 0.0
    %2967 = vmatpush1.msra.mxu0 %v2932
    %2968 = vmatprep.subr.mxu0 0.0
    %2969 = vmatpush1.msra.mxu0 %v2933
    %2970 = vmatprep.subr.mxu0 0.0
    %2971 = vmatpush1.msra.mxu0 %v2934
    %2972 = vmatprep.subr.mxu0 0.0
    %2973 = vmatpush1.msra.mxu0 %v2935
    %2974 = vmatprep.subr.mxu0 0.0
    %2975 = vmatpush1.msra.mxu0 %v2936
    %2976 = vmatprep.subr.mxu0 0.0
    %2977 = vmatpush1.msra.mxu0 0.0
    %2978 = vmatprep.subr.mxu0 0.0
    %2979 = vmatpush1.msra.mxu0 0.0
    %2980 = vmatprep.subr.mxu0 0.0
    %2981 = vmatpush1.msra.mxu0 0.0
    %2982 = vmatprep.subr.mxu0 0.0
    %2983 = vmatpush1.msra.mxu0 0.0
    %2984 = vmatprep.subr.mxu0 0.0
    %2985 = vmatpush1.msra.mxu0 0.0
    %2986 = vmatprep.subr.mxu0 0.0
    %2987 = vmatpush1.msra.mxu0 0.0
    %2988 = vmatprep.subr.mxu0 0.0
    %2989 = vmatpush1.msra.mxu0 0.0
    %2990 = vmatprep.subr.mxu0 0.0
    %2991 = vmatpush1.msra.mxu0 0.0
    %2992 = vmatprep.subr.mxu0 0.0
    %2993 = vmatpush1.msra.mxu0 0.0
    %2994 = vmatprep.subr.mxu0 0.0
    %2995 = vmatpush1.msra.mxu0 0.0
    %2996 = vmatprep.subr.mxu0 0.0
    %2997 = vmatpush1.msra.mxu0 0.0
    %2998 = vmatprep.subr.mxu0 0.0
    %2999 = vmatpush1.msra.mxu0 0.0
    %3000 = vmatprep.subr.mxu0 0.0
    %3001 = vmatpush1.msra.mxu0 0.0
    %3002 = vmatprep.subr.mxu0 0.0
    %3003 = vmatpush1.msra.mxu0 0.0
    %3004 = vmatprep.subr.mxu0 0.0
    %3005 = vmatpush1.msra.mxu0 0.0
    %3006 = vmatprep.subr.mxu0 0.0
    %3007 = vmatpush1.msra.mxu0 0.0
    %3008 = vmatprep.mubr.f32.mxu0 0.0
    %3009 = vmatmul.mubr.f32.gmra.mrb[0].mxu0 %v164
    %v3010 = vpop.f32.mrb[0].mxu0
    %v3011 = vadd.f32 %v2942, %v3010
    %v3012 = vpop.f32.mrb[0].mxu0
    %3013 = vdwg.mxu0
    %v3014 = vld [vmem:[%s15] sm:$0xff]
    %v3015 = vld [vmem:[%s15 + $0x8] sm:$0xff]
    %v3016 = vld [vmem:[%s15 + $0x10] sm:$0xff]
    %v3017 = vld [vmem:[%s15 + $0x18] sm:$0xff]
    %v3018 = vld [vmem:[%s15 + $0x20] sm:$0xff]
    %v3019 = vld [vmem:[%s15 + $0x28] sm:$0xff]
    %v3020 = vld [vmem:[%s15 + $0x30] sm:$0xff]
    %v3021 = vld [vmem:[%s15 + $0x38] sm:$0xff]
    %v3022 = vld [vmem:[%s15 + $0x40] sm:$0xff]
    %v3023 = vld [vmem:[%s15 + $0x48] sm:$0xff]
    %v3024 = vld [vmem:[%s15 + $0x50] sm:$0xff]
    %v3025 = vld [vmem:[%s15 + $0x58] sm:$0xff]
    %v3026 = vld [vmem:[%s15 + $0x60] sm:$0xff]
    %v3027 = vld [vmem:[%s15 + $0x68] sm:$0xff]
    %v3028 = vld [vmem:[%s15 + $0x70] sm:$0xff]
    %v3029 = vld [vmem:[%s15 + $0x78] sm:$0xff]
    %v3030 = vld [vmem:[%s21] sm:$0x1]
    %v3032 = vlaneseq
    %v3033 = vshrl.u32 %v3032, 7
    %v3034 = vsub.s32 0, %v3033
    %v3035 = vrot.slane %v3030, %v3034
    %3037 = vmatprep.subr.mxu0 0.0
    %3038 = vmatpush1.msra.mxu0 %v3014
    %3039 = vmatprep.subr.mxu0 0.0
    %3040 = vmatpush1.msra.mxu0 %v3015
    %3041 = vmatprep.subr.mxu0 0.0
    %3042 = vmatpush1.msra.mxu0 %v3016
    %3043 = vmatprep.subr.mxu0 0.0
    %3044 = vmatpush1.msra.mxu0 %v3017
    %3045 = vmatprep.subr.mxu0 0.0
    %3046 = vmatpush1.msra.mxu0 %v3018
    %3047 = vmatprep.subr.mxu0 0.0
    %3048 = vmatpush1.msra.mxu0 %v3019
    %3049 = vmatprep.subr.mxu0 0.0
    %3050 = vmatpush1.msra.mxu0 %v3020
    %3051 = vmatprep.subr.mxu0 0.0
    %3052 = vmatpush1.msra.mxu0 %v3021
    %3053 = vmatprep.subr.mxu0 0.0
    %3054 = vmatpush1.msra.mxu0 %v3022
    %3055 = vmatprep.subr.mxu0 0.0
    %3056 = vmatpush1.msra.mxu0 %v3023
    %3057 = vmatprep.subr.mxu0 0.0
    %3058 = vmatpush1.msra.mxu0 %v3024
    %3059 = vmatprep.subr.mxu0 0.0
    %3060 = vmatpush1.msra.mxu0 %v3025
    %3061 = vmatprep.subr.mxu0 0.0
    %3062 = vmatpush1.msra.mxu0 %v3026
    %3063 = vmatprep.subr.mxu0 0.0
    %3064 = vmatpush1.msra.mxu0 %v3027
    %3065 = vmatprep.subr.mxu0 0.0
    %3066 = vmatpush1.msra.mxu0 %v3028
    %3067 = vmatprep.subr.mxu0 0.0
    %3068 = vmatpush1.msra.mxu0 %v3029
    %3069 = vmatprep.subr.mxu0 0.0
    %3070 = vmatpush1.msra.mxu0 0.0
    %3071 = vmatprep.subr.mxu0 0.0
    %3072 = vmatpush1.msra.mxu0 0.0
    %3073 = vmatprep.subr.mxu0 0.0
    %3074 = vmatpush1.msra.mxu0 0.0
    %3075 = vmatprep.subr.mxu0 0.0
    %3076 = vmatpush1.msra.mxu0 0.0
    %3077 = vmatprep.subr.mxu0 0.0
    %3078 = vmatpush1.msra.mxu0 0.0
    %3079 = vmatprep.subr.mxu0 0.0
    %3080 = vmatpush1.msra.mxu0 0.0
    %3081 = vmatprep.subr.mxu0 0.0
    %3082 = vmatpush1.msra.mxu0 0.0
    %3083 = vmatprep.subr.mxu0 0.0
    %3084 = vmatpush1.msra.mxu0 0.0
    %3085 = vmatprep.subr.mxu0 0.0
    %3086 = vmatpush1.msra.mxu0 0.0
    %3087 = vmatprep.subr.mxu0 0.0
    %3088 = vmatpush1.msra.mxu0 0.0
    %3089 = vmatprep.subr.mxu0 0.0
    %3090 = vmatpush1.msra.mxu0 0.0
    %3091 = vmatprep.subr.mxu0 0.0
    %3092 = vmatpush1.msra.mxu0 0.0
    %3093 = vmatprep.subr.mxu0 0.0
    %3094 = vmatpush1.msra.mxu0 0.0
    %3095 = vmatprep.subr.mxu0 0.0
    %3096 = vmatpush1.msra.mxu0 0.0
    %3097 = vmatprep.subr.mxu0 0.0
    %3098 = vmatpush1.msra.mxu0 0.0
    %3099 = vmatprep.subr.mxu0 0.0
    %3100 = vmatpush1.msra.mxu0 0.0
    %3101 = vmatprep.mubr.f32.mxu0 0.0
    %3102 = vmatmul.mubr.f32.gmra.mrb[0].mxu0 %v132
    %v3103 = vpop.f32.mrb[0].mxu0
    %v3104 = vadd.f32 %v3035, %v3103
    %v3105 = vpop.f32.mrb[0].mxu0
    %3106 = vdwg.mxu0
    %v3107 = vld [vmem:[%s1014] sm:$0xff]
    %v3108 = vld [vmem:[%s1014 + $0x8] sm:$0xff]
    %v3109 = vld [vmem:[%s1014 + $0x10] sm:$0xff]
    %v3110 = vld [vmem:[%s1014 + $0x18] sm:$0xff]
    %v3111 = vld [vmem:[%s1014 + $0x20] sm:$0xff]
    %v3112 = vld [vmem:[%s1014 + $0x28] sm:$0xff]
    %v3113 = vld [vmem:[%s1014 + $0x30] sm:$0xff]
    %v3114 = vld [vmem:[%s1014 + $0x38] sm:$0xff]
    %v3115 = vld [vmem:[%s1014 + $0x40] sm:$0xff]
    %v3116 = vld [vmem:[%s1014 + $0x48] sm:$0xff]
    %v3117 = vld [vmem:[%s1014 + $0x50] sm:$0xff]
    %v3118 = vld [vmem:[%s1014 + $0x58] sm:$0xff]
    %v3119 = vld [vmem:[%s1014 + $0x60] sm:$0xff]
    %v3120 = vld [vmem:[%s1014 + $0x68] sm:$0xff]
    %v3121 = vld [vmem:[%s1014 + $0x70] sm:$0xff]
    %v3122 = vld [vmem:[%s1014 + $0x78] sm:$0xff]
    %v3123 = vld [vmem:[%s1031] sm:$0x1]
    %v3125 = vlaneseq
    %v3126 = vshrl.u32 %v3125, 7
    %v3127 = vsub.s32 0, %v3126
    %v3128 = vrot.slane %v3123, %v3127
    %3130 = vmatprep.subr.mxu0 0.0
    %3131 = vmatpush1.msra.mxu0 %v3107
    %3132 = vmatprep.subr.mxu0 0.0
    %3133 = vmatpush1.msra.mxu0 %v3108
    %3134 = vmatprep.subr.mxu0 0.0
    %3135 = vmatpush1.msra.mxu0 %v3109
    %3136 = vmatprep.subr.mxu0 0.0
    %3137 = vmatpush1.msra.mxu0 %v3110
    %3138 = vmatprep.subr.mxu0 0.0
    %3139 = vmatpush1.msra.mxu0 %v3111
    %3140 = vmatprep.subr.mxu0 0.0
    %3141 = vmatpush1.msra.mxu0 %v3112
    %3142 = vmatprep.subr.mxu0 0.0
    %3143 = vmatpush1.msra.mxu0 %v3113
    %3144 = vmatprep.subr.mxu0 0.0
    %3145 = vmatpush1.msra.mxu0 %v3114
    %3146 = vmatprep.subr.mxu0 0.0
    %3147 = vmatpush1.msra.mxu0 %v3115
    %3148 = vmatprep.subr.mxu0 0.0
    %3149 = vmatpush1.msra.mxu0 %v3116
    %3150 = vmatprep.subr.mxu0 0.0
    %3151 = vmatpush1.msra.mxu0 %v3117
    %3152 = vmatprep.subr.mxu0 0.0
    %3153 = vmatpush1.msra.mxu0 %v3118
    %3154 = vmatprep.subr.mxu0 0.0
    %3155 = vmatpush1.msra.mxu0 %v3119
    %3156 = vmatprep.subr.mxu0 0.0
    %3157 = vmatpush1.msra.mxu0 %v3120
    %3158 = vmatprep.subr.mxu0 0.0
    %3159 = vmatpush1.msra.mxu0 %v3121
    %3160 = vmatprep.subr.mxu0 0.0
    %3161 = vmatpush1.msra.mxu0 %v3122
    %3162 = vmatprep.subr.mxu0 0.0
    %3163 = vmatpush1.msra.mxu0 0.0
    %3164 = vmatprep.subr.mxu0 0.0
    %3165 = vmatpush1.msra.mxu0 0.0
    %3166 = vmatprep.subr.mxu0 0.0
    %3167 = vmatpush1.msra.mxu0 0.0
    %3168 = vmatprep.subr.mxu0 0.0
    %3169 = vmatpush1.msra.mxu0 0.0
    %3170 = vmatprep.subr.mxu0 0.0
    %3171 = vmatpush1.msra.mxu0 0.0
    %3172 = vmatprep.subr.mxu0 0.0
    %3173 = vmatpush1.msra.mxu0 0.0
    %3174 = vmatprep.subr.mxu0 0.0
    %3175 = vmatpush1.msra.mxu0 0.0
    %3176 = vmatprep.subr.mxu0 0.0
    %3177 = vmatpush1.msra.mxu0 0.0
    %3178 = vmatprep.subr.mxu0 0.0
    %3179 = vmatpush1.msra.mxu0 0.0
    %3180 = vmatprep.subr.mxu0 0.0
    %3181 = vmatpush1.msra.mxu0 0.0
    %3182 = vmatprep.subr.mxu0 0.0
    %3183 = vmatpush1.msra.mxu0 0.0
    %3184 = vmatprep.subr.mxu0 0.0
    %3185 = vmatpush1.msra.mxu0 0.0
    %3186 = vmatprep.subr.mxu0 0.0
    %3187 = vmatpush1.msra.mxu0 0.0
    %3188 = vmatprep.subr.mxu0 0.0
    %3189 = vmatpush1.msra.mxu0 0.0
    %3190 = vmatprep.subr.mxu0 0.0
    %3191 = vmatpush1.msra.mxu0 0.0
    %3192 = vmatprep.subr.mxu0 0.0
    %3193 = vmatpush1.msra.mxu0 0.0
    %3194 = vmatprep.mubr.f32.mxu0 0.0
    %3195 = vmatmul.mubr.f32.gmra.mrb[0].mxu0 %v132
    %v3196 = vpop.f32.mrb[0].mxu0
    %v3197 = vadd.f32 %v3128, %v3196
    %v3198 = vpop.f32.mrb[0].mxu0
    %3199 = vdwg.mxu0
    %v3200 = vld [vmem:[%s1109] sm:$0xff]
    %v3201 = vld [vmem:[%s1109 + $0x8] sm:$0xff]
    %v3202 = vld [vmem:[%s1109 + $0x10] sm:$0xff]
    %v3203 = vld [vmem:[%s1109 + $0x18] sm:$0xff]
    %v3204 = vld [vmem:[%s1109 + $0x20] sm:$0xff]
    %v3205 = vld [vmem:[%s1109 + $0x28] sm:$0xff]
    %v3206 = vld [vmem:[%s1109 + $0x30] sm:$0xff]
    %v3207 = vld [vmem:[%s1109 + $0x38] sm:$0xff]
    %v3208 = vld [vmem:[%s1109 + $0x40] sm:$0xff]
    %v3209 = vld [vmem:[%s1109 + $0x48] sm:$0xff]
    %v3210 = vld [vmem:[%s1109 + $0x50] sm:$0xff]
    %v3211 = vld [vmem:[%s1109 + $0x58] sm:$0xff]
    %v3212 = vld [vmem:[%s1109 + $0x60] sm:$0xff]
    %v3213 = vld [vmem:[%s1109 + $0x68] sm:$0xff]
    %v3214 = vld [vmem:[%s1109 + $0x70] sm:$0xff]
    %v3215 = vld [vmem:[%s1109 + $0x78] sm:$0xff]
    %v3216 = vld [vmem:[%s1126] sm:$0x1]
    %v3218 = vlaneseq
    %v3219 = vshrl.u32 %v3218, 7
    %v3220 = vsub.s32 0, %v3219
    %v3221 = vrot.slane %v3216, %v3220
    %3223 = vmatprep.subr.mxu0 0.0
    %3224 = vmatpush1.msra.mxu0 %v3200
    %3225 = vmatprep.subr.mxu0 0.0
    %3226 = vmatpush1.msra.mxu0 %v3201
    %3227 = vmatprep.subr.mxu0 0.0
    %3228 = vmatpush1.msra.mxu0 %v3202
    %3229 = vmatprep.subr.mxu0 0.0
    %3230 = vmatpush1.msra.mxu0 %v3203
    %3231 = vmatprep.subr.mxu0 0.0
    %3232 = vmatpush1.msra.mxu0 %v3204
    %3233 = vmatprep.subr.mxu0 0.0
    %3234 = vmatpush1.msra.mxu0 %v3205
    %3235 = vmatprep.subr.mxu0 0.0
    %3236 = vmatpush1.msra.mxu0 %v3206
    %3237 = vmatprep.subr.mxu0 0.0
    %3238 = vmatpush1.msra.mxu0 %v3207
    %3239 = vmatprep.subr.mxu0 0.0
    %3240 = vmatpush1.msra.mxu0 %v3208
    %3241 = vmatprep.subr.mxu0 0.0
    %3242 = vmatpush1.msra.mxu0 %v3209
    %3243 = vmatprep.subr.mxu0 0.0
    %3244 = vmatpush1.msra.mxu0 %v3210
    %3245 = vmatprep.subr.mxu0 0.0
    %3246 = vmatpush1.msra.mxu0 %v3211
    %3247 = vmatprep.subr.mxu0 0.0
    %3248 = vmatpush1.msra.mxu0 %v3212
    %3249 = vmatprep.subr.mxu0 0.0
    %3250 = vmatpush1.msra.mxu0 %v3213
    %3251 = vmatprep.subr.mxu0 0.0
    %3252 = vmatpush1.msra.mxu0 %v3214
    %3253 = vmatprep.subr.mxu0 0.0
    %3254 = vmatpush1.msra.mxu0 %v3215
    %3255 = vmatprep.subr.mxu0 0.0
    %3256 = vmatpush1.msra.mxu0 0.0
    %3257 = vmatprep.subr.mxu0 0.0
    %3258 = vmatpush1.msra.mxu0 0.0
    %3259 = vmatprep.subr.mxu0 0.0
    %3260 = vmatpush1.msra.mxu0 0.0
    %3261 = vmatprep.subr.mxu0 0.0
    %3262 = vmatpush1.msra.mxu0 0.0
    %3263 = vmatprep.subr.mxu0 0.0
    %3264 = vmatpush1.msra.mxu0 0.0
    %3265 = vmatprep.subr.mxu0 0.0
    %3266 = vmatpush1.msra.mxu0 0.0
    %3267 = vmatprep.subr.mxu0 0.0
    %3268 = vmatpush1.msra.mxu0 0.0
    %3269 = vmatprep.subr.mxu0 0.0
    %3270 = vmatpush1.msra.mxu0 0.0
    %3271 = vmatprep.subr.mxu0 0.0
    %3272 = vmatpush1.msra.mxu0 0.0
    %3273 = vmatprep.subr.mxu0 0.0
    %3274 = vmatpush1.msra.mxu0 0.0
    %3275 = vmatprep.subr.mxu0 0.0
    %3276 = vmatpush1.msra.mxu0 0.0
    %3277 = vmatprep.subr.mxu0 0.0
    %3278 = vmatpush1.msra.mxu0 0.0
    %3279 = vmatprep.subr.mxu0 0.0
    %3280 = vmatpush1.msra.mxu0 0.0
    %3281 = vmatprep.subr.mxu0 0.0
    %3282 = vmatpush1.msra.mxu0 0.0
    %3283 = vmatprep.subr.mxu0 0.0
    %3284 = vmatpush1.msra.mxu0 0.0
    %3285 = vmatprep.subr.mxu0 0.0
    %3286 = vmatpush1.msra.mxu0 0.0
    %3287 = vmatprep.mubr.f32.mxu0 0.0
    %3288 = vmatmul.mubr.f32.gmra.mrb[0].mxu0 %v132
    %v3289 = vpop.f32.mrb[0].mxu0
    %v3290 = vadd.f32 %v3221, %v3289
    %v3291 = vpop.f32.mrb[0].mxu0
    %3292 = vdwg.mxu0
    %v3293 = vld [vmem:[%s1204] sm:$0xff]
    %v3294 = vld [vmem:[%s1204 + $0x8] sm:$0xff]
    %v3295 = vld [vmem:[%s1204 + $0x10] sm:$0xff]
    %v3296 = vld [vmem:[%s1204 + $0x18] sm:$0xff]
    %v3297 = vld [vmem:[%s1204 + $0x20] sm:$0xff]
    %v3298 = vld [vmem:[%s1204 + $0x28] sm:$0xff]
    %v3299 = vld [vmem:[%s1204 + $0x30] sm:$0xff]
    %v3300 = vld [vmem:[%s1204 + $0x38] sm:$0xff]
    %v3301 = vld [vmem:[%s1204 + $0x40] sm:$0xff]
    %v3302 = vld [vmem:[%s1204 + $0x48] sm:$0xff]
    %v3303 = vld [vmem:[%s1204 + $0x50] sm:$0xff]
    %v3304 = vld [vmem:[%s1204 + $0x58] sm:$0xff]
    %v3305 = vld [vmem:[%s1204 + $0x60] sm:$0xff]
    %v3306 = vld [vmem:[%s1204 + $0x68] sm:$0xff]
    %v3307 = vld [vmem:[%s1204 + $0x70] sm:$0xff]
    %v3308 = vld [vmem:[%s1204 + $0x78] sm:$0xff]
    %v3309 = vld [vmem:[%s1221] sm:$0x1]
    %v3311 = vlaneseq
    %v3312 = vshrl.u32 %v3311, 7
    %v3313 = vsub.s32 0, %v3312
    %v3314 = vrot.slane %v3309, %v3313
    %3316 = vmatprep.subr.mxu0 0.0
    %3317 = vmatpush1.msra.mxu0 %v3293
    %3318 = vmatprep.subr.mxu0 0.0
    %3319 = vmatpush1.msra.mxu0 %v3294
    %3320 = vmatprep.subr.mxu0 0.0
    %3321 = vmatpush1.msra.mxu0 %v3295
    %3322 = vmatprep.subr.mxu0 0.0
    %3323 = vmatpush1.msra.mxu0 %v3296
    %3324 = vmatprep.subr.mxu0 0.0
    %3325 = vmatpush1.msra.mxu0 %v3297
    %3326 = vmatprep.subr.mxu0 0.0
    %3327 = vmatpush1.msra.mxu0 %v3298
    %3328 = vmatprep.subr.mxu0 0.0
    %3329 = vmatpush1.msra.mxu0 %v3299
    %3330 = vmatprep.subr.mxu0 0.0
    %3331 = vmatpush1.msra.mxu0 %v3300
    %3332 = vmatprep.subr.mxu0 0.0
    %3333 = vmatpush1.msra.mxu0 %v3301
    %3334 = vmatprep.subr.mxu0 0.0
    %3335 = vmatpush1.msra.mxu0 %v3302
    %3336 = vmatprep.subr.mxu0 0.0
    %3337 = vmatpush1.msra.mxu0 %v3303
    %3338 = vmatprep.subr.mxu0 0.0
    %3339 = vmatpush1.msra.mxu0 %v3304
    %3340 = vmatprep.subr.mxu0 0.0
    %3341 = vmatpush1.msra.mxu0 %v3305
    %3342 = vmatprep.subr.mxu0 0.0
    %3343 = vmatpush1.msra.mxu0 %v3306
    %3344 = vmatprep.subr.mxu0 0.0
    %3345 = vmatpush1.msra.mxu0 %v3307
    %3346 = vmatprep.subr.mxu0 0.0
    %3347 = vmatpush1.msra.mxu0 %v3308
    %3348 = vmatprep.subr.mxu0 0.0
    %3349 = vmatpush1.msra.mxu0 0.0
    %3350 = vmatprep.subr.mxu0 0.0
    %3351 = vmatpush1.msra.mxu0 0.0
    %3352 = vmatprep.subr.mxu0 0.0
    %3353 = vmatpush1.msra.mxu0 0.0
    %3354 = vmatprep.subr.mxu0 0.0
    %3355 = vmatpush1.msra.mxu0 0.0
    %3356 = vmatprep.subr.mxu0 0.0
    %3357 = vmatpush1.msra.mxu0 0.0
    %3358 = vmatprep.subr.mxu0 0.0
    %3359 = vmatpush1.msra.mxu0 0.0
    %3360 = vmatprep.subr.mxu0 0.0
    %3361 = vmatpush1.msra.mxu0 0.0
    %3362 = vmatprep.subr.mxu0 0.0
    %3363 = vmatpush1.msra.mxu0 0.0
    %3364 = vmatprep.subr.mxu0 0.0
    %3365 = vmatpush1.msra.mxu0 0.0
    %3366 = vmatprep.subr.mxu0 0.0
    %3367 = vmatpush1.msra.mxu0 0.0
    %3368 = vmatprep.subr.mxu0 0.0
    %3369 = vmatpush1.msra.mxu0 0.0
    %3370 = vmatprep.subr.mxu0 0.0
    %3371 = vmatpush1.msra.mxu0 0.0
    %3372 = vmatprep.subr.mxu0 0.0
    %3373 = vmatpush1.msra.mxu0 0.0
    %3374 = vmatprep.subr.mxu0 0.0
    %3375 = vmatpush1.msra.mxu0 0.0
    %3376 = vmatprep.subr.mxu0 0.0
    %3377 = vmatpush1.msra.mxu0 0.0
    %3378 = vmatprep.subr.mxu0 0.0
    %3379 = vmatpush1.msra.mxu0 0.0
    %3380 = vmatprep.mubr.f32.mxu0 0.0
    %3381 = vmatmul.mubr.f32.gmra.mrb[0].mxu0 %v132
    %v3382 = vpop.f32.mrb[0].mxu0
    %v3383 = vadd.f32 %v3314, %v3382
    %v3384 = vpop.f32.mrb[0].mxu0
    %3385 = vdwg.mxu0
    %v3387 = vsel %vm1299, %v2360, 0
    %v3390 = vsel %vm1299, %v2732, 0
    %3392 = vmatprep.subr.mxu0 0.0
    %3393 = vmatpush1.xpose.msra.mxu0 %v3390
    %3394 = vmatprep.subr.mxu0 0.0
    %3395 = vmatpush1.xpose.msra.mxu0 0.0
    %3396 = vmatprep.subr.mxu0 0.0
    %3397 = vmatpush1.xpose.msra.mxu0 0.0
    %3398 = vmatprep.subr.mxu0 0.0
    %3399 = vmatpush1.xpose.msra.mxu0 0.0
    %3400 = vmatprep.subr.mxu0 0.0
    %3401 = vmatpush1.xpose.msra.mxu0 0.0
    %3402 = vmatprep.subr.mxu0 0.0
    %3403 = vmatpush1.xpose.msra.mxu0 0.0
    %3404 = vmatprep.subr.mxu0 0.0
    %3405 = vmatpush1.xpose.msra.mxu0 0.0
    %3406 = vmatprep.subr.mxu0 0.0
    %3407 = vmatpush1.xpose.msra.mxu0 0.0
    %3408 = vmatprep.subr.mxu0 0.0
    %3409 = vmatpush1.xpose.msra.mxu0 0.0
    %3410 = vmatprep.subr.mxu0 0.0
    %3411 = vmatpush1.xpose.msra.mxu0 0.0
    %3412 = vmatprep.subr.mxu0 0.0
    %3413 = vmatpush1.xpose.msra.mxu0 0.0
    %3414 = vmatprep.subr.mxu0 0.0
    %3415 = vmatpush1.xpose.msra.mxu0 0.0
    %3416 = vmatprep.subr.mxu0 0.0
    %3417 = vmatpush1.xpose.msra.mxu0 0.0
    %3418 = vmatprep.subr.mxu0 0.0
    %3419 = vmatpush1.xpose.msra.mxu0 0.0
    %3420 = vmatprep.subr.mxu0 0.0
    %3421 = vmatpush1.xpose.msra.mxu0 0.0
    %3422 = vmatprep.subr.mxu0 0.0
    %3423 = vmatpush1.xpose.msra.mxu0 0.0
    %3424 = vmatprep.subr.mxu0 0.0
    %3425 = vmatpush1.xpose.msra.mxu0 0.0
    %3426 = vmatprep.subr.mxu0 0.0
    %3427 = vmatpush1.xpose.msra.mxu0 0.0
    %3428 = vmatprep.subr.mxu0 0.0
    %3429 = vmatpush1.xpose.msra.mxu0 0.0
    %3430 = vmatprep.subr.mxu0 0.0
    %3431 = vmatpush1.xpose.msra.mxu0 0.0
    %3432 = vmatprep.subr.mxu0 0.0
    %3433 = vmatpush1.xpose.msra.mxu0 0.0
    %3434 = vmatprep.subr.mxu0 0.0
    %3435 = vmatpush1.xpose.msra.mxu0 0.0
    %3436 = vmatprep.subr.mxu0 0.0
    %3437 = vmatpush1.xpose.msra.mxu0 0.0
    %3438 = vmatprep.subr.mxu0 0.0
    %3439 = vmatpush1.xpose.msra.mxu0 0.0
    %3440 = vmatprep.subr.mxu0 0.0
    %3441 = vmatpush1.xpose.msra.mxu0 0.0
    %3442 = vmatprep.subr.mxu0 0.0
    %3443 = vmatpush1.xpose.msra.mxu0 0.0
    %3444 = vmatprep.subr.mxu0 0.0
    %3445 = vmatpush1.xpose.msra.mxu0 0.0
    %3446 = vmatprep.subr.mxu0 0.0
    %3447 = vmatpush1.xpose.msra.mxu0 0.0
    %3448 = vmatprep.subr.mxu0 0.0
    %3449 = vmatpush1.xpose.msra.mxu0 0.0
    %3450 = vmatprep.subr.mxu0 0.0
    %3451 = vmatpush1.xpose.msra.mxu0 0.0
    %3452 = vmatprep.subr.mxu0 0.0
    %3453 = vmatpush1.xpose.msra.mxu0 0.0
    %3454 = vmatprep.subr.mxu0 0.0
    %3455 = vmatpush1.xpose.msra.mxu0 0.0
    %3456 = vmatprep.mubr.f32.mxu0 0.0
    %3457 = vmatmul.mubr.f32.gmra.mrb[0].mxu0 %v3387
    %v3458 = vpop.f32.mrb[0].mxu0
    %v3459 = vadd.f32 0.0, %v3458
    %v3460 = vpop.f32.mrb[0].mxu0
    %3461 = vdwg.mxu0
    %v3463 = vsel %vm1299, %v2453, 0
    %v3466 = vsel %vm1299, %v2825, 0
    %3468 = vmatprep.subr.mxu0 0.0
    %3469 = vmatpush1.xpose.msra.mxu0 %v3466
    %3470 = vmatprep.subr.mxu0 0.0
    %3471 = vmatpush1.xpose.msra.mxu0 0.0
    %3472 = vmatprep.subr.mxu0 0.0
    %3473 = vmatpush1.xpose.msra.mxu0 0.0
    %3474 = vmatprep.subr.mxu0 0.0
    %3475 = vmatpush1.xpose.msra.mxu0 0.0
    %3476 = vmatprep.subr.mxu0 0.0
    %3477 = vmatpush1.xpose.msra.mxu0 0.0
    %3478 = vmatprep.subr.mxu0 0.0
    %3479 = vmatpush1.xpose.msra.mxu0 0.0
    %3480 = vmatprep.subr.mxu0 0.0
    %3481 = vmatpush1.xpose.msra.mxu0 0.0
    %3482 = vmatprep.subr.mxu0 0.0
    %3483 = vmatpush1.xpose.msra.mxu0 0.0
    %3484 = vmatprep.subr.mxu0 0.0
    %3485 = vmatpush1.xpose.msra.mxu0 0.0
    %3486 = vmatprep.subr.mxu0 0.0
    %3487 = vmatpush1.xpose.msra.mxu0 0.0
    %3488 = vmatprep.subr.mxu0 0.0
    %3489 = vmatpush1.xpose.msra.mxu0 0.0
    %3490 = vmatprep.subr.mxu0 0.0
    %3491 = vmatpush1.xpose.msra.mxu0 0.0
    %3492 = vmatprep.subr.mxu0 0.0
    %3493 = vmatpush1.xpose.msra.mxu0 0.0
    %3494 = vmatprep.subr.mxu0 0.0
    %3495 = vmatpush1.xpose.msra.mxu0 0.0
    %3496 = vmatprep.subr.mxu0 0.0
    %3497 = vmatpush1.xpose.msra.mxu0 0.0
    %3498 = vmatprep.subr.mxu0 0.0
    %3499 = vmatpush1.xpose.msra.mxu0 0.0
    %3500 = vmatprep.subr.mxu0 0.0
    %3501 = vmatpush1.xpose.msra.mxu0 0.0
    %3502 = vmatprep.subr.mxu0 0.0
    %3503 = vmatpush1.xpose.msra.mxu0 0.0
    %3504 = vmatprep.subr.mxu0 0.0
    %3505 = vmatpush1.xpose.msra.mxu0 0.0
    %3506 = vmatprep.subr.mxu0 0.0
    %3507 = vmatpush1.xpose.msra.mxu0 0.0
    %3508 = vmatprep.subr.mxu0 0.0
    %3509 = vmatpush1.xpose.msra.mxu0 0.0
    %3510 = vmatprep.subr.mxu0 0.0
    %3511 = vmatpush1.xpose.msra.mxu0 0.0
    %3512 = vmatprep.subr.mxu0 0.0
    %3513 = vmatpush1.xpose.msra.mxu0 0.0
    %3514 = vmatprep.subr.mxu0 0.0
    %3515 = vmatpush1.xpose.msra.mxu0 0.0
    %3516 = vmatprep.subr.mxu0 0.0
    %3517 = vmatpush1.xpose.msra.mxu0 0.0
    %3518 = vmatprep.subr.mxu0 0.0
    %3519 = vmatpush1.xpose.msra.mxu0 0.0
    %3520 = vmatprep.subr.mxu0 0.0
    %3521 = vmatpush1.xpose.msra.mxu0 0.0
    %3522 = vmatprep.subr.mxu0 0.0
    %3523 = vmatpush1.xpose.msra.mxu0 0.0
    %3524 = vmatprep.subr.mxu0 0.0
    %3525 = vmatpush1.xpose.msra.mxu0 0.0
    %3526 = vmatprep.subr.mxu0 0.0
    %3527 = vmatpush1.xpose.msra.mxu0 0.0
    %3528 = vmatprep.subr.mxu0 0.0
    %3529 = vmatpush1.xpose.msra.mxu0 0.0
    %3530 = vmatprep.subr.mxu0 0.0
    %3531 = vmatpush1.xpose.msra.mxu0 0.0
    %3532 = vmatprep.mubr.f32.mxu0 0.0
    %3533 = vmatmul.mubr.f32.gmra.mrb[0].mxu0 %v3463
    %v3534 = vpop.f32.mrb[0].mxu0
    %v3535 = vadd.f32 0.0, %v3534
    %v3536 = vpop.f32.mrb[0].mxu0
    %3537 = vdwg.mxu0
    %v3539 = vsel %vm1299, %v2546, 0
    %v3542 = vsel %vm1299, %v2918, 0
    %3544 = vmatprep.subr.mxu0 0.0
    %3545 = vmatpush1.xpose.msra.mxu0 %v3542
    %3546 = vmatprep.subr.mxu0 0.0
    %3547 = vmatpush1.xpose.msra.mxu0 0.0
    %3548 = vmatprep.subr.mxu0 0.0
    %3549 = vmatpush1.xpose.msra.mxu0 0.0
    %3550 = vmatprep.subr.mxu0 0.0
    %3551 = vmatpush1.xpose.msra.mxu0 0.0
    %3552 = vmatprep.subr.mxu0 0.0
    %3553 = vmatpush1.xpose.msra.mxu0 0.0
    %3554 = vmatprep.subr.mxu0 0.0
    %3555 = vmatpush1.xpose.msra.mxu0 0.0
    %3556 = vmatprep.subr.mxu0 0.0
    %3557 = vmatpush1.xpose.msra.mxu0 0.0
    %3558 = vmatprep.subr.mxu0 0.0
    %3559 = vmatpush1.xpose.msra.mxu0 0.0
    %3560 = vmatprep.subr.mxu0 0.0
    %3561 = vmatpush1.xpose.msra.mxu0 0.0
    %3562 = vmatprep.subr.mxu0 0.0
    %3563 = vmatpush1.xpose.msra.mxu0 0.0
    %3564 = vmatprep.subr.mxu0 0.0
    %3565 = vmatpush1.xpose.msra.mxu0 0.0
    %3566 = vmatprep.subr.mxu0 0.0
    %3567 = vmatpush1.xpose.msra.mxu0 0.0
    %3568 = vmatprep.subr.mxu0 0.0
    %3569 = vmatpush1.xpose.msra.mxu0 0.0
    %3570 = vmatprep.subr.mxu0 0.0
    %3571 = vmatpush1.xpose.msra.mxu0 0.0
    %3572 = vmatprep.subr.mxu0 0.0
    %3573 = vmatpush1.xpose.msra.mxu0 0.0
    %3574 = vmatprep.subr.mxu0 0.0
    %3575 = vmatpush1.xpose.msra.mxu0 0.0
    %3576 = vmatprep.subr.mxu0 0.0
    %3577 = vmatpush1.xpose.msra.mxu0 0.0
    %3578 = vmatprep.subr.mxu0 0.0
    %3579 = vmatpush1.xpose.msra.mxu0 0.0
    %3580 = vmatprep.subr.mxu0 0.0
    %3581 = vmatpush1.xpose.msra.mxu0 0.0
    %3582 = vmatprep.subr.mxu0 0.0
    %3583 = vmatpush1.xpose.msra.mxu0 0.0
    %3584 = vmatprep.subr.mxu0 0.0
    %3585 = vmatpush1.xpose.msra.mxu0 0.0
    %3586 = vmatprep.subr.mxu0 0.0
    %3587 = vmatpush1.xpose.msra.mxu0 0.0
    %3588 = vmatprep.subr.mxu0 0.0
    %3589 = vmatpush1.xpose.msra.mxu0 0.0
    %3590 = vmatprep.subr.mxu0 0.0
    %3591 = vmatpush1.xpose.msra.mxu0 0.0
    %3592 = vmatprep.subr.mxu0 0.0
    %3593 = vmatpush1.xpose.msra.mxu0 0.0
    %3594 = vmatprep.subr.mxu0 0.0
    %3595 = vmatpush1.xpose.msra.mxu0 0.0
    %3596 = vmatprep.subr.mxu0 0.0
    %3597 = vmatpush1.xpose.msra.mxu0 0.0
    %3598 = vmatprep.subr.mxu0 0.0
    %3599 = vmatpush1.xpose.msra.mxu0 0.0
    %3600 = vmatprep.subr.mxu0 0.0
    %3601 = vmatpush1.xpose.msra.mxu0 0.0
    %3602 = vmatprep.subr.mxu0 0.0
    %3603 = vmatpush1.xpose.msra.mxu0 0.0
    %3604 = vmatprep.subr.mxu0 0.0
    %3605 = vmatpush1.xpose.msra.mxu0 0.0
    %3606 = vmatprep.subr.mxu0 0.0
    %3607 = vmatpush1.xpose.msra.mxu0 0.0
    %3608 = vmatprep.mubr.f32.mxu0 0.0
    %3609 = vmatmul.mubr.f32.gmra.mrb[0].mxu0 %v3539
    %v3610 = vpop.f32.mrb[0].mxu0
    %v3611 = vadd.f32 0.0, %v3610
    %v3612 = vpop.f32.mrb[0].mxu0
    %3613 = vdwg.mxu0
    %v3615 = vsel %vm1299, %v2639, 0
    %v3618 = vsel %vm1299, %v3011, 0
    %3620 = vmatprep.subr.mxu0 0.0
    %3621 = vmatpush1.xpose.msra.mxu0 %v3618
    %3622 = vmatprep.subr.mxu0 0.0
    %3623 = vmatpush1.xpose.msra.mxu0 0.0
    %3624 = vmatprep.subr.mxu0 0.0
    %3625 = vmatpush1.xpose.msra.mxu0 0.0
    %3626 = vmatprep.subr.mxu0 0.0
    %3627 = vmatpush1.xpose.msra.mxu0 0.0
    %3628 = vmatprep.subr.mxu0 0.0
    %3629 = vmatpush1.xpose.msra.mxu0 0.0
    %3630 = vmatprep.subr.mxu0 0.0
    %3631 = vmatpush1.xpose.msra.mxu0 0.0
    %3632 = vmatprep.subr.mxu0 0.0
    %3633 = vmatpush1.xpose.msra.mxu0 0.0
    %3634 = vmatprep.subr.mxu0 0.0
    %3635 = vmatpush1.xpose.msra.mxu0 0.0
    %3636 = vmatprep.subr.mxu0 0.0
    %3637 = vmatpush1.xpose.msra.mxu0 0.0
    %3638 = vmatprep.subr.mxu0 0.0
    %3639 = vmatpush1.xpose.msra.mxu0 0.0
    %3640 = vmatprep.subr.mxu0 0.0
    %3641 = vmatpush1.xpose.msra.mxu0 0.0
    %3642 = vmatprep.subr.mxu0 0.0
    %3643 = vmatpush1.xpose.msra.mxu0 0.0
    %3644 = vmatprep.subr.mxu0 0.0
    %3645 = vmatpush1.xpose.msra.mxu0 0.0
    %3646 = vmatprep.subr.mxu0 0.0
    %3647 = vmatpush1.xpose.msra.mxu0 0.0
    %3648 = vmatprep.subr.mxu0 0.0
    %3649 = vmatpush1.xpose.msra.mxu0 0.0
    %3650 = vmatprep.subr.mxu0 0.0
    %3651 = vmatpush1.xpose.msra.mxu0 0.0
    %3652 = vmatprep.subr.mxu0 0.0
    %3653 = vmatpush1.xpose.msra.mxu0 0.0
    %3654 = vmatprep.subr.mxu0 0.0
    %3655 = vmatpush1.xpose.msra.mxu0 0.0
    %3656 = vmatprep.subr.mxu0 0.0
    %3657 = vmatpush1.xpose.msra.mxu0 0.0
    %3658 = vmatprep.subr.mxu0 0.0
    %3659 = vmatpush1.xpose.msra.mxu0 0.0
    %3660 = vmatprep.subr.mxu0 0.0
    %3661 = vmatpush1.xpose.msra.mxu0 0.0
    %3662 = vmatprep.subr.mxu0 0.0
    %3663 = vmatpush1.xpose.msra.mxu0 0.0
    %3664 = vmatprep.subr.mxu0 0.0
    %3665 = vmatpush1.xpose.msra.mxu0 0.0
    %3666 = vmatprep.subr.mxu0 0.0
    %3667 = vmatpush1.xpose.msra.mxu0 0.0
    %3668 = vmatprep.subr.mxu0 0.0
    %3669 = vmatpush1.xpose.msra.mxu0 0.0
    %3670 = vmatprep.subr.mxu0 0.0
    %3671 = vmatpush1.xpose.msra.mxu0 0.0
    %3672 = vmatprep.subr.mxu0 0.0
    %3673 = vmatpush1.xpose.msra.mxu0 0.0
    %3674 = vmatprep.subr.mxu0 0.0
    %3675 = vmatpush1.xpose.msra.mxu0 0.0
    %3676 = vmatprep.subr.mxu0 0.0
    %3677 = vmatpush1.xpose.msra.mxu0 0.0
    %3678 = vmatprep.subr.mxu0 0.0
    %3679 = vmatpush1.xpose.msra.mxu0 0.0
    %3680 = vmatprep.subr.mxu0 0.0
    %3681 = vmatpush1.xpose.msra.mxu0 0.0
    %3682 = vmatprep.subr.mxu0 0.0
    %3683 = vmatpush1.xpose.msra.mxu0 0.0
    %3684 = vmatprep.mubr.f32.mxu0 0.0
    %3685 = vmatmul.mubr.f32.gmra.mrb[0].mxu0 %v3615
    %v3686 = vpop.f32.mrb[0].mxu0
    %v3687 = vadd.f32 0.0, %v3686
    %v3688 = vpop.f32.mrb[0].mxu0
    %3689 = vdwg.mxu0
    %v3690 = vmul.f32 %v3459, 0.17677669
    %v3691 = vmul.f32 %v3535, 0.17677669
    %v3692 = vmul.f32 %v3611, 0.17677669
    %v3693 = vmul.f32 %v3687, 0.17677669
    %v3694 = vadd.f32 %v3690, %v146
    %v3695 = vadd.f32 %v3691, %v146
    %v3696 = vadd.f32 %v3692, %v146
    %v3697 = vadd.f32 %v3693, %v146
    %v3698 = vsel %vm1612, %v3694, -inf
    %3699 = vmax.xlane.f32.xlu0 %v3698
    %v3700 = vpop.xlane.xlu0 %3699
    %v3701 = vsel %vm1612, %v3695, -inf
    %3702 = vmax.xlane.f32.xlu0 %v3701
    %v3703 = vpop.xlane.xlu0 %3702
    %v3704 = vsel %vm1612, %v3696, -inf
    %3705 = vmax.xlane.f32.xlu0 %v3704
    %v3706 = vpop.xlane.xlu0 %3705
    %v3707 = vsel %vm1612, %v3697, -inf
    %3708 = vmax.xlane.f32.xlu0 %v3707
    %v3709 = vpop.xlane.xlu0 %3708
    %v3710 = vsub.f32 %v3694, %v3700
    %v3711 = vsub.f32 %v3695, %v3703
    %v3712 = vsub.f32 %v3696, %v3706
    %v3713 = vsub.f32 %v3697, %v3709
    %v3714 = vmul.f32 %v3710, 1.442695
    %v3715 = vpow.pop %v3714
    %v3716 = vmul.f32 %v3711, 1.442695
    %v3717 = vpow.pop %v3716
    %v3718 = vmul.f32 %v3712, 1.442695
    %v3719 = vpow.pop %v3718
    %v3720 = vmul.f32 %v3713, 1.442695
    %v3721 = vpow.pop %v3720
    %v3722 = vsel %vm1612, %v3715, 0.0
    %3723 = vadd.xlane.f32.xlu0 %v3722
    %v3724 = vpop.xlane.xlu0 %3723
    %v3725 = vsel %vm1612, %v3717, 0.0
    %3726 = vadd.xlane.f32.xlu0 %v3725
    %v3727 = vpop.xlane.xlu0 %3726
    %v3728 = vsel %vm1612, %v3719, 0.0
    %3729 = vadd.xlane.f32.xlu0 %v3728
    %v3730 = vpop.xlane.xlu0 %3729
    %v3731 = vsel %vm1612, %v3721, 0.0
    %3732 = vadd.xlane.f32.xlu0 %v3731
    %v3733 = vpop.xlane.xlu0 %3732
    %v3734 = vrcp.pop %v3724
    %v3735 = vrcp.pop %v3727
    %v3736 = vrcp.pop %v3730
    %v3737 = vrcp.pop %v3733
    %v3738 = vmul.f32 %v3715, %v3734
    %v3739 = vmul.f32 %v3717, %v3735
    %v3740 = vmul.f32 %v3719, %v3736
    %v3741 = vmul.f32 %v3721, %v3737
    %v3743 = vsel %vm1612, %v3738, 0
    %3745 = vmatprep.subr.mxu0 0.0
    %3746 = vmatpush1.msra.mxu0 %v3104
    %3747 = vmatprep.subr.mxu0 0.0
    %3748 = vmatpush1.msra.mxu0 0.0
    %3749 = vmatprep.subr.mxu0 0.0
    %3750 = vmatpush1.msra.mxu0 0.0
    %3751 = vmatprep.subr.mxu0 0.0
    %3752 = vmatpush1.msra.mxu0 0.0
    %3753 = vmatprep.subr.mxu0 0.0
    %3754 = vmatpush1.msra.mxu0 0.0
    %3755 = vmatprep.subr.mxu0 0.0
    %3756 = vmatpush1.msra.mxu0 0.0
    %3757 = vmatprep.subr.mxu0 0.0
    %3758 = vmatpush1.msra.mxu0 0.0
    %3759 = vmatprep.subr.mxu0 0.0
    %3760 = vmatpush1.msra.mxu0 0.0
    %3761 = vmatprep.subr.mxu0 0.0
    %3762 = vmatpush1.msra.mxu0 0.0
    %3763 = vmatprep.subr.mxu0 0.0
    %3764 = vmatpush1.msra.mxu0 0.0
    %3765 = vmatprep.subr.mxu0 0.0
    %3766 = vmatpush1.msra.mxu0 0.0
    %3767 = vmatprep.subr.mxu0 0.0
    %3768 = vmatpush1.msra.mxu0 0.0
    %3769 = vmatprep.subr.mxu0 0.0
    %3770 = vmatpush1.msra.mxu0 0.0
    %3771 = vmatprep.subr.mxu0 0.0
    %3772 = vmatpush1.msra.mxu0 0.0
    %3773 = vmatprep.subr.mxu0 0.0
    %3774 = vmatpush1.msra.mxu0 0.0
    %3775 = vmatprep.subr.mxu0 0.0
    %3776 = vmatpush1.msra.mxu0 0.0
    %3777 = vmatprep.subr.mxu0 0.0
    %3778 = vmatpush1.msra.mxu0 0.0
    %3779 = vmatprep.subr.mxu0 0.0
    %3780 = vmatpush1.msra.mxu0 0.0
    %3781 = vmatprep.subr.mxu0 0.0
    %3782 = vmatpush1.msra.mxu0 0.0
    %3783 = vmatprep.subr.mxu0 0.0
    %3784 = vmatpush1.msra.mxu0 0.0
    %3785 = vmatprep.subr.mxu0 0.0
    %3786 = vmatpush1.msra.mxu0 0.0
    %3787 = vmatprep.subr.mxu0 0.0
    %3788 = vmatpush1.msra.mxu0 0.0
    %3789 = vmatprep.subr.mxu0 0.0
    %3790 = vmatpush1.msra.mxu0 0.0
    %3791 = vmatprep.subr.mxu0 0.0
    %3792 = vmatpush1.msra.mxu0 0.0
    %3793 = vmatprep.subr.mxu0 0.0
    %3794 = vmatpush1.msra.mxu0 0.0
    %3795 = vmatprep.subr.mxu0 0.0
    %3796 = vmatpush1.msra.mxu0 0.0
    %3797 = vmatprep.subr.mxu0 0.0
    %3798 = vmatpush1.msra.mxu0 0.0
    %3799 = vmatprep.subr.mxu0 0.0
    %3800 = vmatpush1.msra.mxu0 0.0
    %3801 = vmatprep.subr.mxu0 0.0
    %3802 = vmatpush1.msra.mxu0 0.0
    %3803 = vmatprep.subr.mxu0 0.0
    %3804 = vmatpush1.msra.mxu0 0.0
    %3805 = vmatprep.subr.mxu0 0.0
    %3806 = vmatpush1.msra.mxu0 0.0
    %3807 = vmatprep.subr.mxu0 0.0
    %3808 = vmatpush1.msra.mxu0 0.0
    %3809 = vmatprep.mubr.f32.mxu0 0.0
    %3810 = vmatmul.mubr.f32.gmra.mrb[0].mxu0 %v3743
    %v3811 = vpop.f32.mrb[0].mxu0
    %v3812 = vadd.f32 0.0, %v3811
    %v3813 = vpop.f32.mrb[0].mxu0
    %3814 = vdwg.mxu0
    %v3816 = vsel %vm1612, %v3739, 0
    %3818 = vmatprep.subr.mxu0 0.0
    %3819 = vmatpush1.msra.mxu0 %v3197
    %3820 = vmatprep.subr.mxu0 0.0
    %3821 = vmatpush1.msra.mxu0 0.0
    %3822 = vmatprep.subr.mxu0 0.0
    %3823 = vmatpush1.msra.mxu0 0.0
    %3824 = vmatprep.subr.mxu0 0.0
    %3825 = vmatpush1.msra.mxu0 0.0
    %3826 = vmatprep.subr.mxu0 0.0
    %3827 = vmatpush1.msra.mxu0 0.0
    %3828 = vmatprep.subr.mxu0 0.0
    %3829 = vmatpush1.msra.mxu0 0.0
    %3830 = vmatprep.subr.mxu0 0.0
    %3831 = vmatpush1.msra.mxu0 0.0
    %3832 = vmatprep.subr.mxu0 0.0
    %3833 = vmatpush1.msra.mxu0 0.0
    %3834 = vmatprep.subr.mxu0 0.0
    %3835 = vmatpush1.msra.mxu0 0.0
    %3836 = vmatprep.subr.mxu0 0.0
    %3837 = vmatpush1.msra.mxu0 0.0
    %3838 = vmatprep.subr.mxu0 0.0
    %3839 = vmatpush1.msra.mxu0 0.0
    %3840 = vmatprep.subr.mxu0 0.0
    %3841 = vmatpush1.msra.mxu0 0.0
    %3842 = vmatprep.subr.mxu0 0.0
    %3843 = vmatpush1.msra.mxu0 0.0
    %3844 = vmatprep.subr.mxu0 0.0
    %3845 = vmatpush1.msra.mxu0 0.0
    %3846 = vmatprep.subr.mxu0 0.0
    %3847 = vmatpush1.msra.mxu0 0.0
    %3848 = vmatprep.subr.mxu0 0.0
    %3849 = vmatpush1.msra.mxu0 0.0
    %3850 = vmatprep.subr.mxu0 0.0
    %3851 = vmatpush1.msra.mxu0 0.0
    %3852 = vmatprep.subr.mxu0 0.0
    %3853 = vmatpush1.msra.mxu0 0.0
    %3854 = vmatprep.subr.mxu0 0.0
    %3855 = vmatpush1.msra.mxu0 0.0
    %3856 = vmatprep.subr.mxu0 0.0
    %3857 = vmatpush1.msra.mxu0 0.0
    %3858 = vmatprep.subr.mxu0 0.0
    %3859 = vmatpush1.msra.mxu0 0.0
    %3860 = vmatprep.subr.mxu0 0.0
    %3861 = vmatpush1.msra.mxu0 0.0
    %3862 = vmatprep.subr.mxu0 0.0
    %3863 = vmatpush1.msra.mxu0 0.0
    %3864 = vmatprep.subr.mxu0 0.0
    %3865 = vmatpush1.msra.mxu0 0.0
    %3866 = vmatprep.subr.mxu0 0.0
    %3867 = vmatpush1.msra.mxu0 0.0
    %3868 = vmatprep.subr.mxu0 0.0
    %3869 = vmatpush1.msra.mxu0 0.0
    %3870 = vmatprep.subr.mxu0 0.0
    %3871 = vmatpush1.msra.mxu0 0.0
    %3872 = vmatprep.subr.mxu0 0.0
    %3873 = vmatpush1.msra.mxu0 0.0
    %3874 = vmatprep.subr.mxu0 0.0
    %3875 = vmatpush1.msra.mxu0 0.0
    %3876 = vmatprep.subr.mxu0 0.0
    %3877 = vmatpush1.msra.mxu0 0.0
    %3878 = vmatprep.subr.mxu0 0.0
    %3879 = vmatpush1.msra.mxu0 0.0
    %3880 = vmatprep.subr.mxu0 0.0
    %3881 = vmatpush1.msra.mxu0 0.0
    %3882 = vmatprep.mubr.f32.mxu0 0.0
    %3883 = vmatmul.mubr.f32.gmra.mrb[0].mxu0 %v3816
    %v3884 = vpop.f32.mrb[0].mxu0
    %v3885 = vadd.f32 0.0, %v3884
    %v3886 = vpop.f32.mrb[0].mxu0
    %3887 = vdwg.mxu0
    %v3889 = vsel %vm1612, %v3740, 0
    %3891 = vmatprep.subr.mxu0 0.0
    %3892 = vmatpush1.msra.mxu0 %v3290
    %3893 = vmatprep.subr.mxu0 0.0
    %3894 = vmatpush1.msra.mxu0 0.0
    %3895 = vmatprep.subr.mxu0 0.0
    %3896 = vmatpush1.msra.mxu0 0.0
    %3897 = vmatprep.subr.mxu0 0.0
    %3898 = vmatpush1.msra.mxu0 0.0
    %3899 = vmatprep.subr.mxu0 0.0
    %3900 = vmatpush1.msra.mxu0 0.0
    %3901 = vmatprep.subr.mxu0 0.0
    %3902 = vmatpush1.msra.mxu0 0.0
    %3903 = vmatprep.subr.mxu0 0.0
    %3904 = vmatpush1.msra.mxu0 0.0
    %3905 = vmatprep.subr.mxu0 0.0
    %3906 = vmatpush1.msra.mxu0 0.0
    %3907 = vmatprep.subr.mxu0 0.0
    %3908 = vmatpush1.msra.mxu0 0.0
    %3909 = vmatprep.subr.mxu0 0.0
    %3910 = vmatpush1.msra.mxu0 0.0
    %3911 = vmatprep.subr.mxu0 0.0
    %3912 = vmatpush1.msra.mxu0 0.0
    %3913 = vmatprep.subr.mxu0 0.0
    %3914 = vmatpush1.msra.mxu0 0.0
    %3915 = vmatprep.subr.mxu0 0.0
    %3916 = vmatpush1.msra.mxu0 0.0
    %3917 = vmatprep.subr.mxu0 0.0
    %3918 = vmatpush1.msra.mxu0 0.0
    %3919 = vmatprep.subr.mxu0 0.0
    %3920 = vmatpush1.msra.mxu0 0.0
    %3921 = vmatprep.subr.mxu0 0.0
    %3922 = vmatpush1.msra.mxu0 0.0
    %3923 = vmatprep.subr.mxu0 0.0
    %3924 = vmatpush1.msra.mxu0 0.0
    %3925 = vmatprep.subr.mxu0 0.0
    %3926 = vmatpush1.msra.mxu0 0.0
    %3927 = vmatprep.subr.mxu0 0.0
    %3928 = vmatpush1.msra.mxu0 0.0
    %3929 = vmatprep.subr.mxu0 0.0
    %3930 = vmatpush1.msra.mxu0 0.0
    %3931 = vmatprep.subr.mxu0 0.0
    %3932 = vmatpush1.msra.mxu0 0.0
    %3933 = vmatprep.subr.mxu0 0.0
    %3934 = vmatpush1.msra.mxu0 0.0
    %3935 = vmatprep.subr.mxu0 0.0
    %3936 = vmatpush1.msra.mxu0 0.0
    %3937 = vmatprep.subr.mxu0 0.0
    %3938 = vmatpush1.msra.mxu0 0.0
    %3939 = vmatprep.subr.mxu0 0.0
    %3940 = vmatpush1.msra.mxu0 0.0
    %3941 = vmatprep.subr.mxu0 0.0
    %3942 = vmatpush1.msra.mxu0 0.0
    %3943 = vmatprep.subr.mxu0 0.0
    %3944 = vmatpush1.msra.mxu0 0.0
    %3945 = vmatprep.subr.mxu0 0.0
    %3946 = vmatpush1.msra.mxu0 0.0
    %3947 = vmatprep.subr.mxu0 0.0
    %3948 = vmatpush1.msra.mxu0 0.0
    %3949 = vmatprep.subr.mxu0 0.0
    %3950 = vmatpush1.msra.mxu0 0.0
    %3951 = vmatprep.subr.mxu0 0.0
    %3952 = vmatpush1.msra.mxu0 0.0
    %3953 = vmatprep.subr.mxu0 0.0
    %3954 = vmatpush1.msra.mxu0 0.0
    %3955 = vmatprep.mubr.f32.mxu0 0.0
    %3956 = vmatmul.mubr.f32.gmra.mrb[0].mxu0 %v3889
    %v3957 = vpop.f32.mrb[0].mxu0
    %v3958 = vadd.f32 0.0, %v3957
    %v3959 = vpop.f32.mrb[0].mxu0
    %3960 = vdwg.mxu0
    %v3962 = vsel %vm1612, %v3741, 0
    %3964 = vmatprep.subr.mxu0 0.0
    %3965 = vmatpush1.msra.mxu0 %v3383
    %3966 = vmatprep.subr.mxu0 0.0
    %3967 = vmatpush1.msra.mxu0 0.0
    %3968 = vmatprep.subr.mxu0 0.0
    %3969 = vmatpush1.msra.mxu0 0.0
    %3970 = vmatprep.subr.mxu0 0.0
    %3971 = vmatpush1.msra.mxu0 0.0
    %3972 = vmatprep.subr.mxu0 0.0
    %3973 = vmatpush1.msra.mxu0 0.0
    %3974 = vmatprep.subr.mxu0 0.0
    %3975 = vmatpush1.msra.mxu0 0.0
    %3976 = vmatprep.subr.mxu0 0.0
    %3977 = vmatpush1.msra.mxu0 0.0
    %3978 = vmatprep.subr.mxu0 0.0
    %3979 = vmatpush1.msra.mxu0 0.0
    %3980 = vmatprep.subr.mxu0 0.0
    %3981 = vmatpush1.msra.mxu0 0.0
    %3982 = vmatprep.subr.mxu0 0.0
    %3983 = vmatpush1.msra.mxu0 0.0
    %3984 = vmatprep.subr.mxu0 0.0
    %3985 = vmatpush1.msra.mxu0 0.0
    %3986 = vmatprep.subr.mxu0 0.0
    %3987 = vmatpush1.msra.mxu0 0.0
    %3988 = vmatprep.subr.mxu0 0.0
    %3989 = vmatpush1.msra.mxu0 0.0
    %3990 = vmatprep.subr.mxu0 0.0
    %3991 = vmatpush1.msra.mxu0 0.0
    %3992 = vmatprep.subr.mxu0 0.0
    %3993 = vmatpush1.msra.mxu0 0.0
    %3994 = vmatprep.subr.mxu0 0.0
    %3995 = vmatpush1.msra.mxu0 0.0
    %3996 = vmatprep.subr.mxu0 0.0
    %3997 = vmatpush1.msra.mxu0 0.0
    %3998 = vmatprep.subr.mxu0 0.0
    %3999 = vmatpush1.msra.mxu0 0.0
    %4000 = vmatprep.subr.mxu0 0.0
    %4001 = vmatpush1.msra.mxu0 0.0
    %4002 = vmatprep.subr.mxu0 0.0
    %4003 = vmatpush1.msra.mxu0 0.0
    %4004 = vmatprep.subr.mxu0 0.0
    %4005 = vmatpush1.msra.mxu0 0.0
    %4006 = vmatprep.subr.mxu0 0.0
    %4007 = vmatpush1.msra.mxu0 0.0
    %4008 = vmatprep.subr.mxu0 0.0
    %4009 = vmatpush1.msra.mxu0 0.0
    %4010 = vmatprep.subr.mxu0 0.0
    %4011 = vmatpush1.msra.mxu0 0.0
    %4012 = vmatprep.subr.mxu0 0.0
    %4013 = vmatpush1.msra.mxu0 0.0
    %4014 = vmatprep.subr.mxu0 0.0
    %4015 = vmatpush1.msra.mxu0 0.0
    %4016 = vmatprep.subr.mxu0 0.0
    %4017 = vmatpush1.msra.mxu0 0.0
    %4018 = vmatprep.subr.mxu0 0.0
    %4019 = vmatpush1.msra.mxu0 0.0
    %4020 = vmatprep.subr.mxu0 0.0
    %4021 = vmatpush1.msra.mxu0 0.0
    %4022 = vmatprep.subr.mxu0 0.0
    %4023 = vmatpush1.msra.mxu0 0.0
    %4024 = vmatprep.subr.mxu0 0.0
    %4025 = vmatpush1.msra.mxu0 0.0
    %4026 = vmatprep.subr.mxu0 0.0
    %4027 = vmatpush1.msra.mxu0 0.0
    %4028 = vmatprep.mubr.f32.mxu0 0.0
    %4029 = vmatmul.mubr.f32.gmra.mrb[0].mxu0 %v3962
    %v4030 = vpop.f32.mrb[0].mxu0
    %v4031 = vadd.f32 0.0, %v4030
    %v4032 = vpop.f32.mrb[0].mxu0
    %4033 = vdwg.mxu0
    %v4034 = vld [vmem:[%s23] sm:$0xff]
    %v4035 = vld [vmem:[%s23 + $0x8] sm:$0xff]
    %v4036 = vld [vmem:[%s23 + $0x10] sm:$0xff]
    %v4037 = vld [vmem:[%s23 + $0x18] sm:$0xff]
    %v4038 = vld [vmem:[%s1953] sm:$0xff]
    %v4039 = vld [vmem:[%s1953 + $0x8] sm:$0xff]
    %v4040 = vld [vmem:[%s1953 + $0x10] sm:$0xff]
    %v4041 = vld [vmem:[%s1953 + $0x18] sm:$0xff]
    %v4043 = vsel %vm1299, %v3885, 0
    %4045 = vmatprep.subr.mxu0 0.0
    %4046 = vmatpush1.msra.mxu0 %v4038
    %4047 = vmatprep.subr.mxu0 0.0
    %4048 = vmatpush1.msra.mxu0 %v4039
    %4049 = vmatprep.subr.mxu0 0.0
    %4050 = vmatpush1.msra.mxu0 %v4040
    %4051 = vmatprep.subr.mxu0 0.0
    %4052 = vmatpush1.msra.mxu0 %v4041
    %4053 = vmatprep.subr.mxu0 0.0
    %4054 = vmatpush1.msra.mxu0 0.0
    %4055 = vmatprep.subr.mxu0 0.0
    %4056 = vmatpush1.msra.mxu0 0.0
    %4057 = vmatprep.subr.mxu0 0.0
    %4058 = vmatpush1.msra.mxu0 0.0
    %4059 = vmatprep.subr.mxu0 0.0
    %4060 = vmatpush1.msra.mxu0 0.0
    %4061 = vmatprep.subr.mxu0 0.0
    %4062 = vmatpush1.msra.mxu0 0.0
    %4063 = vmatprep.subr.mxu0 0.0
    %4064 = vmatpush1.msra.mxu0 0.0
    %4065 = vmatprep.subr.mxu0 0.0
    %4066 = vmatpush1.msra.mxu0 0.0
    %4067 = vmatprep.subr.mxu0 0.0
    %4068 = vmatpush1.msra.mxu0 0.0
    %4069 = vmatprep.subr.mxu0 0.0
    %4070 = vmatpush1.msra.mxu0 0.0
    %4071 = vmatprep.subr.mxu0 0.0
    %4072 = vmatpush1.msra.mxu0 0.0
    %4073 = vmatprep.subr.mxu0 0.0
    %4074 = vmatpush1.msra.mxu0 0.0
    %4075 = vmatprep.subr.mxu0 0.0
    %4076 = vmatpush1.msra.mxu0 0.0
    %4077 = vmatprep.subr.mxu0 0.0
    %4078 = vmatpush1.msra.mxu0 0.0
    %4079 = vmatprep.subr.mxu0 0.0
    %4080 = vmatpush1.msra.mxu0 0.0
    %4081 = vmatprep.subr.mxu0 0.0
    %4082 = vmatpush1.msra.mxu0 0.0
    %4083 = vmatprep.subr.mxu0 0.0
    %4084 = vmatpush1.msra.mxu0 0.0
    %4085 = vmatprep.subr.mxu0 0.0
    %4086 = vmatpush1.msra.mxu0 0.0
    %4087 = vmatprep.subr.mxu0 0.0
    %4088 = vmatpush1.msra.mxu0 0.0
    %4089 = vmatprep.subr.mxu0 0.0
    %4090 = vmatpush1.msra.mxu0 0.0
    %4091 = vmatprep.subr.mxu0 0.0
    %4092 = vmatpush1.msra.mxu0 0.0
    %4093 = vmatprep.subr.mxu0 0.0
    %4094 = vmatpush1.msra.mxu0 0.0
    %4095 = vmatprep.subr.mxu0 0.0
    %4096 = vmatpush1.msra.mxu0 0.0
    %4097 = vmatprep.subr.mxu0 0.0
    %4098 = vmatpush1.msra.mxu0 0.0
    %4099 = vmatprep.subr.mxu0 0.0
    %4100 = vmatpush1.msra.mxu0 0.0
    %4101 = vmatprep.subr.mxu0 0.0
    %4102 = vmatpush1.msra.mxu0 0.0
    %4103 = vmatprep.subr.mxu0 0.0
    %4104 = vmatpush1.msra.mxu0 0.0
    %4105 = vmatprep.subr.mxu0 0.0
    %4106 = vmatpush1.msra.mxu0 0.0
    %4107 = vmatprep.subr.mxu0 0.0
    %4108 = vmatpush1.msra.mxu0 0.0
    %4109 = vmatprep.mubr.f32.mxu0 0.0
    %4110 = vmatmul.mubr.f32.gmra.mrb[0].mxu0 %v4043
    %v4111 = vpop.f32.mrb[0].mxu0
    %v4112 = vadd.f32 0.0, %v4111
    %v4113 = vpop.f32.mrb[0].mxu0
    %4114 = vdwg.mxu0
    %v4116 = vsel %vm1299, %v3812, 0
    %4118 = vmatprep.subr.mxu0 0.0
    %4119 = vmatpush1.msra.mxu0 %v4034
    %4120 = vmatprep.subr.mxu0 0.0
    %4121 = vmatpush1.msra.mxu0 %v4035
    %4122 = vmatprep.subr.mxu0 0.0
    %4123 = vmatpush1.msra.mxu0 %v4036
    %4124 = vmatprep.subr.mxu0 0.0
    %4125 = vmatpush1.msra.mxu0 %v4037
    %4126 = vmatprep.subr.mxu0 0.0
    %4127 = vmatpush1.msra.mxu0 0.0
    %4128 = vmatprep.subr.mxu0 0.0
    %4129 = vmatpush1.msra.mxu0 0.0
    %4130 = vmatprep.subr.mxu0 0.0
    %4131 = vmatpush1.msra.mxu0 0.0
    %4132 = vmatprep.subr.mxu0 0.0
    %4133 = vmatpush1.msra.mxu0 0.0
    %4134 = vmatprep.subr.mxu0 0.0
    %4135 = vmatpush1.msra.mxu0 0.0
    %4136 = vmatprep.subr.mxu0 0.0
    %4137 = vmatpush1.msra.mxu0 0.0
    %4138 = vmatprep.subr.mxu0 0.0
    %4139 = vmatpush1.msra.mxu0 0.0
    %4140 = vmatprep.subr.mxu0 0.0
    %4141 = vmatpush1.msra.mxu0 0.0
    %4142 = vmatprep.subr.mxu0 0.0
    %4143 = vmatpush1.msra.mxu0 0.0
    %4144 = vmatprep.subr.mxu0 0.0
    %4145 = vmatpush1.msra.mxu0 0.0
    %4146 = vmatprep.subr.mxu0 0.0
    %4147 = vmatpush1.msra.mxu0 0.0
    %4148 = vmatprep.subr.mxu0 0.0
    %4149 = vmatpush1.msra.mxu0 0.0
    %4150 = vmatprep.subr.mxu0 0.0
    %4151 = vmatpush1.msra.mxu0 0.0
    %4152 = vmatprep.subr.mxu0 0.0
    %4153 = vmatpush1.msra.mxu0 0.0
    %4154 = vmatprep.subr.mxu0 0.0
    %4155 = vmatpush1.msra.mxu0 0.0
    %4156 = vmatprep.subr.mxu0 0.0
    %4157 = vmatpush1.msra.mxu0 0.0
    %4158 = vmatprep.subr.mxu0 0.0
    %4159 = vmatpush1.msra.mxu0 0.0
    %4160 = vmatprep.subr.mxu0 0.0
    %4161 = vmatpush1.msra.mxu0 0.0
    %4162 = vmatprep.subr.mxu0 0.0
    %4163 = vmatpush1.msra.mxu0 0.0
    %4164 = vmatprep.subr.mxu0 0.0
    %4165 = vmatpush1.msra.mxu0 0.0
    %4166 = vmatprep.subr.mxu0 0.0
    %4167 = vmatpush1.msra.mxu0 0.0
    %4168 = vmatprep.subr.mxu0 0.0
    %4169 = vmatpush1.msra.mxu0 0.0
    %4170 = vmatprep.subr.mxu0 0.0
    %4171 = vmatpush1.msra.mxu0 0.0
    %4172 = vmatprep.subr.mxu0 0.0
    %4173 = vmatpush1.msra.mxu0 0.0
    %4174 = vmatprep.subr.mxu0 0.0
    %4175 = vmatpush1.msra.mxu0 0.0
    %4176 = vmatprep.subr.mxu0 0.0
    %4177 = vmatpush1.msra.mxu0 0.0
    %4178 = vmatprep.subr.mxu0 0.0
    %4179 = vmatpush1.msra.mxu0 0.0
    %4180 = vmatprep.subr.mxu0 0.0
    %4181 = vmatpush1.msra.mxu0 0.0
    %4182 = vmatprep.mubr.f32.mxu0 0.0
    %4183 = vmatmul.mubr.f32.gmra.mrb[0].mxu0 %v4116
    %v4184 = vpop.f32.mrb[0].mxu0
    %v4185 = vadd.f32 %v4112, %v4184
    %v4186 = vpop.f32.mrb[0].mxu0
    %4187 = vdwg.mxu0
    %v4188 = vld [vmem:[%s2104] sm:$0xff]
    %v4189 = vld [vmem:[%s2104 + $0x8] sm:$0xff]
    %v4190 = vld [vmem:[%s2104 + $0x10] sm:$0xff]
    %v4191 = vld [vmem:[%s2104 + $0x18] sm:$0xff]
    %v4193 = vsel %vm1299, %v3958, 0
    %4195 = vmatprep.subr.mxu0 0.0
    %4196 = vmatpush1.msra.mxu0 %v4188
    %4197 = vmatprep.subr.mxu0 0.0
    %4198 = vmatpush1.msra.mxu0 %v4189
    %4199 = vmatprep.subr.mxu0 0.0
    %4200 = vmatpush1.msra.mxu0 %v4190
    %4201 = vmatprep.subr.mxu0 0.0
    %4202 = vmatpush1.msra.mxu0 %v4191
    %4203 = vmatprep.subr.mxu0 0.0
    %4204 = vmatpush1.msra.mxu0 0.0
    %4205 = vmatprep.subr.mxu0 0.0
    %4206 = vmatpush1.msra.mxu0 0.0
    %4207 = vmatprep.subr.mxu0 0.0
    %4208 = vmatpush1.msra.mxu0 0.0
    %4209 = vmatprep.subr.mxu0 0.0
    %4210 = vmatpush1.msra.mxu0 0.0
    %4211 = vmatprep.subr.mxu0 0.0
    %4212 = vmatpush1.msra.mxu0 0.0
    %4213 = vmatprep.subr.mxu0 0.0
    %4214 = vmatpush1.msra.mxu0 0.0
    %4215 = vmatprep.subr.mxu0 0.0
    %4216 = vmatpush1.msra.mxu0 0.0
    %4217 = vmatprep.subr.mxu0 0.0
    %4218 = vmatpush1.msra.mxu0 0.0
    %4219 = vmatprep.subr.mxu0 0.0
    %4220 = vmatpush1.msra.mxu0 0.0
    %4221 = vmatprep.subr.mxu0 0.0
    %4222 = vmatpush1.msra.mxu0 0.0
    %4223 = vmatprep.subr.mxu0 0.0
    %4224 = vmatpush1.msra.mxu0 0.0
    %4225 = vmatprep.subr.mxu0 0.0
    %4226 = vmatpush1.msra.mxu0 0.0
    %4227 = vmatprep.subr.mxu0 0.0
    %4228 = vmatpush1.msra.mxu0 0.0
    %4229 = vmatprep.subr.mxu0 0.0
    %4230 = vmatpush1.msra.mxu0 0.0
    %4231 = vmatprep.subr.mxu0 0.0
    %4232 = vmatpush1.msra.mxu0 0.0
    %4233 = vmatprep.subr.mxu0 0.0
    %4234 = vmatpush1.msra.mxu0 0.0
    %4235 = vmatprep.subr.mxu0 0.0
    %4236 = vmatpush1.msra.mxu0 0.0
    %4237 = vmatprep.subr.mxu0 0.0
    %4238 = vmatpush1.msra.mxu0 0.0
    %4239 = vmatprep.subr.mxu0 0.0
    %4240 = vmatpush1.msra.mxu0 0.0
    %4241 = vmatprep.subr.mxu0 0.0
    %4242 = vmatpush1.msra.mxu0 0.0
    %4243 = vmatprep.subr.mxu0 0.0
    %4244 = vmatpush1.msra.mxu0 0.0
    %4245 = vmatprep.subr.mxu0 0.0
    %4246 = vmatpush1.msra.mxu0 0.0
    %4247 = vmatprep.subr.mxu0 0.0
    %4248 = vmatpush1.msra.mxu0 0.0
    %4249 = vmatprep.subr.mxu0 0.0
    %4250 = vmatpush1.msra.mxu0 0.0
    %4251 = vmatprep.subr.mxu0 0.0
    %4252 = vmatpush1.msra.mxu0 0.0
    %4253 = vmatprep.subr.mxu0 0.0
    %4254 = vmatpush1.msra.mxu0 0.0
    %4255 = vmatprep.subr.mxu0 0.0
    %4256 = vmatpush1.msra.mxu0 0.0
    %4257 = vmatprep.subr.mxu0 0.0
    %4258 = vmatpush1.msra.mxu0 0.0
    %4259 = vmatprep.mubr.f32.mxu0 0.0
    %4260 = vmatmul.mubr.f32.gmra.mrb[0].mxu0 %v4193
    %v4261 = vpop.f32.mrb[0].mxu0
    %v4262 = vadd.f32 0.0, %v4261
    %v4263 = vpop.f32.mrb[0].mxu0
    %4264 = vdwg.mxu0
    %v4265 = vadd.f32 %v4185, %v4262
    %v4266 = vld [vmem:[%s2183] sm:$0xff]
    %v4267 = vld [vmem:[%s2183 + $0x8] sm:$0xff]
    %v4268 = vld [vmem:[%s2183 + $0x10] sm:$0xff]
    %v4269 = vld [vmem:[%s2183 + $0x18] sm:$0xff]
    %v4271 = vsel %vm1299, %v4031, 0
    %4273 = vmatprep.subr.mxu0 0.0
    %4274 = vmatpush1.msra.mxu0 %v4266
    %4275 = vmatprep.subr.mxu0 0.0
    %4276 = vmatpush1.msra.mxu0 %v4267
    %4277 = vmatprep.subr.mxu0 0.0
    %4278 = vmatpush1.msra.mxu0 %v4268
    %4279 = vmatprep.subr.mxu0 0.0
    %4280 = vmatpush1.msra.mxu0 %v4269
    %4281 = vmatprep.subr.mxu0 0.0
    %4282 = vmatpush1.msra.mxu0 0.0
    %4283 = vmatprep.subr.mxu0 0.0
    %4284 = vmatpush1.msra.mxu0 0.0
    %4285 = vmatprep.subr.mxu0 0.0
    %4286 = vmatpush1.msra.mxu0 0.0
    %4287 = vmatprep.subr.mxu0 0.0
    %4288 = vmatpush1.msra.mxu0 0.0
    %4289 = vmatprep.subr.mxu0 0.0
    %4290 = vmatpush1.msra.mxu0 0.0
    %4291 = vmatprep.subr.mxu0 0.0
    %4292 = vmatpush1.msra.mxu0 0.0
    %4293 = vmatprep.subr.mxu0 0.0
    %4294 = vmatpush1.msra.mxu0 0.0
    %4295 = vmatprep.subr.mxu0 0.0
    %4296 = vmatpush1.msra.mxu0 0.0
    %4297 = vmatprep.subr.mxu0 0.0
    %4298 = vmatpush1.msra.mxu0 0.0
    %4299 = vmatprep.subr.mxu0 0.0
    %4300 = vmatpush1.msra.mxu0 0.0
    %4301 = vmatprep.subr.mxu0 0.0
    %4302 = vmatpush1.msra.mxu0 0.0
    %4303 = vmatprep.subr.mxu0 0.0
    %4304 = vmatpush1.msra.mxu0 0.0
    %4305 = vmatprep.subr.mxu0 0.0
    %4306 = vmatpush1.msra.mxu0 0.0
    %4307 = vmatprep.subr.mxu0 0.0
    %4308 = vmatpush1.msra.mxu0 0.0
    %4309 = vmatprep.subr.mxu0 0.0
    %4310 = vmatpush1.msra.mxu0 0.0
    %4311 = vmatprep.subr.mxu0 0.0
    %4312 = vmatpush1.msra.mxu0 0.0
    %4313 = vmatprep.subr.mxu0 0.0
    %4314 = vmatpush1.msra.mxu0 0.0
    %4315 = vmatprep.subr.mxu0 0.0
    %4316 = vmatpush1.msra.mxu0 0.0
    %4317 = vmatprep.subr.mxu0 0.0
    %4318 = vmatpush1.msra.mxu0 0.0
    %4319 = vmatprep.subr.mxu0 0.0
    %4320 = vmatpush1.msra.mxu0 0.0
    %4321 = vmatprep.subr.mxu0 0.0
    %4322 = vmatpush1.msra.mxu0 0.0
    %4323 = vmatprep.subr.mxu0 0.0
    %4324 = vmatpush1.msra.mxu0 0.0
    %4325 = vmatprep.subr.mxu0 0.0
    %4326 = vmatpush1.msra.mxu0 0.0
    %4327 = vmatprep.subr.mxu0 0.0
    %4328 = vmatpush1.msra.mxu0 0.0
    %4329 = vmatprep.subr.mxu0 0.0
    %4330 = vmatpush1.msra.mxu0 0.0
    %4331 = vmatprep.subr.mxu0 0.0
    %4332 = vmatpush1.msra.mxu0 0.0
    %4333 = vmatprep.subr.mxu0 0.0
    %4334 = vmatpush1.msra.mxu0 0.0
    %4335 = vmatprep.subr.mxu0 0.0
    %4336 = vmatpush1.msra.mxu0 0.0
    %4337 = vmatprep.mubr.f32.mxu0 0.0
    %4338 = vmatmul.mubr.f32.gmra.mrb[0].mxu0 %v4271
    %v4339 = vpop.f32.mrb[0].mxu0
    %v4340 = vadd.f32 0.0, %v4339
    %v4341 = vpop.f32.mrb[0].mxu0
    %4342 = vdwg.mxu0
    %v4343 = vadd.f32 %v4265, %v4340
    %v4344 = vld [vmem:[%s25] sm:$0x1]
    %v4346 = vlaneseq
    %v4347 = vshrl.u32 %v4346, 7
    %v4348 = vsub.s32 0, %v4347
    %v4349 = vrot.slane %v4344, %v4348
    %v4351 = vadd.f32 %v4343, %v4349
    %v4352 = vadd.f32 %v131, %v2269
    %v4353 = vadd.f32 %v132, %v4351
    %4354 = vadd.xlane.f32.xlu0 %v4352
    %v4355 = vpop.xlane.xlu0 %4354
    %4356 = vadd.xlane.f32.xlu0 %v4353
    %v4357 = vpop.xlane.xlu0 %4356
    %v4358 = vrcp.pop 128.0
    %v4359 = vmul.f32 %v4355, %v4358
    %v4360 = vmul.f32 %v4357, %v4358
    %v4361 = vsub.f32 %v4352, %v4359
    %v4362 = vsub.f32 %v4353, %v4360
    %v4363 = vmul.f32 %v4361, %v4361
    %v4364 = vmul.f32 %v4362, %v4362
    %4365 = vadd.xlane.f32.xlu0 %v4363
    %v4366 = vpop.xlane.xlu0 %4365
    %4367 = vadd.xlane.f32.xlu0 %v4364
    %v4368 = vpop.xlane.xlu0 %4367
    %v4369 = vmul.f32 %v4366, %v4358
    %v4370 = vmul.f32 %v4368, %v4358
    %v4371 = vadd.f32 %v4369, 1e-05
    %v4372 = vadd.f32 %v4370, 1e-05
    %v4373 = vrsqrt.pop %v4371
    %v4374 = vrsqrt.pop %v4372
    %v4375 = vmul.f32 %v4361, %v4373
    %v4376 = vmul.f32 %v4362, %v4374
    %v4377 = vld [vmem:[%s51] sm:$0x1]
    %v4379 = vlaneseq
    %v4380 = vshrl.u32 %v4379, 7
    %v4381 = vsub.s32 0, %v4380
    %v4382 = vrot.slane %v4377, %v4381
    %v4384 = vmul.f32 %v4375, %v4382
    %v4385 = vmul.f32 %v4376, %v4382
    %v4386 = vld [vmem:[%s53] sm:$0x1]
    %v4388 = vlaneseq
    %v4389 = vshrl.u32 %v4388, 7
    %v4390 = vsub.s32 0, %v4389
    %v4391 = vrot.slane %v4386, %v4390
    %v4393 = vadd.f32 %v4384, %v4391
    %v4394 = vadd.f32 %v4385, %v4391
    %4395 = vrot.lane.b32.xlu0 %v4393, 127
    %v4396 = vpop.permute.xlu0 %4395
    %4397 = vrot.lane.b32.xlu0 %v4394, 127
    %v4398 = vpop.permute.xlu0 %4397
    %4399 = vrot.lane.b32.xlu0 %v4393, 1
    %v4400 = vpop.permute.xlu0 %4399
    %4401 = vrot.lane.b32.xlu0 %v4394, 1
    %v4402 = vpop.permute.xlu0 %4401
    %v4403 = vmul.f32 %v4393, %v135
    %v4404 = vmul.f32 %v4394, %v136
    %v4405 = vmul.f32 %v4396, %v137
    %v4406 = vmul.f32 %v4398, %v138
    %v4407 = vadd.f32 %v4403, %v4405
    %v4408 = vadd.f32 %v4404, %v4406
    %v4409 = vmul.f32 %v4400, %v139
    %v4410 = vmul.f32 %v4402, %v140
    %v4411 = vadd.f32 %v4407, %v4409
    %v4412 = vadd.f32 %v4408, %v4410
    %4413 = vrot.lane.b32.xlu0 %v133, 127
    %v4414 = vpop.permute.xlu0 %4413
    %4415 = vrot.lane.b32.xlu0 %v134, 127
    %v4416 = vpop.permute.xlu0 %4415
    %4417 = vrot.lane.b32.xlu0 %v133, 1
    %v4418 = vpop.permute.xlu0 %4417
    %4419 = vrot.lane.b32.xlu0 %v134, 1
    %v4420 = vpop.permute.xlu0 %4419
    %v4421 = vmul.f32 %v133, %v135
    %v4422 = vmul.f32 %v134, %v136
    %v4423 = vmul.f32 %v4414, %v137
    %v4424 = vmul.f32 %v4416, %v138
    %v4425 = vadd.f32 %v4421, %v4423
    %v4426 = vadd.f32 %v4422, %v4424
    %v4427 = vmul.f32 %v4418, %v139
    %v4428 = vmul.f32 %v4420, %v140
    %v4429 = vadd.f32 %v4425, %v4427
    %v4430 = vadd.f32 %v4426, %v4428
    %v4431 = vld [vmem:[%s27] sm:$0xff]
    %v4432 = vld [vmem:[%s27 + $0x8] sm:$0xff]
    %v4433 = vld [vmem:[%s27 + $0x10] sm:$0xff]
    %v4434 = vld [vmem:[%s27 + $0x18] sm:$0xff]
    %v4435 = vld [vmem:[%s27 + $0x20] sm:$0xff]
    %v4436 = vld [vmem:[%s27 + $0x28] sm:$0xff]
    %v4437 = vld [vmem:[%s27 + $0x30] sm:$0xff]
    %v4438 = vld [vmem:[%s27 + $0x38] sm:$0xff]
    %v4439 = vld [vmem:[%s27 + $0x40] sm:$0xff]
    %v4440 = vld [vmem:[%s27 + $0x48] sm:$0xff]
    %v4441 = vld [vmem:[%s27 + $0x50] sm:$0xff]
    %v4442 = vld [vmem:[%s27 + $0x58] sm:$0xff]
    %v4443 = vld [vmem:[%s27 + $0x60] sm:$0xff]
    %v4444 = vld [vmem:[%s27 + $0x68] sm:$0xff]
    %v4445 = vld [vmem:[%s27 + $0x70] sm:$0xff]
    %v4446 = vld [vmem:[%s27 + $0x78] sm:$0xff]
    %v4447 = vld [vmem:[%s33] sm:$0x1]
    %v4449 = vlaneseq
    %v4450 = vshrl.u32 %v4449, 7
    %v4451 = vsub.s32 0, %v4450
    %v4452 = vrot.slane %v4447, %v4451
    %4454 = vmatprep.subr.mxu0 0.0
    %4455 = vmatpush1.msra.mxu0 %v4431
    %4456 = vmatprep.subr.mxu0 0.0
    %4457 = vmatpush1.msra.mxu0 %v4432
    %4458 = vmatprep.subr.mxu0 0.0
    %4459 = vmatpush1.msra.mxu0 %v4433
    %4460 = vmatprep.subr.mxu0 0.0
    %4461 = vmatpush1.msra.mxu0 %v4434
    %4462 = vmatprep.subr.mxu0 0.0
    %4463 = vmatpush1.msra.mxu0 %v4435
    %4464 = vmatprep.subr.mxu0 0.0
    %4465 = vmatpush1.msra.mxu0 %v4436
    %4466 = vmatprep.subr.mxu0 0.0
    %4467 = vmatpush1.msra.mxu0 %v4437
    %4468 = vmatprep.subr.mxu0 0.0
    %4469 = vmatpush1.msra.mxu0 %v4438
    %4470 = vmatprep.subr.mxu0 0.0
    %4471 = vmatpush1.msra.mxu0 %v4439
    %4472 = vmatprep.subr.mxu0 0.0
    %4473 = vmatpush1.msra.mxu0 %v4440
    %4474 = vmatprep.subr.mxu0 0.0
    %4475 = vmatpush1.msra.mxu0 %v4441
    %4476 = vmatprep.subr.mxu0 0.0
    %4477 = vmatpush1.msra.mxu0 %v4442
    %4478 = vmatprep.subr.mxu0 0.0
    %4479 = vmatpush1.msra.mxu0 %v4443
    %4480 = vmatprep.subr.mxu0 0.0
    %4481 = vmatpush1.msra.mxu0 %v4444
    %4482 = vmatprep.subr.mxu0 0.0
    %4483 = vmatpush1.msra.mxu0 %v4445
    %4484 = vmatprep.subr.mxu0 0.0
    %4485 = vmatpush1.msra.mxu0 %v4446
    %4486 = vmatprep.subr.mxu0 0.0
    %4487 = vmatpush1.msra.mxu0 0.0
    %4488 = vmatprep.subr.mxu0 0.0
    %4489 = vmatpush1.msra.mxu0 0.0
    %4490 = vmatprep.subr.mxu0 0.0
    %4491 = vmatpush1.msra.mxu0 0.0
    %4492 = vmatprep.subr.mxu0 0.0
    %4493 = vmatpush1.msra.mxu0 0.0
    %4494 = vmatprep.subr.mxu0 0.0
    %4495 = vmatpush1.msra.mxu0 0.0
    %4496 = vmatprep.subr.mxu0 0.0
    %4497 = vmatpush1.msra.mxu0 0.0
    %4498 = vmatprep.subr.mxu0 0.0
    %4499 = vmatpush1.msra.mxu0 0.0
    %4500 = vmatprep.subr.mxu0 0.0
    %4501 = vmatpush1.msra.mxu0 0.0
    %4502 = vmatprep.subr.mxu0 0.0
    %4503 = vmatpush1.msra.mxu0 0.0
    %4504 = vmatprep.subr.mxu0 0.0
    %4505 = vmatpush1.msra.mxu0 0.0
    %4506 = vmatprep.subr.mxu0 0.0
    %4507 = vmatpush1.msra.mxu0 0.0
    %4508 = vmatprep.subr.mxu0 0.0
    %4509 = vmatpush1.msra.mxu0 0.0
    %4510 = vmatprep.subr.mxu0 0.0
    %4511 = vmatpush1.msra.mxu0 0.0
    %4512 = vmatprep.subr.mxu0 0.0
    %4513 = vmatpush1.msra.mxu0 0.0
    %4514 = vmatprep.subr.mxu0 0.0
    %4515 = vmatpush1.msra.mxu0 0.0
    %4516 = vmatprep.subr.mxu0 0.0
    %4517 = vmatpush1.msra.mxu0 0.0
    %4518 = vmatprep.mubr.f32.mxu0 0.0
    %4519 = vmatmul.mubr.f32.gmra.mrb[0].mxu0 %v4411
    %v4520 = vpop.f32.mrb[0].mxu0
    %v4521 = vadd.f32 %v4452, %v4520
    %v4522 = vpop.f32.mrb[0].mxu0
    %4523 = vdwg.mxu0
    %s4524 = scalar_lea.vmem %s27, 128
    %v4525 = vld [vmem:[%s4524] sm:$0xff]
    %v4526 = vld [vmem:[%s4524 + $0x8] sm:$0xff]
    %v4527 = vld [vmem:[%s4524 + $0x10] sm:$0xff]
    %v4528 = vld [vmem:[%s4524 + $0x18] sm:$0xff]
    %v4529 = vld [vmem:[%s4524 + $0x20] sm:$0xff]
    %v4530 = vld [vmem:[%s4524 + $0x28] sm:$0xff]
    %v4531 = vld [vmem:[%s4524 + $0x30] sm:$0xff]
    %v4532 = vld [vmem:[%s4524 + $0x38] sm:$0xff]
    %v4533 = vld [vmem:[%s4524 + $0x40] sm:$0xff]
    %v4534 = vld [vmem:[%s4524 + $0x48] sm:$0xff]
    %v4535 = vld [vmem:[%s4524 + $0x50] sm:$0xff]
    %v4536 = vld [vmem:[%s4524 + $0x58] sm:$0xff]
    %v4537 = vld [vmem:[%s4524 + $0x60] sm:$0xff]
    %v4538 = vld [vmem:[%s4524 + $0x68] sm:$0xff]
    %v4539 = vld [vmem:[%s4524 + $0x70] sm:$0xff]
    %v4540 = vld [vmem:[%s4524 + $0x78] sm:$0xff]
    %s4541 = scalar_lea.vmem %s33, 1
    %v4542 = vld [vmem:[%s4541] sm:$0x1]
    %v4544 = vlaneseq
    %v4545 = vshrl.u32 %v4544, 7
    %v4546 = vsub.s32 0, %v4545
    %v4547 = vrot.slane %v4542, %v4546
    %4549 = vmatprep.subr.mxu0 0.0
    %4550 = vmatpush1.msra.mxu0 %v4525
    %4551 = vmatprep.subr.mxu0 0.0
    %4552 = vmatpush1.msra.mxu0 %v4526
    %4553 = vmatprep.subr.mxu0 0.0
    %4554 = vmatpush1.msra.mxu0 %v4527
    %4555 = vmatprep.subr.mxu0 0.0
    %4556 = vmatpush1.msra.mxu0 %v4528
    %4557 = vmatprep.subr.mxu0 0.0
    %4558 = vmatpush1.msra.mxu0 %v4529
    %4559 = vmatprep.subr.mxu0 0.0
    %4560 = vmatpush1.msra.mxu0 %v4530
    %4561 = vmatprep.subr.mxu0 0.0
    %4562 = vmatpush1.msra.mxu0 %v4531
    %4563 = vmatprep.subr.mxu0 0.0
    %4564 = vmatpush1.msra.mxu0 %v4532
    %4565 = vmatprep.subr.mxu0 0.0
    %4566 = vmatpush1.msra.mxu0 %v4533
    %4567 = vmatprep.subr.mxu0 0.0
    %4568 = vmatpush1.msra.mxu0 %v4534
    %4569 = vmatprep.subr.mxu0 0.0
    %4570 = vmatpush1.msra.mxu0 %v4535
    %4571 = vmatprep.subr.mxu0 0.0
    %4572 = vmatpush1.msra.mxu0 %v4536
    %4573 = vmatprep.subr.mxu0 0.0
    %4574 = vmatpush1.msra.mxu0 %v4537
    %4575 = vmatprep.subr.mxu0 0.0
    %4576 = vmatpush1.msra.mxu0 %v4538
    %4577 = vmatprep.subr.mxu0 0.0
    %4578 = vmatpush1.msra.mxu0 %v4539
    %4579 = vmatprep.subr.mxu0 0.0
    %4580 = vmatpush1.msra.mxu0 %v4540
    %4581 = vmatprep.subr.mxu0 0.0
    %4582 = vmatpush1.msra.mxu0 0.0
    %4583 = vmatprep.subr.mxu0 0.0
    %4584 = vmatpush1.msra.mxu0 0.0
    %4585 = vmatprep.subr.mxu0 0.0
    %4586 = vmatpush1.msra.mxu0 0.0
    %4587 = vmatprep.subr.mxu0 0.0
    %4588 = vmatpush1.msra.mxu0 0.0
    %4589 = vmatprep.subr.mxu0 0.0
    %4590 = vmatpush1.msra.mxu0 0.0
    %4591 = vmatprep.subr.mxu0 0.0
    %4592 = vmatpush1.msra.mxu0 0.0
    %4593 = vmatprep.subr.mxu0 0.0
    %4594 = vmatpush1.msra.mxu0 0.0
    %4595 = vmatprep.subr.mxu0 0.0
    %4596 = vmatpush1.msra.mxu0 0.0
    %4597 = vmatprep.subr.mxu0 0.0
    %4598 = vmatpush1.msra.mxu0 0.0
    %4599 = vmatprep.subr.mxu0 0.0
    %4600 = vmatpush1.msra.mxu0 0.0
    %4601 = vmatprep.subr.mxu0 0.0
    %4602 = vmatpush1.msra.mxu0 0.0
    %4603 = vmatprep.subr.mxu0 0.0
    %4604 = vmatpush1.msra.mxu0 0.0
    %4605 = vmatprep.subr.mxu0 0.0
    %4606 = vmatpush1.msra.mxu0 0.0
    %4607 = vmatprep.subr.mxu0 0.0
    %4608 = vmatpush1.msra.mxu0 0.0
    %4609 = vmatprep.subr.mxu0 0.0
    %4610 = vmatpush1.msra.mxu0 0.0
    %4611 = vmatprep.subr.mxu0 0.0
    %4612 = vmatpush1.msra.mxu0 0.0
    %4613 = vmatprep.mubr.f32.mxu0 0.0
    %4614 = vmatmul.mubr.f32.gmra.mrb[0].mxu0 %v4411
    %v4615 = vpop.f32.mrb[0].mxu0
    %v4616 = vadd.f32 %v4547, %v4615
    %v4617 = vpop.f32.mrb[0].mxu0
    %4618 = vdwg.mxu0
    %s4619 = scalar_lea.vmem %s27, 256
    %v4620 = vld [vmem:[%s4619] sm:$0xff]
    %v4621 = vld [vmem:[%s4619 + $0x8] sm:$0xff]
    %v4622 = vld [vmem:[%s4619 + $0x10] sm:$0xff]
    %v4623 = vld [vmem:[%s4619 + $0x18] sm:$0xff]
    %v4624 = vld [vmem:[%s4619 + $0x20] sm:$0xff]
    %v4625 = vld [vmem:[%s4619 + $0x28] sm:$0xff]
    %v4626 = vld [vmem:[%s4619 + $0x30] sm:$0xff]
    %v4627 = vld [vmem:[%s4619 + $0x38] sm:$0xff]
    %v4628 = vld [vmem:[%s4619 + $0x40] sm:$0xff]
    %v4629 = vld [vmem:[%s4619 + $0x48] sm:$0xff]
    %v4630 = vld [vmem:[%s4619 + $0x50] sm:$0xff]
    %v4631 = vld [vmem:[%s4619 + $0x58] sm:$0xff]
    %v4632 = vld [vmem:[%s4619 + $0x60] sm:$0xff]
    %v4633 = vld [vmem:[%s4619 + $0x68] sm:$0xff]
    %v4634 = vld [vmem:[%s4619 + $0x70] sm:$0xff]
    %v4635 = vld [vmem:[%s4619 + $0x78] sm:$0xff]
    %s4636 = scalar_lea.vmem %s33, 2
    %v4637 = vld [vmem:[%s4636] sm:$0x1]
    %v4639 = vlaneseq
    %v4640 = vshrl.u32 %v4639, 7
    %v4641 = vsub.s32 0, %v4640
    %v4642 = vrot.slane %v4637, %v4641
    %4644 = vmatprep.subr.mxu0 0.0
    %4645 = vmatpush1.msra.mxu0 %v4620
    %4646 = vmatprep.subr.mxu0 0.0
    %4647 = vmatpush1.msra.mxu0 %v4621
    %4648 = vmatprep.subr.mxu0 0.0
    %4649 = vmatpush1.msra.mxu0 %v4622
    %4650 = vmatprep.subr.mxu0 0.0
    %4651 = vmatpush1.msra.mxu0 %v4623
    %4652 = vmatprep.subr.mxu0 0.0
    %4653 = vmatpush1.msra.mxu0 %v4624
    %4654 = vmatprep.subr.mxu0 0.0
    %4655 = vmatpush1.msra.mxu0 %v4625
    %4656 = vmatprep.subr.mxu0 0.0
    %4657 = vmatpush1.msra.mxu0 %v4626
    %4658 = vmatprep.subr.mxu0 0.0
    %4659 = vmatpush1.msra.mxu0 %v4627
    %4660 = vmatprep.subr.mxu0 0.0
    %4661 = vmatpush1.msra.mxu0 %v4628
    %4662 = vmatprep.subr.mxu0 0.0
    %4663 = vmatpush1.msra.mxu0 %v4629
    %4664 = vmatprep.subr.mxu0 0.0
    %4665 = vmatpush1.msra.mxu0 %v4630
    %4666 = vmatprep.subr.mxu0 0.0
    %4667 = vmatpush1.msra.mxu0 %v4631
    %4668 = vmatprep.subr.mxu0 0.0
    %4669 = vmatpush1.msra.mxu0 %v4632
    %4670 = vmatprep.subr.mxu0 0.0
    %4671 = vmatpush1.msra.mxu0 %v4633
    %4672 = vmatprep.subr.mxu0 0.0
    %4673 = vmatpush1.msra.mxu0 %v4634
    %4674 = vmatprep.subr.mxu0 0.0
    %4675 = vmatpush1.msra.mxu0 %v4635
    %4676 = vmatprep.subr.mxu0 0.0
    %4677 = vmatpush1.msra.mxu0 0.0
    %4678 = vmatprep.subr.mxu0 0.0
    %4679 = vmatpush1.msra.mxu0 0.0
    %4680 = vmatprep.subr.mxu0 0.0
    %4681 = vmatpush1.msra.mxu0 0.0
    %4682 = vmatprep.subr.mxu0 0.0
    %4683 = vmatpush1.msra.mxu0 0.0
    %4684 = vmatprep.subr.mxu0 0.0
    %4685 = vmatpush1.msra.mxu0 0.0
    %4686 = vmatprep.subr.mxu0 0.0
    %4687 = vmatpush1.msra.mxu0 0.0
    %4688 = vmatprep.subr.mxu0 0.0
    %4689 = vmatpush1.msra.mxu0 0.0
    %4690 = vmatprep.subr.mxu0 0.0
    %4691 = vmatpush1.msra.mxu0 0.0
    %4692 = vmatprep.subr.mxu0 0.0
    %4693 = vmatpush1.msra.mxu0 0.0
    %4694 = vmatprep.subr.mxu0 0.0
    %4695 = vmatpush1.msra.mxu0 0.0
    %4696 = vmatprep.subr.mxu0 0.0
    %4697 = vmatpush1.msra.mxu0 0.0
    %4698 = vmatprep.subr.mxu0 0.0
    %4699 = vmatpush1.msra.mxu0 0.0
    %4700 = vmatprep.subr.mxu0 0.0
    %4701 = vmatpush1.msra.mxu0 0.0
    %4702 = vmatprep.subr.mxu0 0.0
    %4703 = vmatpush1.msra.mxu0 0.0
    %4704 = vmatprep.subr.mxu0 0.0
    %4705 = vmatpush1.msra.mxu0 0.0
    %4706 = vmatprep.subr.mxu0 0.0
    %4707 = vmatpush1.msra.mxu0 0.0
    %4708 = vmatprep.mubr.f32.mxu0 0.0
    %4709 = vmatmul.mubr.f32.gmra.mrb[0].mxu0 %v4411
    %v4710 = vpop.f32.mrb[0].mxu0
    %v4711 = vadd.f32 %v4642, %v4710
    %v4712 = vpop.f32.mrb[0].mxu0
    %4713 = vdwg.mxu0
    %s4714 = scalar_lea.vmem %s27, 384
    %v4715 = vld [vmem:[%s4714] sm:$0xff]
    %v4716 = vld [vmem:[%s4714 + $0x8] sm:$0xff]
    %v4717 = vld [vmem:[%s4714 + $0x10] sm:$0xff]
    %v4718 = vld [vmem:[%s4714 + $0x18] sm:$0xff]
    %v4719 = vld [vmem:[%s4714 + $0x20] sm:$0xff]
    %v4720 = vld [vmem:[%s4714 + $0x28] sm:$0xff]
    %v4721 = vld [vmem:[%s4714 + $0x30] sm:$0xff]
    %v4722 = vld [vmem:[%s4714 + $0x38] sm:$0xff]
    %v4723 = vld [vmem:[%s4714 + $0x40] sm:$0xff]
    %v4724 = vld [vmem:[%s4714 + $0x48] sm:$0xff]
    %v4725 = vld [vmem:[%s4714 + $0x50] sm:$0xff]
    %v4726 = vld [vmem:[%s4714 + $0x58] sm:$0xff]
    %v4727 = vld [vmem:[%s4714 + $0x60] sm:$0xff]
    %v4728 = vld [vmem:[%s4714 + $0x68] sm:$0xff]
    %v4729 = vld [vmem:[%s4714 + $0x70] sm:$0xff]
    %v4730 = vld [vmem:[%s4714 + $0x78] sm:$0xff]
    %s4731 = scalar_lea.vmem %s33, 3
    %v4732 = vld [vmem:[%s4731] sm:$0x1]
    %v4734 = vlaneseq
    %v4735 = vshrl.u32 %v4734, 7
    %v4736 = vsub.s32 0, %v4735
    %v4737 = vrot.slane %v4732, %v4736
    %4739 = vmatprep.subr.mxu0 0.0
    %4740 = vmatpush1.msra.mxu0 %v4715
    %4741 = vmatprep.subr.mxu0 0.0
    %4742 = vmatpush1.msra.mxu0 %v4716
    %4743 = vmatprep.subr.mxu0 0.0
    %4744 = vmatpush1.msra.mxu0 %v4717
    %4745 = vmatprep.subr.mxu0 0.0
    %4746 = vmatpush1.msra.mxu0 %v4718
    %4747 = vmatprep.subr.mxu0 0.0
    %4748 = vmatpush1.msra.mxu0 %v4719
    %4749 = vmatprep.subr.mxu0 0.0
    %4750 = vmatpush1.msra.mxu0 %v4720
    %4751 = vmatprep.subr.mxu0 0.0
    %4752 = vmatpush1.msra.mxu0 %v4721
    %4753 = vmatprep.subr.mxu0 0.0
    %4754 = vmatpush1.msra.mxu0 %v4722
    %4755 = vmatprep.subr.mxu0 0.0
    %4756 = vmatpush1.msra.mxu0 %v4723
    %4757 = vmatprep.subr.mxu0 0.0
    %4758 = vmatpush1.msra.mxu0 %v4724
    %4759 = vmatprep.subr.mxu0 0.0
    %4760 = vmatpush1.msra.mxu0 %v4725
    %4761 = vmatprep.subr.mxu0 0.0
    %4762 = vmatpush1.msra.mxu0 %v4726
    %4763 = vmatprep.subr.mxu0 0.0
    %4764 = vmatpush1.msra.mxu0 %v4727
    %4765 = vmatprep.subr.mxu0 0.0
    %4766 = vmatpush1.msra.mxu0 %v4728
    %4767 = vmatprep.subr.mxu0 0.0
    %4768 = vmatpush1.msra.mxu0 %v4729
    %4769 = vmatprep.subr.mxu0 0.0
    %4770 = vmatpush1.msra.mxu0 %v4730
    %4771 = vmatprep.subr.mxu0 0.0
    %4772 = vmatpush1.msra.mxu0 0.0
    %4773 = vmatprep.subr.mxu0 0.0
    %4774 = vmatpush1.msra.mxu0 0.0
    %4775 = vmatprep.subr.mxu0 0.0
    %4776 = vmatpush1.msra.mxu0 0.0
    %4777 = vmatprep.subr.mxu0 0.0
    %4778 = vmatpush1.msra.mxu0 0.0
    %4779 = vmatprep.subr.mxu0 0.0
    %4780 = vmatpush1.msra.mxu0 0.0
    %4781 = vmatprep.subr.mxu0 0.0
    %4782 = vmatpush1.msra.mxu0 0.0
    %4783 = vmatprep.subr.mxu0 0.0
    %4784 = vmatpush1.msra.mxu0 0.0
    %4785 = vmatprep.subr.mxu0 0.0
    %4786 = vmatpush1.msra.mxu0 0.0
    %4787 = vmatprep.subr.mxu0 0.0
    %4788 = vmatpush1.msra.mxu0 0.0
    %4789 = vmatprep.subr.mxu0 0.0
    %4790 = vmatpush1.msra.mxu0 0.0
    %4791 = vmatprep.subr.mxu0 0.0
    %4792 = vmatpush1.msra.mxu0 0.0
    %4793 = vmatprep.subr.mxu0 0.0
    %4794 = vmatpush1.msra.mxu0 0.0
    %4795 = vmatprep.subr.mxu0 0.0
    %4796 = vmatpush1.msra.mxu0 0.0
    %4797 = vmatprep.subr.mxu0 0.0
    %4798 = vmatpush1.msra.mxu0 0.0
    %4799 = vmatprep.subr.mxu0 0.0
    %4800 = vmatpush1.msra.mxu0 0.0
    %4801 = vmatprep.subr.mxu0 0.0
    %4802 = vmatpush1.msra.mxu0 0.0
    %4803 = vmatprep.mubr.f32.mxu0 0.0
    %4804 = vmatmul.mubr.f32.gmra.mrb[0].mxu0 %v4411
    %v4805 = vpop.f32.mrb[0].mxu0
    %v4806 = vadd.f32 %v4737, %v4805
    %v4807 = vpop.f32.mrb[0].mxu0
    %4808 = vdwg.mxu0
    %v4809 = vld [vmem:[%s29] sm:$0xff]
    %v4810 = vld [vmem:[%s29 + $0x8] sm:$0xff]
    %v4811 = vld [vmem:[%s29 + $0x10] sm:$0xff]
    %v4812 = vld [vmem:[%s29 + $0x18] sm:$0xff]
    %v4813 = vld [vmem:[%s29 + $0x20] sm:$0xff]
    %v4814 = vld [vmem:[%s29 + $0x28] sm:$0xff]
    %v4815 = vld [vmem:[%s29 + $0x30] sm:$0xff]
    %v4816 = vld [vmem:[%s29 + $0x38] sm:$0xff]
    %v4817 = vld [vmem:[%s29 + $0x40] sm:$0xff]
    %v4818 = vld [vmem:[%s29 + $0x48] sm:$0xff]
    %v4819 = vld [vmem:[%s29 + $0x50] sm:$0xff]
    %v4820 = vld [vmem:[%s29 + $0x58] sm:$0xff]
    %v4821 = vld [vmem:[%s29 + $0x60] sm:$0xff]
    %v4822 = vld [vmem:[%s29 + $0x68] sm:$0xff]
    %v4823 = vld [vmem:[%s29 + $0x70] sm:$0xff]
    %v4824 = vld [vmem:[%s29 + $0x78] sm:$0xff]
    %v4825 = vld [vmem:[%s35] sm:$0x1]
    %v4827 = vlaneseq
    %v4828 = vshrl.u32 %v4827, 7
    %v4829 = vsub.s32 0, %v4828
    %v4830 = vrot.slane %v4825, %v4829
    %4832 = vmatprep.subr.mxu0 0.0
    %4833 = vmatpush1.msra.mxu0 %v4809
    %4834 = vmatprep.subr.mxu0 0.0
    %4835 = vmatpush1.msra.mxu0 %v4810
    %4836 = vmatprep.subr.mxu0 0.0
    %4837 = vmatpush1.msra.mxu0 %v4811
    %4838 = vmatprep.subr.mxu0 0.0
    %4839 = vmatpush1.msra.mxu0 %v4812
    %4840 = vmatprep.subr.mxu0 0.0
    %4841 = vmatpush1.msra.mxu0 %v4813
    %4842 = vmatprep.subr.mxu0 0.0
    %4843 = vmatpush1.msra.mxu0 %v4814
    %4844 = vmatprep.subr.mxu0 0.0
    %4845 = vmatpush1.msra.mxu0 %v4815
    %4846 = vmatprep.subr.mxu0 0.0
    %4847 = vmatpush1.msra.mxu0 %v4816
    %4848 = vmatprep.subr.mxu0 0.0
    %4849 = vmatpush1.msra.mxu0 %v4817
    %4850 = vmatprep.subr.mxu0 0.0
    %4851 = vmatpush1.msra.mxu0 %v4818
    %4852 = vmatprep.subr.mxu0 0.0
    %4853 = vmatpush1.msra.mxu0 %v4819
    %4854 = vmatprep.subr.mxu0 0.0
    %4855 = vmatpush1.msra.mxu0 %v4820
    %4856 = vmatprep.subr.mxu0 0.0
    %4857 = vmatpush1.msra.mxu0 %v4821
    %4858 = vmatprep.subr.mxu0 0.0
    %4859 = vmatpush1.msra.mxu0 %v4822
    %4860 = vmatprep.subr.mxu0 0.0
    %4861 = vmatpush1.msra.mxu0 %v4823
    %4862 = vmatprep.subr.mxu0 0.0
    %4863 = vmatpush1.msra.mxu0 %v4824
    %4864 = vmatprep.subr.mxu0 0.0
    %4865 = vmatpush1.msra.mxu0 0.0
    %4866 = vmatprep.subr.mxu0 0.0
    %4867 = vmatpush1.msra.mxu0 0.0
    %4868 = vmatprep.subr.mxu0 0.0
    %4869 = vmatpush1.msra.mxu0 0.0
    %4870 = vmatprep.subr.mxu0 0.0
    %4871 = vmatpush1.msra.mxu0 0.0
    %4872 = vmatprep.subr.mxu0 0.0
    %4873 = vmatpush1.msra.mxu0 0.0
    %4874 = vmatprep.subr.mxu0 0.0
    %4875 = vmatpush1.msra.mxu0 0.0
    %4876 = vmatprep.subr.mxu0 0.0
    %4877 = vmatpush1.msra.mxu0 0.0
    %4878 = vmatprep.subr.mxu0 0.0
    %4879 = vmatpush1.msra.mxu0 0.0
    %4880 = vmatprep.subr.mxu0 0.0
    %4881 = vmatpush1.msra.mxu0 0.0
    %4882 = vmatprep.subr.mxu0 0.0
    %4883 = vmatpush1.msra.mxu0 0.0
    %4884 = vmatprep.subr.mxu0 0.0
    %4885 = vmatpush1.msra.mxu0 0.0
    %4886 = vmatprep.subr.mxu0 0.0
    %4887 = vmatpush1.msra.mxu0 0.0
    %4888 = vmatprep.subr.mxu0 0.0
    %4889 = vmatpush1.msra.mxu0 0.0
    %4890 = vmatprep.subr.mxu0 0.0
    %4891 = vmatpush1.msra.mxu0 0.0
    %4892 = vmatprep.subr.mxu0 0.0
    %4893 = vmatpush1.msra.mxu0 0.0
    %4894 = vmatprep.subr.mxu0 0.0
    %4895 = vmatpush1.msra.mxu0 0.0
    %4896 = vmatprep.mubr.f32.mxu0 0.0
    %4897 = vmatmul.mubr.f32.gmra.mrb[0].mxu0 %v4429
    %v4898 = vpop.f32.mrb[0].mxu0
    %v4899 = vadd.f32 %v4830, %v4898
    %v4900 = vpop.f32.mrb[0].mxu0
    %4901 = vdwg.mxu0
    %s4902 = scalar_lea.vmem %s29, 128
    %v4903 = vld [vmem:[%s4902] sm:$0xff]
    %v4904 = vld [vmem:[%s4902 + $0x8] sm:$0xff]
    %v4905 = vld [vmem:[%s4902 + $0x10] sm:$0xff]
    %v4906 = vld [vmem:[%s4902 + $0x18] sm:$0xff]
    %v4907 = vld [vmem:[%s4902 + $0x20] sm:$0xff]
    %v4908 = vld [vmem:[%s4902 + $0x28] sm:$0xff]
    %v4909 = vld [vmem:[%s4902 + $0x30] sm:$0xff]
    %v4910 = vld [vmem:[%s4902 + $0x38] sm:$0xff]
    %v4911 = vld [vmem:[%s4902 + $0x40] sm:$0xff]
    %v4912 = vld [vmem:[%s4902 + $0x48] sm:$0xff]
    %v4913 = vld [vmem:[%s4902 + $0x50] sm:$0xff]
    %v4914 = vld [vmem:[%s4902 + $0x58] sm:$0xff]
    %v4915 = vld [vmem:[%s4902 + $0x60] sm:$0xff]
    %v4916 = vld [vmem:[%s4902 + $0x68] sm:$0xff]
    %v4917 = vld [vmem:[%s4902 + $0x70] sm:$0xff]
    %v4918 = vld [vmem:[%s4902 + $0x78] sm:$0xff]
    %s4919 = scalar_lea.vmem %s35, 1
    %v4920 = vld [vmem:[%s4919] sm:$0x1]
    %v4922 = vlaneseq
    %v4923 = vshrl.u32 %v4922, 7
    %v4924 = vsub.s32 0, %v4923
    %v4925 = vrot.slane %v4920, %v4924
    %4927 = vmatprep.subr.mxu0 0.0
    %4928 = vmatpush1.msra.mxu0 %v4903
    %4929 = vmatprep.subr.mxu0 0.0
    %4930 = vmatpush1.msra.mxu0 %v4904
    %4931 = vmatprep.subr.mxu0 0.0
    %4932 = vmatpush1.msra.mxu0 %v4905
    %4933 = vmatprep.subr.mxu0 0.0
    %4934 = vmatpush1.msra.mxu0 %v4906
    %4935 = vmatprep.subr.mxu0 0.0
    %4936 = vmatpush1.msra.mxu0 %v4907
    %4937 = vmatprep.subr.mxu0 0.0
    %4938 = vmatpush1.msra.mxu0 %v4908
    %4939 = vmatprep.subr.mxu0 0.0
    %4940 = vmatpush1.msra.mxu0 %v4909
    %4941 = vmatprep.subr.mxu0 0.0
    %4942 = vmatpush1.msra.mxu0 %v4910
    %4943 = vmatprep.subr.mxu0 0.0
    %4944 = vmatpush1.msra.mxu0 %v4911
    %4945 = vmatprep.subr.mxu0 0.0
    %4946 = vmatpush1.msra.mxu0 %v4912
    %4947 = vmatprep.subr.mxu0 0.0
    %4948 = vmatpush1.msra.mxu0 %v4913
    %4949 = vmatprep.subr.mxu0 0.0
    %4950 = vmatpush1.msra.mxu0 %v4914
    %4951 = vmatprep.subr.mxu0 0.0
    %4952 = vmatpush1.msra.mxu0 %v4915
    %4953 = vmatprep.subr.mxu0 0.0
    %4954 = vmatpush1.msra.mxu0 %v4916
    %4955 = vmatprep.subr.mxu0 0.0
    %4956 = vmatpush1.msra.mxu0 %v4917
    %4957 = vmatprep.subr.mxu0 0.0
    %4958 = vmatpush1.msra.mxu0 %v4918
    %4959 = vmatprep.subr.mxu0 0.0
    %4960 = vmatpush1.msra.mxu0 0.0
    %4961 = vmatprep.subr.mxu0 0.0
    %4962 = vmatpush1.msra.mxu0 0.0
    %4963 = vmatprep.subr.mxu0 0.0
    %4964 = vmatpush1.msra.mxu0 0.0
    %4965 = vmatprep.subr.mxu0 0.0
    %4966 = vmatpush1.msra.mxu0 0.0
    %4967 = vmatprep.subr.mxu0 0.0
    %4968 = vmatpush1.msra.mxu0 0.0
    %4969 = vmatprep.subr.mxu0 0.0
    %4970 = vmatpush1.msra.mxu0 0.0
    %4971 = vmatprep.subr.mxu0 0.0
    %4972 = vmatpush1.msra.mxu0 0.0
    %4973 = vmatprep.subr.mxu0 0.0
    %4974 = vmatpush1.msra.mxu0 0.0
    %4975 = vmatprep.subr.mxu0 0.0
    %4976 = vmatpush1.msra.mxu0 0.0
    %4977 = vmatprep.subr.mxu0 0.0
    %4978 = vmatpush1.msra.mxu0 0.0
    %4979 = vmatprep.subr.mxu0 0.0
    %4980 = vmatpush1.msra.mxu0 0.0
    %4981 = vmatprep.subr.mxu0 0.0
    %4982 = vmatpush1.msra.mxu0 0.0
    %4983 = vmatprep.subr.mxu0 0.0
    %4984 = vmatpush1.msra.mxu0 0.0
    %4985 = vmatprep.subr.mxu0 0.0
    %4986 = vmatpush1.msra.mxu0 0.0
    %4987 = vmatprep.subr.mxu0 0.0
    %4988 = vmatpush1.msra.mxu0 0.0
    %4989 = vmatprep.subr.mxu0 0.0
    %4990 = vmatpush1.msra.mxu0 0.0
    %4991 = vmatprep.mubr.f32.mxu0 0.0
    %4992 = vmatmul.mubr.f32.gmra.mrb[0].mxu0 %v4429
    %v4993 = vpop.f32.mrb[0].mxu0
    %v4994 = vadd.f32 %v4925, %v4993
    %v4995 = vpop.f32.mrb[0].mxu0
    %4996 = vdwg.mxu0
    %s4997 = scalar_lea.vmem %s29, 256
    %v4998 = vld [vmem:[%s4997] sm:$0xff]
    %v4999 = vld [vmem:[%s4997 + $0x8] sm:$0xff]
    %v5000 = vld [vmem:[%s4997 + $0x10] sm:$0xff]
    %v5001 = vld [vmem:[%s4997 + $0x18] sm:$0xff]
    %v5002 = vld [vmem:[%s4997 + $0x20] sm:$0xff]
    %v5003 = vld [vmem:[%s4997 + $0x28] sm:$0xff]
    %v5004 = vld [vmem:[%s4997 + $0x30] sm:$0xff]
    %v5005 = vld [vmem:[%s4997 + $0x38] sm:$0xff]
    %v5006 = vld [vmem:[%s4997 + $0x40] sm:$0xff]
    %v5007 = vld [vmem:[%s4997 + $0x48] sm:$0xff]
    %v5008 = vld [vmem:[%s4997 + $0x50] sm:$0xff]
    %v5009 = vld [vmem:[%s4997 + $0x58] sm:$0xff]
    %v5010 = vld [vmem:[%s4997 + $0x60] sm:$0xff]
    %v5011 = vld [vmem:[%s4997 + $0x68] sm:$0xff]
    %v5012 = vld [vmem:[%s4997 + $0x70] sm:$0xff]
    %v5013 = vld [vmem:[%s4997 + $0x78] sm:$0xff]
    %s5014 = scalar_lea.vmem %s35, 2
    %v5015 = vld [vmem:[%s5014] sm:$0x1]
    %v5017 = vlaneseq
    %v5018 = vshrl.u32 %v5017, 7
    %v5019 = vsub.s32 0, %v5018
    %v5020 = vrot.slane %v5015, %v5019
    %5022 = vmatprep.subr.mxu0 0.0
    %5023 = vmatpush1.msra.mxu0 %v4998
    %5024 = vmatprep.subr.mxu0 0.0
    %5025 = vmatpush1.msra.mxu0 %v4999
    %5026 = vmatprep.subr.mxu0 0.0
    %5027 = vmatpush1.msra.mxu0 %v5000
    %5028 = vmatprep.subr.mxu0 0.0
    %5029 = vmatpush1.msra.mxu0 %v5001
    %5030 = vmatprep.subr.mxu0 0.0
    %5031 = vmatpush1.msra.mxu0 %v5002
    %5032 = vmatprep.subr.mxu0 0.0
    %5033 = vmatpush1.msra.mxu0 %v5003
    %5034 = vmatprep.subr.mxu0 0.0
    %5035 = vmatpush1.msra.mxu0 %v5004
    %5036 = vmatprep.subr.mxu0 0.0
    %5037 = vmatpush1.msra.mxu0 %v5005
    %5038 = vmatprep.subr.mxu0 0.0
    %5039 = vmatpush1.msra.mxu0 %v5006
    %5040 = vmatprep.subr.mxu0 0.0
    %5041 = vmatpush1.msra.mxu0 %v5007
    %5042 = vmatprep.subr.mxu0 0.0
    %5043 = vmatpush1.msra.mxu0 %v5008
    %5044 = vmatprep.subr.mxu0 0.0
    %5045 = vmatpush1.msra.mxu0 %v5009
    %5046 = vmatprep.subr.mxu0 0.0
    %5047 = vmatpush1.msra.mxu0 %v5010
    %5048 = vmatprep.subr.mxu0 0.0
    %5049 = vmatpush1.msra.mxu0 %v5011
    %5050 = vmatprep.subr.mxu0 0.0
    %5051 = vmatpush1.msra.mxu0 %v5012
    %5052 = vmatprep.subr.mxu0 0.0
    %5053 = vmatpush1.msra.mxu0 %v5013
    %5054 = vmatprep.subr.mxu0 0.0
    %5055 = vmatpush1.msra.mxu0 0.0
    %5056 = vmatprep.subr.mxu0 0.0
    %5057 = vmatpush1.msra.mxu0 0.0
    %5058 = vmatprep.subr.mxu0 0.0
    %5059 = vmatpush1.msra.mxu0 0.0
    %5060 = vmatprep.subr.mxu0 0.0
    %5061 = vmatpush1.msra.mxu0 0.0
    %5062 = vmatprep.subr.mxu0 0.0
    %5063 = vmatpush1.msra.mxu0 0.0
    %5064 = vmatprep.subr.mxu0 0.0
    %5065 = vmatpush1.msra.mxu0 0.0
    %5066 = vmatprep.subr.mxu0 0.0
    %5067 = vmatpush1.msra.mxu0 0.0
    %5068 = vmatprep.subr.mxu0 0.0
    %5069 = vmatpush1.msra.mxu0 0.0
    %5070 = vmatprep.subr.mxu0 0.0
    %5071 = vmatpush1.msra.mxu0 0.0
    %5072 = vmatprep.subr.mxu0 0.0
    %5073 = vmatpush1.msra.mxu0 0.0
    %5074 = vmatprep.subr.mxu0 0.0
    %5075 = vmatpush1.msra.mxu0 0.0
    %5076 = vmatprep.subr.mxu0 0.0
    %5077 = vmatpush1.msra.mxu0 0.0
    %5078 = vmatprep.subr.mxu0 0.0
    %5079 = vmatpush1.msra.mxu0 0.0
    %5080 = vmatprep.subr.mxu0 0.0
    %5081 = vmatpush1.msra.mxu0 0.0
    %5082 = vmatprep.subr.mxu0 0.0
    %5083 = vmatpush1.msra.mxu0 0.0
    %5084 = vmatprep.subr.mxu0 0.0
    %5085 = vmatpush1.msra.mxu0 0.0
    %5086 = vmatprep.mubr.f32.mxu0 0.0
    %5087 = vmatmul.mubr.f32.gmra.mrb[0].mxu0 %v4429
    %v5088 = vpop.f32.mrb[0].mxu0
    %v5089 = vadd.f32 %v5020, %v5088
    %v5090 = vpop.f32.mrb[0].mxu0
    %5091 = vdwg.mxu0
    %s5092 = scalar_lea.vmem %s29, 384
    %v5093 = vld [vmem:[%s5092] sm:$0xff]
    %v5094 = vld [vmem:[%s5092 + $0x8] sm:$0xff]
    %v5095 = vld [vmem:[%s5092 + $0x10] sm:$0xff]
    %v5096 = vld [vmem:[%s5092 + $0x18] sm:$0xff]
    %v5097 = vld [vmem:[%s5092 + $0x20] sm:$0xff]
    %v5098 = vld [vmem:[%s5092 + $0x28] sm:$0xff]
    %v5099 = vld [vmem:[%s5092 + $0x30] sm:$0xff]
    %v5100 = vld [vmem:[%s5092 + $0x38] sm:$0xff]
    %v5101 = vld [vmem:[%s5092 + $0x40] sm:$0xff]
    %v5102 = vld [vmem:[%s5092 + $0x48] sm:$0xff]
    %v5103 = vld [vmem:[%s5092 + $0x50] sm:$0xff]
    %v5104 = vld [vmem:[%s5092 + $0x58] sm:$0xff]
    %v5105 = vld [vmem:[%s5092 + $0x60] sm:$0xff]
    %v5106 = vld [vmem:[%s5092 + $0x68] sm:$0xff]
    %v5107 = vld [vmem:[%s5092 + $0x70] sm:$0xff]
    %v5108 = vld [vmem:[%s5092 + $0x78] sm:$0xff]
    %s5109 = scalar_lea.vmem %s35, 3
    %v5110 = vld [vmem:[%s5109] sm:$0x1]
    %v5112 = vlaneseq
    %v5113 = vshrl.u32 %v5112, 7
    %v5114 = vsub.s32 0, %v5113
    %v5115 = vrot.slane %v5110, %v5114
    %5117 = vmatprep.subr.mxu0 0.0
    %5118 = vmatpush1.msra.mxu0 %v5093
    %5119 = vmatprep.subr.mxu0 0.0
    %5120 = vmatpush1.msra.mxu0 %v5094
    %5121 = vmatprep.subr.mxu0 0.0
    %5122 = vmatpush1.msra.mxu0 %v5095
    %5123 = vmatprep.subr.mxu0 0.0
    %5124 = vmatpush1.msra.mxu0 %v5096
    %5125 = vmatprep.subr.mxu0 0.0
    %5126 = vmatpush1.msra.mxu0 %v5097
    %5127 = vmatprep.subr.mxu0 0.0
    %5128 = vmatpush1.msra.mxu0 %v5098
    %5129 = vmatprep.subr.mxu0 0.0
    %5130 = vmatpush1.msra.mxu0 %v5099
    %5131 = vmatprep.subr.mxu0 0.0
    %5132 = vmatpush1.msra.mxu0 %v5100
    %5133 = vmatprep.subr.mxu0 0.0
    %5134 = vmatpush1.msra.mxu0 %v5101
    %5135 = vmatprep.subr.mxu0 0.0
    %5136 = vmatpush1.msra.mxu0 %v5102
    %5137 = vmatprep.subr.mxu0 0.0
    %5138 = vmatpush1.msra.mxu0 %v5103
    %5139 = vmatprep.subr.mxu0 0.0
    %5140 = vmatpush1.msra.mxu0 %v5104
    %5141 = vmatprep.subr.mxu0 0.0
    %5142 = vmatpush1.msra.mxu0 %v5105
    %5143 = vmatprep.subr.mxu0 0.0
    %5144 = vmatpush1.msra.mxu0 %v5106
    %5145 = vmatprep.subr.mxu0 0.0
    %5146 = vmatpush1.msra.mxu0 %v5107
    %5147 = vmatprep.subr.mxu0 0.0
    %5148 = vmatpush1.msra.mxu0 %v5108
    %5149 = vmatprep.subr.mxu0 0.0
    %5150 = vmatpush1.msra.mxu0 0.0
    %5151 = vmatprep.subr.mxu0 0.0
    %5152 = vmatpush1.msra.mxu0 0.0
    %5153 = vmatprep.subr.mxu0 0.0
    %5154 = vmatpush1.msra.mxu0 0.0
    %5155 = vmatprep.subr.mxu0 0.0
    %5156 = vmatpush1.msra.mxu0 0.0
    %5157 = vmatprep.subr.mxu0 0.0
    %5158 = vmatpush1.msra.mxu0 0.0
    %5159 = vmatprep.subr.mxu0 0.0
    %5160 = vmatpush1.msra.mxu0 0.0
    %5161 = vmatprep.subr.mxu0 0.0
    %5162 = vmatpush1.msra.mxu0 0.0
    %5163 = vmatprep.subr.mxu0 0.0
    %5164 = vmatpush1.msra.mxu0 0.0
    %5165 = vmatprep.subr.mxu0 0.0
    %5166 = vmatpush1.msra.mxu0 0.0
    %5167 = vmatprep.subr.mxu0 0.0
    %5168 = vmatpush1.msra.mxu0 0.0
    %5169 = vmatprep.subr.mxu0 0.0
    %5170 = vmatpush1.msra.mxu0 0.0
    %5171 = vmatprep.subr.mxu0 0.0
    %5172 = vmatpush1.msra.mxu0 0.0
    %5173 = vmatprep.subr.mxu0 0.0
    %5174 = vmatpush1.msra.mxu0 0.0
    %5175 = vmatprep.subr.mxu0 0.0
    %5176 = vmatpush1.msra.mxu0 0.0
    %5177 = vmatprep.subr.mxu0 0.0
    %5178 = vmatpush1.msra.mxu0 0.0
    %5179 = vmatprep.subr.mxu0 0.0
    %5180 = vmatpush1.msra.mxu0 0.0
    %5181 = vmatprep.mubr.f32.mxu0 0.0
    %5182 = vmatmul.mubr.f32.gmra.mrb[0].mxu0 %v4429
    %v5183 = vpop.f32.mrb[0].mxu0
    %v5184 = vadd.f32 %v5115, %v5183
    %v5185 = vpop.f32.mrb[0].mxu0
    %5186 = vdwg.mxu0
    %v5187 = vld [vmem:[%s31] sm:$0xff]
    %v5188 = vld [vmem:[%s31 + $0x8] sm:$0xff]
    %v5189 = vld [vmem:[%s31 + $0x10] sm:$0xff]
    %v5190 = vld [vmem:[%s31 + $0x18] sm:$0xff]
    %v5191 = vld [vmem:[%s31 + $0x20] sm:$0xff]
    %v5192 = vld [vmem:[%s31 + $0x28] sm:$0xff]
    %v5193 = vld [vmem:[%s31 + $0x30] sm:$0xff]
    %v5194 = vld [vmem:[%s31 + $0x38] sm:$0xff]
    %v5195 = vld [vmem:[%s31 + $0x40] sm:$0xff]
    %v5196 = vld [vmem:[%s31 + $0x48] sm:$0xff]
    %v5197 = vld [vmem:[%s31 + $0x50] sm:$0xff]
    %v5198 = vld [vmem:[%s31 + $0x58] sm:$0xff]
    %v5199 = vld [vmem:[%s31 + $0x60] sm:$0xff]
    %v5200 = vld [vmem:[%s31 + $0x68] sm:$0xff]
    %v5201 = vld [vmem:[%s31 + $0x70] sm:$0xff]
    %v5202 = vld [vmem:[%s31 + $0x78] sm:$0xff]
    %v5203 = vld [vmem:[%s37] sm:$0x1]
    %v5205 = vlaneseq
    %v5206 = vshrl.u32 %v5205, 7
    %v5207 = vsub.s32 0, %v5206
    %v5208 = vrot.slane %v5203, %v5207
    %5210 = vmatprep.subr.mxu0 0.0
    %5211 = vmatpush1.msra.mxu0 %v5187
    %5212 = vmatprep.subr.mxu0 0.0
    %5213 = vmatpush1.msra.mxu0 %v5188
    %5214 = vmatprep.subr.mxu0 0.0
    %5215 = vmatpush1.msra.mxu0 %v5189
    %5216 = vmatprep.subr.mxu0 0.0
    %5217 = vmatpush1.msra.mxu0 %v5190
    %5218 = vmatprep.subr.mxu0 0.0
    %5219 = vmatpush1.msra.mxu0 %v5191
    %5220 = vmatprep.subr.mxu0 0.0
    %5221 = vmatpush1.msra.mxu0 %v5192
    %5222 = vmatprep.subr.mxu0 0.0
    %5223 = vmatpush1.msra.mxu0 %v5193
    %5224 = vmatprep.subr.mxu0 0.0
    %5225 = vmatpush1.msra.mxu0 %v5194
    %5226 = vmatprep.subr.mxu0 0.0
    %5227 = vmatpush1.msra.mxu0 %v5195
    %5228 = vmatprep.subr.mxu0 0.0
    %5229 = vmatpush1.msra.mxu0 %v5196
    %5230 = vmatprep.subr.mxu0 0.0
    %5231 = vmatpush1.msra.mxu0 %v5197
    %5232 = vmatprep.subr.mxu0 0.0
    %5233 = vmatpush1.msra.mxu0 %v5198
    %5234 = vmatprep.subr.mxu0 0.0
    %5235 = vmatpush1.msra.mxu0 %v5199
    %5236 = vmatprep.subr.mxu0 0.0
    %5237 = vmatpush1.msra.mxu0 %v5200
    %5238 = vmatprep.subr.mxu0 0.0
    %5239 = vmatpush1.msra.mxu0 %v5201
    %5240 = vmatprep.subr.mxu0 0.0
    %5241 = vmatpush1.msra.mxu0 %v5202
    %5242 = vmatprep.subr.mxu0 0.0
    %5243 = vmatpush1.msra.mxu0 0.0
    %5244 = vmatprep.subr.mxu0 0.0
    %5245 = vmatpush1.msra.mxu0 0.0
    %5246 = vmatprep.subr.mxu0 0.0
    %5247 = vmatpush1.msra.mxu0 0.0
    %5248 = vmatprep.subr.mxu0 0.0
    %5249 = vmatpush1.msra.mxu0 0.0
    %5250 = vmatprep.subr.mxu0 0.0
    %5251 = vmatpush1.msra.mxu0 0.0
    %5252 = vmatprep.subr.mxu0 0.0
    %5253 = vmatpush1.msra.mxu0 0.0
    %5254 = vmatprep.subr.mxu0 0.0
    %5255 = vmatpush1.msra.mxu0 0.0
    %5256 = vmatprep.subr.mxu0 0.0
    %5257 = vmatpush1.msra.mxu0 0.0
    %5258 = vmatprep.subr.mxu0 0.0
    %5259 = vmatpush1.msra.mxu0 0.0
    %5260 = vmatprep.subr.mxu0 0.0
    %5261 = vmatpush1.msra.mxu0 0.0
    %5262 = vmatprep.subr.mxu0 0.0
    %5263 = vmatpush1.msra.mxu0 0.0
    %5264 = vmatprep.subr.mxu0 0.0
    %5265 = vmatpush1.msra.mxu0 0.0
    %5266 = vmatprep.subr.mxu0 0.0
    %5267 = vmatpush1.msra.mxu0 0.0
    %5268 = vmatprep.subr.mxu0 0.0
    %5269 = vmatpush1.msra.mxu0 0.0
    %5270 = vmatprep.subr.mxu0 0.0
    %5271 = vmatpush1.msra.mxu0 0.0
    %5272 = vmatprep.subr.mxu0 0.0
    %5273 = vmatpush1.msra.mxu0 0.0
    %5274 = vmatprep.mubr.f32.mxu0 0.0
    %5275 = vmatmul.mubr.f32.gmra.mrb[0].mxu0 %v133
    %v5276 = vpop.f32.mrb[0].mxu0
    %v5277 = vadd.f32 %v5208, %v5276
    %v5278 = vpop.f32.mrb[0].mxu0
    %5279 = vdwg.mxu0
    %s5280 = scalar_lea.vmem %s31, 128
    %v5281 = vld [vmem:[%s5280] sm:$0xff]
    %v5282 = vld [vmem:[%s5280 + $0x8] sm:$0xff]
    %v5283 = vld [vmem:[%s5280 + $0x10] sm:$0xff]
    %v5284 = vld [vmem:[%s5280 + $0x18] sm:$0xff]
    %v5285 = vld [vmem:[%s5280 + $0x20] sm:$0xff]
    %v5286 = vld [vmem:[%s5280 + $0x28] sm:$0xff]
    %v5287 = vld [vmem:[%s5280 + $0x30] sm:$0xff]
    %v5288 = vld [vmem:[%s5280 + $0x38] sm:$0xff]
    %v5289 = vld [vmem:[%s5280 + $0x40] sm:$0xff]
    %v5290 = vld [vmem:[%s5280 + $0x48] sm:$0xff]
    %v5291 = vld [vmem:[%s5280 + $0x50] sm:$0xff]
    %v5292 = vld [vmem:[%s5280 + $0x58] sm:$0xff]
    %v5293 = vld [vmem:[%s5280 + $0x60] sm:$0xff]
    %v5294 = vld [vmem:[%s5280 + $0x68] sm:$0xff]
    %v5295 = vld [vmem:[%s5280 + $0x70] sm:$0xff]
    %v5296 = vld [vmem:[%s5280 + $0x78] sm:$0xff]
    %s5297 = scalar_lea.vmem %s37, 1
    %v5298 = vld [vmem:[%s5297] sm:$0x1]
    %v5300 = vlaneseq
    %v5301 = vshrl.u32 %v5300, 7
    %v5302 = vsub.s32 0, %v5301
    %v5303 = vrot.slane %v5298, %v5302
    %5305 = vmatprep.subr.mxu0 0.0
    %5306 = vmatpush1.msra.mxu0 %v5281
    %5307 = vmatprep.subr.mxu0 0.0
    %5308 = vmatpush1.msra.mxu0 %v5282
    %5309 = vmatprep.subr.mxu0 0.0
    %5310 = vmatpush1.msra.mxu0 %v5283
    %5311 = vmatprep.subr.mxu0 0.0
    %5312 = vmatpush1.msra.mxu0 %v5284
    %5313 = vmatprep.subr.mxu0 0.0
    %5314 = vmatpush1.msra.mxu0 %v5285
    %5315 = vmatprep.subr.mxu0 0.0
    %5316 = vmatpush1.msra.mxu0 %v5286
    %5317 = vmatprep.subr.mxu0 0.0
    %5318 = vmatpush1.msra.mxu0 %v5287
    %5319 = vmatprep.subr.mxu0 0.0
    %5320 = vmatpush1.msra.mxu0 %v5288
    %5321 = vmatprep.subr.mxu0 0.0
    %5322 = vmatpush1.msra.mxu0 %v5289
    %5323 = vmatprep.subr.mxu0 0.0
    %5324 = vmatpush1.msra.mxu0 %v5290
    %5325 = vmatprep.subr.mxu0 0.0
    %5326 = vmatpush1.msra.mxu0 %v5291
    %5327 = vmatprep.subr.mxu0 0.0
    %5328 = vmatpush1.msra.mxu0 %v5292
    %5329 = vmatprep.subr.mxu0 0.0
    %5330 = vmatpush1.msra.mxu0 %v5293
    %5331 = vmatprep.subr.mxu0 0.0
    %5332 = vmatpush1.msra.mxu0 %v5294
    %5333 = vmatprep.subr.mxu0 0.0
    %5334 = vmatpush1.msra.mxu0 %v5295
    %5335 = vmatprep.subr.mxu0 0.0
    %5336 = vmatpush1.msra.mxu0 %v5296
    %5337 = vmatprep.subr.mxu0 0.0
    %5338 = vmatpush1.msra.mxu0 0.0
    %5339 = vmatprep.subr.mxu0 0.0
    %5340 = vmatpush1.msra.mxu0 0.0
    %5341 = vmatprep.subr.mxu0 0.0
    %5342 = vmatpush1.msra.mxu0 0.0
    %5343 = vmatprep.subr.mxu0 0.0
    %5344 = vmatpush1.msra.mxu0 0.0
    %5345 = vmatprep.subr.mxu0 0.0
    %5346 = vmatpush1.msra.mxu0 0.0
    %5347 = vmatprep.subr.mxu0 0.0
    %5348 = vmatpush1.msra.mxu0 0.0
    %5349 = vmatprep.subr.mxu0 0.0
    %5350 = vmatpush1.msra.mxu0 0.0
    %5351 = vmatprep.subr.mxu0 0.0
    %5352 = vmatpush1.msra.mxu0 0.0
    %5353 = vmatprep.subr.mxu0 0.0
    %5354 = vmatpush1.msra.mxu0 0.0
    %5355 = vmatprep.subr.mxu0 0.0
    %5356 = vmatpush1.msra.mxu0 0.0
    %5357 = vmatprep.subr.mxu0 0.0
    %5358 = vmatpush1.msra.mxu0 0.0
    %5359 = vmatprep.subr.mxu0 0.0
    %5360 = vmatpush1.msra.mxu0 0.0
    %5361 = vmatprep.subr.mxu0 0.0
    %5362 = vmatpush1.msra.mxu0 0.0
    %5363 = vmatprep.subr.mxu0 0.0
    %5364 = vmatpush1.msra.mxu0 0.0
    %5365 = vmatprep.subr.mxu0 0.0
    %5366 = vmatpush1.msra.mxu0 0.0
    %5367 = vmatprep.subr.mxu0 0.0
    %5368 = vmatpush1.msra.mxu0 0.0
    %5369 = vmatprep.mubr.f32.mxu0 0.0
    %5370 = vmatmul.mubr.f32.gmra.mrb[0].mxu0 %v133
    %v5371 = vpop.f32.mrb[0].mxu0
    %v5372 = vadd.f32 %v5303, %v5371
    %v5373 = vpop.f32.mrb[0].mxu0
    %5374 = vdwg.mxu0
    %s5375 = scalar_lea.vmem %s31, 256
    %v5376 = vld [vmem:[%s5375] sm:$0xff]
    %v5377 = vld [vmem:[%s5375 + $0x8] sm:$0xff]
    %v5378 = vld [vmem:[%s5375 + $0x10] sm:$0xff]
    %v5379 = vld [vmem:[%s5375 + $0x18] sm:$0xff]
    %v5380 = vld [vmem:[%s5375 + $0x20] sm:$0xff]
    %v5381 = vld [vmem:[%s5375 + $0x28] sm:$0xff]
    %v5382 = vld [vmem:[%s5375 + $0x30] sm:$0xff]
    %v5383 = vld [vmem:[%s5375 + $0x38] sm:$0xff]
    %v5384 = vld [vmem:[%s5375 + $0x40] sm:$0xff]
    %v5385 = vld [vmem:[%s5375 + $0x48] sm:$0xff]
    %v5386 = vld [vmem:[%s5375 + $0x50] sm:$0xff]
    %v5387 = vld [vmem:[%s5375 + $0x58] sm:$0xff]
    %v5388 = vld [vmem:[%s5375 + $0x60] sm:$0xff]
    %v5389 = vld [vmem:[%s5375 + $0x68] sm:$0xff]
    %v5390 = vld [vmem:[%s5375 + $0x70] sm:$0xff]
    %v5391 = vld [vmem:[%s5375 + $0x78] sm:$0xff]
    %s5392 = scalar_lea.vmem %s37, 2
    %v5393 = vld [vmem:[%s5392] sm:$0x1]
    %v5395 = vlaneseq
    %v5396 = vshrl.u32 %v5395, 7
    %v5397 = vsub.s32 0, %v5396
    %v5398 = vrot.slane %v5393, %v5397
    %5400 = vmatprep.subr.mxu0 0.0
    %5401 = vmatpush1.msra.mxu0 %v5376
    %5402 = vmatprep.subr.mxu0 0.0
    %5403 = vmatpush1.msra.mxu0 %v5377
    %5404 = vmatprep.subr.mxu0 0.0
    %5405 = vmatpush1.msra.mxu0 %v5378
    %5406 = vmatprep.subr.mxu0 0.0
    %5407 = vmatpush1.msra.mxu0 %v5379
    %5408 = vmatprep.subr.mxu0 0.0
    %5409 = vmatpush1.msra.mxu0 %v5380
    %5410 = vmatprep.subr.mxu0 0.0
    %5411 = vmatpush1.msra.mxu0 %v5381
    %5412 = vmatprep.subr.mxu0 0.0
    %5413 = vmatpush1.msra.mxu0 %v5382
    %5414 = vmatprep.subr.mxu0 0.0
    %5415 = vmatpush1.msra.mxu0 %v5383
    %5416 = vmatprep.subr.mxu0 0.0
    %5417 = vmatpush1.msra.mxu0 %v5384
    %5418 = vmatprep.subr.mxu0 0.0
    %5419 = vmatpush1.msra.mxu0 %v5385
    %5420 = vmatprep.subr.mxu0 0.0
    %5421 = vmatpush1.msra.mxu0 %v5386
    %5422 = vmatprep.subr.mxu0 0.0
    %5423 = vmatpush1.msra.mxu0 %v5387
    %5424 = vmatprep.subr.mxu0 0.0
    %5425 = vmatpush1.msra.mxu0 %v5388
    %5426 = vmatprep.subr.mxu0 0.0
    %5427 = vmatpush1.msra.mxu0 %v5389
    %5428 = vmatprep.subr.mxu0 0.0
    %5429 = vmatpush1.msra.mxu0 %v5390
    %5430 = vmatprep.subr.mxu0 0.0
    %5431 = vmatpush1.msra.mxu0 %v5391
    %5432 = vmatprep.subr.mxu0 0.0
    %5433 = vmatpush1.msra.mxu0 0.0
    %5434 = vmatprep.subr.mxu0 0.0
    %5435 = vmatpush1.msra.mxu0 0.0
    %5436 = vmatprep.subr.mxu0 0.0
    %5437 = vmatpush1.msra.mxu0 0.0
    %5438 = vmatprep.subr.mxu0 0.0
    %5439 = vmatpush1.msra.mxu0 0.0
    %5440 = vmatprep.subr.mxu0 0.0
    %5441 = vmatpush1.msra.mxu0 0.0
    %5442 = vmatprep.subr.mxu0 0.0
    %5443 = vmatpush1.msra.mxu0 0.0
    %5444 = vmatprep.subr.mxu0 0.0
    %5445 = vmatpush1.msra.mxu0 0.0
    %5446 = vmatprep.subr.mxu0 0.0
    %5447 = vmatpush1.msra.mxu0 0.0
    %5448 = vmatprep.subr.mxu0 0.0
    %5449 = vmatpush1.msra.mxu0 0.0
    %5450 = vmatprep.subr.mxu0 0.0
    %5451 = vmatpush1.msra.mxu0 0.0
    %5452 = vmatprep.subr.mxu0 0.0
    %5453 = vmatpush1.msra.mxu0 0.0
    %5454 = vmatprep.subr.mxu0 0.0
    %5455 = vmatpush1.msra.mxu0 0.0
    %5456 = vmatprep.subr.mxu0 0.0
    %5457 = vmatpush1.msra.mxu0 0.0
    %5458 = vmatprep.subr.mxu0 0.0
    %5459 = vmatpush1.msra.mxu0 0.0
    %5460 = vmatprep.subr.mxu0 0.0
    %5461 = vmatpush1.msra.mxu0 0.0
    %5462 = vmatprep.subr.mxu0 0.0
    %5463 = vmatpush1.msra.mxu0 0.0
    %5464 = vmatprep.mubr.f32.mxu0 0.0
    %5465 = vmatmul.mubr.f32.gmra.mrb[0].mxu0 %v133
    %v5466 = vpop.f32.mrb[0].mxu0
    %v5467 = vadd.f32 %v5398, %v5466
    %v5468 = vpop.f32.mrb[0].mxu0
    %5469 = vdwg.mxu0
    %s5470 = scalar_lea.vmem %s31, 384
    %v5471 = vld [vmem:[%s5470] sm:$0xff]
    %v5472 = vld [vmem:[%s5470 + $0x8] sm:$0xff]
    %v5473 = vld [vmem:[%s5470 + $0x10] sm:$0xff]
    %v5474 = vld [vmem:[%s5470 + $0x18] sm:$0xff]
    %v5475 = vld [vmem:[%s5470 + $0x20] sm:$0xff]
    %v5476 = vld [vmem:[%s5470 + $0x28] sm:$0xff]
    %v5477 = vld [vmem:[%s5470 + $0x30] sm:$0xff]
    %v5478 = vld [vmem:[%s5470 + $0x38] sm:$0xff]
    %v5479 = vld [vmem:[%s5470 + $0x40] sm:$0xff]
    %v5480 = vld [vmem:[%s5470 + $0x48] sm:$0xff]
    %v5481 = vld [vmem:[%s5470 + $0x50] sm:$0xff]
    %v5482 = vld [vmem:[%s5470 + $0x58] sm:$0xff]
    %v5483 = vld [vmem:[%s5470 + $0x60] sm:$0xff]
    %v5484 = vld [vmem:[%s5470 + $0x68] sm:$0xff]
    %v5485 = vld [vmem:[%s5470 + $0x70] sm:$0xff]
    %v5486 = vld [vmem:[%s5470 + $0x78] sm:$0xff]
    %s5487 = scalar_lea.vmem %s37, 3
    %v5488 = vld [vmem:[%s5487] sm:$0x1]
    %v5490 = vlaneseq
    %v5491 = vshrl.u32 %v5490, 7
    %v5492 = vsub.s32 0, %v5491
    %v5493 = vrot.slane %v5488, %v5492
    %5495 = vmatprep.subr.mxu0 0.0
    %5496 = vmatpush1.msra.mxu0 %v5471
    %5497 = vmatprep.subr.mxu0 0.0
    %5498 = vmatpush1.msra.mxu0 %v5472
    %5499 = vmatprep.subr.mxu0 0.0
    %5500 = vmatpush1.msra.mxu0 %v5473
    %5501 = vmatprep.subr.mxu0 0.0
    %5502 = vmatpush1.msra.mxu0 %v5474
    %5503 = vmatprep.subr.mxu0 0.0
    %5504 = vmatpush1.msra.mxu0 %v5475
    %5505 = vmatprep.subr.mxu0 0.0
    %5506 = vmatpush1.msra.mxu0 %v5476
    %5507 = vmatprep.subr.mxu0 0.0
    %5508 = vmatpush1.msra.mxu0 %v5477
    %5509 = vmatprep.subr.mxu0 0.0
    %5510 = vmatpush1.msra.mxu0 %v5478
    %5511 = vmatprep.subr.mxu0 0.0
    %5512 = vmatpush1.msra.mxu0 %v5479
    %5513 = vmatprep.subr.mxu0 0.0
    %5514 = vmatpush1.msra.mxu0 %v5480
    %5515 = vmatprep.subr.mxu0 0.0
    %5516 = vmatpush1.msra.mxu0 %v5481
    %5517 = vmatprep.subr.mxu0 0.0
    %5518 = vmatpush1.msra.mxu0 %v5482
    %5519 = vmatprep.subr.mxu0 0.0
    %5520 = vmatpush1.msra.mxu0 %v5483
    %5521 = vmatprep.subr.mxu0 0.0
    %5522 = vmatpush1.msra.mxu0 %v5484
    %5523 = vmatprep.subr.mxu0 0.0
    %5524 = vmatpush1.msra.mxu0 %v5485
    %5525 = vmatprep.subr.mxu0 0.0
    %5526 = vmatpush1.msra.mxu0 %v5486
    %5527 = vmatprep.subr.mxu0 0.0
    %5528 = vmatpush1.msra.mxu0 0.0
    %5529 = vmatprep.subr.mxu0 0.0
    %5530 = vmatpush1.msra.mxu0 0.0
    %5531 = vmatprep.subr.mxu0 0.0
    %5532 = vmatpush1.msra.mxu0 0.0
    %5533 = vmatprep.subr.mxu0 0.0
    %5534 = vmatpush1.msra.mxu0 0.0
    %5535 = vmatprep.subr.mxu0 0.0
    %5536 = vmatpush1.msra.mxu0 0.0
    %5537 = vmatprep.subr.mxu0 0.0
    %5538 = vmatpush1.msra.mxu0 0.0
    %5539 = vmatprep.subr.mxu0 0.0
    %5540 = vmatpush1.msra.mxu0 0.0
    %5541 = vmatprep.subr.mxu0 0.0
    %5542 = vmatpush1.msra.mxu0 0.0
    %5543 = vmatprep.subr.mxu0 0.0
    %5544 = vmatpush1.msra.mxu0 0.0
    %5545 = vmatprep.subr.mxu0 0.0
    %5546 = vmatpush1.msra.mxu0 0.0
    %5547 = vmatprep.subr.mxu0 0.0
    %5548 = vmatpush1.msra.mxu0 0.0
    %5549 = vmatprep.subr.mxu0 0.0
    %5550 = vmatpush1.msra.mxu0 0.0
    %5551 = vmatprep.subr.mxu0 0.0
    %5552 = vmatpush1.msra.mxu0 0.0
    %5553 = vmatprep.subr.mxu0 0.0
    %5554 = vmatpush1.msra.mxu0 0.0
    %5555 = vmatprep.subr.mxu0 0.0
    %5556 = vmatpush1.msra.mxu0 0.0
    %5557 = vmatprep.subr.mxu0 0.0
    %5558 = vmatpush1.msra.mxu0 0.0
    %5559 = vmatprep.mubr.f32.mxu0 0.0
    %5560 = vmatmul.mubr.f32.gmra.mrb[0].mxu0 %v133
    %v5561 = vpop.f32.mrb[0].mxu0
    %v5562 = vadd.f32 %v5493, %v5561
    %v5563 = vpop.f32.mrb[0].mxu0
    %5564 = vdwg.mxu0
    %v5566 = vsel %vm1299, %v4521, 0
    %v5569 = vsel %vm1299, %v4899, 0
    %5571 = vmatprep.subr.mxu0 0.0
    %5572 = vmatpush1.xpose.msra.mxu0 %v5569
    %5573 = vmatprep.subr.mxu0 0.0
    %5574 = vmatpush1.xpose.msra.mxu0 0.0
    %5575 = vmatprep.subr.mxu0 0.0
    %5576 = vmatpush1.xpose.msra.mxu0 0.0
    %5577 = vmatprep.subr.mxu0 0.0
    %5578 = vmatpush1.xpose.msra.mxu0 0.0
    %5579 = vmatprep.subr.mxu0 0.0
    %5580 = vmatpush1.xpose.msra.mxu0 0.0
    %5581 = vmatprep.subr.mxu0 0.0
    %5582 = vmatpush1.xpose.msra.mxu0 0.0
    %5583 = vmatprep.subr.mxu0 0.0
    %5584 = vmatpush1.xpose.msra.mxu0 0.0
    %5585 = vmatprep.subr.mxu0 0.0
    %5586 = vmatpush1.xpose.msra.mxu0 0.0
    %5587 = vmatprep.subr.mxu0 0.0
    %5588 = vmatpush1.xpose.msra.mxu0 0.0
    %5589 = vmatprep.subr.mxu0 0.0
    %5590 = vmatpush1.xpose.msra.mxu0 0.0
    %5591 = vmatprep.subr.mxu0 0.0
    %5592 = vmatpush1.xpose.msra.mxu0 0.0
    %5593 = vmatprep.subr.mxu0 0.0
    %5594 = vmatpush1.xpose.msra.mxu0 0.0
    %5595 = vmatprep.subr.mxu0 0.0
    %5596 = vmatpush1.xpose.msra.mxu0 0.0
    %5597 = vmatprep.subr.mxu0 0.0
    %5598 = vmatpush1.xpose.msra.mxu0 0.0
    %5599 = vmatprep.subr.mxu0 0.0
    %5600 = vmatpush1.xpose.msra.mxu0 0.0
    %5601 = vmatprep.subr.mxu0 0.0
    %5602 = vmatpush1.xpose.msra.mxu0 0.0
    %5603 = vmatprep.subr.mxu0 0.0
    %5604 = vmatpush1.xpose.msra.mxu0 0.0
    %5605 = vmatprep.subr.mxu0 0.0
    %5606 = vmatpush1.xpose.msra.mxu0 0.0
    %5607 = vmatprep.subr.mxu0 0.0
    %5608 = vmatpush1.xpose.msra.mxu0 0.0
    %5609 = vmatprep.subr.mxu0 0.0
    %5610 = vmatpush1.xpose.msra.mxu0 0.0
    %5611 = vmatprep.subr.mxu0 0.0
    %5612 = vmatpush1.xpose.msra.mxu0 0.0
    %5613 = vmatprep.subr.mxu0 0.0
    %5614 = vmatpush1.xpose.msra.mxu0 0.0
    %5615 = vmatprep.subr.mxu0 0.0
    %5616 = vmatpush1.xpose.msra.mxu0 0.0
    %5617 = vmatprep.subr.mxu0 0.0
    %5618 = vmatpush1.xpose.msra.mxu0 0.0
    %5619 = vmatprep.subr.mxu0 0.0
    %5620 = vmatpush1.xpose.msra.mxu0 0.0
    %5621 = vmatprep.subr.mxu0 0.0
    %5622 = vmatpush1.xpose.msra.mxu0 0.0
    %5623 = vmatprep.subr.mxu0 0.0
    %5624 = vmatpush1.xpose.msra.mxu0 0.0
    %5625 = vmatprep.subr.mxu0 0.0
    %5626 = vmatpush1.xpose.msra.mxu0 0.0
    %5627 = vmatprep.subr.mxu0 0.0
    %5628 = vmatpush1.xpose.msra.mxu0 0.0
    %5629 = vmatprep.subr.mxu0 0.0
    %5630 = vmatpush1.xpose.msra.mxu0 0.0
    %5631 = vmatprep.subr.mxu0 0.0
    %5632 = vmatpush1.xpose.msra.mxu0 0.0
    %5633 = vmatprep.subr.mxu0 0.0
    %5634 = vmatpush1.xpose.msra.mxu0 0.0
    %5635 = vmatprep.mubr.f32.mxu0 0.0
    %5636 = vmatmul.mubr.f32.gmra.mrb[0].mxu0 %v5566
    %v5637 = vpop.f32.mrb[0].mxu0
    %v5638 = vadd.f32 0.0, %v5637
    %v5639 = vpop.f32.mrb[0].mxu0
    %5640 = vdwg.mxu0
    %v5642 = vsel %vm1299, %v4616, 0
    %v5645 = vsel %vm1299, %v4994, 0
    %5647 = vmatprep.subr.mxu0 0.0
    %5648 = vmatpush1.xpose.msra.mxu0 %v5645
    %5649 = vmatprep.subr.mxu0 0.0
    %5650 = vmatpush1.xpose.msra.mxu0 0.0
    %5651 = vmatprep.subr.mxu0 0.0
    %5652 = vmatpush1.xpose.msra.mxu0 0.0
    %5653 = vmatprep.subr.mxu0 0.0
    %5654 = vmatpush1.xpose.msra.mxu0 0.0
    %5655 = vmatprep.subr.mxu0 0.0
    %5656 = vmatpush1.xpose.msra.mxu0 0.0
    %5657 = vmatprep.subr.mxu0 0.0
    %5658 = vmatpush1.xpose.msra.mxu0 0.0
    %5659 = vmatprep.subr.mxu0 0.0
    %5660 = vmatpush1.xpose.msra.mxu0 0.0
    %5661 = vmatprep.subr.mxu0 0.0
    %5662 = vmatpush1.xpose.msra.mxu0 0.0
    %5663 = vmatprep.subr.mxu0 0.0
    %5664 = vmatpush1.xpose.msra.mxu0 0.0
    %5665 = vmatprep.subr.mxu0 0.0
    %5666 = vmatpush1.xpose.msra.mxu0 0.0
    %5667 = vmatprep.subr.mxu0 0.0
    %5668 = vmatpush1.xpose.msra.mxu0 0.0
    %5669 = vmatprep.subr.mxu0 0.0
    %5670 = vmatpush1.xpose.msra.mxu0 0.0
    %5671 = vmatprep.subr.mxu0 0.0
    %5672 = vmatpush1.xpose.msra.mxu0 0.0
    %5673 = vmatprep.subr.mxu0 0.0
    %5674 = vmatpush1.xpose.msra.mxu0 0.0
    %5675 = vmatprep.subr.mxu0 0.0
    %5676 = vmatpush1.xpose.msra.mxu0 0.0
    %5677 = vmatprep.subr.mxu0 0.0
    %5678 = vmatpush1.xpose.msra.mxu0 0.0
    %5679 = vmatprep.subr.mxu0 0.0
    %5680 = vmatpush1.xpose.msra.mxu0 0.0
    %5681 = vmatprep.subr.mxu0 0.0
    %5682 = vmatpush1.xpose.msra.mxu0 0.0
    %5683 = vmatprep.subr.mxu0 0.0
    %5684 = vmatpush1.xpose.msra.mxu0 0.0
    %5685 = vmatprep.subr.mxu0 0.0
    %5686 = vmatpush1.xpose.msra.mxu0 0.0
    %5687 = vmatprep.subr.mxu0 0.0
    %5688 = vmatpush1.xpose.msra.mxu0 0.0
    %5689 = vmatprep.subr.mxu0 0.0
    %5690 = vmatpush1.xpose.msra.mxu0 0.0
    %5691 = vmatprep.subr.mxu0 0.0
    %5692 = vmatpush1.xpose.msra.mxu0 0.0
    %5693 = vmatprep.subr.mxu0 0.0
    %5694 = vmatpush1.xpose.msra.mxu0 0.0
    %5695 = vmatprep.subr.mxu0 0.0
    %5696 = vmatpush1.xpose.msra.mxu0 0.0
    %5697 = vmatprep.subr.mxu0 0.0
    %5698 = vmatpush1.xpose.msra.mxu0 0.0
    %5699 = vmatprep.subr.mxu0 0.0
    %5700 = vmatpush1.xpose.msra.mxu0 0.0
    %5701 = vmatprep.subr.mxu0 0.0
    %5702 = vmatpush1.xpose.msra.mxu0 0.0
    %5703 = vmatprep.subr.mxu0 0.0
    %5704 = vmatpush1.xpose.msra.mxu0 0.0
    %5705 = vmatprep.subr.mxu0 0.0
    %5706 = vmatpush1.xpose.msra.mxu0 0.0
    %5707 = vmatprep.subr.mxu0 0.0
    %5708 = vmatpush1.xpose.msra.mxu0 0.0
    %5709 = vmatprep.subr.mxu0 0.0
    %5710 = vmatpush1.xpose.msra.mxu0 0.0
    %5711 = vmatprep.mubr.f32.mxu0 0.0
    %5712 = vmatmul.mubr.f32.gmra.mrb[0].mxu0 %v5642
    %v5713 = vpop.f32.mrb[0].mxu0
    %v5714 = vadd.f32 0.0, %v5713
    %v5715 = vpop.f32.mrb[0].mxu0
    %5716 = vdwg.mxu0
    %v5718 = vsel %vm1299, %v4711, 0
    %v5721 = vsel %vm1299, %v5089, 0
    %5723 = vmatprep.subr.mxu0 0.0
    %5724 = vmatpush1.xpose.msra.mxu0 %v5721
    %5725 = vmatprep.subr.mxu0 0.0
    %5726 = vmatpush1.xpose.msra.mxu0 0.0
    %5727 = vmatprep.subr.mxu0 0.0
    %5728 = vmatpush1.xpose.msra.mxu0 0.0
    %5729 = vmatprep.subr.mxu0 0.0
    %5730 = vmatpush1.xpose.msra.mxu0 0.0
    %5731 = vmatprep.subr.mxu0 0.0
    %5732 = vmatpush1.xpose.msra.mxu0 0.0
    %5733 = vmatprep.subr.mxu0 0.0
    %5734 = vmatpush1.xpose.msra.mxu0 0.0
    %5735 = vmatprep.subr.mxu0 0.0
    %5736 = vmatpush1.xpose.msra.mxu0 0.0
    %5737 = vmatprep.subr.mxu0 0.0
    %5738 = vmatpush1.xpose.msra.mxu0 0.0
    %5739 = vmatprep.subr.mxu0 0.0
    %5740 = vmatpush1.xpose.msra.mxu0 0.0
    %5741 = vmatprep.subr.mxu0 0.0
    %5742 = vmatpush1.xpose.msra.mxu0 0.0
    %5743 = vmatprep.subr.mxu0 0.0
    %5744 = vmatpush1.xpose.msra.mxu0 0.0
    %5745 = vmatprep.subr.mxu0 0.0
    %5746 = vmatpush1.xpose.msra.mxu0 0.0
    %5747 = vmatprep.subr.mxu0 0.0
    %5748 = vmatpush1.xpose.msra.mxu0 0.0
    %5749 = vmatprep.subr.mxu0 0.0
    %5750 = vmatpush1.xpose.msra.mxu0 0.0
    %5751 = vmatprep.subr.mxu0 0.0
    %5752 = vmatpush1.xpose.msra.mxu0 0.0
    %5753 = vmatprep.subr.mxu0 0.0
    %5754 = vmatpush1.xpose.msra.mxu0 0.0
    %5755 = vmatprep.subr.mxu0 0.0
    %5756 = vmatpush1.xpose.msra.mxu0 0.0
    %5757 = vmatprep.subr.mxu0 0.0
    %5758 = vmatpush1.xpose.msra.mxu0 0.0
    %5759 = vmatprep.subr.mxu0 0.0
    %5760 = vmatpush1.xpose.msra.mxu0 0.0
    %5761 = vmatprep.subr.mxu0 0.0
    %5762 = vmatpush1.xpose.msra.mxu0 0.0
    %5763 = vmatprep.subr.mxu0 0.0
    %5764 = vmatpush1.xpose.msra.mxu0 0.0
    %5765 = vmatprep.subr.mxu0 0.0
    %5766 = vmatpush1.xpose.msra.mxu0 0.0
    %5767 = vmatprep.subr.mxu0 0.0
    %5768 = vmatpush1.xpose.msra.mxu0 0.0
    %5769 = vmatprep.subr.mxu0 0.0
    %5770 = vmatpush1.xpose.msra.mxu0 0.0
    %5771 = vmatprep.subr.mxu0 0.0
    %5772 = vmatpush1.xpose.msra.mxu0 0.0
    %5773 = vmatprep.subr.mxu0 0.0
    %5774 = vmatpush1.xpose.msra.mxu0 0.0
    %5775 = vmatprep.subr.mxu0 0.0
    %5776 = vmatpush1.xpose.msra.mxu0 0.0
    %5777 = vmatprep.subr.mxu0 0.0
    %5778 = vmatpush1.xpose.msra.mxu0 0.0
    %5779 = vmatprep.subr.mxu0 0.0
    %5780 = vmatpush1.xpose.msra.mxu0 0.0
    %5781 = vmatprep.subr.mxu0 0.0
    %5782 = vmatpush1.xpose.msra.mxu0 0.0
    %5783 = vmatprep.subr.mxu0 0.0
    %5784 = vmatpush1.xpose.msra.mxu0 0.0
    %5785 = vmatprep.subr.mxu0 0.0
    %5786 = vmatpush1.xpose.msra.mxu0 0.0
    %5787 = vmatprep.mubr.f32.mxu0 0.0
    %5788 = vmatmul.mubr.f32.gmra.mrb[0].mxu0 %v5718
    %v5789 = vpop.f32.mrb[0].mxu0
    %v5790 = vadd.f32 0.0, %v5789
    %v5791 = vpop.f32.mrb[0].mxu0
    %5792 = vdwg.mxu0
    %v5794 = vsel %vm1299, %v4806, 0
    %v5797 = vsel %vm1299, %v5184, 0
    %5799 = vmatprep.subr.mxu0 0.0
    %5800 = vmatpush1.xpose.msra.mxu0 %v5797
    %5801 = vmatprep.subr.mxu0 0.0
    %5802 = vmatpush1.xpose.msra.mxu0 0.0
    %5803 = vmatprep.subr.mxu0 0.0
    %5804 = vmatpush1.xpose.msra.mxu0 0.0
    %5805 = vmatprep.subr.mxu0 0.0
    %5806 = vmatpush1.xpose.msra.mxu0 0.0
    %5807 = vmatprep.subr.mxu0 0.0
    %5808 = vmatpush1.xpose.msra.mxu0 0.0
    %5809 = vmatprep.subr.mxu0 0.0
    %5810 = vmatpush1.xpose.msra.mxu0 0.0
    %5811 = vmatprep.subr.mxu0 0.0
    %5812 = vmatpush1.xpose.msra.mxu0 0.0
    %5813 = vmatprep.subr.mxu0 0.0
    %5814 = vmatpush1.xpose.msra.mxu0 0.0
    %5815 = vmatprep.subr.mxu0 0.0
    %5816 = vmatpush1.xpose.msra.mxu0 0.0
    %5817 = vmatprep.subr.mxu0 0.0
    %5818 = vmatpush1.xpose.msra.mxu0 0.0
    %5819 = vmatprep.subr.mxu0 0.0
    %5820 = vmatpush1.xpose.msra.mxu0 0.0
    %5821 = vmatprep.subr.mxu0 0.0
    %5822 = vmatpush1.xpose.msra.mxu0 0.0
    %5823 = vmatprep.subr.mxu0 0.0
    %5824 = vmatpush1.xpose.msra.mxu0 0.0
    %5825 = vmatprep.subr.mxu0 0.0
    %5826 = vmatpush1.xpose.msra.mxu0 0.0
    %5827 = vmatprep.subr.mxu0 0.0
    %5828 = vmatpush1.xpose.msra.mxu0 0.0
    %5829 = vmatprep.subr.mxu0 0.0
    %5830 = vmatpush1.xpose.msra.mxu0 0.0
    %5831 = vmatprep.subr.mxu0 0.0
    %5832 = vmatpush1.xpose.msra.mxu0 0.0
    %5833 = vmatprep.subr.mxu0 0.0
    %5834 = vmatpush1.xpose.msra.mxu0 0.0
    %5835 = vmatprep.subr.mxu0 0.0
    %5836 = vmatpush1.xpose.msra.mxu0 0.0
    %5837 = vmatprep.subr.mxu0 0.0
    %5838 = vmatpush1.xpose.msra.mxu0 0.0
    %5839 = vmatprep.subr.mxu0 0.0
    %5840 = vmatpush1.xpose.msra.mxu0 0.0
    %5841 = vmatprep.subr.mxu0 0.0
    %5842 = vmatpush1.xpose.msra.mxu0 0.0
    %5843 = vmatprep.subr.mxu0 0.0
    %5844 = vmatpush1.xpose.msra.mxu0 0.0
    %5845 = vmatprep.subr.mxu0 0.0
    %5846 = vmatpush1.xpose.msra.mxu0 0.0
    %5847 = vmatprep.subr.mxu0 0.0
    %5848 = vmatpush1.xpose.msra.mxu0 0.0
    %5849 = vmatprep.subr.mxu0 0.0
    %5850 = vmatpush1.xpose.msra.mxu0 0.0
    %5851 = vmatprep.subr.mxu0 0.0
    %5852 = vmatpush1.xpose.msra.mxu0 0.0
    %5853 = vmatprep.subr.mxu0 0.0
    %5854 = vmatpush1.xpose.msra.mxu0 0.0
    %5855 = vmatprep.subr.mxu0 0.0
    %5856 = vmatpush1.xpose.msra.mxu0 0.0
    %5857 = vmatprep.subr.mxu0 0.0
    %5858 = vmatpush1.xpose.msra.mxu0 0.0
    %5859 = vmatprep.subr.mxu0 0.0
    %5860 = vmatpush1.xpose.msra.mxu0 0.0
    %5861 = vmatprep.subr.mxu0 0.0
    %5862 = vmatpush1.xpose.msra.mxu0 0.0
    %5863 = vmatprep.mubr.f32.mxu0 0.0
    %5864 = vmatmul.mubr.f32.gmra.mrb[0].mxu0 %v5794
    %v5865 = vpop.f32.mrb[0].mxu0
    %v5866 = vadd.f32 0.0, %v5865
    %v5867 = vpop.f32.mrb[0].mxu0
    %5868 = vdwg.mxu0
    %v5869 = vmul.f32 %v5638, 0.17677669
    %v5870 = vmul.f32 %v5714, 0.17677669
    %v5871 = vmul.f32 %v5790, 0.17677669
    %v5872 = vmul.f32 %v5866, 0.17677669
    %v5873 = vadd.f32 %v5869, %v146
    %v5874 = vadd.f32 %v5870, %v146
    %v5875 = vadd.f32 %v5871, %v146
    %v5876 = vadd.f32 %v5872, %v146
    %v5877 = vsel %vm1612, %v5873, -inf
    %5878 = vmax.xlane.f32.xlu0 %v5877
    %v5879 = vpop.xlane.xlu0 %5878
    %v5880 = vsel %vm1612, %v5874, -inf
    %5881 = vmax.xlane.f32.xlu0 %v5880
    %v5882 = vpop.xlane.xlu0 %5881
    %v5883 = vsel %vm1612, %v5875, -inf
    %5884 = vmax.xlane.f32.xlu0 %v5883
    %v5885 = vpop.xlane.xlu0 %5884
    %v5886 = vsel %vm1612, %v5876, -inf
    %5887 = vmax.xlane.f32.xlu0 %v5886
    %v5888 = vpop.xlane.xlu0 %5887
    %v5889 = vsub.f32 %v5873, %v5879
    %v5890 = vsub.f32 %v5874, %v5882
    %v5891 = vsub.f32 %v5875, %v5885
    %v5892 = vsub.f32 %v5876, %v5888
    %v5893 = vmul.f32 %v5889, 1.442695
    %v5894 = vpow.pop %v5893
    %v5895 = vmul.f32 %v5890, 1.442695
    %v5896 = vpow.pop %v5895
    %v5897 = vmul.f32 %v5891, 1.442695
    %v5898 = vpow.pop %v5897
    %v5899 = vmul.f32 %v5892, 1.442695
    %v5900 = vpow.pop %v5899
    %v5901 = vsel %vm1612, %v5894, 0.0
    %5902 = vadd.xlane.f32.xlu0 %v5901
    %v5903 = vpop.xlane.xlu0 %5902
    %v5904 = vsel %vm1612, %v5896, 0.0
    %5905 = vadd.xlane.f32.xlu0 %v5904
    %v5906 = vpop.xlane.xlu0 %5905
    %v5907 = vsel %vm1612, %v5898, 0.0
    %5908 = vadd.xlane.f32.xlu0 %v5907
    %v5909 = vpop.xlane.xlu0 %5908
    %v5910 = vsel %vm1612, %v5900, 0.0
    %5911 = vadd.xlane.f32.xlu0 %v5910
    %v5912 = vpop.xlane.xlu0 %5911
    %v5913 = vrcp.pop %v5903
    %v5914 = vrcp.pop %v5906
    %v5915 = vrcp.pop %v5909
    %v5916 = vrcp.pop %v5912
    %v5917 = vmul.f32 %v5894, %v5913
    %v5918 = vmul.f32 %v5896, %v5914
    %v5919 = vmul.f32 %v5898, %v5915
    %v5920 = vmul.f32 %v5900, %v5916
    %v5922 = vsel %vm1612, %v5917, 0
    %5924 = vmatprep.subr.mxu0 0.0
    %5925 = vmatpush1.msra.mxu0 %v5277
    %5926 = vmatprep.subr.mxu0 0.0
    %5927 = vmatpush1.msra.mxu0 0.0
    %5928 = vmatprep.subr.mxu0 0.0
    %5929 = vmatpush1.msra.mxu0 0.0
    %5930 = vmatprep.subr.mxu0 0.0
    %5931 = vmatpush1.msra.mxu0 0.0
    %5932 = vmatprep.subr.mxu0 0.0
    %5933 = vmatpush1.msra.mxu0 0.0
    %5934 = vmatprep.subr.mxu0 0.0
    %5935 = vmatpush1.msra.mxu0 0.0
    %5936 = vmatprep.subr.mxu0 0.0
    %5937 = vmatpush1.msra.mxu0 0.0
    %5938 = vmatprep.subr.mxu0 0.0
    %5939 = vmatpush1.msra.mxu0 0.0
    %5940 = vmatprep.subr.mxu0 0.0
    %5941 = vmatpush1.msra.mxu0 0.0
    %5942 = vmatprep.subr.mxu0 0.0
    %5943 = vmatpush1.msra.mxu0 0.0
    %5944 = vmatprep.subr.mxu0 0.0
    %5945 = vmatpush1.msra.mxu0 0.0
    %5946 = vmatprep.subr.mxu0 0.0
    %5947 = vmatpush1.msra.mxu0 0.0
    %5948 = vmatprep.subr.mxu0 0.0
    %5949 = vmatpush1.msra.mxu0 0.0
    %5950 = vmatprep.subr.mxu0 0.0
    %5951 = vmatpush1.msra.mxu0 0.0
    %5952 = vmatprep.subr.mxu0 0.0
    %5953 = vmatpush1.msra.mxu0 0.0
    %5954 = vmatprep.subr.mxu0 0.0
    %5955 = vmatpush1.msra.mxu0 0.0
    %5956 = vmatprep.subr.mxu0 0.0
    %5957 = vmatpush1.msra.mxu0 0.0
    %5958 = vmatprep.subr.mxu0 0.0
    %5959 = vmatpush1.msra.mxu0 0.0
    %5960 = vmatprep.subr.mxu0 0.0
    %5961 = vmatpush1.msra.mxu0 0.0
    %5962 = vmatprep.subr.mxu0 0.0
    %5963 = vmatpush1.msra.mxu0 0.0
    %5964 = vmatprep.subr.mxu0 0.0
    %5965 = vmatpush1.msra.mxu0 0.0
    %5966 = vmatprep.subr.mxu0 0.0
    %5967 = vmatpush1.msra.mxu0 0.0
    %5968 = vmatprep.subr.mxu0 0.0
    %5969 = vmatpush1.msra.mxu0 0.0
    %5970 = vmatprep.subr.mxu0 0.0
    %5971 = vmatpush1.msra.mxu0 0.0
    %5972 = vmatprep.subr.mxu0 0.0
    %5973 = vmatpush1.msra.mxu0 0.0
    %5974 = vmatprep.subr.mxu0 0.0
    %5975 = vmatpush1.msra.mxu0 0.0
    %5976 = vmatprep.subr.mxu0 0.0
    %5977 = vmatpush1.msra.mxu0 0.0
    %5978 = vmatprep.subr.mxu0 0.0
    %5979 = vmatpush1.msra.mxu0 0.0
    %5980 = vmatprep.subr.mxu0 0.0
    %5981 = vmatpush1.msra.mxu0 0.0
    %5982 = vmatprep.subr.mxu0 0.0
    %5983 = vmatpush1.msra.mxu0 0.0
    %5984 = vmatprep.subr.mxu0 0.0
    %5985 = vmatpush1.msra.mxu0 0.0
    %5986 = vmatprep.subr.mxu0 0.0
    %5987 = vmatpush1.msra.mxu0 0.0
    %5988 = vmatprep.mubr.f32.mxu0 0.0
    %5989 = vmatmul.mubr.f32.gmra.mrb[0].mxu0 %v5922
    %v5990 = vpop.f32.mrb[0].mxu0
    %v5991 = vadd.f32 0.0, %v5990
    %v5992 = vpop.f32.mrb[0].mxu0
    %5993 = vdwg.mxu0
    %v5995 = vsel %vm1612, %v5918, 0
    %5997 = vmatprep.subr.mxu0 0.0
    %5998 = vmatpush1.msra.mxu0 %v5372
    %5999 = vmatprep.subr.mxu0 0.0
    %6000 = vmatpush1.msra.mxu0 0.0
    %6001 = vmatprep.subr.mxu0 0.0
    %6002 = vmatpush1.msra.mxu0 0.0
    %6003 = vmatprep.subr.mxu0 0.0
    %6004 = vmatpush1.msra.mxu0 0.0
    %6005 = vmatprep.subr.mxu0 0.0
    %6006 = vmatpush1.msra.mxu0 0.0
    %6007 = vmatprep.subr.mxu0 0.0
    %6008 = vmatpush1.msra.mxu0 0.0
    %6009 = vmatprep.subr.mxu0 0.0
    %6010 = vmatpush1.msra.mxu0 0.0
    %6011 = vmatprep.subr.mxu0 0.0
    %6012 = vmatpush1.msra.mxu0 0.0
    %6013 = vmatprep.subr.mxu0 0.0
    %6014 = vmatpush1.msra.mxu0 0.0
    %6015 = vmatprep.subr.mxu0 0.0
    %6016 = vmatpush1.msra.mxu0 0.0
    %6017 = vmatprep.subr.mxu0 0.0
    %6018 = vmatpush1.msra.mxu0 0.0
    %6019 = vmatprep.subr.mxu0 0.0
    %6020 = vmatpush1.msra.mxu0 0.0
    %6021 = vmatprep.subr.mxu0 0.0
    %6022 = vmatpush1.msra.mxu0 0.0
    %6023 = vmatprep.subr.mxu0 0.0
    %6024 = vmatpush1.msra.mxu0 0.0
    %6025 = vmatprep.subr.mxu0 0.0
    %6026 = vmatpush1.msra.mxu0 0.0
    %6027 = vmatprep.subr.mxu0 0.0
    %6028 = vmatpush1.msra.mxu0 0.0
    %6029 = vmatprep.subr.mxu0 0.0
    %6030 = vmatpush1.msra.mxu0 0.0
    %6031 = vmatprep.subr.mxu0 0.0
    %6032 = vmatpush1.msra.mxu0 0.0
    %6033 = vmatprep.subr.mxu0 0.0
    %6034 = vmatpush1.msra.mxu0 0.0
    %6035 = vmatprep.subr.mxu0 0.0
    %6036 = vmatpush1.msra.mxu0 0.0
    %6037 = vmatprep.subr.mxu0 0.0
    %6038 = vmatpush1.msra.mxu0 0.0
    %6039 = vmatprep.subr.mxu0 0.0
    %6040 = vmatpush1.msra.mxu0 0.0
    %6041 = vmatprep.subr.mxu0 0.0
    %6042 = vmatpush1.msra.mxu0 0.0
    %6043 = vmatprep.subr.mxu0 0.0
    %6044 = vmatpush1.msra.mxu0 0.0
    %6045 = vmatprep.subr.mxu0 0.0
    %6046 = vmatpush1.msra.mxu0 0.0
    %6047 = vmatprep.subr.mxu0 0.0
    %6048 = vmatpush1.msra.mxu0 0.0
    %6049 = vmatprep.subr.mxu0 0.0
    %6050 = vmatpush1.msra.mxu0 0.0
    %6051 = vmatprep.subr.mxu0 0.0
    %6052 = vmatpush1.msra.mxu0 0.0
    %6053 = vmatprep.subr.mxu0 0.0
    %6054 = vmatpush1.msra.mxu0 0.0
    %6055 = vmatprep.subr.mxu0 0.0
    %6056 = vmatpush1.msra.mxu0 0.0
    %6057 = vmatprep.subr.mxu0 0.0
    %6058 = vmatpush1.msra.mxu0 0.0
    %6059 = vmatprep.subr.mxu0 0.0
    %6060 = vmatpush1.msra.mxu0 0.0
    %6061 = vmatprep.mubr.f32.mxu0 0.0
    %6062 = vmatmul.mubr.f32.gmra.mrb[0].mxu0 %v5995
    %v6063 = vpop.f32.mrb[0].mxu0
    %v6064 = vadd.f32 0.0, %v6063
    %v6065 = vpop.f32.mrb[0].mxu0
    %6066 = vdwg.mxu0
    %v6068 = vsel %vm1612, %v5919, 0
    %6070 = vmatprep.subr.mxu0 0.0
    %6071 = vmatpush1.msra.mxu0 %v5467
    %6072 = vmatprep.subr.mxu0 0.0
    %6073 = vmatpush1.msra.mxu0 0.0
    %6074 = vmatprep.subr.mxu0 0.0
    %6075 = vmatpush1.msra.mxu0 0.0
    %6076 = vmatprep.subr.mxu0 0.0
    %6077 = vmatpush1.msra.mxu0 0.0
    %6078 = vmatprep.subr.mxu0 0.0
    %6079 = vmatpush1.msra.mxu0 0.0
    %6080 = vmatprep.subr.mxu0 0.0
    %6081 = vmatpush1.msra.mxu0 0.0
    %6082 = vmatprep.subr.mxu0 0.0
    %6083 = vmatpush1.msra.mxu0 0.0
    %6084 = vmatprep.subr.mxu0 0.0
    %6085 = vmatpush1.msra.mxu0 0.0
    %6086 = vmatprep.subr.mxu0 0.0
    %6087 = vmatpush1.msra.mxu0 0.0
    %6088 = vmatprep.subr.mxu0 0.0
    %6089 = vmatpush1.msra.mxu0 0.0
    %6090 = vmatprep.subr.mxu0 0.0
    %6091 = vmatpush1.msra.mxu0 0.0
    %6092 = vmatprep.subr.mxu0 0.0
    %6093 = vmatpush1.msra.mxu0 0.0
    %6094 = vmatprep.subr.mxu0 0.0
    %6095 = vmatpush1.msra.mxu0 0.0
    %6096 = vmatprep.subr.mxu0 0.0
    %6097 = vmatpush1.msra.mxu0 0.0
    %6098 = vmatprep.subr.mxu0 0.0
    %6099 = vmatpush1.msra.mxu0 0.0
    %6100 = vmatprep.subr.mxu0 0.0
    %6101 = vmatpush1.msra.mxu0 0.0
    %6102 = vmatprep.subr.mxu0 0.0
    %6103 = vmatpush1.msra.mxu0 0.0
    %6104 = vmatprep.subr.mxu0 0.0
    %6105 = vmatpush1.msra.mxu0 0.0
    %6106 = vmatprep.subr.mxu0 0.0
    %6107 = vmatpush1.msra.mxu0 0.0
    %6108 = vmatprep.subr.mxu0 0.0
    %6109 = vmatpush1.msra.mxu0 0.0
    %6110 = vmatprep.subr.mxu0 0.0
    %6111 = vmatpush1.msra.mxu0 0.0
    %6112 = vmatprep.subr.mxu0 0.0
    %6113 = vmatpush1.msra.mxu0 0.0
    %6114 = vmatprep.subr.mxu0 0.0
    %6115 = vmatpush1.msra.mxu0 0.0
    %6116 = vmatprep.subr.mxu0 0.0
    %6117 = vmatpush1.msra.mxu0 0.0
    %6118 = vmatprep.subr.mxu0 0.0
    %6119 = vmatpush1.msra.mxu0 0.0
    %6120 = vmatprep.subr.mxu0 0.0
    %6121 = vmatpush1.msra.mxu0 0.0
    %6122 = vmatprep.subr.mxu0 0.0
    %6123 = vmatpush1.msra.mxu0 0.0
    %6124 = vmatprep.subr.mxu0 0.0
    %6125 = vmatpush1.msra.mxu0 0.0
    %6126 = vmatprep.subr.mxu0 0.0
    %6127 = vmatpush1.msra.mxu0 0.0
    %6128 = vmatprep.subr.mxu0 0.0
    %6129 = vmatpush1.msra.mxu0 0.0
    %6130 = vmatprep.subr.mxu0 0.0
    %6131 = vmatpush1.msra.mxu0 0.0
    %6132 = vmatprep.subr.mxu0 0.0
    %6133 = vmatpush1.msra.mxu0 0.0
    %6134 = vmatprep.mubr.f32.mxu0 0.0
    %6135 = vmatmul.mubr.f32.gmra.mrb[0].mxu0 %v6068
    %v6136 = vpop.f32.mrb[0].mxu0
    %v6137 = vadd.f32 0.0, %v6136
    %v6138 = vpop.f32.mrb[0].mxu0
    %6139 = vdwg.mxu0
    %v6141 = vsel %vm1612, %v5920, 0
    %6143 = vmatprep.subr.mxu0 0.0
    %6144 = vmatpush1.msra.mxu0 %v5562
    %6145 = vmatprep.subr.mxu0 0.0
    %6146 = vmatpush1.msra.mxu0 0.0
    %6147 = vmatprep.subr.mxu0 0.0
    %6148 = vmatpush1.msra.mxu0 0.0
    %6149 = vmatprep.subr.mxu0 0.0
    %6150 = vmatpush1.msra.mxu0 0.0
    %6151 = vmatprep.subr.mxu0 0.0
    %6152 = vmatpush1.msra.mxu0 0.0
    %6153 = vmatprep.subr.mxu0 0.0
    %6154 = vmatpush1.msra.mxu0 0.0
    %6155 = vmatprep.subr.mxu0 0.0
    %6156 = vmatpush1.msra.mxu0 0.0
    %6157 = vmatprep.subr.mxu0 0.0
    %6158 = vmatpush1.msra.mxu0 0.0
    %6159 = vmatprep.subr.mxu0 0.0
    %6160 = vmatpush1.msra.mxu0 0.0
    %6161 = vmatprep.subr.mxu0 0.0
    %6162 = vmatpush1.msra.mxu0 0.0
    %6163 = vmatprep.subr.mxu0 0.0
    %6164 = vmatpush1.msra.mxu0 0.0
    %6165 = vmatprep.subr.mxu0 0.0
    %6166 = vmatpush1.msra.mxu0 0.0
    %6167 = vmatprep.subr.mxu0 0.0
    %6168 = vmatpush1.msra.mxu0 0.0
    %6169 = vmatprep.subr.mxu0 0.0
    %6170 = vmatpush1.msra.mxu0 0.0
    %6171 = vmatprep.subr.mxu0 0.0
    %6172 = vmatpush1.msra.mxu0 0.0
    %6173 = vmatprep.subr.mxu0 0.0
    %6174 = vmatpush1.msra.mxu0 0.0
    %6175 = vmatprep.subr.mxu0 0.0
    %6176 = vmatpush1.msra.mxu0 0.0
    %6177 = vmatprep.subr.mxu0 0.0
    %6178 = vmatpush1.msra.mxu0 0.0
    %6179 = vmatprep.subr.mxu0 0.0
    %6180 = vmatpush1.msra.mxu0 0.0
    %6181 = vmatprep.subr.mxu0 0.0
    %6182 = vmatpush1.msra.mxu0 0.0
    %6183 = vmatprep.subr.mxu0 0.0
    %6184 = vmatpush1.msra.mxu0 0.0
    %6185 = vmatprep.subr.mxu0 0.0
    %6186 = vmatpush1.msra.mxu0 0.0
    %6187 = vmatprep.subr.mxu0 0.0
    %6188 = vmatpush1.msra.mxu0 0.0
    %6189 = vmatprep.subr.mxu0 0.0
    %6190 = vmatpush1.msra.mxu0 0.0
    %6191 = vmatprep.subr.mxu0 0.0
    %6192 = vmatpush1.msra.mxu0 0.0
    %6193 = vmatprep.subr.mxu0 0.0
    %6194 = vmatpush1.msra.mxu0 0.0
    %6195 = vmatprep.subr.mxu0 0.0
    %6196 = vmatpush1.msra.mxu0 0.0
    %6197 = vmatprep.subr.mxu0 0.0
    %6198 = vmatpush1.msra.mxu0 0.0
    %6199 = vmatprep.subr.mxu0 0.0
    %6200 = vmatpush1.msra.mxu0 0.0
    %6201 = vmatprep.subr.mxu0 0.0
    %6202 = vmatpush1.msra.mxu0 0.0
    %6203 = vmatprep.subr.mxu0 0.0
    %6204 = vmatpush1.msra.mxu0 0.0
    %6205 = vmatprep.subr.mxu0 0.0
    %6206 = vmatpush1.msra.mxu0 0.0
    %6207 = vmatprep.mubr.f32.mxu0 0.0
    %6208 = vmatmul.mubr.f32.gmra.mrb[0].mxu0 %v6141
    %v6209 = vpop.f32.mrb[0].mxu0
    %v6210 = vadd.f32 0.0, %v6209
    %v6211 = vpop.f32.mrb[0].mxu0
    %6212 = vdwg.mxu0
    %v6213 = vld [vmem:[%s39] sm:$0xff]
    %v6214 = vld [vmem:[%s39 + $0x8] sm:$0xff]
    %v6215 = vld [vmem:[%s39 + $0x10] sm:$0xff]
    %v6216 = vld [vmem:[%s39 + $0x18] sm:$0xff]
    %s6217 = scalar_lea.vmem %s39, 32
    %v6218 = vld [vmem:[%s6217] sm:$0xff]
    %v6219 = vld [vmem:[%s6217 + $0x8] sm:$0xff]
    %v6220 = vld [vmem:[%s6217 + $0x10] sm:$0xff]
    %v6221 = vld [vmem:[%s6217 + $0x18] sm:$0xff]
    %v6223 = vsel %vm1299, %v6064, 0
    %6225 = vmatprep.subr.mxu0 0.0
    %6226 = vmatpush1.msra.mxu0 %v6218
    %6227 = vmatprep.subr.mxu0 0.0
    %6228 = vmatpush1.msra.mxu0 %v6219
    %6229 = vmatprep.subr.mxu0 0.0
    %6230 = vmatpush1.msra.mxu0 %v6220
    %6231 = vmatprep.subr.mxu0 0.0
    %6232 = vmatpush1.msra.mxu0 %v6221
    %6233 = vmatprep.subr.mxu0 0.0
    %6234 = vmatpush1.msra.mxu0 0.0
    %6235 = vmatprep.subr.mxu0 0.0
    %6236 = vmatpush1.msra.mxu0 0.0
    %6237 = vmatprep.subr.mxu0 0.0
    %6238 = vmatpush1.msra.mxu0 0.0
    %6239 = vmatprep.subr.mxu0 0.0
    %6240 = vmatpush1.msra.mxu0 0.0
    %6241 = vmatprep.subr.mxu0 0.0
    %6242 = vmatpush1.msra.mxu0 0.0
    %6243 = vmatprep.subr.mxu0 0.0
    %6244 = vmatpush1.msra.mxu0 0.0
    %6245 = vmatprep.subr.mxu0 0.0
    %6246 = vmatpush1.msra.mxu0 0.0
    %6247 = vmatprep.subr.mxu0 0.0
    %6248 = vmatpush1.msra.mxu0 0.0
    %6249 = vmatprep.subr.mxu0 0.0
    %6250 = vmatpush1.msra.mxu0 0.0
    %6251 = vmatprep.subr.mxu0 0.0
    %6252 = vmatpush1.msra.mxu0 0.0
    %6253 = vmatprep.subr.mxu0 0.0
    %6254 = vmatpush1.msra.mxu0 0.0
    %6255 = vmatprep.subr.mxu0 0.0
    %6256 = vmatpush1.msra.mxu0 0.0
    %6257 = vmatprep.subr.mxu0 0.0
    %6258 = vmatpush1.msra.mxu0 0.0
    %6259 = vmatprep.subr.mxu0 0.0
    %6260 = vmatpush1.msra.mxu0 0.0
    %6261 = vmatprep.subr.mxu0 0.0
    %6262 = vmatpush1.msra.mxu0 0.0
    %6263 = vmatprep.subr.mxu0 0.0
    %6264 = vmatpush1.msra.mxu0 0.0
    %6265 = vmatprep.subr.mxu0 0.0
    %6266 = vmatpush1.msra.mxu0 0.0
    %6267 = vmatprep.subr.mxu0 0.0
    %6268 = vmatpush1.msra.mxu0 0.0
    %6269 = vmatprep.subr.mxu0 0.0
    %6270 = vmatpush1.msra.mxu0 0.0
    %6271 = vmatprep.subr.mxu0 0.0
    %6272 = vmatpush1.msra.mxu0 0.0
    %6273 = vmatprep.subr.mxu0 0.0
    %6274 = vmatpush1.msra.mxu0 0.0
    %6275 = vmatprep.subr.mxu0 0.0
    %6276 = vmatpush1.msra.mxu0 0.0
    %6277 = vmatprep.subr.mxu0 0.0
    %6278 = vmatpush1.msra.mxu0 0.0
    %6279 = vmatprep.subr.mxu0 0.0
    %6280 = vmatpush1.msra.mxu0 0.0
    %6281 = vmatprep.subr.mxu0 0.0
    %6282 = vmatpush1.msra.mxu0 0.0
    %6283 = vmatprep.subr.mxu0 0.0
    %6284 = vmatpush1.msra.mxu0 0.0
    %6285 = vmatprep.subr.mxu0 0.0
    %6286 = vmatpush1.msra.mxu0 0.0
    %6287 = vmatprep.subr.mxu0 0.0
    %6288 = vmatpush1.msra.mxu0 0.0
    %6289 = vmatprep.mubr.f32.mxu0 0.0
    %6290 = vmatmul.mubr.f32.gmra.mrb[0].mxu0 %v6223
    %v6291 = vpop.f32.mrb[0].mxu0
    %v6292 = vadd.f32 0.0, %v6291
    %v6293 = vpop.f32.mrb[0].mxu0
    %6294 = vdwg.mxu0
    %v6296 = vsel %vm1299, %v5991, 0
    %6298 = vmatprep.subr.mxu0 0.0
    %6299 = vmatpush1.msra.mxu0 %v6213
    %6300 = vmatprep.subr.mxu0 0.0
    %6301 = vmatpush1.msra.mxu0 %v6214
    %6302 = vmatprep.subr.mxu0 0.0
    %6303 = vmatpush1.msra.mxu0 %v6215
    %6304 = vmatprep.subr.mxu0 0.0
    %6305 = vmatpush1.msra.mxu0 %v6216
    %6306 = vmatprep.subr.mxu0 0.0
    %6307 = vmatpush1.msra.mxu0 0.0
    %6308 = vmatprep.subr.mxu0 0.0
    %6309 = vmatpush1.msra.mxu0 0.0
    %6310 = vmatprep.subr.mxu0 0.0
    %6311 = vmatpush1.msra.mxu0 0.0
    %6312 = vmatprep.subr.mxu0 0.0
    %6313 = vmatpush1.msra.mxu0 0.0
    %6314 = vmatprep.subr.mxu0 0.0
    %6315 = vmatpush1.msra.mxu0 0.0
    %6316 = vmatprep.subr.mxu0 0.0
    %6317 = vmatpush1.msra.mxu0 0.0
    %6318 = vmatprep.subr.mxu0 0.0
    %6319 = vmatpush1.msra.mxu0 0.0
    %6320 = vmatprep.subr.mxu0 0.0
    %6321 = vmatpush1.msra.mxu0 0.0
    %6322 = vmatprep.subr.mxu0 0.0
    %6323 = vmatpush1.msra.mxu0 0.0
    %6324 = vmatprep.subr.mxu0 0.0
    %6325 = vmatpush1.msra.mxu0 0.0
    %6326 = vmatprep.subr.mxu0 0.0
    %6327 = vmatpush1.msra.mxu0 0.0
    %6328 = vmatprep.subr.mxu0 0.0
    %6329 = vmatpush1.msra.mxu0 0.0
    %6330 = vmatprep.subr.mxu0 0.0
    %6331 = vmatpush1.msra.mxu0 0.0
    %6332 = vmatprep.subr.mxu0 0.0
    %6333 = vmatpush1.msra.mxu0 0.0
    %6334 = vmatprep.subr.mxu0 0.0
    %6335 = vmatpush1.msra.mxu0 0.0
    %6336 = vmatprep.subr.mxu0 0.0
    %6337 = vmatpush1.msra.mxu0 0.0
    %6338 = vmatprep.subr.mxu0 0.0
    %6339 = vmatpush1.msra.mxu0 0.0
    %6340 = vmatprep.subr.mxu0 0.0
    %6341 = vmatpush1.msra.mxu0 0.0
    %6342 = vmatprep.subr.mxu0 0.0
    %6343 = vmatpush1.msra.mxu0 0.0
    %6344 = vmatprep.subr.mxu0 0.0
    %6345 = vmatpush1.msra.mxu0 0.0
    %6346 = vmatprep.subr.mxu0 0.0
    %6347 = vmatpush1.msra.mxu0 0.0
    %6348 = vmatprep.subr.mxu0 0.0
    %6349 = vmatpush1.msra.mxu0 0.0
    %6350 = vmatprep.subr.mxu0 0.0
    %6351 = vmatpush1.msra.mxu0 0.0
    %6352 = vmatprep.subr.mxu0 0.0
    %6353 = vmatpush1.msra.mxu0 0.0
    %6354 = vmatprep.subr.mxu0 0.0
    %6355 = vmatpush1.msra.mxu0 0.0
    %6356 = vmatprep.subr.mxu0 0.0
    %6357 = vmatpush1.msra.mxu0 0.0
    %6358 = vmatprep.subr.mxu0 0.0
    %6359 = vmatpush1.msra.mxu0 0.0
    %6360 = vmatprep.subr.mxu0 0.0
    %6361 = vmatpush1.msra.mxu0 0.0
    %6362 = vmatprep.mubr.f32.mxu0 0.0
    %6363 = vmatmul.mubr.f32.gmra.mrb[0].mxu0 %v6296
    %v6364 = vpop.f32.mrb[0].mxu0
    %v6365 = vadd.f32 %v6292, %v6364
    %v6366 = vpop.f32.mrb[0].mxu0
    %6367 = vdwg.mxu0
    %s6368 = scalar_lea.vmem %s39, 64
    %v6369 = vld [vmem:[%s6368] sm:$0xff]
    %v6370 = vld [vmem:[%s6368 + $0x8] sm:$0xff]
    %v6371 = vld [vmem:[%s6368 + $0x10] sm:$0xff]
    %v6372 = vld [vmem:[%s6368 + $0x18] sm:$0xff]
    %v6374 = vsel %vm1299, %v6137, 0
    %6376 = vmatprep.subr.mxu0 0.0
    %6377 = vmatpush1.msra.mxu0 %v6369
    %6378 = vmatprep.subr.mxu0 0.0
    %6379 = vmatpush1.msra.mxu0 %v6370
    %6380 = vmatprep.subr.mxu0 0.0
    %6381 = vmatpush1.msra.mxu0 %v6371
    %6382 = vmatprep.subr.mxu0 0.0
    %6383 = vmatpush1.msra.mxu0 %v6372
    %6384 = vmatprep.subr.mxu0 0.0
    %6385 = vmatpush1.msra.mxu0 0.0
    %6386 = vmatprep.subr.mxu0 0.0
    %6387 = vmatpush1.msra.mxu0 0.0
    %6388 = vmatprep.subr.mxu0 0.0
    %6389 = vmatpush1.msra.mxu0 0.0
    %6390 = vmatprep.subr.mxu0 0.0
    %6391 = vmatpush1.msra.mxu0 0.0
    %6392 = vmatprep.subr.mxu0 0.0
    %6393 = vmatpush1.msra.mxu0 0.0
    %6394 = vmatprep.subr.mxu0 0.0
    %6395 = vmatpush1.msra.mxu0 0.0
    %6396 = vmatprep.subr.mxu0 0.0
    %6397 = vmatpush1.msra.mxu0 0.0
    %6398 = vmatprep.subr.mxu0 0.0
    %6399 = vmatpush1.msra.mxu0 0.0
    %6400 = vmatprep.subr.mxu0 0.0
    %6401 = vmatpush1.msra.mxu0 0.0
    %6402 = vmatprep.subr.mxu0 0.0
    %6403 = vmatpush1.msra.mxu0 0.0
    %6404 = vmatprep.subr.mxu0 0.0
    %6405 = vmatpush1.msra.mxu0 0.0
    %6406 = vmatprep.subr.mxu0 0.0
    %6407 = vmatpush1.msra.mxu0 0.0
    %6408 = vmatprep.subr.mxu0 0.0
    %6409 = vmatpush1.msra.mxu0 0.0
    %6410 = vmatprep.subr.mxu0 0.0
    %6411 = vmatpush1.msra.mxu0 0.0
    %6412 = vmatprep.subr.mxu0 0.0
    %6413 = vmatpush1.msra.mxu0 0.0
    %6414 = vmatprep.subr.mxu0 0.0
    %6415 = vmatpush1.msra.mxu0 0.0
    %6416 = vmatprep.subr.mxu0 0.0
    %6417 = vmatpush1.msra.mxu0 0.0
    %6418 = vmatprep.subr.mxu0 0.0
    %6419 = vmatpush1.msra.mxu0 0.0
    %6420 = vmatprep.subr.mxu0 0.0
    %6421 = vmatpush1.msra.mxu0 0.0
    %6422 = vmatprep.subr.mxu0 0.0
    %6423 = vmatpush1.msra.mxu0 0.0
    %6424 = vmatprep.subr.mxu0 0.0
    %6425 = vmatpush1.msra.mxu0 0.0
    %6426 = vmatprep.subr.mxu0 0.0
    %6427 = vmatpush1.msra.mxu0 0.0
    %6428 = vmatprep.subr.mxu0 0.0
    %6429 = vmatpush1.msra.mxu0 0.0
    %6430 = vmatprep.subr.mxu0 0.0
    %6431 = vmatpush1.msra.mxu0 0.0
    %6432 = vmatprep.subr.mxu0 0.0
    %6433 = vmatpush1.msra.mxu0 0.0
    %6434 = vmatprep.subr.mxu0 0.0
    %6435 = vmatpush1.msra.mxu0 0.0
    %6436 = vmatprep.subr.mxu0 0.0
    %6437 = vmatpush1.msra.mxu0 0.0
    %6438 = vmatprep.subr.mxu0 0.0
    %6439 = vmatpush1.msra.mxu0 0.0
    %6440 = vmatprep.mubr.f32.mxu0 0.0
    %6441 = vmatmul.mubr.f32.gmra.mrb[0].mxu0 %v6374
    %v6442 = vpop.f32.mrb[0].mxu0
    %v6443 = vadd.f32 0.0, %v6442
    %v6444 = vpop.f32.mrb[0].mxu0
    %6445 = vdwg.mxu0
    %v6446 = vadd.f32 %v6365, %v6443
    %s6447 = scalar_lea.vmem %s39, 96
    %v6448 = vld [vmem:[%s6447] sm:$0xff]
    %v6449 = vld [vmem:[%s6447 + $0x8] sm:$0xff]
    %v6450 = vld [vmem:[%s6447 + $0x10] sm:$0xff]
    %v6451 = vld [vmem:[%s6447 + $0x18] sm:$0xff]
    %v6453 = vsel %vm1299, %v6210, 0
    %6455 = vmatprep.subr.mxu0 0.0
    %6456 = vmatpush1.msra.mxu0 %v6448
    %6457 = vmatprep.subr.mxu0 0.0
    %6458 = vmatpush1.msra.mxu0 %v6449
    %6459 = vmatprep.subr.mxu0 0.0
    %6460 = vmatpush1.msra.mxu0 %v6450
    %6461 = vmatprep.subr.mxu0 0.0
    %6462 = vmatpush1.msra.mxu0 %v6451
    %6463 = vmatprep.subr.mxu0 0.0
    %6464 = vmatpush1.msra.mxu0 0.0
    %6465 = vmatprep.subr.mxu0 0.0
    %6466 = vmatpush1.msra.mxu0 0.0
    %6467 = vmatprep.subr.mxu0 0.0
    %6468 = vmatpush1.msra.mxu0 0.0
    %6469 = vmatprep.subr.mxu0 0.0
    %6470 = vmatpush1.msra.mxu0 0.0
    %6471 = vmatprep.subr.mxu0 0.0
    %6472 = vmatpush1.msra.mxu0 0.0
    %6473 = vmatprep.subr.mxu0 0.0
    %6474 = vmatpush1.msra.mxu0 0.0
    %6475 = vmatprep.subr.mxu0 0.0
    %6476 = vmatpush1.msra.mxu0 0.0
    %6477 = vmatprep.subr.mxu0 0.0
    %6478 = vmatpush1.msra.mxu0 0.0
    %6479 = vmatprep.subr.mxu0 0.0
    %6480 = vmatpush1.msra.mxu0 0.0
    %6481 = vmatprep.subr.mxu0 0.0
    %6482 = vmatpush1.msra.mxu0 0.0
    %6483 = vmatprep.subr.mxu0 0.0
    %6484 = vmatpush1.msra.mxu0 0.0
    %6485 = vmatprep.subr.mxu0 0.0
    %6486 = vmatpush1.msra.mxu0 0.0
    %6487 = vmatprep.subr.mxu0 0.0
    %6488 = vmatpush1.msra.mxu0 0.0
    %6489 = vmatprep.subr.mxu0 0.0
    %6490 = vmatpush1.msra.mxu0 0.0
    %6491 = vmatprep.subr.mxu0 0.0
    %6492 = vmatpush1.msra.mxu0 0.0
    %6493 = vmatprep.subr.mxu0 0.0
    %6494 = vmatpush1.msra.mxu0 0.0
    %6495 = vmatprep.subr.mxu0 0.0
    %6496 = vmatpush1.msra.mxu0 0.0
    %6497 = vmatprep.subr.mxu0 0.0
    %6498 = vmatpush1.msra.mxu0 0.0
    %6499 = vmatprep.subr.mxu0 0.0
    %6500 = vmatpush1.msra.mxu0 0.0
    %6501 = vmatprep.subr.mxu0 0.0
    %6502 = vmatpush1.msra.mxu0 0.0
    %6503 = vmatprep.subr.mxu0 0.0
    %6504 = vmatpush1.msra.mxu0 0.0
    %6505 = vmatprep.subr.mxu0 0.0
    %6506 = vmatpush1.msra.mxu0 0.0
    %6507 = vmatprep.subr.mxu0 0.0
    %6508 = vmatpush1.msra.mxu0 0.0
    %6509 = vmatprep.subr.mxu0 0.0
    %6510 = vmatpush1.msra.mxu0 0.0
    %6511 = vmatprep.subr.mxu0 0.0
    %6512 = vmatpush1.msra.mxu0 0.0
    %6513 = vmatprep.subr.mxu0 0.0
    %6514 = vmatpush1.msra.mxu0 0.0
    %6515 = vmatprep.subr.mxu0 0.0
    %6516 = vmatpush1.msra.mxu0 0.0
    %6517 = vmatprep.subr.mxu0 0.0
    %6518 = vmatpush1.msra.mxu0 0.0
    %6519 = vmatprep.mubr.f32.mxu0 0.0
    %6520 = vmatmul.mubr.f32.gmra.mrb[0].mxu0 %v6453
    %v6521 = vpop.f32.mrb[0].mxu0
    %v6522 = vadd.f32 0.0, %v6521
    %v6523 = vpop.f32.mrb[0].mxu0
    %6524 = vdwg.mxu0
    %v6525 = vadd.f32 %v6446, %v6522
    %v6526 = vld [vmem:[%s41] sm:$0x1]
    %v6528 = vlaneseq
    %v6529 = vshrl.u32 %v6528, 7
    %v6530 = vsub.s32 0, %v6529
    %v6531 = vrot.slane %v6526, %v6530
    %v6533 = vadd.f32 %v6525, %v6531
    %v6534 = vld [vmem:[%s27] sm:$0xff]
    %v6535 = vld [vmem:[%s27 + $0x8] sm:$0xff]
    %v6536 = vld [vmem:[%s27 + $0x10] sm:$0xff]
    %v6537 = vld [vmem:[%s27 + $0x18] sm:$0xff]
    %v6538 = vld [vmem:[%s27 + $0x20] sm:$0xff]
    %v6539 = vld [vmem:[%s27 + $0x28] sm:$0xff]
    %v6540 = vld [vmem:[%s27 + $0x30] sm:$0xff]
    %v6541 = vld [vmem:[%s27 + $0x38] sm:$0xff]
    %v6542 = vld [vmem:[%s27 + $0x40] sm:$0xff]
    %v6543 = vld [vmem:[%s27 + $0x48] sm:$0xff]
    %v6544 = vld [vmem:[%s27 + $0x50] sm:$0xff]
    %v6545 = vld [vmem:[%s27 + $0x58] sm:$0xff]
    %v6546 = vld [vmem:[%s27 + $0x60] sm:$0xff]
    %v6547 = vld [vmem:[%s27 + $0x68] sm:$0xff]
    %v6548 = vld [vmem:[%s27 + $0x70] sm:$0xff]
    %v6549 = vld [vmem:[%s27 + $0x78] sm:$0xff]
    %v6550 = vld [vmem:[%s33] sm:$0x1]
    %v6552 = vlaneseq
    %v6553 = vshrl.u32 %v6552, 7
    %v6554 = vsub.s32 0, %v6553
    %v6555 = vrot.slane %v6550, %v6554
    %6557 = vmatprep.subr.mxu0 0.0
    %6558 = vmatpush1.msra.mxu0 %v6534
    %6559 = vmatprep.subr.mxu0 0.0
    %6560 = vmatpush1.msra.mxu0 %v6535
    %6561 = vmatprep.subr.mxu0 0.0
    %6562 = vmatpush1.msra.mxu0 %v6536
    %6563 = vmatprep.subr.mxu0 0.0
    %6564 = vmatpush1.msra.mxu0 %v6537
    %6565 = vmatprep.subr.mxu0 0.0
    %6566 = vmatpush1.msra.mxu0 %v6538
    %6567 = vmatprep.subr.mxu0 0.0
    %6568 = vmatpush1.msra.mxu0 %v6539
    %6569 = vmatprep.subr.mxu0 0.0
    %6570 = vmatpush1.msra.mxu0 %v6540
    %6571 = vmatprep.subr.mxu0 0.0
    %6572 = vmatpush1.msra.mxu0 %v6541
    %6573 = vmatprep.subr.mxu0 0.0
    %6574 = vmatpush1.msra.mxu0 %v6542
    %6575 = vmatprep.subr.mxu0 0.0
    %6576 = vmatpush1.msra.mxu0 %v6543
    %6577 = vmatprep.subr.mxu0 0.0
    %6578 = vmatpush1.msra.mxu0 %v6544
    %6579 = vmatprep.subr.mxu0 0.0
    %6580 = vmatpush1.msra.mxu0 %v6545
    %6581 = vmatprep.subr.mxu0 0.0
    %6582 = vmatpush1.msra.mxu0 %v6546
    %6583 = vmatprep.subr.mxu0 0.0
    %6584 = vmatpush1.msra.mxu0 %v6547
    %6585 = vmatprep.subr.mxu0 0.0
    %6586 = vmatpush1.msra.mxu0 %v6548
    %6587 = vmatprep.subr.mxu0 0.0
    %6588 = vmatpush1.msra.mxu0 %v6549
    %6589 = vmatprep.subr.mxu0 0.0
    %6590 = vmatpush1.msra.mxu0 0.0
    %6591 = vmatprep.subr.mxu0 0.0
    %6592 = vmatpush1.msra.mxu0 0.0
    %6593 = vmatprep.subr.mxu0 0.0
    %6594 = vmatpush1.msra.mxu0 0.0
    %6595 = vmatprep.subr.mxu0 0.0
    %6596 = vmatpush1.msra.mxu0 0.0
    %6597 = vmatprep.subr.mxu0 0.0
    %6598 = vmatpush1.msra.mxu0 0.0
    %6599 = vmatprep.subr.mxu0 0.0
    %6600 = vmatpush1.msra.mxu0 0.0
    %6601 = vmatprep.subr.mxu0 0.0
    %6602 = vmatpush1.msra.mxu0 0.0
    %6603 = vmatprep.subr.mxu0 0.0
    %6604 = vmatpush1.msra.mxu0 0.0
    %6605 = vmatprep.subr.mxu0 0.0
    %6606 = vmatpush1.msra.mxu0 0.0
    %6607 = vmatprep.subr.mxu0 0.0
    %6608 = vmatpush1.msra.mxu0 0.0
    %6609 = vmatprep.subr.mxu0 0.0
    %6610 = vmatpush1.msra.mxu0 0.0
    %6611 = vmatprep.subr.mxu0 0.0
    %6612 = vmatpush1.msra.mxu0 0.0
    %6613 = vmatprep.subr.mxu0 0.0
    %6614 = vmatpush1.msra.mxu0 0.0
    %6615 = vmatprep.subr.mxu0 0.0
    %6616 = vmatpush1.msra.mxu0 0.0
    %6617 = vmatprep.subr.mxu0 0.0
    %6618 = vmatpush1.msra.mxu0 0.0
    %6619 = vmatprep.subr.mxu0 0.0
    %6620 = vmatpush1.msra.mxu0 0.0
    %6621 = vmatprep.mubr.f32.mxu0 0.0
    %6622 = vmatmul.mubr.f32.gmra.mrb[0].mxu0 %v4412
    %v6623 = vpop.f32.mrb[0].mxu0
    %v6624 = vadd.f32 %v6555, %v6623
    %v6625 = vpop.f32.mrb[0].mxu0
    %6626 = vdwg.mxu0
    %v6627 = vld [vmem:[%s4524] sm:$0xff]
    %v6628 = vld [vmem:[%s4524 + $0x8] sm:$0xff]
    %v6629 = vld [vmem:[%s4524 + $0x10] sm:$0xff]
    %v6630 = vld [vmem:[%s4524 + $0x18] sm:$0xff]
    %v6631 = vld [vmem:[%s4524 + $0x20] sm:$0xff]
    %v6632 = vld [vmem:[%s4524 + $0x28] sm:$0xff]
    %v6633 = vld [vmem:[%s4524 + $0x30] sm:$0xff]
    %v6634 = vld [vmem:[%s4524 + $0x38] sm:$0xff]
    %v6635 = vld [vmem:[%s4524 + $0x40] sm:$0xff]
    %v6636 = vld [vmem:[%s4524 + $0x48] sm:$0xff]
    %v6637 = vld [vmem:[%s4524 + $0x50] sm:$0xff]
    %v6638 = vld [vmem:[%s4524 + $0x58] sm:$0xff]
    %v6639 = vld [vmem:[%s4524 + $0x60] sm:$0xff]
    %v6640 = vld [vmem:[%s4524 + $0x68] sm:$0xff]
    %v6641 = vld [vmem:[%s4524 + $0x70] sm:$0xff]
    %v6642 = vld [vmem:[%s4524 + $0x78] sm:$0xff]
    %v6643 = vld [vmem:[%s4541] sm:$0x1]
    %v6645 = vlaneseq
    %v6646 = vshrl.u32 %v6645, 7
    %v6647 = vsub.s32 0, %v6646
    %v6648 = vrot.slane %v6643, %v6647
    %6650 = vmatprep.subr.mxu0 0.0
    %6651 = vmatpush1.msra.mxu0 %v6627
    %6652 = vmatprep.subr.mxu0 0.0
    %6653 = vmatpush1.msra.mxu0 %v6628
    %6654 = vmatprep.subr.mxu0 0.0
    %6655 = vmatpush1.msra.mxu0 %v6629
    %6656 = vmatprep.subr.mxu0 0.0
    %6657 = vmatpush1.msra.mxu0 %v6630
    %6658 = vmatprep.subr.mxu0 0.0
    %6659 = vmatpush1.msra.mxu0 %v6631
    %6660 = vmatprep.subr.mxu0 0.0
    %6661 = vmatpush1.msra.mxu0 %v6632
    %6662 = vmatprep.subr.mxu0 0.0
    %6663 = vmatpush1.msra.mxu0 %v6633
    %6664 = vmatprep.subr.mxu0 0.0
    %6665 = vmatpush1.msra.mxu0 %v6634
    %6666 = vmatprep.subr.mxu0 0.0
    %6667 = vmatpush1.msra.mxu0 %v6635
    %6668 = vmatprep.subr.mxu0 0.0
    %6669 = vmatpush1.msra.mxu0 %v6636
    %6670 = vmatprep.subr.mxu0 0.0
    %6671 = vmatpush1.msra.mxu0 %v6637
    %6672 = vmatprep.subr.mxu0 0.0
    %6673 = vmatpush1.msra.mxu0 %v6638
    %6674 = vmatprep.subr.mxu0 0.0
    %6675 = vmatpush1.msra.mxu0 %v6639
    %6676 = vmatprep.subr.mxu0 0.0
    %6677 = vmatpush1.msra.mxu0 %v6640
    %6678 = vmatprep.subr.mxu0 0.0
    %6679 = vmatpush1.msra.mxu0 %v6641
    %6680 = vmatprep.subr.mxu0 0.0
    %6681 = vmatpush1.msra.mxu0 %v6642
    %6682 = vmatprep.subr.mxu0 0.0
    %6683 = vmatpush1.msra.mxu0 0.0
    %6684 = vmatprep.subr.mxu0 0.0
    %6685 = vmatpush1.msra.mxu0 0.0
    %6686 = vmatprep.subr.mxu0 0.0
    %6687 = vmatpush1.msra.mxu0 0.0
    %6688 = vmatprep.subr.mxu0 0.0
    %6689 = vmatpush1.msra.mxu0 0.0
    %6690 = vmatprep.subr.mxu0 0.0
    %6691 = vmatpush1.msra.mxu0 0.0
    %6692 = vmatprep.subr.mxu0 0.0
    %6693 = vmatpush1.msra.mxu0 0.0
    %6694 = vmatprep.subr.mxu0 0.0
    %6695 = vmatpush1.msra.mxu0 0.0
    %6696 = vmatprep.subr.mxu0 0.0
    %6697 = vmatpush1.msra.mxu0 0.0
    %6698 = vmatprep.subr.mxu0 0.0
    %6699 = vmatpush1.msra.mxu0 0.0
    %6700 = vmatprep.subr.mxu0 0.0
    %6701 = vmatpush1.msra.mxu0 0.0
    %6702 = vmatprep.subr.mxu0 0.0
    %6703 = vmatpush1.msra.mxu0 0.0
    %6704 = vmatprep.subr.mxu0 0.0
    %6705 = vmatpush1.msra.mxu0 0.0
    %6706 = vmatprep.subr.mxu0 0.0
    %6707 = vmatpush1.msra.mxu0 0.0
    %6708 = vmatprep.subr.mxu0 0.0
    %6709 = vmatpush1.msra.mxu0 0.0
    %6710 = vmatprep.subr.mxu0 0.0
    %6711 = vmatpush1.msra.mxu0 0.0
    %6712 = vmatprep.subr.mxu0 0.0
    %6713 = vmatpush1.msra.mxu0 0.0
    %6714 = vmatprep.mubr.f32.mxu0 0.0
    %6715 = vmatmul.mubr.f32.gmra.mrb[0].mxu0 %v4412
    %v6716 = vpop.f32.mrb[0].mxu0
    %v6717 = vadd.f32 %v6648, %v6716
    %v6718 = vpop.f32.mrb[0].mxu0
    %6719 = vdwg.mxu0
    %v6720 = vld [vmem:[%s4619] sm:$0xff]
    %v6721 = vld [vmem:[%s4619 + $0x8] sm:$0xff]
    %v6722 = vld [vmem:[%s4619 + $0x10] sm:$0xff]
    %v6723 = vld [vmem:[%s4619 + $0x18] sm:$0xff]
    %v6724 = vld [vmem:[%s4619 + $0x20] sm:$0xff]
    %v6725 = vld [vmem:[%s4619 + $0x28] sm:$0xff]
    %v6726 = vld [vmem:[%s4619 + $0x30] sm:$0xff]
    %v6727 = vld [vmem:[%s4619 + $0x38] sm:$0xff]
    %v6728 = vld [vmem:[%s4619 + $0x40] sm:$0xff]
    %v6729 = vld [vmem:[%s4619 + $0x48] sm:$0xff]
    %v6730 = vld [vmem:[%s4619 + $0x50] sm:$0xff]
    %v6731 = vld [vmem:[%s4619 + $0x58] sm:$0xff]
    %v6732 = vld [vmem:[%s4619 + $0x60] sm:$0xff]
    %v6733 = vld [vmem:[%s4619 + $0x68] sm:$0xff]
    %v6734 = vld [vmem:[%s4619 + $0x70] sm:$0xff]
    %v6735 = vld [vmem:[%s4619 + $0x78] sm:$0xff]
    %v6736 = vld [vmem:[%s4636] sm:$0x1]
    %v6738 = vlaneseq
    %v6739 = vshrl.u32 %v6738, 7
    %v6740 = vsub.s32 0, %v6739
    %v6741 = vrot.slane %v6736, %v6740
    %6743 = vmatprep.subr.mxu0 0.0
    %6744 = vmatpush1.msra.mxu0 %v6720
    %6745 = vmatprep.subr.mxu0 0.0
    %6746 = vmatpush1.msra.mxu0 %v6721
    %6747 = vmatprep.subr.mxu0 0.0
    %6748 = vmatpush1.msra.mxu0 %v6722
    %6749 = vmatprep.subr.mxu0 0.0
    %6750 = vmatpush1.msra.mxu0 %v6723
    %6751 = vmatprep.subr.mxu0 0.0
    %6752 = vmatpush1.msra.mxu0 %v6724
    %6753 = vmatprep.subr.mxu0 0.0
    %6754 = vmatpush1.msra.mxu0 %v6725
    %6755 = vmatprep.subr.mxu0 0.0
    %6756 = vmatpush1.msra.mxu0 %v6726
    %6757 = vmatprep.subr.mxu0 0.0
    %6758 = vmatpush1.msra.mxu0 %v6727
    %6759 = vmatprep.subr.mxu0 0.0
    %6760 = vmatpush1.msra.mxu0 %v6728
    %6761 = vmatprep.subr.mxu0 0.0
    %6762 = vmatpush1.msra.mxu0 %v6729
    %6763 = vmatprep.subr.mxu0 0.0
    %6764 = vmatpush1.msra.mxu0 %v6730
    %6765 = vmatprep.subr.mxu0 0.0
    %6766 = vmatpush1.msra.mxu0 %v6731
    %6767 = vmatprep.subr.mxu0 0.0
    %6768 = vmatpush1.msra.mxu0 %v6732
    %6769 = vmatprep.subr.mxu0 0.0
    %6770 = vmatpush1.msra.mxu0 %v6733
    %6771 = vmatprep.subr.mxu0 0.0
    %6772 = vmatpush1.msra.mxu0 %v6734
    %6773 = vmatprep.subr.mxu0 0.0
    %6774 = vmatpush1.msra.mxu0 %v6735
    %6775 = vmatprep.subr.mxu0 0.0
    %6776 = vmatpush1.msra.mxu0 0.0
    %6777 = vmatprep.subr.mxu0 0.0
    %6778 = vmatpush1.msra.mxu0 0.0
    %6779 = vmatprep.subr.mxu0 0.0
    %6780 = vmatpush1.msra.mxu0 0.0
    %6781 = vmatprep.subr.mxu0 0.0
    %6782 = vmatpush1.msra.mxu0 0.0
    %6783 = vmatprep.subr.mxu0 0.0
    %6784 = vmatpush1.msra.mxu0 0.0
    %6785 = vmatprep.subr.mxu0 0.0
    %6786 = vmatpush1.msra.mxu0 0.0
    %6787 = vmatprep.subr.mxu0 0.0
    %6788 = vmatpush1.msra.mxu0 0.0
    %6789 = vmatprep.subr.mxu0 0.0
    %6790 = vmatpush1.msra.mxu0 0.0
    %6791 = vmatprep.subr.mxu0 0.0
    %6792 = vmatpush1.msra.mxu0 0.0
    %6793 = vmatprep.subr.mxu0 0.0
    %6794 = vmatpush1.msra.mxu0 0.0
    %6795 = vmatprep.subr.mxu0 0.0
    %6796 = vmatpush1.msra.mxu0 0.0
    %6797 = vmatprep.subr.mxu0 0.0
    %6798 = vmatpush1.msra.mxu0 0.0
    %6799 = vmatprep.subr.mxu0 0.0
    %6800 = vmatpush1.msra.mxu0 0.0
    %6801 = vmatprep.subr.mxu0 0.0
    %6802 = vmatpush1.msra.mxu0 0.0
    %6803 = vmatprep.subr.mxu0 0.0
    %6804 = vmatpush1.msra.mxu0 0.0
    %6805 = vmatprep.subr.mxu0 0.0
    %6806 = vmatpush1.msra.mxu0 0.0
    %6807 = vmatprep.mubr.f32.mxu0 0.0
    %6808 = vmatmul.mubr.f32.gmra.mrb[0].mxu0 %v4412
    %v6809 = vpop.f32.mrb[0].mxu0
    %v6810 = vadd.f32 %v6741, %v6809
    %v6811 = vpop.f32.mrb[0].mxu0
    %6812 = vdwg.mxu0
    %v6813 = vld [vmem:[%s4714] sm:$0xff]
    %v6814 = vld [vmem:[%s4714 + $0x8] sm:$0xff]
    %v6815 = vld [vmem:[%s4714 + $0x10] sm:$0xff]
    %v6816 = vld [vmem:[%s4714 + $0x18] sm:$0xff]
    %v6817 = vld [vmem:[%s4714 + $0x20] sm:$0xff]
    %v6818 = vld [vmem:[%s4714 + $0x28] sm:$0xff]
    %v6819 = vld [vmem:[%s4714 + $0x30] sm:$0xff]
    %v6820 = vld [vmem:[%s4714 + $0x38] sm:$0xff]
    %v6821 = vld [vmem:[%s4714 + $0x40] sm:$0xff]
    %v6822 = vld [vmem:[%s4714 + $0x48] sm:$0xff]
    %v6823 = vld [vmem:[%s4714 + $0x50] sm:$0xff]
    %v6824 = vld [vmem:[%s4714 + $0x58] sm:$0xff]
    %v6825 = vld [vmem:[%s4714 + $0x60] sm:$0xff]
    %v6826 = vld [vmem:[%s4714 + $0x68] sm:$0xff]
    %v6827 = vld [vmem:[%s4714 + $0x70] sm:$0xff]
    %v6828 = vld [vmem:[%s4714 + $0x78] sm:$0xff]
    %v6829 = vld [vmem:[%s4731] sm:$0x1]
    %v6831 = vlaneseq
    %v6832 = vshrl.u32 %v6831, 7
    %v6833 = vsub.s32 0, %v6832
    %v6834 = vrot.slane %v6829, %v6833
    %6836 = vmatprep.subr.mxu0 0.0
    %6837 = vmatpush1.msra.mxu0 %v6813
    %6838 = vmatprep.subr.mxu0 0.0
    %6839 = vmatpush1.msra.mxu0 %v6814
    %6840 = vmatprep.subr.mxu0 0.0
    %6841 = vmatpush1.msra.mxu0 %v6815
    %6842 = vmatprep.subr.mxu0 0.0
    %6843 = vmatpush1.msra.mxu0 %v6816
    %6844 = vmatprep.subr.mxu0 0.0
    %6845 = vmatpush1.msra.mxu0 %v6817
    %6846 = vmatprep.subr.mxu0 0.0
    %6847 = vmatpush1.msra.mxu0 %v6818
    %6848 = vmatprep.subr.mxu0 0.0
    %6849 = vmatpush1.msra.mxu0 %v6819
    %6850 = vmatprep.subr.mxu0 0.0
    %6851 = vmatpush1.msra.mxu0 %v6820
    %6852 = vmatprep.subr.mxu0 0.0
    %6853 = vmatpush1.msra.mxu0 %v6821
    %6854 = vmatprep.subr.mxu0 0.0
    %6855 = vmatpush1.msra.mxu0 %v6822
    %6856 = vmatprep.subr.mxu0 0.0
    %6857 = vmatpush1.msra.mxu0 %v6823
    %6858 = vmatprep.subr.mxu0 0.0
    %6859 = vmatpush1.msra.mxu0 %v6824
    %6860 = vmatprep.subr.mxu0 0.0
    %6861 = vmatpush1.msra.mxu0 %v6825
    %6862 = vmatprep.subr.mxu0 0.0
    %6863 = vmatpush1.msra.mxu0 %v6826
    %6864 = vmatprep.subr.mxu0 0.0
    %6865 = vmatpush1.msra.mxu0 %v6827
    %6866 = vmatprep.subr.mxu0 0.0
    %6867 = vmatpush1.msra.mxu0 %v6828
    %6868 = vmatprep.subr.mxu0 0.0
    %6869 = vmatpush1.msra.mxu0 0.0
    %6870 = vmatprep.subr.mxu0 0.0
    %6871 = vmatpush1.msra.mxu0 0.0
    %6872 = vmatprep.subr.mxu0 0.0
    %6873 = vmatpush1.msra.mxu0 0.0
    %6874 = vmatprep.subr.mxu0 0.0
    %6875 = vmatpush1.msra.mxu0 0.0
    %6876 = vmatprep.subr.mxu0 0.0
    %6877 = vmatpush1.msra.mxu0 0.0
    %6878 = vmatprep.subr.mxu0 0.0
    %6879 = vmatpush1.msra.mxu0 0.0
    %6880 = vmatprep.subr.mxu0 0.0
    %6881 = vmatpush1.msra.mxu0 0.0
    %6882 = vmatprep.subr.mxu0 0.0
    %6883 = vmatpush1.msra.mxu0 0.0
    %6884 = vmatprep.subr.mxu0 0.0
    %6885 = vmatpush1.msra.mxu0 0.0
    %6886 = vmatprep.subr.mxu0 0.0
    %6887 = vmatpush1.msra.mxu0 0.0
    %6888 = vmatprep.subr.mxu0 0.0
    %6889 = vmatpush1.msra.mxu0 0.0
    %6890 = vmatprep.subr.mxu0 0.0
    %6891 = vmatpush1.msra.mxu0 0.0
    %6892 = vmatprep.subr.mxu0 0.0
    %6893 = vmatpush1.msra.mxu0 0.0
    %6894 = vmatprep.subr.mxu0 0.0
    %6895 = vmatpush1.msra.mxu0 0.0
    %6896 = vmatprep.subr.mxu0 0.0
    %6897 = vmatpush1.msra.mxu0 0.0
    %6898 = vmatprep.subr.mxu0 0.0
    %6899 = vmatpush1.msra.mxu0 0.0
    %6900 = vmatprep.mubr.f32.mxu0 0.0
    %6901 = vmatmul.mubr.f32.gmra.mrb[0].mxu0 %v4412
    %v6902 = vpop.f32.mrb[0].mxu0
    %v6903 = vadd.f32 %v6834, %v6902
    %v6904 = vpop.f32.mrb[0].mxu0
    %6905 = vdwg.mxu0
    %v6906 = vld [vmem:[%s29] sm:$0xff]
    %v6907 = vld [vmem:[%s29 + $0x8] sm:$0xff]
    %v6908 = vld [vmem:[%s29 + $0x10] sm:$0xff]
    %v6909 = vld [vmem:[%s29 + $0x18] sm:$0xff]
    %v6910 = vld [vmem:[%s29 + $0x20] sm:$0xff]
    %v6911 = vld [vmem:[%s29 + $0x28] sm:$0xff]
    %v6912 = vld [vmem:[%s29 + $0x30] sm:$0xff]
    %v6913 = vld [vmem:[%s29 + $0x38] sm:$0xff]
    %v6914 = vld [vmem:[%s29 + $0x40] sm:$0xff]
    %v6915 = vld [vmem:[%s29 + $0x48] sm:$0xff]
    %v6916 = vld [vmem:[%s29 + $0x50] sm:$0xff]
    %v6917 = vld [vmem:[%s29 + $0x58] sm:$0xff]
    %v6918 = vld [vmem:[%s29 + $0x60] sm:$0xff]
    %v6919 = vld [vmem:[%s29 + $0x68] sm:$0xff]
    %v6920 = vld [vmem:[%s29 + $0x70] sm:$0xff]
    %v6921 = vld [vmem:[%s29 + $0x78] sm:$0xff]
    %v6922 = vld [vmem:[%s35] sm:$0x1]
    %v6924 = vlaneseq
    %v6925 = vshrl.u32 %v6924, 7
    %v6926 = vsub.s32 0, %v6925
    %v6927 = vrot.slane %v6922, %v6926
    %6929 = vmatprep.subr.mxu0 0.0
    %6930 = vmatpush1.msra.mxu0 %v6906
    %6931 = vmatprep.subr.mxu0 0.0
    %6932 = vmatpush1.msra.mxu0 %v6907
    %6933 = vmatprep.subr.mxu0 0.0
    %6934 = vmatpush1.msra.mxu0 %v6908
    %6935 = vmatprep.subr.mxu0 0.0
    %6936 = vmatpush1.msra.mxu0 %v6909
    %6937 = vmatprep.subr.mxu0 0.0
    %6938 = vmatpush1.msra.mxu0 %v6910
    %6939 = vmatprep.subr.mxu0 0.0
    %6940 = vmatpush1.msra.mxu0 %v6911
    %6941 = vmatprep.subr.mxu0 0.0
    %6942 = vmatpush1.msra.mxu0 %v6912
    %6943 = vmatprep.subr.mxu0 0.0
    %6944 = vmatpush1.msra.mxu0 %v6913
    %6945 = vmatprep.subr.mxu0 0.0
    %6946 = vmatpush1.msra.mxu0 %v6914
    %6947 = vmatprep.subr.mxu0 0.0
    %6948 = vmatpush1.msra.mxu0 %v6915
    %6949 = vmatprep.subr.mxu0 0.0
    %6950 = vmatpush1.msra.mxu0 %v6916
    %6951 = vmatprep.subr.mxu0 0.0
    %6952 = vmatpush1.msra.mxu0 %v6917
    %6953 = vmatprep.subr.mxu0 0.0
    %6954 = vmatpush1.msra.mxu0 %v6918
    %6955 = vmatprep.subr.mxu0 0.0
    %6956 = vmatpush1.msra.mxu0 %v6919
    %6957 = vmatprep.subr.mxu0 0.0
    %6958 = vmatpush1.msra.mxu0 %v6920
    %6959 = vmatprep.subr.mxu0 0.0
    %6960 = vmatpush1.msra.mxu0 %v6921
    %6961 = vmatprep.subr.mxu0 0.0
    %6962 = vmatpush1.msra.mxu0 0.0
    %6963 = vmatprep.subr.mxu0 0.0
    %6964 = vmatpush1.msra.mxu0 0.0
    %6965 = vmatprep.subr.mxu0 0.0
    %6966 = vmatpush1.msra.mxu0 0.0
    %6967 = vmatprep.subr.mxu0 0.0
    %6968 = vmatpush1.msra.mxu0 0.0
    %6969 = vmatprep.subr.mxu0 0.0
    %6970 = vmatpush1.msra.mxu0 0.0
    %6971 = vmatprep.subr.mxu0 0.0
    %6972 = vmatpush1.msra.mxu0 0.0
    %6973 = vmatprep.subr.mxu0 0.0
    %6974 = vmatpush1.msra.mxu0 0.0
    %6975 = vmatprep.subr.mxu0 0.0
    %6976 = vmatpush1.msra.mxu0 0.0
    %6977 = vmatprep.subr.mxu0 0.0
    %6978 = vmatpush1.msra.mxu0 0.0
    %6979 = vmatprep.subr.mxu0 0.0
    %6980 = vmatpush1.msra.mxu0 0.0
    %6981 = vmatprep.subr.mxu0 0.0
    %6982 = vmatpush1.msra.mxu0 0.0
    %6983 = vmatprep.subr.mxu0 0.0
    %6984 = vmatpush1.msra.mxu0 0.0
    %6985 = vmatprep.subr.mxu0 0.0
    %6986 = vmatpush1.msra.mxu0 0.0
    %6987 = vmatprep.subr.mxu0 0.0
    %6988 = vmatpush1.msra.mxu0 0.0
    %6989 = vmatprep.subr.mxu0 0.0
    %6990 = vmatpush1.msra.mxu0 0.0
    %6991 = vmatprep.subr.mxu0 0.0
    %6992 = vmatpush1.msra.mxu0 0.0
    %6993 = vmatprep.mubr.f32.mxu0 0.0
    %6994 = vmatmul.mubr.f32.gmra.mrb[0].mxu0 %v4430
    %v6995 = vpop.f32.mrb[0].mxu0
    %v6996 = vadd.f32 %v6927, %v6995
    %v6997 = vpop.f32.mrb[0].mxu0
    %6998 = vdwg.mxu0
    %v6999 = vld [vmem:[%s4902] sm:$0xff]
    %v7000 = vld [vmem:[%s4902 + $0x8] sm:$0xff]
    %v7001 = vld [vmem:[%s4902 + $0x10] sm:$0xff]
    %v7002 = vld [vmem:[%s4902 + $0x18] sm:$0xff]
    %v7003 = vld [vmem:[%s4902 + $0x20] sm:$0xff]
    %v7004 = vld [vmem:[%s4902 + $0x28] sm:$0xff]
    %v7005 = vld [vmem:[%s4902 + $0x30] sm:$0xff]
    %v7006 = vld [vmem:[%s4902 + $0x38] sm:$0xff]
    %v7007 = vld [vmem:[%s4902 + $0x40] sm:$0xff]
    %v7008 = vld [vmem:[%s4902 + $0x48] sm:$0xff]
    %v7009 = vld [vmem:[%s4902 + $0x50] sm:$0xff]
    %v7010 = vld [vmem:[%s4902 + $0x58] sm:$0xff]
    %v7011 = vld [vmem:[%s4902 + $0x60] sm:$0xff]
    %v7012 = vld [vmem:[%s4902 + $0x68] sm:$0xff]
    %v7013 = vld [vmem:[%s4902 + $0x70] sm:$0xff]
    %v7014 = vld [vmem:[%s4902 + $0x78] sm:$0xff]
    %v7015 = vld [vmem:[%s4919] sm:$0x1]
    %v7017 = vlaneseq
    %v7018 = vshrl.u32 %v7017, 7
    %v7019 = vsub.s32 0, %v7018
    %v7020 = vrot.slane %v7015, %v7019
    %7022 = vmatprep.subr.mxu0 0.0
    %7023 = vmatpush1.msra.mxu0 %v6999
    %7024 = vmatprep.subr.mxu0 0.0
    %7025 = vmatpush1.msra.mxu0 %v7000
    %7026 = vmatprep.subr.mxu0 0.0
    %7027 = vmatpush1.msra.mxu0 %v7001
    %7028 = vmatprep.subr.mxu0 0.0
    %7029 = vmatpush1.msra.mxu0 %v7002
    %7030 = vmatprep.subr.mxu0 0.0
    %7031 = vmatpush1.msra.mxu0 %v7003
    %7032 = vmatprep.subr.mxu0 0.0
    %7033 = vmatpush1.msra.mxu0 %v7004
    %7034 = vmatprep.subr.mxu0 0.0
    %7035 = vmatpush1.msra.mxu0 %v7005
    %7036 = vmatprep.subr.mxu0 0.0
    %7037 = vmatpush1.msra.mxu0 %v7006
    %7038 = vmatprep.subr.mxu0 0.0
    %7039 = vmatpush1.msra.mxu0 %v7007
    %7040 = vmatprep.subr.mxu0 0.0
    %7041 = vmatpush1.msra.mxu0 %v7008
    %7042 = vmatprep.subr.mxu0 0.0
    %7043 = vmatpush1.msra.mxu0 %v7009
    %7044 = vmatprep.subr.mxu0 0.0
    %7045 = vmatpush1.msra.mxu0 %v7010
    %7046 = vmatprep.subr.mxu0 0.0
    %7047 = vmatpush1.msra.mxu0 %v7011
    %7048 = vmatprep.subr.mxu0 0.0
    %7049 = vmatpush1.msra.mxu0 %v7012
    %7050 = vmatprep.subr.mxu0 0.0
    %7051 = vmatpush1.msra.mxu0 %v7013
    %7052 = vmatprep.subr.mxu0 0.0
    %7053 = vmatpush1.msra.mxu0 %v7014
    %7054 = vmatprep.subr.mxu0 0.0
    %7055 = vmatpush1.msra.mxu0 0.0
    %7056 = vmatprep.subr.mxu0 0.0
    %7057 = vmatpush1.msra.mxu0 0.0
    %7058 = vmatprep.subr.mxu0 0.0
    %7059 = vmatpush1.msra.mxu0 0.0
    %7060 = vmatprep.subr.mxu0 0.0
    %7061 = vmatpush1.msra.mxu0 0.0
    %7062 = vmatprep.subr.mxu0 0.0
    %7063 = vmatpush1.msra.mxu0 0.0
    %7064 = vmatprep.subr.mxu0 0.0
    %7065 = vmatpush1.msra.mxu0 0.0
    %7066 = vmatprep.subr.mxu0 0.0
    %7067 = vmatpush1.msra.mxu0 0.0
    %7068 = vmatprep.subr.mxu0 0.0
    %7069 = vmatpush1.msra.mxu0 0.0
    %7070 = vmatprep.subr.mxu0 0.0
    %7071 = vmatpush1.msra.mxu0 0.0
    %7072 = vmatprep.subr.mxu0 0.0
    %7073 = vmatpush1.msra.mxu0 0.0
    %7074 = vmatprep.subr.mxu0 0.0
    %7075 = vmatpush1.msra.mxu0 0.0
    %7076 = vmatprep.subr.mxu0 0.0
    %7077 = vmatpush1.msra.mxu0 0.0
    %7078 = vmatprep.subr.mxu0 0.0
    %7079 = vmatpush1.msra.mxu0 0.0
    %7080 = vmatprep.subr.mxu0 0.0
    %7081 = vmatpush1.msra.mxu0 0.0
    %7082 = vmatprep.subr.mxu0 0.0
    %7083 = vmatpush1.msra.mxu0 0.0
    %7084 = vmatprep.subr.mxu0 0.0
    %7085 = vmatpush1.msra.mxu0 0.0
    %7086 = vmatprep.mubr.f32.mxu0 0.0
    %7087 = vmatmul.mubr.f32.gmra.mrb[0].mxu0 %v4430
    %v7088 = vpop.f32.mrb[0].mxu0
    %v7089 = vadd.f32 %v7020, %v7088
    %v7090 = vpop.f32.mrb[0].mxu0
    %7091 = vdwg.mxu0
    %v7092 = vld [vmem:[%s4997] sm:$0xff]
    %v7093 = vld [vmem:[%s4997 + $0x8] sm:$0xff]
    %v7094 = vld [vmem:[%s4997 + $0x10] sm:$0xff]
    %v7095 = vld [vmem:[%s4997 + $0x18] sm:$0xff]
    %v7096 = vld [vmem:[%s4997 + $0x20] sm:$0xff]
    %v7097 = vld [vmem:[%s4997 + $0x28] sm:$0xff]
    %v7098 = vld [vmem:[%s4997 + $0x30] sm:$0xff]
    %v7099 = vld [vmem:[%s4997 + $0x38] sm:$0xff]
    %v7100 = vld [vmem:[%s4997 + $0x40] sm:$0xff]
    %v7101 = vld [vmem:[%s4997 + $0x48] sm:$0xff]
    %v7102 = vld [vmem:[%s4997 + $0x50] sm:$0xff]
    %v7103 = vld [vmem:[%s4997 + $0x58] sm:$0xff]
    %v7104 = vld [vmem:[%s4997 + $0x60] sm:$0xff]
    %v7105 = vld [vmem:[%s4997 + $0x68] sm:$0xff]
    %v7106 = vld [vmem:[%s4997 + $0x70] sm:$0xff]
    %v7107 = vld [vmem:[%s4997 + $0x78] sm:$0xff]
    %v7108 = vld [vmem:[%s5014] sm:$0x1]
    %v7110 = vlaneseq
    %v7111 = vshrl.u32 %v7110, 7
    %v7112 = vsub.s32 0, %v7111
    %v7113 = vrot.slane %v7108, %v7112
    %7115 = vmatprep.subr.mxu0 0.0
    %7116 = vmatpush1.msra.mxu0 %v7092
    %7117 = vmatprep.subr.mxu0 0.0
    %7118 = vmatpush1.msra.mxu0 %v7093
    %7119 = vmatprep.subr.mxu0 0.0
    %7120 = vmatpush1.msra.mxu0 %v7094
    %7121 = vmatprep.subr.mxu0 0.0
    %7122 = vmatpush1.msra.mxu0 %v7095
    %7123 = vmatprep.subr.mxu0 0.0
    %7124 = vmatpush1.msra.mxu0 %v7096
    %7125 = vmatprep.subr.mxu0 0.0
    %7126 = vmatpush1.msra.mxu0 %v7097
    %7127 = vmatprep.subr.mxu0 0.0
    %7128 = vmatpush1.msra.mxu0 %v7098
    %7129 = vmatprep.subr.mxu0 0.0
    %7130 = vmatpush1.msra.mxu0 %v7099
    %7131 = vmatprep.subr.mxu0 0.0
    %7132 = vmatpush1.msra.mxu0 %v7100
    %7133 = vmatprep.subr.mxu0 0.0
    %7134 = vmatpush1.msra.mxu0 %v7101
    %7135 = vmatprep.subr.mxu0 0.0
    %7136 = vmatpush1.msra.mxu0 %v7102
    %7137 = vmatprep.subr.mxu0 0.0
    %7138 = vmatpush1.msra.mxu0 %v7103
    %7139 = vmatprep.subr.mxu0 0.0
    %7140 = vmatpush1.msra.mxu0 %v7104
    %7141 = vmatprep.subr.mxu0 0.0
    %7142 = vmatpush1.msra.mxu0 %v7105
    %7143 = vmatprep.subr.mxu0 0.0
    %7144 = vmatpush1.msra.mxu0 %v7106
    %7145 = vmatprep.subr.mxu0 0.0
    %7146 = vmatpush1.msra.mxu0 %v7107
    %7147 = vmatprep.subr.mxu0 0.0
    %7148 = vmatpush1.msra.mxu0 0.0
    %7149 = vmatprep.subr.mxu0 0.0
    %7150 = vmatpush1.msra.mxu0 0.0
    %7151 = vmatprep.subr.mxu0 0.0
    %7152 = vmatpush1.msra.mxu0 0.0
    %7153 = vmatprep.subr.mxu0 0.0
    %7154 = vmatpush1.msra.mxu0 0.0
    %7155 = vmatprep.subr.mxu0 0.0
    %7156 = vmatpush1.msra.mxu0 0.0
    %7157 = vmatprep.subr.mxu0 0.0
    %7158 = vmatpush1.msra.mxu0 0.0
    %7159 = vmatprep.subr.mxu0 0.0
    %7160 = vmatpush1.msra.mxu0 0.0
    %7161 = vmatprep.subr.mxu0 0.0
    %7162 = vmatpush1.msra.mxu0 0.0
    %7163 = vmatprep.subr.mxu0 0.0
    %7164 = vmatpush1.msra.mxu0 0.0
    %7165 = vmatprep.subr.mxu0 0.0
    %7166 = vmatpush1.msra.mxu0 0.0
    %7167 = vmatprep.subr.mxu0 0.0
    %7168 = vmatpush1.msra.mxu0 0.0
    %7169 = vmatprep.subr.mxu0 0.0
    %7170 = vmatpush1.msra.mxu0 0.0
    %7171 = vmatprep.subr.mxu0 0.0
    %7172 = vmatpush1.msra.mxu0 0.0
    %7173 = vmatprep.subr.mxu0 0.0
    %7174 = vmatpush1.msra.mxu0 0.0
    %7175 = vmatprep.subr.mxu0 0.0
    %7176 = vmatpush1.msra.mxu0 0.0
    %7177 = vmatprep.subr.mxu0 0.0
    %7178 = vmatpush1.msra.mxu0 0.0
    %7179 = vmatprep.mubr.f32.mxu0 0.0
    %7180 = vmatmul.mubr.f32.gmra.mrb[0].mxu0 %v4430
    %v7181 = vpop.f32.mrb[0].mxu0
    %v7182 = vadd.f32 %v7113, %v7181
    %v7183 = vpop.f32.mrb[0].mxu0
    %7184 = vdwg.mxu0
    %v7185 = vld [vmem:[%s5092] sm:$0xff]
    %v7186 = vld [vmem:[%s5092 + $0x8] sm:$0xff]
    %v7187 = vld [vmem:[%s5092 + $0x10] sm:$0xff]
    %v7188 = vld [vmem:[%s5092 + $0x18] sm:$0xff]
    %v7189 = vld [vmem:[%s5092 + $0x20] sm:$0xff]
    %v7190 = vld [vmem:[%s5092 + $0x28] sm:$0xff]
    %v7191 = vld [vmem:[%s5092 + $0x30] sm:$0xff]
    %v7192 = vld [vmem:[%s5092 + $0x38] sm:$0xff]
    %v7193 = vld [vmem:[%s5092 + $0x40] sm:$0xff]
    %v7194 = vld [vmem:[%s5092 + $0x48] sm:$0xff]
    %v7195 = vld [vmem:[%s5092 + $0x50] sm:$0xff]
    %v7196 = vld [vmem:[%s5092 + $0x58] sm:$0xff]
    %v7197 = vld [vmem:[%s5092 + $0x60] sm:$0xff]
    %v7198 = vld [vmem:[%s5092 + $0x68] sm:$0xff]
    %v7199 = vld [vmem:[%s5092 + $0x70] sm:$0xff]
    %v7200 = vld [vmem:[%s5092 + $0x78] sm:$0xff]
    %v7201 = vld [vmem:[%s5109] sm:$0x1]
    %v7203 = vlaneseq
    %v7204 = vshrl.u32 %v7203, 7
    %v7205 = vsub.s32 0, %v7204
    %v7206 = vrot.slane %v7201, %v7205
    %7208 = vmatprep.subr.mxu0 0.0
    %7209 = vmatpush1.msra.mxu0 %v7185
    %7210 = vmatprep.subr.mxu0 0.0
    %7211 = vmatpush1.msra.mxu0 %v7186
    %7212 = vmatprep.subr.mxu0 0.0
    %7213 = vmatpush1.msra.mxu0 %v7187
    %7214 = vmatprep.subr.mxu0 0.0
    %7215 = vmatpush1.msra.mxu0 %v7188
    %7216 = vmatprep.subr.mxu0 0.0
    %7217 = vmatpush1.msra.mxu0 %v7189
    %7218 = vmatprep.subr.mxu0 0.0
    %7219 = vmatpush1.msra.mxu0 %v7190
    %7220 = vmatprep.subr.mxu0 0.0
    %7221 = vmatpush1.msra.mxu0 %v7191
    %7222 = vmatprep.subr.mxu0 0.0
    %7223 = vmatpush1.msra.mxu0 %v7192
    %7224 = vmatprep.subr.mxu0 0.0
    %7225 = vmatpush1.msra.mxu0 %v7193
    %7226 = vmatprep.subr.mxu0 0.0
    %7227 = vmatpush1.msra.mxu0 %v7194
    %7228 = vmatprep.subr.mxu0 0.0
    %7229 = vmatpush1.msra.mxu0 %v7195
    %7230 = vmatprep.subr.mxu0 0.0
    %7231 = vmatpush1.msra.mxu0 %v7196
    %7232 = vmatprep.subr.mxu0 0.0
    %7233 = vmatpush1.msra.mxu0 %v7197
    %7234 = vmatprep.subr.mxu0 0.0
    %7235 = vmatpush1.msra.mxu0 %v7198
    %7236 = vmatprep.subr.mxu0 0.0
    %7237 = vmatpush1.msra.mxu0 %v7199
    %7238 = vmatprep.subr.mxu0 0.0
    %7239 = vmatpush1.msra.mxu0 %v7200
    %7240 = vmatprep.subr.mxu0 0.0
    %7241 = vmatpush1.msra.mxu0 0.0
    %7242 = vmatprep.subr.mxu0 0.0
    %7243 = vmatpush1.msra.mxu0 0.0
    %7244 = vmatprep.subr.mxu0 0.0
    %7245 = vmatpush1.msra.mxu0 0.0
    %7246 = vmatprep.subr.mxu0 0.0
    %7247 = vmatpush1.msra.mxu0 0.0
    %7248 = vmatprep.subr.mxu0 0.0
    %7249 = vmatpush1.msra.mxu0 0.0
    %7250 = vmatprep.subr.mxu0 0.0
    %7251 = vmatpush1.msra.mxu0 0.0
    %7252 = vmatprep.subr.mxu0 0.0
    %7253 = vmatpush1.msra.mxu0 0.0
    %7254 = vmatprep.subr.mxu0 0.0
    %7255 = vmatpush1.msra.mxu0 0.0
    %7256 = vmatprep.subr.mxu0 0.0
    %7257 = vmatpush1.msra.mxu0 0.0
    %7258 = vmatprep.subr.mxu0 0.0
    %7259 = vmatpush1.msra.mxu0 0.0
    %7260 = vmatprep.subr.mxu0 0.0
    %7261 = vmatpush1.msra.mxu0 0.0
    %7262 = vmatprep.subr.mxu0 0.0
    %7263 = vmatpush1.msra.mxu0 0.0
    %7264 = vmatprep.subr.mxu0 0.0
    %7265 = vmatpush1.msra.mxu0 0.0
    %7266 = vmatprep.subr.mxu0 0.0
    %7267 = vmatpush1.msra.mxu0 0.0
    %7268 = vmatprep.subr.mxu0 0.0
    %7269 = vmatpush1.msra.mxu0 0.0
    %7270 = vmatprep.subr.mxu0 0.0
    %7271 = vmatpush1.msra.mxu0 0.0
    %7272 = vmatprep.mubr.f32.mxu0 0.0
    %7273 = vmatmul.mubr.f32.gmra.mrb[0].mxu0 %v4430
    %v7274 = vpop.f32.mrb[0].mxu0
    %v7275 = vadd.f32 %v7206, %v7274
    %v7276 = vpop.f32.mrb[0].mxu0
    %7277 = vdwg.mxu0
    %v7278 = vld [vmem:[%s31] sm:$0xff]
    %v7279 = vld [vmem:[%s31 + $0x8] sm:$0xff]
    %v7280 = vld [vmem:[%s31 + $0x10] sm:$0xff]
    %v7281 = vld [vmem:[%s31 + $0x18] sm:$0xff]
    %v7282 = vld [vmem:[%s31 + $0x20] sm:$0xff]
    %v7283 = vld [vmem:[%s31 + $0x28] sm:$0xff]
    %v7284 = vld [vmem:[%s31 + $0x30] sm:$0xff]
    %v7285 = vld [vmem:[%s31 + $0x38] sm:$0xff]
    %v7286 = vld [vmem:[%s31 + $0x40] sm:$0xff]
    %v7287 = vld [vmem:[%s31 + $0x48] sm:$0xff]
    %v7288 = vld [vmem:[%s31 + $0x50] sm:$0xff]
    %v7289 = vld [vmem:[%s31 + $0x58] sm:$0xff]
    %v7290 = vld [vmem:[%s31 + $0x60] sm:$0xff]
    %v7291 = vld [vmem:[%s31 + $0x68] sm:$0xff]
    %v7292 = vld [vmem:[%s31 + $0x70] sm:$0xff]
    %v7293 = vld [vmem:[%s31 + $0x78] sm:$0xff]
    %v7294 = vld [vmem:[%s37] sm:$0x1]
    %v7296 = vlaneseq
    %v7297 = vshrl.u32 %v7296, 7
    %v7298 = vsub.s32 0, %v7297
    %v7299 = vrot.slane %v7294, %v7298
    %7301 = vmatprep.subr.mxu0 0.0
    %7302 = vmatpush1.msra.mxu0 %v7278
    %7303 = vmatprep.subr.mxu0 0.0
    %7304 = vmatpush1.msra.mxu0 %v7279
    %7305 = vmatprep.subr.mxu0 0.0
    %7306 = vmatpush1.msra.mxu0 %v7280
    %7307 = vmatprep.subr.mxu0 0.0
    %7308 = vmatpush1.msra.mxu0 %v7281
    %7309 = vmatprep.subr.mxu0 0.0
    %7310 = vmatpush1.msra.mxu0 %v7282
    %7311 = vmatprep.subr.mxu0 0.0
    %7312 = vmatpush1.msra.mxu0 %v7283
    %7313 = vmatprep.subr.mxu0 0.0
    %7314 = vmatpush1.msra.mxu0 %v7284
    %7315 = vmatprep.subr.mxu0 0.0
    %7316 = vmatpush1.msra.mxu0 %v7285
    %7317 = vmatprep.subr.mxu0 0.0
    %7318 = vmatpush1.msra.mxu0 %v7286
    %7319 = vmatprep.subr.mxu0 0.0
    %7320 = vmatpush1.msra.mxu0 %v7287
    %7321 = vmatprep.subr.mxu0 0.0
    %7322 = vmatpush1.msra.mxu0 %v7288
    %7323 = vmatprep.subr.mxu0 0.0
    %7324 = vmatpush1.msra.mxu0 %v7289
    %7325 = vmatprep.subr.mxu0 0.0
    %7326 = vmatpush1.msra.mxu0 %v7290
    %7327 = vmatprep.subr.mxu0 0.0
    %7328 = vmatpush1.msra.mxu0 %v7291
    %7329 = vmatprep.subr.mxu0 0.0
    %7330 = vmatpush1.msra.mxu0 %v7292
    %7331 = vmatprep.subr.mxu0 0.0
    %7332 = vmatpush1.msra.mxu0 %v7293
    %7333 = vmatprep.subr.mxu0 0.0
    %7334 = vmatpush1.msra.mxu0 0.0
    %7335 = vmatprep.subr.mxu0 0.0
    %7336 = vmatpush1.msra.mxu0 0.0
    %7337 = vmatprep.subr.mxu0 0.0
    %7338 = vmatpush1.msra.mxu0 0.0
    %7339 = vmatprep.subr.mxu0 0.0
    %7340 = vmatpush1.msra.mxu0 0.0
    %7341 = vmatprep.subr.mxu0 0.0
    %7342 = vmatpush1.msra.mxu0 0.0
    %7343 = vmatprep.subr.mxu0 0.0
    %7344 = vmatpush1.msra.mxu0 0.0
    %7345 = vmatprep.subr.mxu0 0.0
    %7346 = vmatpush1.msra.mxu0 0.0
    %7347 = vmatprep.subr.mxu0 0.0
    %7348 = vmatpush1.msra.mxu0 0.0
    %7349 = vmatprep.subr.mxu0 0.0
    %7350 = vmatpush1.msra.mxu0 0.0
    %7351 = vmatprep.subr.mxu0 0.0
    %7352 = vmatpush1.msra.mxu0 0.0
    %7353 = vmatprep.subr.mxu0 0.0
    %7354 = vmatpush1.msra.mxu0 0.0
    %7355 = vmatprep.subr.mxu0 0.0
    %7356 = vmatpush1.msra.mxu0 0.0
    %7357 = vmatprep.subr.mxu0 0.0
    %7358 = vmatpush1.msra.mxu0 0.0
    %7359 = vmatprep.subr.mxu0 0.0
    %7360 = vmatpush1.msra.mxu0 0.0
    %7361 = vmatprep.subr.mxu0 0.0
    %7362 = vmatpush1.msra.mxu0 0.0
    %7363 = vmatprep.subr.mxu0 0.0
    %7364 = vmatpush1.msra.mxu0 0.0
    %7365 = vmatprep.mubr.f32.mxu0 0.0
    %7366 = vmatmul.mubr.f32.gmra.mrb[0].mxu0 %v134
    %v7367 = vpop.f32.mrb[0].mxu0
    %v7368 = vadd.f32 %v7299, %v7367
    %v7369 = vpop.f32.mrb[0].mxu0
    %7370 = vdwg.mxu0
    %v7371 = vld [vmem:[%s5280] sm:$0xff]
    %v7372 = vld [vmem:[%s5280 + $0x8] sm:$0xff]
    %v7373 = vld [vmem:[%s5280 + $0x10] sm:$0xff]
    %v7374 = vld [vmem:[%s5280 + $0x18] sm:$0xff]
    %v7375 = vld [vmem:[%s5280 + $0x20] sm:$0xff]
    %v7376 = vld [vmem:[%s5280 + $0x28] sm:$0xff]
    %v7377 = vld [vmem:[%s5280 + $0x30] sm:$0xff]
    %v7378 = vld [vmem:[%s5280 + $0x38] sm:$0xff]
    %v7379 = vld [vmem:[%s5280 + $0x40] sm:$0xff]
    %v7380 = vld [vmem:[%s5280 + $0x48] sm:$0xff]
    %v7381 = vld [vmem:[%s5280 + $0x50] sm:$0xff]
    %v7382 = vld [vmem:[%s5280 + $0x58] sm:$0xff]
    %v7383 = vld [vmem:[%s5280 + $0x60] sm:$0xff]
    %v7384 = vld [vmem:[%s5280 + $0x68] sm:$0xff]
    %v7385 = vld [vmem:[%s5280 + $0x70] sm:$0xff]
    %v7386 = vld [vmem:[%s5280 + $0x78] sm:$0xff]
    %v7387 = vld [vmem:[%s5297] sm:$0x1]
    %v7389 = vlaneseq
    %v7390 = vshrl.u32 %v7389, 7
    %v7391 = vsub.s32 0, %v7390
    %v7392 = vrot.slane %v7387, %v7391
    %7394 = vmatprep.subr.mxu0 0.0
    %7395 = vmatpush1.msra.mxu0 %v7371
    %7396 = vmatprep.subr.mxu0 0.0
    %7397 = vmatpush1.msra.mxu0 %v7372
    %7398 = vmatprep.subr.mxu0 0.0
    %7399 = vmatpush1.msra.mxu0 %v7373
    %7400 = vmatprep.subr.mxu0 0.0
    %7401 = vmatpush1.msra.mxu0 %v7374
    %7402 = vmatprep.subr.mxu0 0.0
    %7403 = vmatpush1.msra.mxu0 %v7375
    %7404 = vmatprep.subr.mxu0 0.0
    %7405 = vmatpush1.msra.mxu0 %v7376
    %7406 = vmatprep.subr.mxu0 0.0
    %7407 = vmatpush1.msra.mxu0 %v7377
    %7408 = vmatprep.subr.mxu0 0.0
    %7409 = vmatpush1.msra.mxu0 %v7378
    %7410 = vmatprep.subr.mxu0 0.0
    %7411 = vmatpush1.msra.mxu0 %v7379
    %7412 = vmatprep.subr.mxu0 0.0
    %7413 = vmatpush1.msra.mxu0 %v7380
    %7414 = vmatprep.subr.mxu0 0.0
    %7415 = vmatpush1.msra.mxu0 %v7381
    %7416 = vmatprep.subr.mxu0 0.0
    %7417 = vmatpush1.msra.mxu0 %v7382
    %7418 = vmatprep.subr.mxu0 0.0
    %7419 = vmatpush1.msra.mxu0 %v7383
    %7420 = vmatprep.subr.mxu0 0.0
    %7421 = vmatpush1.msra.mxu0 %v7384
    %7422 = vmatprep.subr.mxu0 0.0
    %7423 = vmatpush1.msra.mxu0 %v7385
    %7424 = vmatprep.subr.mxu0 0.0
    %7425 = vmatpush1.msra.mxu0 %v7386
    %7426 = vmatprep.subr.mxu0 0.0
    %7427 = vmatpush1.msra.mxu0 0.0
    %7428 = vmatprep.subr.mxu0 0.0
    %7429 = vmatpush1.msra.mxu0 0.0
    %7430 = vmatprep.subr.mxu0 0.0
    %7431 = vmatpush1.msra.mxu0 0.0
    %7432 = vmatprep.subr.mxu0 0.0
    %7433 = vmatpush1.msra.mxu0 0.0
    %7434 = vmatprep.subr.mxu0 0.0
    %7435 = vmatpush1.msra.mxu0 0.0
    %7436 = vmatprep.subr.mxu0 0.0
    %7437 = vmatpush1.msra.mxu0 0.0
    %7438 = vmatprep.subr.mxu0 0.0
    %7439 = vmatpush1.msra.mxu0 0.0
    %7440 = vmatprep.subr.mxu0 0.0
    %7441 = vmatpush1.msra.mxu0 0.0
    %7442 = vmatprep.subr.mxu0 0.0
    %7443 = vmatpush1.msra.mxu0 0.0
    %7444 = vmatprep.subr.mxu0 0.0
    %7445 = vmatpush1.msra.mxu0 0.0
    %7446 = vmatprep.subr.mxu0 0.0
    %7447 = vmatpush1.msra.mxu0 0.0
    %7448 = vmatprep.subr.mxu0 0.0
    %7449 = vmatpush1.msra.mxu0 0.0
    %7450 = vmatprep.subr.mxu0 0.0
    %7451 = vmatpush1.msra.mxu0 0.0
    %7452 = vmatprep.subr.mxu0 0.0
    %7453 = vmatpush1.msra.mxu0 0.0
    %7454 = vmatprep.subr.mxu0 0.0
    %7455 = vmatpush1.msra.mxu0 0.0
    %7456 = vmatprep.subr.mxu0 0.0
    %7457 = vmatpush1.msra.mxu0 0.0
    %7458 = vmatprep.mubr.f32.mxu0 0.0
    %7459 = vmatmul.mubr.f32.gmra.mrb[0].mxu0 %v134
    %v7460 = vpop.f32.mrb[0].mxu0
    %v7461 = vadd.f32 %v7392, %v7460
    %v7462 = vpop.f32.mrb[0].mxu0
    %7463 = vdwg.mxu0
    %v7464 = vld [vmem:[%s5375] sm:$0xff]
    %v7465 = vld [vmem:[%s5375 + $0x8] sm:$0xff]
    %v7466 = vld [vmem:[%s5375 + $0x10] sm:$0xff]
    %v7467 = vld [vmem:[%s5375 + $0x18] sm:$0xff]
    %v7468 = vld [vmem:[%s5375 + $0x20] sm:$0xff]
    %v7469 = vld [vmem:[%s5375 + $0x28] sm:$0xff]
    %v7470 = vld [vmem:[%s5375 + $0x30] sm:$0xff]
    %v7471 = vld [vmem:[%s5375 + $0x38] sm:$0xff]
    %v7472 = vld [vmem:[%s5375 + $0x40] sm:$0xff]
    %v7473 = vld [vmem:[%s5375 + $0x48] sm:$0xff]
    %v7474 = vld [vmem:[%s5375 + $0x50] sm:$0xff]
    %v7475 = vld [vmem:[%s5375 + $0x58] sm:$0xff]
    %v7476 = vld [vmem:[%s5375 + $0x60] sm:$0xff]
    %v7477 = vld [vmem:[%s5375 + $0x68] sm:$0xff]
    %v7478 = vld [vmem:[%s5375 + $0x70] sm:$0xff]
    %v7479 = vld [vmem:[%s5375 + $0x78] sm:$0xff]
    %v7480 = vld [vmem:[%s5392] sm:$0x1]
    %v7482 = vlaneseq
    %v7483 = vshrl.u32 %v7482, 7
    %v7484 = vsub.s32 0, %v7483
    %v7485 = vrot.slane %v7480, %v7484
    %7487 = vmatprep.subr.mxu0 0.0
    %7488 = vmatpush1.msra.mxu0 %v7464
    %7489 = vmatprep.subr.mxu0 0.0
    %7490 = vmatpush1.msra.mxu0 %v7465
    %7491 = vmatprep.subr.mxu0 0.0
    %7492 = vmatpush1.msra.mxu0 %v7466
    %7493 = vmatprep.subr.mxu0 0.0
    %7494 = vmatpush1.msra.mxu0 %v7467
    %7495 = vmatprep.subr.mxu0 0.0
    %7496 = vmatpush1.msra.mxu0 %v7468
    %7497 = vmatprep.subr.mxu0 0.0
    %7498 = vmatpush1.msra.mxu0 %v7469
    %7499 = vmatprep.subr.mxu0 0.0
    %7500 = vmatpush1.msra.mxu0 %v7470
    %7501 = vmatprep.subr.mxu0 0.0
    %7502 = vmatpush1.msra.mxu0 %v7471
    %7503 = vmatprep.subr.mxu0 0.0
    %7504 = vmatpush1.msra.mxu0 %v7472
    %7505 = vmatprep.subr.mxu0 0.0
    %7506 = vmatpush1.msra.mxu0 %v7473
    %7507 = vmatprep.subr.mxu0 0.0
    %7508 = vmatpush1.msra.mxu0 %v7474
    %7509 = vmatprep.subr.mxu0 0.0
    %7510 = vmatpush1.msra.mxu0 %v7475
    %7511 = vmatprep.subr.mxu0 0.0
    %7512 = vmatpush1.msra.mxu0 %v7476
    %7513 = vmatprep.subr.mxu0 0.0
    %7514 = vmatpush1.msra.mxu0 %v7477
    %7515 = vmatprep.subr.mxu0 0.0
    %7516 = vmatpush1.msra.mxu0 %v7478
    %7517 = vmatprep.subr.mxu0 0.0
    %7518 = vmatpush1.msra.mxu0 %v7479
    %7519 = vmatprep.subr.mxu0 0.0
    %7520 = vmatpush1.msra.mxu0 0.0
    %7521 = vmatprep.subr.mxu0 0.0
    %7522 = vmatpush1.msra.mxu0 0.0
    %7523 = vmatprep.subr.mxu0 0.0
    %7524 = vmatpush1.msra.mxu0 0.0
    %7525 = vmatprep.subr.mxu0 0.0
    %7526 = vmatpush1.msra.mxu0 0.0
    %7527 = vmatprep.subr.mxu0 0.0
    %7528 = vmatpush1.msra.mxu0 0.0
    %7529 = vmatprep.subr.mxu0 0.0
    %7530 = vmatpush1.msra.mxu0 0.0
    %7531 = vmatprep.subr.mxu0 0.0
    %7532 = vmatpush1.msra.mxu0 0.0
    %7533 = vmatprep.subr.mxu0 0.0
    %7534 = vmatpush1.msra.mxu0 0.0
    %7535 = vmatprep.subr.mxu0 0.0
    %7536 = vmatpush1.msra.mxu0 0.0
    %7537 = vmatprep.subr.mxu0 0.0
    %7538 = vmatpush1.msra.mxu0 0.0
    %7539 = vmatprep.subr.mxu0 0.0
    %7540 = vmatpush1.msra.mxu0 0.0
    %7541 = vmatprep.subr.mxu0 0.0
    %7542 = vmatpush1.msra.mxu0 0.0
    %7543 = vmatprep.subr.mxu0 0.0
    %7544 = vmatpush1.msra.mxu0 0.0
    %7545 = vmatprep.subr.mxu0 0.0
    %7546 = vmatpush1.msra.mxu0 0.0
    %7547 = vmatprep.subr.mxu0 0.0
    %7548 = vmatpush1.msra.mxu0 0.0
    %7549 = vmatprep.subr.mxu0 0.0
    %7550 = vmatpush1.msra.mxu0 0.0
    %7551 = vmatprep.mubr.f32.mxu0 0.0
    %7552 = vmatmul.mubr.f32.gmra.mrb[0].mxu0 %v134
    %v7553 = vpop.f32.mrb[0].mxu0
    %v7554 = vadd.f32 %v7485, %v7553
    %v7555 = vpop.f32.mrb[0].mxu0
    %7556 = vdwg.mxu0
    %v7557 = vld [vmem:[%s5470] sm:$0xff]
    %v7558 = vld [vmem:[%s5470 + $0x8] sm:$0xff]
    %v7559 = vld [vmem:[%s5470 + $0x10] sm:$0xff]
    %v7560 = vld [vmem:[%s5470 + $0x18] sm:$0xff]
    %v7561 = vld [vmem:[%s5470 + $0x20] sm:$0xff]
    %v7562 = vld [vmem:[%s5470 + $0x28] sm:$0xff]
    %v7563 = vld [vmem:[%s5470 + $0x30] sm:$0xff]
    %v7564 = vld [vmem:[%s5470 + $0x38] sm:$0xff]
    %v7565 = vld [vmem:[%s5470 + $0x40] sm:$0xff]
    %v7566 = vld [vmem:[%s5470 + $0x48] sm:$0xff]
    %v7567 = vld [vmem:[%s5470 + $0x50] sm:$0xff]
    %v7568 = vld [vmem:[%s5470 + $0x58] sm:$0xff]
    %v7569 = vld [vmem:[%s5470 + $0x60] sm:$0xff]
    %v7570 = vld [vmem:[%s5470 + $0x68] sm:$0xff]
    %v7571 = vld [vmem:[%s5470 + $0x70] sm:$0xff]
    %v7572 = vld [vmem:[%s5470 + $0x78] sm:$0xff]
    %v7573 = vld [vmem:[%s5487] sm:$0x1]
    %v7575 = vlaneseq
    %v7576 = vshrl.u32 %v7575, 7
    %v7577 = vsub.s32 0, %v7576
    %v7578 = vrot.slane %v7573, %v7577
    %7580 = vmatprep.subr.mxu0 0.0
    %7581 = vmatpush1.msra.mxu0 %v7557
    %7582 = vmatprep.subr.mxu0 0.0
    %7583 = vmatpush1.msra.mxu0 %v7558
    %7584 = vmatprep.subr.mxu0 0.0
    %7585 = vmatpush1.msra.mxu0 %v7559
    %7586 = vmatprep.subr.mxu0 0.0
    %7587 = vmatpush1.msra.mxu0 %v7560
    %7588 = vmatprep.subr.mxu0 0.0
    %7589 = vmatpush1.msra.mxu0 %v7561
    %7590 = vmatprep.subr.mxu0 0.0
    %7591 = vmatpush1.msra.mxu0 %v7562
    %7592 = vmatprep.subr.mxu0 0.0
    %7593 = vmatpush1.msra.mxu0 %v7563
    %7594 = vmatprep.subr.mxu0 0.0
    %7595 = vmatpush1.msra.mxu0 %v7564
    %7596 = vmatprep.subr.mxu0 0.0
    %7597 = vmatpush1.msra.mxu0 %v7565
    %7598 = vmatprep.subr.mxu0 0.0
    %7599 = vmatpush1.msra.mxu0 %v7566
    %7600 = vmatprep.subr.mxu0 0.0
    %7601 = vmatpush1.msra.mxu0 %v7567
    %7602 = vmatprep.subr.mxu0 0.0
    %7603 = vmatpush1.msra.mxu0 %v7568
    %7604 = vmatprep.subr.mxu0 0.0
    %7605 = vmatpush1.msra.mxu0 %v7569
    %7606 = vmatprep.subr.mxu0 0.0
    %7607 = vmatpush1.msra.mxu0 %v7570
    %7608 = vmatprep.subr.mxu0 0.0
    %7609 = vmatpush1.msra.mxu0 %v7571
    %7610 = vmatprep.subr.mxu0 0.0
    %7611 = vmatpush1.msra.mxu0 %v7572
    %7612 = vmatprep.subr.mxu0 0.0
    %7613 = vmatpush1.msra.mxu0 0.0
    %7614 = vmatprep.subr.mxu0 0.0
    %7615 = vmatpush1.msra.mxu0 0.0
    %7616 = vmatprep.subr.mxu0 0.0
    %7617 = vmatpush1.msra.mxu0 0.0
    %7618 = vmatprep.subr.mxu0 0.0
    %7619 = vmatpush1.msra.mxu0 0.0
    %7620 = vmatprep.subr.mxu0 0.0
    %7621 = vmatpush1.msra.mxu0 0.0
    %7622 = vmatprep.subr.mxu0 0.0
    %7623 = vmatpush1.msra.mxu0 0.0
    %7624 = vmatprep.subr.mxu0 0.0
    %7625 = vmatpush1.msra.mxu0 0.0
    %7626 = vmatprep.subr.mxu0 0.0
    %7627 = vmatpush1.msra.mxu0 0.0
    %7628 = vmatprep.subr.mxu0 0.0
    %7629 = vmatpush1.msra.mxu0 0.0
    %7630 = vmatprep.subr.mxu0 0.0
    %7631 = vmatpush1.msra.mxu0 0.0
    %7632 = vmatprep.subr.mxu0 0.0
    %7633 = vmatpush1.msra.mxu0 0.0
    %7634 = vmatprep.subr.mxu0 0.0
    %7635 = vmatpush1.msra.mxu0 0.0
    %7636 = vmatprep.subr.mxu0 0.0
    %7637 = vmatpush1.msra.mxu0 0.0
    %7638 = vmatprep.subr.mxu0 0.0
    %7639 = vmatpush1.msra.mxu0 0.0
    %7640 = vmatprep.subr.mxu0 0.0
    %7641 = vmatpush1.msra.mxu0 0.0
    %7642 = vmatprep.subr.mxu0 0.0
    %7643 = vmatpush1.msra.mxu0 0.0
    %7644 = vmatprep.mubr.f32.mxu0 0.0
    %7645 = vmatmul.mubr.f32.gmra.mrb[0].mxu0 %v134
    %v7646 = vpop.f32.mrb[0].mxu0
    %v7647 = vadd.f32 %v7578, %v7646
    %v7648 = vpop.f32.mrb[0].mxu0
    %7649 = vdwg.mxu0
    %v7651 = vsel %vm1299, %v6624, 0
    %v7654 = vsel %vm1299, %v6996, 0
    %7656 = vmatprep.subr.mxu0 0.0
    %7657 = vmatpush1.xpose.msra.mxu0 %v7654
    %7658 = vmatprep.subr.mxu0 0.0
    %7659 = vmatpush1.xpose.msra.mxu0 0.0
    %7660 = vmatprep.subr.mxu0 0.0
    %7661 = vmatpush1.xpose.msra.mxu0 0.0
    %7662 = vmatprep.subr.mxu0 0.0
    %7663 = vmatpush1.xpose.msra.mxu0 0.0
    %7664 = vmatprep.subr.mxu0 0.0
    %7665 = vmatpush1.xpose.msra.mxu0 0.0
    %7666 = vmatprep.subr.mxu0 0.0
    %7667 = vmatpush1.xpose.msra.mxu0 0.0
    %7668 = vmatprep.subr.mxu0 0.0
    %7669 = vmatpush1.xpose.msra.mxu0 0.0
    %7670 = vmatprep.subr.mxu0 0.0
    %7671 = vmatpush1.xpose.msra.mxu0 0.0
    %7672 = vmatprep.subr.mxu0 0.0
    %7673 = vmatpush1.xpose.msra.mxu0 0.0
    %7674 = vmatprep.subr.mxu0 0.0
    %7675 = vmatpush1.xpose.msra.mxu0 0.0
    %7676 = vmatprep.subr.mxu0 0.0
    %7677 = vmatpush1.xpose.msra.mxu0 0.0
    %7678 = vmatprep.subr.mxu0 0.0
    %7679 = vmatpush1.xpose.msra.mxu0 0.0
    %7680 = vmatprep.subr.mxu0 0.0
    %7681 = vmatpush1.xpose.msra.mxu0 0.0
    %7682 = vmatprep.subr.mxu0 0.0
    %7683 = vmatpush1.xpose.msra.mxu0 0.0
    %7684 = vmatprep.subr.mxu0 0.0
    %7685 = vmatpush1.xpose.msra.mxu0 0.0
    %7686 = vmatprep.subr.mxu0 0.0
    %7687 = vmatpush1.xpose.msra.mxu0 0.0
    %7688 = vmatprep.subr.mxu0 0.0
    %7689 = vmatpush1.xpose.msra.mxu0 0.0
    %7690 = vmatprep.subr.mxu0 0.0
    %7691 = vmatpush1.xpose.msra.mxu0 0.0
    %7692 = vmatprep.subr.mxu0 0.0
    %7693 = vmatpush1.xpose.msra.mxu0 0.0
    %7694 = vmatprep.subr.mxu0 0.0
    %7695 = vmatpush1.xpose.msra.mxu0 0.0
    %7696 = vmatprep.subr.mxu0 0.0
    %7697 = vmatpush1.xpose.msra.mxu0 0.0
    %7698 = vmatprep.subr.mxu0 0.0
    %7699 = vmatpush1.xpose.msra.mxu0 0.0
    %7700 = vmatprep.subr.mxu0 0.0
    %7701 = vmatpush1.xpose.msra.mxu0 0.0
    %7702 = vmatprep.subr.mxu0 0.0
    %7703 = vmatpush1.xpose.msra.mxu0 0.0
    %7704 = vmatprep.subr.mxu0 0.0
    %7705 = vmatpush1.xpose.msra.mxu0 0.0
    %7706 = vmatprep.subr.mxu0 0.0
    %7707 = vmatpush1.xpose.msra.mxu0 0.0
    %7708 = vmatprep.subr.mxu0 0.0
    %7709 = vmatpush1.xpose.msra.mxu0 0.0
    %7710 = vmatprep.subr.mxu0 0.0
    %7711 = vmatpush1.xpose.msra.mxu0 0.0
    %7712 = vmatprep.subr.mxu0 0.0
    %7713 = vmatpush1.xpose.msra.mxu0 0.0
    %7714 = vmatprep.subr.mxu0 0.0
    %7715 = vmatpush1.xpose.msra.mxu0 0.0
    %7716 = vmatprep.subr.mxu0 0.0
    %7717 = vmatpush1.xpose.msra.mxu0 0.0
    %7718 = vmatprep.subr.mxu0 0.0
    %7719 = vmatpush1.xpose.msra.mxu0 0.0
    %7720 = vmatprep.mubr.f32.mxu0 0.0
    %7721 = vmatmul.mubr.f32.gmra.mrb[0].mxu0 %v7651
    %v7722 = vpop.f32.mrb[0].mxu0
    %v7723 = vadd.f32 0.0, %v7722
    %v7724 = vpop.f32.mrb[0].mxu0
    %7725 = vdwg.mxu0
    %v7727 = vsel %vm1299, %v6717, 0
    %v7730 = vsel %vm1299, %v7089, 0
    %7732 = vmatprep.subr.mxu0 0.0
    %7733 = vmatpush1.xpose.msra.mxu0 %v7730
    %7734 = vmatprep.subr.mxu0 0.0
    %7735 = vmatpush1.xpose.msra.mxu0 0.0
    %7736 = vmatprep.subr.mxu0 0.0
    %7737 = vmatpush1.xpose.msra.mxu0 0.0
    %7738 = vmatprep.subr.mxu0 0.0
    %7739 = vmatpush1.xpose.msra.mxu0 0.0
    %7740 = vmatprep.subr.mxu0 0.0
    %7741 = vmatpush1.xpose.msra.mxu0 0.0
    %7742 = vmatprep.subr.mxu0 0.0
    %7743 = vmatpush1.xpose.msra.mxu0 0.0
    %7744 = vmatprep.subr.mxu0 0.0
    %7745 = vmatpush1.xpose.msra.mxu0 0.0
    %7746 = vmatprep.subr.mxu0 0.0
    %7747 = vmatpush1.xpose.msra.mxu0 0.0
    %7748 = vmatprep.subr.mxu0 0.0
    %7749 = vmatpush1.xpose.msra.mxu0 0.0
    %7750 = vmatprep.subr.mxu0 0.0
    %7751 = vmatpush1.xpose.msra.mxu0 0.0
    %7752 = vmatprep.subr.mxu0 0.0
    %7753 = vmatpush1.xpose.msra.mxu0 0.0
    %7754 = vmatprep.subr.mxu0 0.0
    %7755 = vmatpush1.xpose.msra.mxu0 0.0
    %7756 = vmatprep.subr.mxu0 0.0
    %7757 = vmatpush1.xpose.msra.mxu0 0.0
    %7758 = vmatprep.subr.mxu0 0.0
    %7759 = vmatpush1.xpose.msra.mxu0 0.0
    %7760 = vmatprep.subr.mxu0 0.0
    %7761 = vmatpush1.xpose.msra.mxu0 0.0
    %7762 = vmatprep.subr.mxu0 0.0
    %7763 = vmatpush1.xpose.msra.mxu0 0.0
    %7764 = vmatprep.subr.mxu0 0.0
    %7765 = vmatpush1.xpose.msra.mxu0 0.0
    %7766 = vmatprep.subr.mxu0 0.0
    %7767 = vmatpush1.xpose.msra.mxu0 0.0
    %7768 = vmatprep.subr.mxu0 0.0
    %7769 = vmatpush1.xpose.msra.mxu0 0.0
    %7770 = vmatprep.subr.mxu0 0.0
    %7771 = vmatpush1.xpose.msra.mxu0 0.0
    %7772 = vmatprep.subr.mxu0 0.0
    %7773 = vmatpush1.xpose.msra.mxu0 0.0
    %7774 = vmatprep.subr.mxu0 0.0
    %7775 = vmatpush1.xpose.msra.mxu0 0.0
    %7776 = vmatprep.subr.mxu0 0.0
    %7777 = vmatpush1.xpose.msra.mxu0 0.0
    %7778 = vmatprep.subr.mxu0 0.0
    %7779 = vmatpush1.xpose.msra.mxu0 0.0
    %7780 = vmatprep.subr.mxu0 0.0
    %7781 = vmatpush1.xpose.msra.mxu0 0.0
    %7782 = vmatprep.subr.mxu0 0.0
    %7783 = vmatpush1.xpose.msra.mxu0 0.0
    %7784 = vmatprep.subr.mxu0 0.0
    %7785 = vmatpush1.xpose.msra.mxu0 0.0
    %7786 = vmatprep.subr.mxu0 0.0
    %7787 = vmatpush1.xpose.msra.mxu0 0.0
    %7788 = vmatprep.subr.mxu0 0.0
    %7789 = vmatpush1.xpose.msra.mxu0 0.0
    %7790 = vmatprep.subr.mxu0 0.0
    %7791 = vmatpush1.xpose.msra.mxu0 0.0
    %7792 = vmatprep.subr.mxu0 0.0
    %7793 = vmatpush1.xpose.msra.mxu0 0.0
    %7794 = vmatprep.subr.mxu0 0.0
    %7795 = vmatpush1.xpose.msra.mxu0 0.0
    %7796 = vmatprep.mubr.f32.mxu0 0.0
    %7797 = vmatmul.mubr.f32.gmra.mrb[0].mxu0 %v7727
    %v7798 = vpop.f32.mrb[0].mxu0
    %v7799 = vadd.f32 0.0, %v7798
    %v7800 = vpop.f32.mrb[0].mxu0
    %7801 = vdwg.mxu0
    %v7803 = vsel %vm1299, %v6810, 0
    %v7806 = vsel %vm1299, %v7182, 0
    %7808 = vmatprep.subr.mxu0 0.0
    %7809 = vmatpush1.xpose.msra.mxu0 %v7806
    %7810 = vmatprep.subr.mxu0 0.0
    %7811 = vmatpush1.xpose.msra.mxu0 0.0
    %7812 = vmatprep.subr.mxu0 0.0
    %7813 = vmatpush1.xpose.msra.mxu0 0.0
    %7814 = vmatprep.subr.mxu0 0.0
    %7815 = vmatpush1.xpose.msra.mxu0 0.0
    %7816 = vmatprep.subr.mxu0 0.0
    %7817 = vmatpush1.xpose.msra.mxu0 0.0
    %7818 = vmatprep.subr.mxu0 0.0
    %7819 = vmatpush1.xpose.msra.mxu0 0.0
    %7820 = vmatprep.subr.mxu0 0.0
    %7821 = vmatpush1.xpose.msra.mxu0 0.0
    %7822 = vmatprep.subr.mxu0 0.0
    %7823 = vmatpush1.xpose.msra.mxu0 0.0
    %7824 = vmatprep.subr.mxu0 0.0
    %7825 = vmatpush1.xpose.msra.mxu0 0.0
    %7826 = vmatprep.subr.mxu0 0.0
    %7827 = vmatpush1.xpose.msra.mxu0 0.0
    %7828 = vmatprep.subr.mxu0 0.0
    %7829 = vmatpush1.xpose.msra.mxu0 0.0
    %7830 = vmatprep.subr.mxu0 0.0
    %7831 = vmatpush1.xpose.msra.mxu0 0.0
    %7832 = vmatprep.subr.mxu0 0.0
    %7833 = vmatpush1.xpose.msra.mxu0 0.0
    %7834 = vmatprep.subr.mxu0 0.0
    %7835 = vmatpush1.xpose.msra.mxu0 0.0
    %7836 = vmatprep.subr.mxu0 0.0
    %7837 = vmatpush1.xpose.msra.mxu0 0.0
    %7838 = vmatprep.subr.mxu0 0.0
    %7839 = vmatpush1.xpose.msra.mxu0 0.0
    %7840 = vmatprep.subr.mxu0 0.0
    %7841 = vmatpush1.xpose.msra.mxu0 0.0
    %7842 = vmatprep.subr.mxu0 0.0
    %7843 = vmatpush1.xpose.msra.mxu0 0.0
    %7844 = vmatprep.subr.mxu0 0.0
    %7845 = vmatpush1.xpose.msra.mxu0 0.0
    %7846 = vmatprep.subr.mxu0 0.0
    %7847 = vmatpush1.xpose.msra.mxu0 0.0
    %7848 = vmatprep.subr.mxu0 0.0
    %7849 = vmatpush1.xpose.msra.mxu0 0.0
    %7850 = vmatprep.subr.mxu0 0.0
    %7851 = vmatpush1.xpose.msra.mxu0 0.0
    %7852 = vmatprep.subr.mxu0 0.0
    %7853 = vmatpush1.xpose.msra.mxu0 0.0
    %7854 = vmatprep.subr.mxu0 0.0
    %7855 = vmatpush1.xpose.msra.mxu0 0.0
    %7856 = vmatprep.subr.mxu0 0.0
    %7857 = vmatpush1.xpose.msra.mxu0 0.0
    %7858 = vmatprep.subr.mxu0 0.0
    %7859 = vmatpush1.xpose.msra.mxu0 0.0
    %7860 = vmatprep.subr.mxu0 0.0
    %7861 = vmatpush1.xpose.msra.mxu0 0.0
    %7862 = vmatprep.subr.mxu0 0.0
    %7863 = vmatpush1.xpose.msra.mxu0 0.0
    %7864 = vmatprep.subr.mxu0 0.0
    %7865 = vmatpush1.xpose.msra.mxu0 0.0
    %7866 = vmatprep.subr.mxu0 0.0
    %7867 = vmatpush1.xpose.msra.mxu0 0.0
    %7868 = vmatprep.subr.mxu0 0.0
    %7869 = vmatpush1.xpose.msra.mxu0 0.0
    %7870 = vmatprep.subr.mxu0 0.0
    %7871 = vmatpush1.xpose.msra.mxu0 0.0
    %7872 = vmatprep.mubr.f32.mxu0 0.0
    %7873 = vmatmul.mubr.f32.gmra.mrb[0].mxu0 %v7803
    %v7874 = vpop.f32.mrb[0].mxu0
    %v7875 = vadd.f32 0.0, %v7874
    %v7876 = vpop.f32.mrb[0].mxu0
    %7877 = vdwg.mxu0
    %v7879 = vsel %vm1299, %v6903, 0
    %v7882 = vsel %vm1299, %v7275, 0
    %7884 = vmatprep.subr.mxu0 0.0
    %7885 = vmatpush1.xpose.msra.mxu0 %v7882
    %7886 = vmatprep.subr.mxu0 0.0
    %7887 = vmatpush1.xpose.msra.mxu0 0.0
    %7888 = vmatprep.subr.mxu0 0.0
    %7889 = vmatpush1.xpose.msra.mxu0 0.0
    %7890 = vmatprep.subr.mxu0 0.0
    %7891 = vmatpush1.xpose.msra.mxu0 0.0
    %7892 = vmatprep.subr.mxu0 0.0
    %7893 = vmatpush1.xpose.msra.mxu0 0.0
    %7894 = vmatprep.subr.mxu0 0.0
    %7895 = vmatpush1.xpose.msra.mxu0 0.0
    %7896 = vmatprep.subr.mxu0 0.0
    %7897 = vmatpush1.xpose.msra.mxu0 0.0
    %7898 = vmatprep.subr.mxu0 0.0
    %7899 = vmatpush1.xpose.msra.mxu0 0.0
    %7900 = vmatprep.subr.mxu0 0.0
    %7901 = vmatpush1.xpose.msra.mxu0 0.0
    %7902 = vmatprep.subr.mxu0 0.0
    %7903 = vmatpush1.xpose.msra.mxu0 0.0
    %7904 = vmatprep.subr.mxu0 0.0
    %7905 = vmatpush1.xpose.msra.mxu0 0.0
    %7906 = vmatprep.subr.mxu0 0.0
    %7907 = vmatpush1.xpose.msra.mxu0 0.0
    %7908 = vmatprep.subr.mxu0 0.0
    %7909 = vmatpush1.xpose.msra.mxu0 0.0
    %7910 = vmatprep.subr.mxu0 0.0
    %7911 = vmatpush1.xpose.msra.mxu0 0.0
    %7912 = vmatprep.subr.mxu0 0.0
    %7913 = vmatpush1.xpose.msra.mxu0 0.0
    %7914 = vmatprep.subr.mxu0 0.0
    %7915 = vmatpush1.xpose.msra.mxu0 0.0
    %7916 = vmatprep.subr.mxu0 0.0
    %7917 = vmatpush1.xpose.msra.mxu0 0.0
    %7918 = vmatprep.subr.mxu0 0.0
    %7919 = vmatpush1.xpose.msra.mxu0 0.0
    %7920 = vmatprep.subr.mxu0 0.0
    %7921 = vmatpush1.xpose.msra.mxu0 0.0
    %7922 = vmatprep.subr.mxu0 0.0
    %7923 = vmatpush1.xpose.msra.mxu0 0.0
    %7924 = vmatprep.subr.mxu0 0.0
    %7925 = vmatpush1.xpose.msra.mxu0 0.0
    %7926 = vmatprep.subr.mxu0 0.0
    %7927 = vmatpush1.xpose.msra.mxu0 0.0
    %7928 = vmatprep.subr.mxu0 0.0
    %7929 = vmatpush1.xpose.msra.mxu0 0.0
    %7930 = vmatprep.subr.mxu0 0.0
    %7931 = vmatpush1.xpose.msra.mxu0 0.0
    %7932 = vmatprep.subr.mxu0 0.0
    %7933 = vmatpush1.xpose.msra.mxu0 0.0
    %7934 = vmatprep.subr.mxu0 0.0
    %7935 = vmatpush1.xpose.msra.mxu0 0.0
    %7936 = vmatprep.subr.mxu0 0.0
    %7937 = vmatpush1.xpose.msra.mxu0 0.0
    %7938 = vmatprep.subr.mxu0 0.0
    %7939 = vmatpush1.xpose.msra.mxu0 0.0
    %7940 = vmatprep.subr.mxu0 0.0
    %7941 = vmatpush1.xpose.msra.mxu0 0.0
    %7942 = vmatprep.subr.mxu0 0.0
    %7943 = vmatpush1.xpose.msra.mxu0 0.0
    %7944 = vmatprep.subr.mxu0 0.0
    %7945 = vmatpush1.xpose.msra.mxu0 0.0
    %7946 = vmatprep.subr.mxu0 0.0
    %7947 = vmatpush1.xpose.msra.mxu0 0.0
    %7948 = vmatprep.mubr.f32.mxu0 0.0
    %7949 = vmatmul.mubr.f32.gmra.mrb[0].mxu0 %v7879
    %v7950 = vpop.f32.mrb[0].mxu0
    %v7951 = vadd.f32 0.0, %v7950
    %v7952 = vpop.f32.mrb[0].mxu0
    %7953 = vdwg.mxu0
    %v7954 = vmul.f32 %v7723, 0.17677669
    %v7955 = vmul.f32 %v7799, 0.17677669
    %v7956 = vmul.f32 %v7875, 0.17677669
    %v7957 = vmul.f32 %v7951, 0.17677669
    %v7958 = vadd.f32 %v7954, %v146
    %v7959 = vadd.f32 %v7955, %v146
    %v7960 = vadd.f32 %v7956, %v146
    %v7961 = vadd.f32 %v7957, %v146
    %v7962 = vsel %vm1612, %v7958, -inf
    %7963 = vmax.xlane.f32.xlu0 %v7962
    %v7964 = vpop.xlane.xlu0 %7963
    %v7965 = vsel %vm1612, %v7959, -inf
    %7966 = vmax.xlane.f32.xlu0 %v7965
    %v7967 = vpop.xlane.xlu0 %7966
    %v7968 = vsel %vm1612, %v7960, -inf
    %7969 = vmax.xlane.f32.xlu0 %v7968
    %v7970 = vpop.xlane.xlu0 %7969
    %v7971 = vsel %vm1612, %v7961, -inf
    %7972 = vmax.xlane.f32.xlu0 %v7971
    %v7973 = vpop.xlane.xlu0 %7972
    %v7974 = vsub.f32 %v7958, %v7964
    %v7975 = vsub.f32 %v7959, %v7967
    %v7976 = vsub.f32 %v7960, %v7970
    %v7977 = vsub.f32 %v7961, %v7973
    %v7978 = vmul.f32 %v7974, 1.442695
    %v7979 = vpow.pop %v7978
    %v7980 = vmul.f32 %v7975, 1.442695
    %v7981 = vpow.pop %v7980
    %v7982 = vmul.f32 %v7976, 1.442695
    %v7983 = vpow.pop %v7982
    %v7984 = vmul.f32 %v7977, 1.442695
    %v7985 = vpow.pop %v7984
    %v7986 = vsel %vm1612, %v7979, 0.0
    %7987 = vadd.xlane.f32.xlu0 %v7986
    %v7988 = vpop.xlane.xlu0 %7987
    %v7989 = vsel %vm1612, %v7981, 0.0
    %7990 = vadd.xlane.f32.xlu0 %v7989
    %v7991 = vpop.xlane.xlu0 %7990
    %v7992 = vsel %vm1612, %v7983, 0.0
    %7993 = vadd.xlane.f32.xlu0 %v7992
    %v7994 = vpop.xlane.xlu0 %7993
    %v7995 = vsel %vm1612, %v7985, 0.0
    %7996 = vadd.xlane.f32.xlu0 %v7995
    %v7997 = vpop.xlane.xlu0 %7996
    %v7998 = vrcp.pop %v7988
    %v7999 = vrcp.pop %v7991
    %v8000 = vrcp.pop %v7994
    %v8001 = vrcp.pop %v7997
    %v8002 = vmul.f32 %v7979, %v7998
    %v8003 = vmul.f32 %v7981, %v7999
    %v8004 = vmul.f32 %v7983, %v8000
    %v8005 = vmul.f32 %v7985, %v8001
    %v8007 = vsel %vm1612, %v8002, 0
    %8009 = vmatprep.subr.mxu0 0.0
    %8010 = vmatpush1.msra.mxu0 %v7368
    %8011 = vmatprep.subr.mxu0 0.0
    %8012 = vmatpush1.msra.mxu0 0.0
    %8013 = vmatprep.subr.mxu0 0.0
    %8014 = vmatpush1.msra.mxu0 0.0
    %8015 = vmatprep.subr.mxu0 0.0
    %8016 = vmatpush1.msra.mxu0 0.0
    %8017 = vmatprep.subr.mxu0 0.0
    %8018 = vmatpush1.msra.mxu0 0.0
    %8019 = vmatprep.subr.mxu0 0.0
    %8020 = vmatpush1.msra.mxu0 0.0
    %8021 = vmatprep.subr.mxu0 0.0
    %8022 = vmatpush1.msra.mxu0 0.0
    %8023 = vmatprep.subr.mxu0 0.0
    %8024 = vmatpush1.msra.mxu0 0.0
    %8025 = vmatprep.subr.mxu0 0.0
    %8026 = vmatpush1.msra.mxu0 0.0
    %8027 = vmatprep.subr.mxu0 0.0
    %8028 = vmatpush1.msra.mxu0 0.0
    %8029 = vmatprep.subr.mxu0 0.0
    %8030 = vmatpush1.msra.mxu0 0.0
    %8031 = vmatprep.subr.mxu0 0.0
    %8032 = vmatpush1.msra.mxu0 0.0
    %8033 = vmatprep.subr.mxu0 0.0
    %8034 = vmatpush1.msra.mxu0 0.0
    %8035 = vmatprep.subr.mxu0 0.0
    %8036 = vmatpush1.msra.mxu0 0.0
    %8037 = vmatprep.subr.mxu0 0.0
    %8038 = vmatpush1.msra.mxu0 0.0
    %8039 = vmatprep.subr.mxu0 0.0
    %8040 = vmatpush1.msra.mxu0 0.0
    %8041 = vmatprep.subr.mxu0 0.0
    %8042 = vmatpush1.msra.mxu0 0.0
    %8043 = vmatprep.subr.mxu0 0.0
    %8044 = vmatpush1.msra.mxu0 0.0
    %8045 = vmatprep.subr.mxu0 0.0
    %8046 = vmatpush1.msra.mxu0 0.0
    %8047 = vmatprep.subr.mxu0 0.0
    %8048 = vmatpush1.msra.mxu0 0.0
    %8049 = vmatprep.subr.mxu0 0.0
    %8050 = vmatpush1.msra.mxu0 0.0
    %8051 = vmatprep.subr.mxu0 0.0
    %8052 = vmatpush1.msra.mxu0 0.0
    %8053 = vmatprep.subr.mxu0 0.0
    %8054 = vmatpush1.msra.mxu0 0.0
    %8055 = vmatprep.subr.mxu0 0.0
    %8056 = vmatpush1.msra.mxu0 0.0
    %8057 = vmatprep.subr.mxu0 0.0
    %8058 = vmatpush1.msra.mxu0 0.0
    %8059 = vmatprep.subr.mxu0 0.0
    %8060 = vmatpush1.msra.mxu0 0.0
    %8061 = vmatprep.subr.mxu0 0.0
    %8062 = vmatpush1.msra.mxu0 0.0
    %8063 = vmatprep.subr.mxu0 0.0
    %8064 = vmatpush1.msra.mxu0 0.0
    %8065 = vmatprep.subr.mxu0 0.0
    %8066 = vmatpush1.msra.mxu0 0.0
    %8067 = vmatprep.subr.mxu0 0.0
    %8068 = vmatpush1.msra.mxu0 0.0
    %8069 = vmatprep.subr.mxu0 0.0
    %8070 = vmatpush1.msra.mxu0 0.0
    %8071 = vmatprep.subr.mxu0 0.0
    %8072 = vmatpush1.msra.mxu0 0.0
    %8073 = vmatprep.mubr.f32.mxu0 0.0
    %8074 = vmatmul.mubr.f32.gmra.mrb[0].mxu0 %v8007
    %v8075 = vpop.f32.mrb[0].mxu0
    %v8076 = vadd.f32 0.0, %v8075
    %v8077 = vpop.f32.mrb[0].mxu0
    %8078 = vdwg.mxu0
    %v8080 = vsel %vm1612, %v8003, 0
    %8082 = vmatprep.subr.mxu0 0.0
    %8083 = vmatpush1.msra.mxu0 %v7461
    %8084 = vmatprep.subr.mxu0 0.0
    %8085 = vmatpush1.msra.mxu0 0.0
    %8086 = vmatprep.subr.mxu0 0.0
    %8087 = vmatpush1.msra.mxu0 0.0
    %8088 = vmatprep.subr.mxu0 0.0
    %8089 = vmatpush1.msra.mxu0 0.0
    %8090 = vmatprep.subr.mxu0 0.0
    %8091 = vmatpush1.msra.mxu0 0.0
    %8092 = vmatprep.subr.mxu0 0.0
    %8093 = vmatpush1.msra.mxu0 0.0
    %8094 = vmatprep.subr.mxu0 0.0
    %8095 = vmatpush1.msra.mxu0 0.0
    %8096 = vmatprep.subr.mxu0 0.0
    %8097 = vmatpush1.msra.mxu0 0.0
    %8098 = vmatprep.subr.mxu0 0.0
    %8099 = vmatpush1.msra.mxu0 0.0
    %8100 = vmatprep.subr.mxu0 0.0
    %8101 = vmatpush1.msra.mxu0 0.0
    %8102 = vmatprep.subr.mxu0 0.0
    %8103 = vmatpush1.msra.mxu0 0.0
    %8104 = vmatprep.subr.mxu0 0.0
    %8105 = vmatpush1.msra.mxu0 0.0
    %8106 = vmatprep.subr.mxu0 0.0
    %8107 = vmatpush1.msra.mxu0 0.0
    %8108 = vmatprep.subr.mxu0 0.0
    %8109 = vmatpush1.msra.mxu0 0.0
    %8110 = vmatprep.subr.mxu0 0.0
    %8111 = vmatpush1.msra.mxu0 0.0
    %8112 = vmatprep.subr.mxu0 0.0
    %8113 = vmatpush1.msra.mxu0 0.0
    %8114 = vmatprep.subr.mxu0 0.0
    %8115 = vmatpush1.msra.mxu0 0.0
    %8116 = vmatprep.subr.mxu0 0.0
    %8117 = vmatpush1.msra.mxu0 0.0
    %8118 = vmatprep.subr.mxu0 0.0
    %8119 = vmatpush1.msra.mxu0 0.0
    %8120 = vmatprep.subr.mxu0 0.0
    %8121 = vmatpush1.msra.mxu0 0.0
    %8122 = vmatprep.subr.mxu0 0.0
    %8123 = vmatpush1.msra.mxu0 0.0
    %8124 = vmatprep.subr.mxu0 0.0
    %8125 = vmatpush1.msra.mxu0 0.0
    %8126 = vmatprep.subr.mxu0 0.0
    %8127 = vmatpush1.msra.mxu0 0.0
    %8128 = vmatprep.subr.mxu0 0.0
    %8129 = vmatpush1.msra.mxu0 0.0
    %8130 = vmatprep.subr.mxu0 0.0
    %8131 = vmatpush1.msra.mxu0 0.0
    %8132 = vmatprep.subr.mxu0 0.0
    %8133 = vmatpush1.msra.mxu0 0.0
    %8134 = vmatprep.subr.mxu0 0.0
    %8135 = vmatpush1.msra.mxu0 0.0
    %8136 = vmatprep.subr.mxu0 0.0
    %8137 = vmatpush1.msra.mxu0 0.0
    %8138 = vmatprep.subr.mxu0 0.0
    %8139 = vmatpush1.msra.mxu0 0.0
    %8140 = vmatprep.subr.mxu0 0.0
    %8141 = vmatpush1.msra.mxu0 0.0
    %8142 = vmatprep.subr.mxu0 0.0
    %8143 = vmatpush1.msra.mxu0 0.0
    %8144 = vmatprep.subr.mxu0 0.0
    %8145 = vmatpush1.msra.mxu0 0.0
    %8146 = vmatprep.mubr.f32.mxu0 0.0
    %8147 = vmatmul.mubr.f32.gmra.mrb[0].mxu0 %v8080
    %v8148 = vpop.f32.mrb[0].mxu0
    %v8149 = vadd.f32 0.0, %v8148
    %v8150 = vpop.f32.mrb[0].mxu0
    %8151 = vdwg.mxu0
    %v8153 = vsel %vm1612, %v8004, 0
    %8155 = vmatprep.subr.mxu0 0.0
    %8156 = vmatpush1.msra.mxu0 %v7554
    %8157 = vmatprep.subr.mxu0 0.0
    %8158 = vmatpush1.msra.mxu0 0.0
    %8159 = vmatprep.subr.mxu0 0.0
    %8160 = vmatpush1.msra.mxu0 0.0
    %8161 = vmatprep.subr.mxu0 0.0
    %8162 = vmatpush1.msra.mxu0 0.0
    %8163 = vmatprep.subr.mxu0 0.0
    %8164 = vmatpush1.msra.mxu0 0.0
    %8165 = vmatprep.subr.mxu0 0.0
    %8166 = vmatpush1.msra.mxu0 0.0
    %8167 = vmatprep.subr.mxu0 0.0
    %8168 = vmatpush1.msra.mxu0 0.0
    %8169 = vmatprep.subr.mxu0 0.0
    %8170 = vmatpush1.msra.mxu0 0.0
    %8171 = vmatprep.subr.mxu0 0.0
    %8172 = vmatpush1.msra.mxu0 0.0
    %8173 = vmatprep.subr.mxu0 0.0
    %8174 = vmatpush1.msra.mxu0 0.0
    %8175 = vmatprep.subr.mxu0 0.0
    %8176 = vmatpush1.msra.mxu0 0.0
    %8177 = vmatprep.subr.mxu0 0.0
    %8178 = vmatpush1.msra.mxu0 0.0
    %8179 = vmatprep.subr.mxu0 0.0
    %8180 = vmatpush1.msra.mxu0 0.0
    %8181 = vmatprep.subr.mxu0 0.0
    %8182 = vmatpush1.msra.mxu0 0.0
    %8183 = vmatprep.subr.mxu0 0.0
    %8184 = vmatpush1.msra.mxu0 0.0
    %8185 = vmatprep.subr.mxu0 0.0
    %8186 = vmatpush1.msra.mxu0 0.0
    %8187 = vmatprep.subr.mxu0 0.0
    %8188 = vmatpush1.msra.mxu0 0.0
    %8189 = vmatprep.subr.mxu0 0.0
    %8190 = vmatpush1.msra.mxu0 0.0
    %8191 = vmatprep.subr.mxu0 0.0
    %8192 = vmatpush1.msra.mxu0 0.0
    %8193 = vmatprep.subr.mxu0 0.0
    %8194 = vmatpush1.msra.mxu0 0.0
    %8195 = vmatprep.subr.mxu0 0.0
    %8196 = vmatpush1.msra.mxu0 0.0
    %8197 = vmatprep.subr.mxu0 0.0
    %8198 = vmatpush1.msra.mxu0 0.0
    %8199 = vmatprep.subr.mxu0 0.0
    %8200 = vmatpush1.msra.mxu0 0.0
    %8201 = vmatprep.subr.mxu0 0.0
    %8202 = vmatpush1.msra.mxu0 0.0
    %8203 = vmatprep.subr.mxu0 0.0
    %8204 = vmatpush1.msra.mxu0 0.0
    %8205 = vmatprep.subr.mxu0 0.0
    %8206 = vmatpush1.msra.mxu0 0.0
    %8207 = vmatprep.subr.mxu0 0.0
    %8208 = vmatpush1.msra.mxu0 0.0
    %8209 = vmatprep.subr.mxu0 0.0
    %8210 = vmatpush1.msra.mxu0 0.0
    %8211 = vmatprep.subr.mxu0 0.0
    %8212 = vmatpush1.msra.mxu0 0.0
    %8213 = vmatprep.subr.mxu0 0.0
    %8214 = vmatpush1.msra.mxu0 0.0
    %8215 = vmatprep.subr.mxu0 0.0
    %8216 = vmatpush1.msra.mxu0 0.0
    %8217 = vmatprep.subr.mxu0 0.0
    %8218 = vmatpush1.msra.mxu0 0.0
    %8219 = vmatprep.mubr.f32.mxu0 0.0
    %8220 = vmatmul.mubr.f32.gmra.mrb[0].mxu0 %v8153
    %v8221 = vpop.f32.mrb[0].mxu0
    %v8222 = vadd.f32 0.0, %v8221
    %v8223 = vpop.f32.mrb[0].mxu0
    %8224 = vdwg.mxu0
    %v8226 = vsel %vm1612, %v8005, 0
    %8228 = vmatprep.subr.mxu0 0.0
    %8229 = vmatpush1.msra.mxu0 %v7647
    %8230 = vmatprep.subr.mxu0 0.0
    %8231 = vmatpush1.msra.mxu0 0.0
    %8232 = vmatprep.subr.mxu0 0.0
    %8233 = vmatpush1.msra.mxu0 0.0
    %8234 = vmatprep.subr.mxu0 0.0
    %8235 = vmatpush1.msra.mxu0 0.0
    %8236 = vmatprep.subr.mxu0 0.0
    %8237 = vmatpush1.msra.mxu0 0.0
    %8238 = vmatprep.subr.mxu0 0.0
    %8239 = vmatpush1.msra.mxu0 0.0
    %8240 = vmatprep.subr.mxu0 0.0
    %8241 = vmatpush1.msra.mxu0 0.0
    %8242 = vmatprep.subr.mxu0 0.0
    %8243 = vmatpush1.msra.mxu0 0.0
    %8244 = vmatprep.subr.mxu0 0.0
    %8245 = vmatpush1.msra.mxu0 0.0
    %8246 = vmatprep.subr.mxu0 0.0
    %8247 = vmatpush1.msra.mxu0 0.0
    %8248 = vmatprep.subr.mxu0 0.0
    %8249 = vmatpush1.msra.mxu0 0.0
    %8250 = vmatprep.subr.mxu0 0.0
    %8251 = vmatpush1.msra.mxu0 0.0
    %8252 = vmatprep.subr.mxu0 0.0
    %8253 = vmatpush1.msra.mxu0 0.0
    %8254 = vmatprep.subr.mxu0 0.0
    %8255 = vmatpush1.msra.mxu0 0.0
    %8256 = vmatprep.subr.mxu0 0.0
    %8257 = vmatpush1.msra.mxu0 0.0
    %8258 = vmatprep.subr.mxu0 0.0
    %8259 = vmatpush1.msra.mxu0 0.0
    %8260 = vmatprep.subr.mxu0 0.0
    %8261 = vmatpush1.msra.mxu0 0.0
    %8262 = vmatprep.subr.mxu0 0.0
    %8263 = vmatpush1.msra.mxu0 0.0
    %8264 = vmatprep.subr.mxu0 0.0
    %8265 = vmatpush1.msra.mxu0 0.0
    %8266 = vmatprep.subr.mxu0 0.0
    %8267 = vmatpush1.msra.mxu0 0.0
    %8268 = vmatprep.subr.mxu0 0.0
    %8269 = vmatpush1.msra.mxu0 0.0
    %8270 = vmatprep.subr.mxu0 0.0
    %8271 = vmatpush1.msra.mxu0 0.0
    %8272 = vmatprep.subr.mxu0 0.0
    %8273 = vmatpush1.msra.mxu0 0.0
    %8274 = vmatprep.subr.mxu0 0.0
    %8275 = vmatpush1.msra.mxu0 0.0
    %8276 = vmatprep.subr.mxu0 0.0
    %8277 = vmatpush1.msra.mxu0 0.0
    %8278 = vmatprep.subr.mxu0 0.0
    %8279 = vmatpush1.msra.mxu0 0.0
    %8280 = vmatprep.subr.mxu0 0.0
    %8281 = vmatpush1.msra.mxu0 0.0
    %8282 = vmatprep.subr.mxu0 0.0
    %8283 = vmatpush1.msra.mxu0 0.0
    %8284 = vmatprep.subr.mxu0 0.0
    %8285 = vmatpush1.msra.mxu0 0.0
    %8286 = vmatprep.subr.mxu0 0.0
    %8287 = vmatpush1.msra.mxu0 0.0
    %8288 = vmatprep.subr.mxu0 0.0
    %8289 = vmatpush1.msra.mxu0 0.0
    %8290 = vmatprep.subr.mxu0 0.0
    %8291 = vmatpush1.msra.mxu0 0.0
    %8292 = vmatprep.mubr.f32.mxu0 0.0
    %8293 = vmatmul.mubr.f32.gmra.mrb[0].mxu0 %v8226
    %v8294 = vpop.f32.mrb[0].mxu0
    %v8295 = vadd.f32 0.0, %v8294
    %v8296 = vpop.f32.mrb[0].mxu0
    %8297 = vdwg.mxu0
    %v8298 = vld [vmem:[%s39] sm:$0xff]
    %v8299 = vld [vmem:[%s39 + $0x8] sm:$0xff]
    %v8300 = vld [vmem:[%s39 + $0x10] sm:$0xff]
    %v8301 = vld [vmem:[%s39 + $0x18] sm:$0xff]
    %v8302 = vld [vmem:[%s6217] sm:$0xff]
    %v8303 = vld [vmem:[%s6217 + $0x8] sm:$0xff]
    %v8304 = vld [vmem:[%s6217 + $0x10] sm:$0xff]
    %v8305 = vld [vmem:[%s6217 + $0x18] sm:$0xff]
    %v8307 = vsel %vm1299, %v8149, 0
    %8309 = vmatprep.subr.mxu0 0.0
    %8310 = vmatpush1.msra.mxu0 %v8302
    %8311 = vmatprep.subr.mxu0 0.0
    %8312 = vmatpush1.msra.mxu0 %v8303
    %8313 = vmatprep.subr.mxu0 0.0
    %8314 = vmatpush1.msra.mxu0 %v8304
    %8315 = vmatprep.subr.mxu0 0.0
    %8316 = vmatpush1.msra.mxu0 %v8305
    %8317 = vmatprep.subr.mxu0 0.0
    %8318 = vmatpush1.msra.mxu0 0.0
    %8319 = vmatprep.subr.mxu0 0.0
    %8320 = vmatpush1.msra.mxu0 0.0
    %8321 = vmatprep.subr.mxu0 0.0
    %8322 = vmatpush1.msra.mxu0 0.0
    %8323 = vmatprep.subr.mxu0 0.0
    %8324 = vmatpush1.msra.mxu0 0.0
    %8325 = vmatprep.subr.mxu0 0.0
    %8326 = vmatpush1.msra.mxu0 0.0
    %8327 = vmatprep.subr.mxu0 0.0
    %8328 = vmatpush1.msra.mxu0 0.0
    %8329 = vmatprep.subr.mxu0 0.0
    %8330 = vmatpush1.msra.mxu0 0.0
    %8331 = vmatprep.subr.mxu0 0.0
    %8332 = vmatpush1.msra.mxu0 0.0
    %8333 = vmatprep.subr.mxu0 0.0
    %8334 = vmatpush1.msra.mxu0 0.0
    %8335 = vmatprep.subr.mxu0 0.0
    %8336 = vmatpush1.msra.mxu0 0.0
    %8337 = vmatprep.subr.mxu0 0.0
    %8338 = vmatpush1.msra.mxu0 0.0
    %8339 = vmatprep.subr.mxu0 0.0
    %8340 = vmatpush1.msra.mxu0 0.0
    %8341 = vmatprep.subr.mxu0 0.0
    %8342 = vmatpush1.msra.mxu0 0.0
    %8343 = vmatprep.subr.mxu0 0.0
    %8344 = vmatpush1.msra.mxu0 0.0
    %8345 = vmatprep.subr.mxu0 0.0
    %8346 = vmatpush1.msra.mxu0 0.0
    %8347 = vmatprep.subr.mxu0 0.0
    %8348 = vmatpush1.msra.mxu0 0.0
    %8349 = vmatprep.subr.mxu0 0.0
    %8350 = vmatpush1.msra.mxu0 0.0
    %8351 = vmatprep.subr.mxu0 0.0
    %8352 = vmatpush1.msra.mxu0 0.0
    %8353 = vmatprep.subr.mxu0 0.0
    %8354 = vmatpush1.msra.mxu0 0.0
    %8355 = vmatprep.subr.mxu0 0.0
    %8356 = vmatpush1.msra.mxu0 0.0
    %8357 = vmatprep.subr.mxu0 0.0
    %8358 = vmatpush1.msra.mxu0 0.0
    %8359 = vmatprep.subr.mxu0 0.0
    %8360 = vmatpush1.msra.mxu0 0.0
    %8361 = vmatprep.subr.mxu0 0.0
    %8362 = vmatpush1.msra.mxu0 0.0
    %8363 = vmatprep.subr.mxu0 0.0
    %8364 = vmatpush1.msra.mxu0 0.0
    %8365 = vmatprep.subr.mxu0 0.0
    %8366 = vmatpush1.msra.mxu0 0.0
    %8367 = vmatprep.subr.mxu0 0.0
    %8368 = vmatpush1.msra.mxu0 0.0
    %8369 = vmatprep.subr.mxu0 0.0
    %8370 = vmatpush1.msra.mxu0 0.0
    %8371 = vmatprep.subr.mxu0 0.0
    %8372 = vmatpush1.msra.mxu0 0.0
    %8373 = vmatprep.mubr.f32.mxu0 0.0
    %8374 = vmatmul.mubr.f32.gmra.mrb[0].mxu0 %v8307
    %v8375 = vpop.f32.mrb[0].mxu0
    %v8376 = vadd.f32 0.0, %v8375
    %v8377 = vpop.f32.mrb[0].mxu0
    %8378 = vdwg.mxu0
    %v8380 = vsel %vm1299, %v8076, 0
    %8382 = vmatprep.subr.mxu0 0.0
    %8383 = vmatpush1.msra.mxu0 %v8298
    %8384 = vmatprep.subr.mxu0 0.0
    %8385 = vmatpush1.msra.mxu0 %v8299
    %8386 = vmatprep.subr.mxu0 0.0
    %8387 = vmatpush1.msra.mxu0 %v8300
    %8388 = vmatprep.subr.mxu0 0.0
    %8389 = vmatpush1.msra.mxu0 %v8301
    %8390 = vmatprep.subr.mxu0 0.0
    %8391 = vmatpush1.msra.mxu0 0.0
    %8392 = vmatprep.subr.mxu0 0.0
    %8393 = vmatpush1.msra.mxu0 0.0
    %8394 = vmatprep.subr.mxu0 0.0
    %8395 = vmatpush1.msra.mxu0 0.0
    %8396 = vmatprep.subr.mxu0 0.0
    %8397 = vmatpush1.msra.mxu0 0.0
    %8398 = vmatprep.subr.mxu0 0.0
    %8399 = vmatpush1.msra.mxu0 0.0
    %8400 = vmatprep.subr.mxu0 0.0
    %8401 = vmatpush1.msra.mxu0 0.0
    %8402 = vmatprep.subr.mxu0 0.0
    %8403 = vmatpush1.msra.mxu0 0.0
    %8404 = vmatprep.subr.mxu0 0.0
    %8405 = vmatpush1.msra.mxu0 0.0
    %8406 = vmatprep.subr.mxu0 0.0
    %8407 = vmatpush1.msra.mxu0 0.0
    %8408 = vmatprep.subr.mxu0 0.0
    %8409 = vmatpush1.msra.mxu0 0.0
    %8410 = vmatprep.subr.mxu0 0.0
    %8411 = vmatpush1.msra.mxu0 0.0
    %8412 = vmatprep.subr.mxu0 0.0
    %8413 = vmatpush1.msra.mxu0 0.0
    %8414 = vmatprep.subr.mxu0 0.0
    %8415 = vmatpush1.msra.mxu0 0.0
    %8416 = vmatprep.subr.mxu0 0.0
    %8417 = vmatpush1.msra.mxu0 0.0
    %8418 = vmatprep.subr.mxu0 0.0
    %8419 = vmatpush1.msra.mxu0 0.0
    %8420 = vmatprep.subr.mxu0 0.0
    %8421 = vmatpush1.msra.mxu0 0.0
    %8422 = vmatprep.subr.mxu0 0.0
    %8423 = vmatpush1.msra.mxu0 0.0
    %8424 = vmatprep.subr.mxu0 0.0
    %8425 = vmatpush1.msra.mxu0 0.0
    %8426 = vmatprep.subr.mxu0 0.0
    %8427 = vmatpush1.msra.mxu0 0.0
    %8428 = vmatprep.subr.mxu0 0.0
    %8429 = vmatpush1.msra.mxu0 0.0
    %8430 = vmatprep.subr.mxu0 0.0
    %8431 = vmatpush1.msra.mxu0 0.0
    %8432 = vmatprep.subr.mxu0 0.0
    %8433 = vmatpush1.msra.mxu0 0.0
    %8434 = vmatprep.subr.mxu0 0.0
    %8435 = vmatpush1.msra.mxu0 0.0
    %8436 = vmatprep.subr.mxu0 0.0
    %8437 = vmatpush1.msra.mxu0 0.0
    %8438 = vmatprep.subr.mxu0 0.0
    %8439 = vmatpush1.msra.mxu0 0.0
    %8440 = vmatprep.subr.mxu0 0.0
    %8441 = vmatpush1.msra.mxu0 0.0
    %8442 = vmatprep.subr.mxu0 0.0
    %8443 = vmatpush1.msra.mxu0 0.0
    %8444 = vmatprep.subr.mxu0 0.0
    %8445 = vmatpush1.msra.mxu0 0.0
    %8446 = vmatprep.mubr.f32.mxu0 0.0
    %8447 = vmatmul.mubr.f32.gmra.mrb[0].mxu0 %v8380
    %v8448 = vpop.f32.mrb[0].mxu0
    %v8449 = vadd.f32 %v8376, %v8448
    %v8450 = vpop.f32.mrb[0].mxu0
    %8451 = vdwg.mxu0
    %v8452 = vld [vmem:[%s6368] sm:$0xff]
    %v8453 = vld [vmem:[%s6368 + $0x8] sm:$0xff]
    %v8454 = vld [vmem:[%s6368 + $0x10] sm:$0xff]
    %v8455 = vld [vmem:[%s6368 + $0x18] sm:$0xff]
    %v8457 = vsel %vm1299, %v8222, 0
    %8459 = vmatprep.subr.mxu0 0.0
    %8460 = vmatpush1.msra.mxu0 %v8452
    %8461 = vmatprep.subr.mxu0 0.0
    %8462 = vmatpush1.msra.mxu0 %v8453
    %8463 = vmatprep.subr.mxu0 0.0
    %8464 = vmatpush1.msra.mxu0 %v8454
    %8465 = vmatprep.subr.mxu0 0.0
    %8466 = vmatpush1.msra.mxu0 %v8455
    %8467 = vmatprep.subr.mxu0 0.0
    %8468 = vmatpush1.msra.mxu0 0.0
    %8469 = vmatprep.subr.mxu0 0.0
    %8470 = vmatpush1.msra.mxu0 0.0
    %8471 = vmatprep.subr.mxu0 0.0
    %8472 = vmatpush1.msra.mxu0 0.0
    %8473 = vmatprep.subr.mxu0 0.0
    %8474 = vmatpush1.msra.mxu0 0.0
    %8475 = vmatprep.subr.mxu0 0.0
    %8476 = vmatpush1.msra.mxu0 0.0
    %8477 = vmatprep.subr.mxu0 0.0
    %8478 = vmatpush1.msra.mxu0 0.0
    %8479 = vmatprep.subr.mxu0 0.0
    %8480 = vmatpush1.msra.mxu0 0.0
    %8481 = vmatprep.subr.mxu0 0.0
    %8482 = vmatpush1.msra.mxu0 0.0
    %8483 = vmatprep.subr.mxu0 0.0
    %8484 = vmatpush1.msra.mxu0 0.0
    %8485 = vmatprep.subr.mxu0 0.0
    %8486 = vmatpush1.msra.mxu0 0.0
    %8487 = vmatprep.subr.mxu0 0.0
    %8488 = vmatpush1.msra.mxu0 0.0
    %8489 = vmatprep.subr.mxu0 0.0
    %8490 = vmatpush1.msra.mxu0 0.0
    %8491 = vmatprep.subr.mxu0 0.0
    %8492 = vmatpush1.msra.mxu0 0.0
    %8493 = vmatprep.subr.mxu0 0.0
    %8494 = vmatpush1.msra.mxu0 0.0
    %8495 = vmatprep.subr.mxu0 0.0
    %8496 = vmatpush1.msra.mxu0 0.0
    %8497 = vmatprep.subr.mxu0 0.0
    %8498 = vmatpush1.msra.mxu0 0.0
    %8499 = vmatprep.subr.mxu0 0.0
    %8500 = vmatpush1.msra.mxu0 0.0
    %8501 = vmatprep.subr.mxu0 0.0
    %8502 = vmatpush1.msra.mxu0 0.0
    %8503 = vmatprep.subr.mxu0 0.0
    %8504 = vmatpush1.msra.mxu0 0.0
    %8505 = vmatprep.subr.mxu0 0.0
    %8506 = vmatpush1.msra.mxu0 0.0
    %8507 = vmatprep.subr.mxu0 0.0
    %8508 = vmatpush1.msra.mxu0 0.0
    %8509 = vmatprep.subr.mxu0 0.0
    %8510 = vmatpush1.msra.mxu0 0.0
    %8511 = vmatprep.subr.mxu0 0.0
    %8512 = vmatpush1.msra.mxu0 0.0
    %8513 = vmatprep.subr.mxu0 0.0
    %8514 = vmatpush1.msra.mxu0 0.0
    %8515 = vmatprep.subr.mxu0 0.0
    %8516 = vmatpush1.msra.mxu0 0.0
    %8517 = vmatprep.subr.mxu0 0.0
    %8518 = vmatpush1.msra.mxu0 0.0
    %8519 = vmatprep.subr.mxu0 0.0
    %8520 = vmatpush1.msra.mxu0 0.0
    %8521 = vmatprep.subr.mxu0 0.0
    %8522 = vmatpush1.msra.mxu0 0.0
    %8523 = vmatprep.mubr.f32.mxu0 0.0
    %8524 = vmatmul.mubr.f32.gmra.mrb[0].mxu0 %v8457
    %v8525 = vpop.f32.mrb[0].mxu0
    %v8526 = vadd.f32 0.0, %v8525
    %v8527 = vpop.f32.mrb[0].mxu0
    %8528 = vdwg.mxu0
    %v8529 = vadd.f32 %v8449, %v8526
    %v8530 = vld [vmem:[%s6447] sm:$0xff]
    %v8531 = vld [vmem:[%s6447 + $0x8] sm:$0xff]
    %v8532 = vld [vmem:[%s6447 + $0x10] sm:$0xff]
    %v8533 = vld [vmem:[%s6447 + $0x18] sm:$0xff]
    %v8535 = vsel %vm1299, %v8295, 0
    %8537 = vmatprep.subr.mxu0 0.0
    %8538 = vmatpush1.msra.mxu0 %v8530
    %8539 = vmatprep.subr.mxu0 0.0
    %8540 = vmatpush1.msra.mxu0 %v8531
    %8541 = vmatprep.subr.mxu0 0.0
    %8542 = vmatpush1.msra.mxu0 %v8532
    %8543 = vmatprep.subr.mxu0 0.0
    %8544 = vmatpush1.msra.mxu0 %v8533
    %8545 = vmatprep.subr.mxu0 0.0
    %8546 = vmatpush1.msra.mxu0 0.0
    %8547 = vmatprep.subr.mxu0 0.0
    %8548 = vmatpush1.msra.mxu0 0.0
    %8549 = vmatprep.subr.mxu0 0.0
    %8550 = vmatpush1.msra.mxu0 0.0
    %8551 = vmatprep.subr.mxu0 0.0
    %8552 = vmatpush1.msra.mxu0 0.0
    %8553 = vmatprep.subr.mxu0 0.0
    %8554 = vmatpush1.msra.mxu0 0.0
    %8555 = vmatprep.subr.mxu0 0.0
    %8556 = vmatpush1.msra.mxu0 0.0
    %8557 = vmatprep.subr.mxu0 0.0
    %8558 = vmatpush1.msra.mxu0 0.0
    %8559 = vmatprep.subr.mxu0 0.0
    %8560 = vmatpush1.msra.mxu0 0.0
    %8561 = vmatprep.subr.mxu0 0.0
    %8562 = vmatpush1.msra.mxu0 0.0
    %8563 = vmatprep.subr.mxu0 0.0
    %8564 = vmatpush1.msra.mxu0 0.0
    %8565 = vmatprep.subr.mxu0 0.0
    %8566 = vmatpush1.msra.mxu0 0.0
    %8567 = vmatprep.subr.mxu0 0.0
    %8568 = vmatpush1.msra.mxu0 0.0
    %8569 = vmatprep.subr.mxu0 0.0
    %8570 = vmatpush1.msra.mxu0 0.0
    %8571 = vmatprep.subr.mxu0 0.0
    %8572 = vmatpush1.msra.mxu0 0.0
    %8573 = vmatprep.subr.mxu0 0.0
    %8574 = vmatpush1.msra.mxu0 0.0
    %8575 = vmatprep.subr.mxu0 0.0
    %8576 = vmatpush1.msra.mxu0 0.0
    %8577 = vmatprep.subr.mxu0 0.0
    %8578 = vmatpush1.msra.mxu0 0.0
    %8579 = vmatprep.subr.mxu0 0.0
    %8580 = vmatpush1.msra.mxu0 0.0
    %8581 = vmatprep.subr.mxu0 0.0
    %8582 = vmatpush1.msra.mxu0 0.0
    %8583 = vmatprep.subr.mxu0 0.0
    %8584 = vmatpush1.msra.mxu0 0.0
    %8585 = vmatprep.subr.mxu0 0.0
    %8586 = vmatpush1.msra.mxu0 0.0
    %8587 = vmatprep.subr.mxu0 0.0
    %8588 = vmatpush1.msra.mxu0 0.0
    %8589 = vmatprep.subr.mxu0 0.0
    %8590 = vmatpush1.msra.mxu0 0.0
    %8591 = vmatprep.subr.mxu0 0.0
    %8592 = vmatpush1.msra.mxu0 0.0
    %8593 = vmatprep.subr.mxu0 0.0
    %8594 = vmatpush1.msra.mxu0 0.0
    %8595 = vmatprep.subr.mxu0 0.0
    %8596 = vmatpush1.msra.mxu0 0.0
    %8597 = vmatprep.subr.mxu0 0.0
    %8598 = vmatpush1.msra.mxu0 0.0
    %8599 = vmatprep.subr.mxu0 0.0
    %8600 = vmatpush1.msra.mxu0 0.0
    %8601 = vmatprep.mubr.f32.mxu0 0.0
    %8602 = vmatmul.mubr.f32.gmra.mrb[0].mxu0 %v8535
    %v8603 = vpop.f32.mrb[0].mxu0
    %v8604 = vadd.f32 0.0, %v8603
    %v8605 = vpop.f32.mrb[0].mxu0
    %8606 = vdwg.mxu0
    %v8607 = vadd.f32 %v8529, %v8604
    %v8608 = vld [vmem:[%s41] sm:$0x1]
    %v8610 = vlaneseq
    %v8611 = vshrl.u32 %v8610, 7
    %v8612 = vsub.s32 0, %v8611
    %v8613 = vrot.slane %v8608, %v8612
    %v8615 = vadd.f32 %v8607, %v8613
    %v8616 = vadd.f32 %v4393, %v6533
    %v8617 = vadd.f32 %v4394, %v8615
    %8618 = vadd.xlane.f32.xlu0 %v8616
    %v8619 = vpop.xlane.xlu0 %8618
    %8620 = vadd.xlane.f32.xlu0 %v8617
    %v8621 = vpop.xlane.xlu0 %8620
    %v8622 = vmul.f32 %v8619, %v4358
    %v8623 = vmul.f32 %v8621, %v4358
    %v8624 = vsub.f32 %v8616, %v8622
    %v8625 = vsub.f32 %v8617, %v8623
    %v8626 = vmul.f32 %v8624, %v8624
    %v8627 = vmul.f32 %v8625, %v8625
    %8628 = vadd.xlane.f32.xlu0 %v8626
    %v8629 = vpop.xlane.xlu0 %8628
    %8630 = vadd.xlane.f32.xlu0 %v8627
    %v8631 = vpop.xlane.xlu0 %8630
    %v8632 = vmul.f32 %v8629, %v4358
    %v8633 = vmul.f32 %v8631, %v4358
    %v8634 = vadd.f32 %v8632, 1e-05
    %v8635 = vadd.f32 %v8633, 1e-05
    %v8636 = vrsqrt.pop %v8634
    %v8637 = vrsqrt.pop %v8635
    %v8638 = vmul.f32 %v8624, %v8636
    %v8639 = vmul.f32 %v8625, %v8637
    %v8640 = vld [vmem:[%s55] sm:$0x1]
    %v8642 = vlaneseq
    %v8643 = vshrl.u32 %v8642, 7
    %v8644 = vsub.s32 0, %v8643
    %v8645 = vrot.slane %v8640, %v8644
    %v8647 = vmul.f32 %v8638, %v8645
    %v8648 = vmul.f32 %v8639, %v8645
    %v8649 = vld [vmem:[%s57] sm:$0x1]
    %v8651 = vlaneseq
    %v8652 = vshrl.u32 %v8651, 7
    %v8653 = vsub.s32 0, %v8652
    %v8654 = vrot.slane %v8649, %v8653
    %v8656 = vadd.f32 %v8647, %v8654
    %v8657 = vadd.f32 %v8648, %v8654
    %v8658 = vld [vmem:[%s43] sm:$0xff]
    %v8659 = vld [vmem:[%s43 + $0x8] sm:$0xff]
    %v8660 = vld [vmem:[%s43 + $0x10] sm:$0xff]
    %v8661 = vld [vmem:[%s43 + $0x18] sm:$0xff]
    %v8662 = vld [vmem:[%s43 + $0x20] sm:$0xff]
    %v8663 = vld [vmem:[%s43 + $0x28] sm:$0xff]
    %v8664 = vld [vmem:[%s43 + $0x30] sm:$0xff]
    %v8665 = vld [vmem:[%s43 + $0x38] sm:$0xff]
    %v8666 = vld [vmem:[%s43 + $0x40] sm:$0xff]
    %v8667 = vld [vmem:[%s43 + $0x48] sm:$0xff]
    %v8668 = vld [vmem:[%s43 + $0x50] sm:$0xff]
    %v8669 = vld [vmem:[%s43 + $0x58] sm:$0xff]
    %v8670 = vld [vmem:[%s43 + $0x60] sm:$0xff]
    %v8671 = vld [vmem:[%s43 + $0x68] sm:$0xff]
    %v8672 = vld [vmem:[%s43 + $0x70] sm:$0xff]
    %v8673 = vld [vmem:[%s43 + $0x78] sm:$0xff]
    %v8674 = vld [vmem:[%s43 + $0x80] sm:$0xff]
    %v8675 = vld [vmem:[%s43 + $0x88] sm:$0xff]
    %v8676 = vld [vmem:[%s43 + $0x90] sm:$0xff]
    %v8677 = vld [vmem:[%s43 + $0x98] sm:$0xff]
    %v8678 = vld [vmem:[%s43 + $0xa0] sm:$0xff]
    %v8679 = vld [vmem:[%s43 + $0xa8] sm:$0xff]
    %v8680 = vld [vmem:[%s43 + $0xb0] sm:$0xff]
    %v8681 = vld [vmem:[%s43 + $0xb8] sm:$0xff]
    %v8682 = vld [vmem:[%s43 + $0xc0] sm:$0xff]
    %v8683 = vld [vmem:[%s43 + $0xc8] sm:$0xff]
    %v8684 = vld [vmem:[%s43 + $0xd0] sm:$0xff]
    %v8685 = vld [vmem:[%s43 + $0xd8] sm:$0xff]
    %v8686 = vld [vmem:[%s43 + $0xe0] sm:$0xff]
    %v8687 = vld [vmem:[%s43 + $0xe8] sm:$0xff]
    %v8688 = vld [vmem:[%s43 + $0xf0] sm:$0xff]
    %v8689 = vld [vmem:[%s43 + $0xf8] sm:$0xff]
    %v8690 = vld [vmem:[%s45] sm:$0x3]
    %v8692 = vlaneseq
    %v8693 = vshrl.u32 %v8692, 7
    %v8694 = vsub.s32 0, %v8693
    %v8695 = vrot.slane %v8690, %v8694
    %v8696 = vlaneseq
    %v8697 = vshrl.u32 %v8696, 7
    %v8698 = vsub.s32 1, %v8697
    %v8699 = vrot.slane %v8690, %v8698
    %8702 = vmatprep.subr.mxu0 %v8659
    %8703 = vmatpush1.msra.mxu0 %v8658
    %8704 = vmatprep.subr.mxu0 %v8661
    %8705 = vmatpush1.msra.mxu0 %v8660
    %8706 = vmatprep.subr.mxu0 %v8663
    %8707 = vmatpush1.msra.mxu0 %v8662
    %8708 = vmatprep.subr.mxu0 %v8665
    %8709 = vmatpush1.msra.mxu0 %v8664
    %8710 = vmatprep.subr.mxu0 %v8667
    %8711 = vmatpush1.msra.mxu0 %v8666
    %8712 = vmatprep.subr.mxu0 %v8669
    %8713 = vmatpush1.msra.mxu0 %v8668
    %8714 = vmatprep.subr.mxu0 %v8671
    %8715 = vmatpush1.msra.mxu0 %v8670
    %8716 = vmatprep.subr.mxu0 %v8673
    %8717 = vmatpush1.msra.mxu0 %v8672
    %8718 = vmatprep.subr.mxu0 %v8675
    %8719 = vmatpush1.msra.mxu0 %v8674
    %8720 = vmatprep.subr.mxu0 %v8677
    %8721 = vmatpush1.msra.mxu0 %v8676
    %8722 = vmatprep.subr.mxu0 %v8679
    %8723 = vmatpush1.msra.mxu0 %v8678
    %8724 = vmatprep.subr.mxu0 %v8681
    %8725 = vmatpush1.msra.mxu0 %v8680
    %8726 = vmatprep.subr.mxu0 %v8683
    %8727 = vmatpush1.msra.mxu0 %v8682
    %8728 = vmatprep.subr.mxu0 %v8685
    %8729 = vmatpush1.msra.mxu0 %v8684
    %8730 = vmatprep.subr.mxu0 %v8687
    %8731 = vmatpush1.msra.mxu0 %v8686
    %8732 = vmatprep.subr.mxu0 %v8689
    %8733 = vmatpush1.msra.mxu0 %v8688
    %8734 = vmatprep.subr.mxu0 0.0
    %8735 = vmatpush1.msra.mxu0 0.0
    %8736 = vmatprep.subr.mxu0 0.0
    %8737 = vmatpush1.msra.mxu0 0.0
    %8738 = vmatprep.subr.mxu0 0.0
    %8739 = vmatpush1.msra.mxu0 0.0
    %8740 = vmatprep.subr.mxu0 0.0
    %8741 = vmatpush1.msra.mxu0 0.0
    %8742 = vmatprep.subr.mxu0 0.0
    %8743 = vmatpush1.msra.mxu0 0.0
    %8744 = vmatprep.subr.mxu0 0.0
    %8745 = vmatpush1.msra.mxu0 0.0
    %8746 = vmatprep.subr.mxu0 0.0
    %8747 = vmatpush1.msra.mxu0 0.0
    %8748 = vmatprep.subr.mxu0 0.0
    %8749 = vmatpush1.msra.mxu0 0.0
    %8750 = vmatprep.subr.mxu0 0.0
    %8751 = vmatpush1.msra.mxu0 0.0
    %8752 = vmatprep.subr.mxu0 0.0
    %8753 = vmatpush1.msra.mxu0 0.0
    %8754 = vmatprep.subr.mxu0 0.0
    %8755 = vmatpush1.msra.mxu0 0.0
    %8756 = vmatprep.subr.mxu0 0.0
    %8757 = vmatpush1.msra.mxu0 0.0
    %8758 = vmatprep.subr.mxu0 0.0
    %8759 = vmatpush1.msra.mxu0 0.0
    %8760 = vmatprep.subr.mxu0 0.0
    %8761 = vmatpush1.msra.mxu0 0.0
    %8762 = vmatprep.subr.mxu0 0.0
    %8763 = vmatpush1.msra.mxu0 0.0
    %8764 = vmatprep.subr.mxu0 0.0
    %8765 = vmatpush1.msra.mxu0 0.0
    %8766 = vmatprep.mubr.f32.mxu0 0.0
    %8767 = vmatmul.mubr.f32.gmra.mrb[0].mxu0 %v8656
    %v8768 = vpop.f32.mrb[0].mxu0
    %v8769 = vadd.f32 %v8695, %v8768
    %v8770 = vpop.f32.mrb[0].mxu0
    %v8771 = vadd.f32 %v8699, %v8770
    %8772 = vmatprep.mubr.f32.mxu0 0.0
    %8773 = vmatmul.mubr.f32.gmra.mrb[0].mxu0 %v8657
    %v8774 = vpop.f32.mrb[0].mxu0
    %v8775 = vadd.f32 %v8695, %v8774
    %v8776 = vpop.f32.mrb[0].mxu0
    %v8777 = vadd.f32 %v8699, %v8776
    %8778 = vdwg.mxu0
    %v8779 = vmax.f32 %v8769, 0.0
    %v8780 = vmax.f32 %v8771, 0.0
    %v8781 = vmax.f32 %v8775, 0.0
    %v8782 = vmax.f32 %v8777, 0.0
    %v8783 = vld [vmem:[%s47] sm:$0xff]
    %v8784 = vld [vmem:[%s47 + $0x8] sm:$0xff]
    %v8785 = vld [vmem:[%s47 + $0x10] sm:$0xff]
    %v8786 = vld [vmem:[%s47 + $0x18] sm:$0xff]
    %v8787 = vld [vmem:[%s47 + $0x20] sm:$0xff]
    %v8788 = vld [vmem:[%s47 + $0x28] sm:$0xff]
    %v8789 = vld [vmem:[%s47 + $0x30] sm:$0xff]
    %v8790 = vld [vmem:[%s47 + $0x38] sm:$0xff]
    %v8791 = vld [vmem:[%s47 + $0x40] sm:$0xff]
    %v8792 = vld [vmem:[%s47 + $0x48] sm:$0xff]
    %v8793 = vld [vmem:[%s47 + $0x50] sm:$0xff]
    %v8794 = vld [vmem:[%s47 + $0x58] sm:$0xff]
    %v8795 = vld [vmem:[%s47 + $0x60] sm:$0xff]
    %v8796 = vld [vmem:[%s47 + $0x68] sm:$0xff]
    %v8797 = vld [vmem:[%s47 + $0x70] sm:$0xff]
    %v8798 = vld [vmem:[%s47 + $0x78] sm:$0xff]
    %v8799 = vld [vmem:[%s47 + $0x80] sm:$0xff]
    %v8800 = vld [vmem:[%s47 + $0x88] sm:$0xff]
    %v8801 = vld [vmem:[%s47 + $0x90] sm:$0xff]
    %v8802 = vld [vmem:[%s47 + $0x98] sm:$0xff]
    %v8803 = vld [vmem:[%s47 + $0xa0] sm:$0xff]
    %v8804 = vld [vmem:[%s47 + $0xa8] sm:$0xff]
    %v8805 = vld [vmem:[%s47 + $0xb0] sm:$0xff]
    %v8806 = vld [vmem:[%s47 + $0xb8] sm:$0xff]
    %v8807 = vld [vmem:[%s47 + $0xc0] sm:$0xff]
    %v8808 = vld [vmem:[%s47 + $0xc8] sm:$0xff]
    %v8809 = vld [vmem:[%s47 + $0xd0] sm:$0xff]
    %v8810 = vld [vmem:[%s47 + $0xd8] sm:$0xff]
    %v8811 = vld [vmem:[%s47 + $0xe0] sm:$0xff]
    %v8812 = vld [vmem:[%s47 + $0xe8] sm:$0xff]
    %v8813 = vld [vmem:[%s47 + $0xf0] sm:$0xff]
    %v8814 = vld [vmem:[%s47 + $0xf8] sm:$0xff]
    %v8815 = vld [vmem:[%s49] sm:$0x1]
    %v8817 = vlaneseq
    %v8818 = vshrl.u32 %v8817, 7
    %v8819 = vsub.s32 0, %v8818
    %v8820 = vrot.slane %v8815, %v8819
    %8822 = vmatprep.subr.mxu0 0.0
    %8823 = vmatpush1.msra.mxu0 %v8783
    %8824 = vmatprep.subr.mxu0 0.0
    %8825 = vmatpush1.msra.mxu0 %v8784
    %8826 = vmatprep.subr.mxu0 0.0
    %8827 = vmatpush1.msra.mxu0 %v8785
    %8828 = vmatprep.subr.mxu0 0.0
    %8829 = vmatpush1.msra.mxu0 %v8786
    %8830 = vmatprep.subr.mxu0 0.0
    %8831 = vmatpush1.msra.mxu0 %v8787
    %8832 = vmatprep.subr.mxu0 0.0
    %8833 = vmatpush1.msra.mxu0 %v8788
    %8834 = vmatprep.subr.mxu0 0.0
    %8835 = vmatpush1.msra.mxu0 %v8789
    %8836 = vmatprep.subr.mxu0 0.0
    %8837 = vmatpush1.msra.mxu0 %v8790
    %8838 = vmatprep.subr.mxu0 0.0
    %8839 = vmatpush1.msra.mxu0 %v8791
    %8840 = vmatprep.subr.mxu0 0.0
    %8841 = vmatpush1.msra.mxu0 %v8792
    %8842 = vmatprep.subr.mxu0 0.0
    %8843 = vmatpush1.msra.mxu0 %v8793
    %8844 = vmatprep.subr.mxu0 0.0
    %8845 = vmatpush1.msra.mxu0 %v8794
    %8846 = vmatprep.subr.mxu0 0.0
    %8847 = vmatpush1.msra.mxu0 %v8795
    %8848 = vmatprep.subr.mxu0 0.0
    %8849 = vmatpush1.msra.mxu0 %v8796
    %8850 = vmatprep.subr.mxu0 0.0
    %8851 = vmatpush1.msra.mxu0 %v8797
    %8852 = vmatprep.subr.mxu0 0.0
    %8853 = vmatpush1.msra.mxu0 %v8798
    %8854 = vmatprep.subr.mxu0 0.0
    %8855 = vmatpush1.msra.mxu0 %v8799
    %8856 = vmatprep.subr.mxu0 0.0
    %8857 = vmatpush1.msra.mxu0 %v8800
    %8858 = vmatprep.subr.mxu0 0.0
    %8859 = vmatpush1.msra.mxu0 %v8801
    %8860 = vmatprep.subr.mxu0 0.0
    %8861 = vmatpush1.msra.mxu0 %v8802
    %8862 = vmatprep.subr.mxu0 0.0
    %8863 = vmatpush1.msra.mxu0 %v8803
    %8864 = vmatprep.subr.mxu0 0.0
    %8865 = vmatpush1.msra.mxu0 %v8804
    %8866 = vmatprep.subr.mxu0 0.0
    %8867 = vmatpush1.msra.mxu0 %v8805
    %8868 = vmatprep.subr.mxu0 0.0
    %8869 = vmatpush1.msra.mxu0 %v8806
    %8870 = vmatprep.subr.mxu0 0.0
    %8871 = vmatpush1.msra.mxu0 %v8807
    %8872 = vmatprep.subr.mxu0 0.0
    %8873 = vmatpush1.msra.mxu0 %v8808
    %8874 = vmatprep.subr.mxu0 0.0
    %8875 = vmatpush1.msra.mxu0 %v8809
    %8876 = vmatprep.subr.mxu0 0.0
    %8877 = vmatpush1.msra.mxu0 %v8810
    %8878 = vmatprep.subr.mxu0 0.0
    %8879 = vmatpush1.msra.mxu0 %v8811
    %8880 = vmatprep.subr.mxu0 0.0
    %8881 = vmatpush1.msra.mxu0 %v8812
    %8882 = vmatprep.subr.mxu0 0.0
    %8883 = vmatpush1.msra.mxu0 %v8813
    %8884 = vmatprep.subr.mxu0 0.0
    %8885 = vmatpush1.msra.mxu0 %v8814
    %8886 = vmatprep.mubr.f32.mxu0 %v8780
    %8887 = vmatmul.mubr.f32.gmra.mrb[0].mxu0 %v8779
    %v8888 = vpop.f32.mrb[0].mxu0
    %v8889 = vadd.f32 %v8820, %v8888
    %v8890 = vpop.f32.mrb[0].mxu0
    %8891 = vmatprep.mubr.f32.mxu0 %v8782
    %8892 = vmatmul.mubr.f32.gmra.mrb[0].mxu0 %v8781
    %v8893 = vpop.f32.mrb[0].mxu0
    %v8894 = vadd.f32 %v8820, %v8893
    %v8895 = vpop.f32.mrb[0].mxu0
    %8896 = vdwg.mxu0
    %v8897 = vadd.f32 %v8656, %v8889
    %v8898 = vadd.f32 %v8657, %v8894
    %8899 = vadd.xlane.f32.xlu0 %v8897
    %v8900 = vpop.xlane.xlu0 %8899
    %8901 = vadd.xlane.f32.xlu0 %v8898
    %v8902 = vpop.xlane.xlu0 %8901
    %v8903 = vmul.f32 %v8900, %v4358
    %v8904 = vmul.f32 %v8902, %v4358
    %v8905 = vsub.f32 %v8897, %v8903
    %v8906 = vsub.f32 %v8898, %v8904
    %v8907 = vmul.f32 %v8905, %v8905
    %v8908 = vmul.f32 %v8906, %v8906
    %8909 = vadd.xlane.f32.xlu0 %v8907
    %v8910 = vpop.xlane.xlu0 %8909
    %8911 = vadd.xlane.f32.xlu0 %v8908
    %v8912 = vpop.xlane.xlu0 %8911
    %v8913 = vmul.f32 %v8910, %v4358
    %v8914 = vmul.f32 %v8912, %v4358
    %v8915 = vadd.f32 %v8913, 1e-05
    %v8916 = vadd.f32 %v8914, 1e-05
    %v8917 = vrsqrt.pop %v8915
    %v8918 = vrsqrt.pop %v8916
    %v8919 = vmul.f32 %v8905, %v8917
    %v8920 = vmul.f32 %v8906, %v8918
    %v8921 = vld [vmem:[%s59] sm:$0x1]
    %v8923 = vlaneseq
    %v8924 = vshrl.u32 %v8923, 7
    %v8925 = vsub.s32 0, %v8924
    %v8926 = vrot.slane %v8921, %v8925
    %v8928 = vmul.f32 %v8919, %v8926
    %v8929 = vmul.f32 %v8920, %v8926
    %v8930 = vld [vmem:[%s61] sm:$0x1]
    %v8932 = vlaneseq
    %v8933 = vshrl.u32 %v8932, 7
    %v8934 = vsub.s32 0, %v8933
    %v8935 = vrot.slane %v8930, %v8934
    %v8937 = vadd.f32 %v8928, %v8935
    %v8938 = vadd.f32 %v8929, %v8935
    %8939 = vst [vmem:[#allocation2] sm:$0xff] %v8937
    %8940 = vst [vmem:[#allocation2 + $0x8] sm:$0xff] %v8938
    // Predicated region
    $region126: #{tpu_custom_call.1} parent=1 // pred_check
      _
    $region127: #{tpu_custom_call.1} parent=1 // pred_check_branch
      %8942 = sbr.rel (0) target = $region129
    $region128: #{tpu_custom_call.1} parent=1 // pred_region
      %s8944 = ssub.s32 256, 256
      %8945 = vsyncadd [#allocation3], %s8944
      %s8946 = sshll.u32 [#allocation2], 4
      %s8947 = int_to_ptr.vmem [resolvable:$true] %s8946
      %8952 = dma.vmem_to_hbm [thread:$0]  %s8947, 256, %s63, [#allocation3], 128, 128, 8
    $region129: #{tpu_custom_call.1} parent=1 // pred_fallthru
      _
    // Predicated region
    $region130: #{tpu_custom_call.1} parent=1 // pred_check
      _
    $region131: #{tpu_custom_call.1} parent=1 // pred_check_branch
      %8954 = sbr.rel (0) target = $region133
    $region132: #{tpu_custom_call.1} parent=1 // pred_region
      %8955 = dma.done [#allocation3], 256
    $region133: #{tpu_custom_call.1} parent=1 // pred_fallthru
      _
    %8956 = vsyncpa [#allocation3], 1

</llo_original>
